<compile_context>
chip_gen: v7x
topology: tpu7x:2x2x1
jax: 0.10.0
libtpu: 0.0.40
codegen_flags: <defaults>
</compile_context>

<pallas_src>
import math
import functools

import jax
import jax.numpy as jnp
from jax.experimental import pallas as pl
from jax.experimental.pallas import tpu as pltpu  # noqa: F401  (TPU backend)

D_MODEL = 32
N_HEADS = 4
D_HEAD = D_MODEL // N_HEADS
D_FF = 64
N_LAYERS = 2
LN_EPS = 1e-5  # PyTorch LayerNorm default


# ---------------------------------------------------------------------------
# in-kernel helper (traced inside the Pallas kernel)
# ---------------------------------------------------------------------------
def _layernorm(x, g, b):
    mu = jnp.mean(x, axis=-1, keepdims=True)
    var = jnp.mean((x - mu) ** 2, axis=-1, keepdims=True)
    return (x - mu) * jax.lax.rsqrt(var + LN_EPS) * g + b


# ---------------------------------------------------------------------------
# single fused Pallas kernel: the whole Decoder forward
# ---------------------------------------------------------------------------
def decoder_kernel(x_ref, mem_ref, mask_ref,
                   ln1g, ln1b, wqkv, bqkv, wo1, bo1,
                   ln2g, ln2b, wq2, bq2, wkv2, bkv2, wo2, bo2,
                   ln3g, ln3b, w1, b1, w2, b2,
                   lnfg, lnfb,
                   out_ref, *, B, Lt, Ls):
    """N_LAYERS pre-norm decoder layers + final LayerNorm, fully fused.

    x_ref:    (B*Lt, D) target activations (batch folded into matmul M dim)
    mem_ref:  (B*Ls, D) encoder memory
    mask_ref: (B, 1, Ls) source mask (1 = keep, 0 = mask)
    """
    D, H, Dh = D_MODEL, N_HEADS, D_HEAD
    scale = 1.0 / math.sqrt(Dh)

    x = x_ref[...]                                      # (B*Lt, D), stays resident
    mem = mem_ref[...]                                  # (B*Ls, D)
    # additive source mask computed ONCE, reused by every src-attn sublayer
    neg = jnp.where(mask_ref[...] == 0.0, -1e9, 0.0)    # (B, 1, Ls)

    def mha(q2d, k2d, v2d, wo_l, bo_l, Lq, Lk, add_mask):
        """Multi-head attention. q2d is pre-scaled by 1/sqrt(Dh).

        Heads are statically unrolled; batch is the einsum batch dim, and the
        output projection W_o is folded per head into a lane-dense (B*Lq, D)
        accumulator, so there is no concatenate / narrow head write.
        """
        out = jnp.zeros((B * Lq, D), jnp.float32)
        for h in range(H):
            sl = slice(h * Dh, (h + 1) * Dh)
            qh = q2d[:, sl].reshape(B, Lq, Dh)
            kh = k2d[:, sl].reshape(B, Lk, Dh)
            vh = v2d[:, sl].reshape(B, Lk, Dh)
            s = jnp.einsum("bqd,bkd->bqk", qh, kh,
                           preferred_element_type=jnp.float32)      # (B, Lq, Lk)
            if add_mask is not None:        # statically skipped for self-attention
                s = s + add_mask
            e = jnp.exp(s - jnp.max(s, axis=-1, keepdims=True))
            p = e * pl.reciprocal(jnp.sum(e, axis=-1, keepdims=True), approx=True)
            oh = jnp.einsum("bqk,bkd->bqd", p, vh,
                            preferred_element_type=jnp.float32)     # (B, Lq, Dh)
            # concat(heads) @ Wo == sum_h head_h @ Wo[h*Dh:(h+1)*Dh, :]
            out = out + jnp.dot(oh.reshape(B * Lq, Dh), wo_l[sl, :],
                                preferred_element_type=jnp.float32)
        return out + bo_l

    for l in range(N_LAYERS):                           # static unroll over layers
        # ---- self-attention sublayer: x + MHA(LN(x)) (no mask: all-ones) ----
        y = _layernorm(x, ln1g[l], ln1b[l])
        qkv = jnp.dot(y, wqkv[l], preferred_element_type=jnp.float32) + bqkv[l]
        x = x + mha(qkv[:, :D] * scale, qkv[:, D:2 * D], qkv[:, 2 * D:],
                    wo1[l], bo1[l], Lt, Lt, None)

        # ---- source-attention sublayer: x + MHA(q=LN(x), kv=memory, src_mask) ----
        y = _layernorm(x, ln2g[l], ln2b[l])
        q = (jnp.dot(y, wq2[l], preferred_element_type=jnp.float32) + bq2[l]) * scale
        kv = jnp.dot(mem, wkv2[l], preferred_element_type=jnp.float32) + bkv2[l]
        x = x + mha(q, kv[:, :D], kv[:, D:],
                    wo2[l], bo2[l], Lt, Ls, neg)

        # ---- feed-forward sublayer: x + W2 relu(W1 LN(x) + b1) + b2 ----
        y = _layernorm(x, ln3g[l], ln3b[l])
        hdn = jnp.maximum(
            jnp.dot(y, w1[l], preferred_element_type=jnp.float32) + b1[l], 0.0)
        x = x + jnp.dot(hdn, w2[l], preferred_element_type=jnp.float32) + b2[l]

    # final LayerNorm, single store of the whole result
    out_ref[...] = _layernorm(x, lnfg[...], lnfb[...])


# ---------------------------------------------------------------------------
# wrapper: weight packing + pallas_call plumbing
# ---------------------------------------------------------------------------
def _pack_params(params):
    """Stack per-layer weights on a leading N_LAYERS axis; pack QKV / KV."""
    layers = params["layers"]

    def st(fn):
        return jnp.stack([fn(lp) for lp in layers])

    sa = lambda lp: lp["self_attn"]
    xa = lambda lp: lp["src_attn"]
    return (
        st(lambda lp: lp["ln1"]["g"]), st(lambda lp: lp["ln1"]["b"]),
        st(lambda lp: jnp.concatenate([sa(lp)["wq"], sa(lp)["wk"], sa(lp)["wv"]], 1)),
        st(lambda lp: jnp.concatenate([sa(lp)["bq"], sa(lp)["bk"], sa(lp)["bv"]], 1)),
        st(lambda lp: sa(lp)["wo"]), st(lambda lp: sa(lp)["bo"]),
        st(lambda lp: lp["ln2"]["g"]), st(lambda lp: lp["ln2"]["b"]),
        st(lambda lp: xa(lp)["wq"]), st(lambda lp: xa(lp)["bq"]),
        st(lambda lp: jnp.concatenate([xa(lp)["wk"], xa(lp)["wv"]], 1)),
        st(lambda lp: jnp.concatenate([xa(lp)["bk"], xa(lp)["bv"]], 1)),
        st(lambda lp: xa(lp)["wo"]), st(lambda lp: xa(lp)["bo"]),
        st(lambda lp: lp["ln3"]["g"]), st(lambda lp: lp["ln3"]["b"]),
        st(lambda lp: lp["ffn"]["w1"]), st(lambda lp: lp["ffn"]["b1"]),
        st(lambda lp: lp["ffn"]["w2"]), st(lambda lp: lp["ffn"]["b2"]),
        params["norm"]["g"], params["norm"]["b"],
    )


def decoder_forward(x, memory, src_mask, params):
    """Pallas implementation of Decoder.forward(x, memory, src_mask)."""
    B, Lt, D = x.shape
    Ls = memory.shape[1]
    kernel = functools.partial(decoder_kernel, B=B, Lt=Lt, Ls=Ls)
    # No grid: the whole problem (<200 KB of params + activations) fits VMEM on
    # every TPU generation, so everything runs in a single fused invocation —
    # no per-sublayer launches, no intermediate HBM round-trips of x.
    out = pl.pallas_call(
        kernel,
        out_shape=jax.ShapeDtypeStruct((B * Lt, D), x.dtype),
    )(x.reshape(B * Lt, D), memory.reshape(B * Ls, D), src_mask,
      *_pack_params(params))
    return out.reshape(B, Lt, D)


# ---------------------------------------------------------------------------
# deterministic synthetic parameters
# ---------------------------------------------------------------------------
def init_params(key):
    kit = iter(jax.random.split(key, 256))

    def dense(din, dout):
        w = jax.random.normal(next(kit), (din, dout), jnp.float32) * 0.05
        b = jax.random.normal(next(kit), (1, dout), jnp.float32) * 0.05
        return w, b

    def ln():
        return {"g": jnp.ones((1, D_MODEL), jnp.float32),
                "b": jnp.zeros((1, D_MODEL), jnp.float32)}

    def attn():
        wq, bq = dense(D_MODEL, D_MODEL)
        wk, bk = dense(D_MODEL, D_MODEL)
        wv, bv = dense(D_MODEL, D_MODEL)
        wo, bo = dense(D_MODEL, D_MODEL)
        return dict(wq=wq, bq=bq, wk=wk, bk=bk, wv=wv, bv=bv, wo=wo, bo=bo)

    layers = []
    for _ in range(N_LAYERS):
        w1, b1 = dense(D_MODEL, D_FF)
        w2, b2 = dense(D_FF, D_MODEL)
        layers.append(dict(ln1=ln(), self_attn=attn(),
                           ln2=ln(), src_attn=attn(),
                           ln3=ln(), ffn=dict(w1=w1, b1=b1, w2=w2, b2=b2)))
    return dict(layers=layers, norm=ln())


# ---------------------------------------------------------------------------
# pure-JAX reference (correctness check)
# ---------------------------------------------------------------------------
def _ref_ln(x, g, b):
    mu = x.mean(-1, keepdims=True)
    var = ((x - mu) ** 2).mean(-1, keepdims=True)
    return (x - mu) / jnp.sqrt(var + LN_EPS) * g + b


def _ref_mha(q_in, kv_in, mask, p):
    q = q_in @ p["wq"] + p["bq"]
    k = kv_in @ p["wk"] + p["bk"]
    v = kv_in @ p["wv"] + p["bv"]
    B, Lq, _ = q.shape
    Lk = k.shape[1]
    q = q.reshape(B, Lq, N_HEADS, D_HEAD).transpose(0, 2, 1, 3)
    k = k.reshape(B, Lk, N_HEADS, D_HEAD).transpose(0, 2, 1, 3)
    v = v.reshape(B, Lk, N_HEADS, D_HEAD).transpose(0, 2, 1, 3)
    s = jnp.einsum("bhqd,bhkd->bhqk", q, k) / math.sqrt(D_HEAD)
    s = jnp.where(mask[:, None, :, :] == 0.0, -1e9, s)
    a = jax.nn.softmax(s, axis=-1)
    o = jnp.einsum("bhqk,bhkd->bhqd", a, v).transpose(0, 2, 1, 3).reshape(B, Lq, -1)
    return o @ p["wo"] + p["bo"]


def ref_decoder(x, memory, src_mask, params):
    B, Lt, _ = x.shape
    ones = jnp.ones((B, 1, Lt), jnp.float32)
    for lp in params["layers"]:
        y = _ref_ln(x, lp["ln1"]["g"], lp["ln1"]["b"])
        x = x + _ref_mha(y, y, ones, lp["self_attn"])
        y = _ref_ln(x, lp["ln2"]["g"], lp["ln2"]["b"])
        x = x + _ref_mha(y, memory, src_mask, lp["src_attn"])
        y = _ref_ln(x, lp["ln3"]["g"], lp["ln3"]["b"])
        h = jnp.maximum(y @ lp["ffn"]["w1"] + lp["ffn"]["b1"], 0.0)
        x = x + h @ lp["ffn"]["w2"] + lp["ffn"]["b2"]
    return _ref_ln(x, params["norm"]["g"], params["norm"]["b"])


# ---------------------------------------------------------------------------
if __name__ == "__main__":
    key = jax.random.PRNGKey(0)
    kx, km, kp = jax.random.split(key, 3)

    B, Lt, Ls = 2, 8, 8
    x = jax.random.normal(kx, (B, Lt, D_MODEL), jnp.float32)
    memory = jax.random.normal(km, (B, Ls, D_MODEL), jnp.float32)
    src_mask = jnp.ones((B, 1, Ls), jnp.float32)
    src_mask = src_mask.at[1, 0, Ls - 2:].set(0.0)  # mask 2 src positions in batch 1

    params = init_params(kp)

    fwd = jax.jit(decoder_forward)
    out = fwd(x, memory, src_mask, params)
    out = jax.block_until_ready(out)

    ref = ref_decoder(x, memory, src_mask, params)
    assert out.shape == (B, Lt, D_MODEL)
    max_err = float(jnp.max(jnp.abs(out - ref)))
    assert max_err < 2e-2, f"mismatch vs reference: {max_err}"

    print("KERNEL_OK")
</pallas_src>

<mosaic_0001>
module attributes {stable_mosaic.version = 11 : i64} {
  func.func @decoder_kernel(%arg0: memref<16x32xf32, #tpu.memory_space<vmem>>, %arg1: memref<16x32xf32, #tpu.memory_space<vmem>>, %arg2: memref<2x1x8xf32, #tpu.memory_space<vmem>>, %arg3: memref<2x1x32xf32, #tpu.memory_space<vmem>>, %arg4: memref<2x1x32xf32, #tpu.memory_space<vmem>>, %arg5: memref<2x32x96xf32, #tpu.memory_space<vmem>>, %arg6: memref<2x1x96xf32, #tpu.memory_space<vmem>>, %arg7: memref<2x32x32xf32, #tpu.memory_space<vmem>>, %arg8: memref<2x1x32xf32, #tpu.memory_space<vmem>>, %arg9: memref<2x1x32xf32, #tpu.memory_space<vmem>>, %arg10: memref<2x1x32xf32, #tpu.memory_space<vmem>>, %arg11: memref<2x32x32xf32, #tpu.memory_space<vmem>>, %arg12: memref<2x1x32xf32, #tpu.memory_space<vmem>>, %arg13: memref<2x32x64xf32, #tpu.memory_space<vmem>>, %arg14: memref<2x1x64xf32, #tpu.memory_space<vmem>>, %arg15: memref<2x32x32xf32, #tpu.memory_space<vmem>>, %arg16: memref<2x1x32xf32, #tpu.memory_space<vmem>>, %arg17: memref<2x1x32xf32, #tpu.memory_space<vmem>>, %arg18: memref<2x1x32xf32, #tpu.memory_space<vmem>>, %arg19: memref<2x32x64xf32, #tpu.memory_space<vmem>>, %arg20: memref<2x1x64xf32, #tpu.memory_space<vmem>>, %arg21: memref<2x64x32xf32, #tpu.memory_space<vmem>>, %arg22: memref<2x1x32xf32, #tpu.memory_space<vmem>>, %arg23: memref<1x32xf32, #tpu.memory_space<vmem>>, %arg24: memref<1x32xf32, #tpu.memory_space<vmem>>, %arg25: memref<16x32xf32, #tpu.memory_space<vmem>>) attributes {dimension_semantics = [], scalar_prefetch = 0 : i64, scratch_operands = 0 : i64, tpu.core_type = #tpu.core_type<tc>} {
    %c0 = arith.constant 0 : index
    %c0_0 = arith.constant 0 : index
    %0 = vector.load %arg0[%c0, %c0_0] : memref<16x32xf32, #tpu.memory_space<vmem>>, vector<16x32xf32>
    %c0_1 = arith.constant 0 : index
    %c0_2 = arith.constant 0 : index
    %1 = vector.load %arg1[%c0_1, %c0_2] : memref<16x32xf32, #tpu.memory_space<vmem>>, vector<16x32xf32>
    %c0_3 = arith.constant 0 : index
    %c0_4 = arith.constant 0 : index
    %c0_5 = arith.constant 0 : index
    %2 = vector.load %arg2[%c0_3, %c0_4, %c0_5] : memref<2x1x8xf32, #tpu.memory_space<vmem>>, vector<2x1x8xf32>
    %cst = arith.constant 0.000000e+00 : f32
    %3 = vector.broadcast %cst : f32 to vector<2x1x8xf32>
    %4 = arith.cmpf oeq, %2, %3 : vector<2x1x8xf32>
    %cst_6 = arith.constant -1.000000e+09 : f32
    %cst_7 = arith.constant 0.000000e+00 : f32
    %5 = vector.broadcast %cst_6 : f32 to vector<2x1x8xf32>
    %6 = vector.broadcast %cst_7 : f32 to vector<2x1x8xf32>
    %7 = arith.select %4, %5, %6 : vector<2x1x8xi1>, vector<2x1x8xf32>
    %c0_8 = arith.constant 0 : index
    %c0_9 = arith.constant 0 : index
    %c0_10 = arith.constant 0 : index
    %8 = vector.load %arg3[%c0_8, %c0_9, %c0_10] : memref<2x1x32xf32, #tpu.memory_space<vmem>>, vector<1x1x32xf32>
    %9 = vector.shape_cast %8 : vector<1x1x32xf32> to vector<1x32xf32>
    %c0_11 = arith.constant 0 : index
    %c0_12 = arith.constant 0 : index
    %c0_13 = arith.constant 0 : index
    %10 = vector.load %arg4[%c0_11, %c0_12, %c0_13] : memref<2x1x32xf32, #tpu.memory_space<vmem>>, vector<1x1x32xf32>
    %11 = vector.shape_cast %10 : vector<1x1x32xf32> to vector<1x32xf32>
    %cst_14 = arith.constant dense<0.000000e+00> : vector<16xf32>
    %12 = vector.multi_reduction <add>, %0, %cst_14 [1] : vector<16x32xf32> to vector<16xf32>
    %13 = vector.shape_cast %12 : vector<16xf32> to vector<16x1xf32>
    %cst_15 = arith.constant 3.200000e+01 : f32
    %14 = vector.broadcast %cst_15 : f32 to vector<16x1xf32>
    %15 = arith.divf %13, %14 : vector<16x1xf32>
    %16 = vector.broadcast %15 : vector<16x1xf32> to vector<16x32xf32>
    %17 = arith.subf %0, %16 : vector<16x32xf32>
    %18 = arith.mulf %17, %17 : vector<16x32xf32>
    %cst_16 = arith.constant dense<0.000000e+00> : vector<16xf32>
    %19 = vector.multi_reduction <add>, %18, %cst_16 [1] : vector<16x32xf32> to vector<16xf32>
    %20 = vector.shape_cast %19 : vector<16xf32> to vector<16x1xf32>
    %cst_17 = arith.constant 3.200000e+01 : f32
    %21 = vector.broadcast %cst_17 : f32 to vector<16x1xf32>
    %22 = arith.divf %20, %21 : vector<16x1xf32>
    %23 = vector.broadcast %15 : vector<16x1xf32> to vector<16x32xf32>
    %24 = arith.subf %0, %23 : vector<16x32xf32>
    %cst_18 = arith.constant 9.99999974E-6 : f32
    %25 = vector.broadcast %cst_18 : f32 to vector<16x1xf32>
    %26 = arith.addf %22, %25 : vector<16x1xf32>
    %27 = math.rsqrt %26 : vector<16x1xf32>
    %28 = vector.broadcast %27 : vector<16x1xf32> to vector<16x32xf32>
    %29 = arith.mulf %24, %28 : vector<16x32xf32>
    %30 = vector.broadcast %9 : vector<1x32xf32> to vector<16x32xf32>
    %31 = arith.mulf %29, %30 : vector<16x32xf32>
    %32 = vector.broadcast %11 : vector<1x32xf32> to vector<16x32xf32>
    %33 = arith.addf %31, %32 : vector<16x32xf32>
    %c0_19 = arith.constant 0 : index
    %c0_20 = arith.constant 0 : index
    %c0_21 = arith.constant 0 : index
    %34 = vector.load %arg5[%c0_19, %c0_20, %c0_21] : memref<2x32x96xf32, #tpu.memory_space<vmem>>, vector<1x32x96xf32>
    %35 = vector.shape_cast %34 : vector<1x32x96xf32> to vector<32x96xf32>
    %cst_22 = arith.constant dense<0.000000e+00> : vector<16x96xf32>
    %36 = tpu.matmul %33, %35, %cst_22 {dimension_numbers = #tpu.dot_dimension_numbers<[1], [0], [0], [1], [0, 0, 1, 1], [], []>} : vector<16x32xf32>, vector<32x96xf32>, vector<16x96xf32> -> vector<16x96xf32>
    %c0_23 = arith.constant 0 : index
    %c0_24 = arith.constant 0 : index
    %c0_25 = arith.constant 0 : index
    %37 = vector.load %arg6[%c0_23, %c0_24, %c0_25] : memref<2x1x96xf32, #tpu.memory_space<vmem>>, vector<1x1x96xf32>
    %38 = vector.shape_cast %37 : vector<1x1x96xf32> to vector<1x96xf32>
    %39 = vector.broadcast %38 : vector<1x96xf32> to vector<16x96xf32>
    %40 = arith.addf %36, %39 : vector<16x96xf32>
    %41 = vector.extract_strided_slice %40 {offsets = [0, 0], sizes = [16, 32], strides = [1, 1]} : vector<16x96xf32> to vector<16x32xf32>
    %cst_26 = arith.constant 0.353553385 : f32
    %42 = vector.broadcast %cst_26 : f32 to vector<16x32xf32>
    %43 = arith.mulf %41, %42 : vector<16x32xf32>
    %44 = vector.extract_strided_slice %40 {offsets = [0, 32], sizes = [16, 32], strides = [1, 1]} : vector<16x96xf32> to vector<16x32xf32>
    %45 = vector.extract_strided_slice %40 {offsets = [0, 64], sizes = [16, 32], strides = [1, 1]} : vector<16x96xf32> to vector<16x32xf32>
    %c0_27 = arith.constant 0 : index
    %c0_28 = arith.constant 0 : index
    %c0_29 = arith.constant 0 : index
    %46 = vector.load %arg7[%c0_27, %c0_28, %c0_29] : memref<2x32x32xf32, #tpu.memory_space<vmem>>, vector<1x32x32xf32>
    %47 = vector.shape_cast %46 : vector<1x32x32xf32> to vector<32x32xf32>
    %c0_30 = arith.constant 0 : index
    %c0_31 = arith.constant 0 : index
    %c0_32 = arith.constant 0 : index
    %48 = vector.load %arg8[%c0_30, %c0_31, %c0_32] : memref<2x1x32xf32, #tpu.memory_space<vmem>>, vector<1x1x32xf32>
    %49 = vector.shape_cast %48 : vector<1x1x32xf32> to vector<1x32xf32>
    %cst_33 = arith.constant 0.000000e+00 : f32
    %50 = vector.broadcast %cst_33 : f32 to vector<16x32xf32>
    %51 = vector.extract_strided_slice %43 {offsets = [0, 0], sizes = [16, 8], strides = [1, 1]} : vector<16x32xf32> to vector<16x8xf32>
    %52 = vector.shape_cast %51 : vector<16x8xf32> to vector<2x8x8xf32>
    %53 = vector.extract_strided_slice %44 {offsets = [0, 0], sizes = [16, 8], strides = [1, 1]} : vector<16x32xf32> to vector<16x8xf32>
    %54 = vector.shape_cast %53 : vector<16x8xf32> to vector<2x8x8xf32>
    %55 = vector.extract_strided_slice %45 {offsets = [0, 0], sizes = [16, 8], strides = [1, 1]} : vector<16x32xf32> to vector<16x8xf32>
    %56 = vector.shape_cast %55 : vector<16x8xf32> to vector<2x8x8xf32>
    "tpu.trace_start"() <{level = 10 : i32, message = "bqd,bkd->bqk"}> : () -> ()
    %cst_34 = arith.constant dense<0.000000e+00> : vector<2x8x8xf32>
    %57 = tpu.matmul %52, %54, %cst_34 {dimension_numbers = #tpu.dot_dimension_numbers<[2], [2], [1], [1], [0, 0, 0, 1, 1, 1], [0], [0]>} : vector<2x8x8xf32>, vector<2x8x8xf32>, vector<2x8x8xf32> -> vector<2x8x8xf32>
    "tpu.trace_stop"() : () -> ()
    %cst_35 = arith.constant dense<0xFF800000> : vector<2x8xf32>
    %58 = vector.multi_reduction <maximumf>, %57, %cst_35 [2] : vector<2x8x8xf32> to vector<2x8xf32>
    %59 = vector.shape_cast %58 : vector<2x8xf32> to vector<2x8x1xf32>
    %60 = vector.broadcast %59 : vector<2x8x1xf32> to vector<2x8x8xf32>
    %61 = arith.subf %57, %60 : vector<2x8x8xf32>
    %62 = math.exp %61 : vector<2x8x8xf32>
    %cst_36 = arith.constant dense<0.000000e+00> : vector<2x8xf32>
    %63 = vector.multi_reduction <add>, %62, %cst_36 [2] : vector<2x8x8xf32> to vector<2x8xf32>
    %64 = vector.shape_cast %63 : vector<2x8xf32> to vector<2x8x1xf32>
    %65 = tpu.reciprocal %64 {approx = true} : vector<2x8x1xf32> -> vector<2x8x1xf32>
    %66 = vector.broadcast %65 : vector<2x8x1xf32> to vector<2x8x8xf32>
    %67 = arith.mulf %62, %66 : vector<2x8x8xf32>
    "tpu.trace_start"() <{level = 10 : i32, message = "bqk,bkd->bqd"}> : () -> ()
    %cst_37 = arith.constant dense<0.000000e+00> : vector<2x8x8xf32>
    %68 = tpu.matmul %67, %56, %cst_37 {dimension_numbers = #tpu.dot_dimension_numbers<[2], [1], [1], [2], [0, 0, 0, 1, 1, 2], [0], [0]>} : vector<2x8x8xf32>, vector<2x8x8xf32>, vector<2x8x8xf32> -> vector<2x8x8xf32>
    "tpu.trace_stop"() : () -> ()
    %69 = vector.shape_cast %68 : vector<2x8x8xf32> to vector<16x8xf32>
    %70 = vector.extract_strided_slice %47 {offsets = [0, 0], sizes = [8, 32], strides = [1, 1]} : vector<32x32xf32> to vector<8x32xf32>
    %cst_38 = arith.constant dense<0.000000e+00> : vector<16x32xf32>
    %71 = tpu.matmul %69, %70, %cst_38 {dimension_numbers = #tpu.dot_dimension_numbers<[1], [0], [0], [1], [0, 0, 1, 1], [], []>} : vector<16x8xf32>, vector<8x32xf32>, vector<16x32xf32> -> vector<16x32xf32>
    %72 = arith.addf %50, %71 : vector<16x32xf32>
    %73 = vector.extract_strided_slice %43 {offsets = [0, 8], sizes = [16, 8], strides = [1, 1]} : vector<16x32xf32> to vector<16x8xf32>
    %74 = vector.shape_cast %73 : vector<16x8xf32> to vector<2x8x8xf32>
    %75 = vector.extract_strided_slice %44 {offsets = [0, 8], sizes = [16, 8], strides = [1, 1]} : vector<16x32xf32> to vector<16x8xf32>
    %76 = vector.shape_cast %75 : vector<16x8xf32> to vector<2x8x8xf32>
    %77 = vector.extract_strided_slice %45 {offsets = [0, 8], sizes = [16, 8], strides = [1, 1]} : vector<16x32xf32> to vector<16x8xf32>
    %78 = vector.shape_cast %77 : vector<16x8xf32> to vector<2x8x8xf32>
    "tpu.trace_start"() <{level = 10 : i32, message = "bqd,bkd->bqk"}> : () -> ()
    %cst_39 = arith.constant dense<0.000000e+00> : vector<2x8x8xf32>
    %79 = tpu.matmul %74, %76, %cst_39 {dimension_numbers = #tpu.dot_dimension_numbers<[2], [2], [1], [1], [0, 0, 0, 1, 1, 1], [0], [0]>} : vector<2x8x8xf32>, vector<2x8x8xf32>, vector<2x8x8xf32> -> vector<2x8x8xf32>
    "tpu.trace_stop"() : () -> ()
    %cst_40 = arith.constant dense<0xFF800000> : vector<2x8xf32>
    %80 = vector.multi_reduction <maximumf>, %79, %cst_40 [2] : vector<2x8x8xf32> to vector<2x8xf32>
    %81 = vector.shape_cast %80 : vector<2x8xf32> to vector<2x8x1xf32>
    %82 = vector.broadcast %81 : vector<2x8x1xf32> to vector<2x8x8xf32>
    %83 = arith.subf %79, %82 : vector<2x8x8xf32>
    %84 = math.exp %83 : vector<2x8x8xf32>
    %cst_41 = arith.constant dense<0.000000e+00> : vector<2x8xf32>
    %85 = vector.multi_reduction <add>, %84, %cst_41 [2] : vector<2x8x8xf32> to vector<2x8xf32>
    %86 = vector.shape_cast %85 : vector<2x8xf32> to vector<2x8x1xf32>
    %87 = tpu.reciprocal %86 {approx = true} : vector<2x8x1xf32> -> vector<2x8x1xf32>
    %88 = vector.broadcast %87 : vector<2x8x1xf32> to vector<2x8x8xf32>
    %89 = arith.mulf %84, %88 : vector<2x8x8xf32>
    "tpu.trace_start"() <{level = 10 : i32, message = "bqk,bkd->bqd"}> : () -> ()
    %cst_42 = arith.constant dense<0.000000e+00> : vector<2x8x8xf32>
    %90 = tpu.matmul %89, %78, %cst_42 {dimension_numbers = #tpu.dot_dimension_numbers<[2], [1], [1], [2], [0, 0, 0, 1, 1, 2], [0], [0]>} : vector<2x8x8xf32>, vector<2x8x8xf32>, vector<2x8x8xf32> -> vector<2x8x8xf32>
    "tpu.trace_stop"() : () -> ()
    %91 = vector.shape_cast %90 : vector<2x8x8xf32> to vector<16x8xf32>
    %92 = vector.extract_strided_slice %47 {offsets = [8, 0], sizes = [8, 32], strides = [1, 1]} : vector<32x32xf32> to vector<8x32xf32>
    %cst_43 = arith.constant dense<0.000000e+00> : vector<16x32xf32>
    %93 = tpu.matmul %91, %92, %cst_43 {dimension_numbers = #tpu.dot_dimension_numbers<[1], [0], [0], [1], [0, 0, 1, 1], [], []>} : vector<16x8xf32>, vector<8x32xf32>, vector<16x32xf32> -> vector<16x32xf32>
    %94 = arith.addf %72, %93 : vector<16x32xf32>
    %95 = vector.extract_strided_slice %43 {offsets = [0, 16], sizes = [16, 8], strides = [1, 1]} : vector<16x32xf32> to vector<16x8xf32>
    %96 = vector.shape_cast %95 : vector<16x8xf32> to vector<2x8x8xf32>
    %97 = vector.extract_strided_slice %44 {offsets = [0, 16], sizes = [16, 8], strides = [1, 1]} : vector<16x32xf32> to vector<16x8xf32>
    %98 = vector.shape_cast %97 : vector<16x8xf32> to vector<2x8x8xf32>
    %99 = vector.extract_strided_slice %45 {offsets = [0, 16], sizes = [16, 8], strides = [1, 1]} : vector<16x32xf32> to vector<16x8xf32>
    %100 = vector.shape_cast %99 : vector<16x8xf32> to vector<2x8x8xf32>
    "tpu.trace_start"() <{level = 10 : i32, message = "bqd,bkd->bqk"}> : () -> ()
    %cst_44 = arith.constant dense<0.000000e+00> : vector<2x8x8xf32>
    %101 = tpu.matmul %96, %98, %cst_44 {dimension_numbers = #tpu.dot_dimension_numbers<[2], [2], [1], [1], [0, 0, 0, 1, 1, 1], [0], [0]>} : vector<2x8x8xf32>, vector<2x8x8xf32>, vector<2x8x8xf32> -> vector<2x8x8xf32>
    "tpu.trace_stop"() : () -> ()
    %cst_45 = arith.constant dense<0xFF800000> : vector<2x8xf32>
    %102 = vector.multi_reduction <maximumf>, %101, %cst_45 [2] : vector<2x8x8xf32> to vector<2x8xf32>
    %103 = vector.shape_cast %102 : vector<2x8xf32> to vector<2x8x1xf32>
    %104 = vector.broadcast %103 : vector<2x8x1xf32> to vector<2x8x8xf32>
    %105 = arith.subf %101, %104 : vector<2x8x8xf32>
    %106 = math.exp %105 : vector<2x8x8xf32>
    %cst_46 = arith.constant dense<0.000000e+00> : vector<2x8xf32>
    %107 = vector.multi_reduction <add>, %106, %cst_46 [2] : vector<2x8x8xf32> to vector<2x8xf32>
    %108 = vector.shape_cast %107 : vector<2x8xf32> to vector<2x8x1xf32>
    %109 = tpu.reciprocal %108 {approx = true} : vector<2x8x1xf32> -> vector<2x8x1xf32>
    %110 = vector.broadcast %109 : vector<2x8x1xf32> to vector<2x8x8xf32>
    %111 = arith.mulf %106, %110 : vector<2x8x8xf32>
    "tpu.trace_start"() <{level = 10 : i32, message = "bqk,bkd->bqd"}> : () -> ()
    %cst_47 = arith.constant dense<0.000000e+00> : vector<2x8x8xf32>
    %112 = tpu.matmul %111, %100, %cst_47 {dimension_numbers = #tpu.dot_dimension_numbers<[2], [1], [1], [2], [0, 0, 0, 1, 1, 2], [0], [0]>} : vector<2x8x8xf32>, vector<2x8x8xf32>, vector<2x8x8xf32> -> vector<2x8x8xf32>
    "tpu.trace_stop"() : () -> ()
    %113 = vector.shape_cast %112 : vector<2x8x8xf32> to vector<16x8xf32>
    %114 = vector.extract_strided_slice %47 {offsets = [16, 0], sizes = [8, 32], strides = [1, 1]} : vector<32x32xf32> to vector<8x32xf32>
    %cst_48 = arith.constant dense<0.000000e+00> : vector<16x32xf32>
    %115 = tpu.matmul %113, %114, %cst_48 {dimension_numbers = #tpu.dot_dimension_numbers<[1], [0], [0], [1], [0, 0, 1, 1], [], []>} : vector<16x8xf32>, vector<8x32xf32>, vector<16x32xf32> -> vector<16x32xf32>
    %116 = arith.addf %94, %115 : vector<16x32xf32>
    %117 = vector.extract_strided_slice %43 {offsets = [0, 24], sizes = [16, 8], strides = [1, 1]} : vector<16x32xf32> to vector<16x8xf32>
    %118 = vector.shape_cast %117 : vector<16x8xf32> to vector<2x8x8xf32>
    %119 = vector.extract_strided_slice %44 {offsets = [0, 24], sizes = [16, 8], strides = [1, 1]} : vector<16x32xf32> to vector<16x8xf32>
    %120 = vector.shape_cast %119 : vector<16x8xf32> to vector<2x8x8xf32>
    %121 = vector.extract_strided_slice %45 {offsets = [0, 24], sizes = [16, 8], strides = [1, 1]} : vector<16x32xf32> to vector<16x8xf32>
    %122 = vector.shape_cast %121 : vector<16x8xf32> to vector<2x8x8xf32>
    "tpu.trace_start"() <{level = 10 : i32, message = "bqd,bkd->bqk"}> : () -> ()
    %cst_49 = arith.constant dense<0.000000e+00> : vector<2x8x8xf32>
    %123 = tpu.matmul %118, %120, %cst_49 {dimension_numbers = #tpu.dot_dimension_numbers<[2], [2], [1], [1], [0, 0, 0, 1, 1, 1], [0], [0]>} : vector<2x8x8xf32>, vector<2x8x8xf32>, vector<2x8x8xf32> -> vector<2x8x8xf32>
    "tpu.trace_stop"() : () -> ()
    %cst_50 = arith.constant dense<0xFF800000> : vector<2x8xf32>
    %124 = vector.multi_reduction <maximumf>, %123, %cst_50 [2] : vector<2x8x8xf32> to vector<2x8xf32>
    %125 = vector.shape_cast %124 : vector<2x8xf32> to vector<2x8x1xf32>
    %126 = vector.broadcast %125 : vector<2x8x1xf32> to vector<2x8x8xf32>
    %127 = arith.subf %123, %126 : vector<2x8x8xf32>
    %128 = math.exp %127 : vector<2x8x8xf32>
    %cst_51 = arith.constant dense<0.000000e+00> : vector<2x8xf32>
    %129 = vector.multi_reduction <add>, %128, %cst_51 [2] : vector<2x8x8xf32> to vector<2x8xf32>
    %130 = vector.shape_cast %129 : vector<2x8xf32> to vector<2x8x1xf32>
    %131 = tpu.reciprocal %130 {approx = true} : vector<2x8x1xf32> -> vector<2x8x1xf32>
    %132 = vector.broadcast %131 : vector<2x8x1xf32> to vector<2x8x8xf32>
    %133 = arith.mulf %128, %132 : vector<2x8x8xf32>
    "tpu.trace_start"() <{level = 10 : i32, message = "bqk,bkd->bqd"}> : () -> ()
    %cst_52 = arith.constant dense<0.000000e+00> : vector<2x8x8xf32>
    %134 = tpu.matmul %133, %122, %cst_52 {dimension_numbers = #tpu.dot_dimension_numbers<[2], [1], [1], [2], [0, 0, 0, 1, 1, 2], [0], [0]>} : vector<2x8x8xf32>, vector<2x8x8xf32>, vector<2x8x8xf32> -> vector<2x8x8xf32>
    "tpu.trace_stop"() : () -> ()
    %135 = vector.shape_cast %134 : vector<2x8x8xf32> to vector<16x8xf32>
    %136 = vector.extract_strided_slice %47 {offsets = [24, 0], sizes = [8, 32], strides = [1, 1]} : vector<32x32xf32> to vector<8x32xf32>
    %cst_53 = arith.constant dense<0.000000e+00> : vector<16x32xf32>
    %137 = tpu.matmul %135, %136, %cst_53 {dimension_numbers = #tpu.dot_dimension_numbers<[1], [0], [0], [1], [0, 0, 1, 1], [], []>} : vector<16x8xf32>, vector<8x32xf32>, vector<16x32xf32> -> vector<16x32xf32>
    %138 = arith.addf %116, %137 : vector<16x32xf32>
    %139 = vector.broadcast %49 : vector<1x32xf32> to vector<16x32xf32>
    %140 = arith.addf %138, %139 : vector<16x32xf32>
    %141 = arith.addf %0, %140 : vector<16x32xf32>
    %c0_54 = arith.constant 0 : index
    %c0_55 = arith.constant 0 : index
    %c0_56 = arith.constant 0 : index
    %142 = vector.load %arg9[%c0_54, %c0_55, %c0_56] : memref<2x1x32xf32, #tpu.memory_space<vmem>>, vector<1x1x32xf32>
    %143 = vector.shape_cast %142 : vector<1x1x32xf32> to vector<1x32xf32>
    %c0_57 = arith.constant 0 : index
    %c0_58 = arith.constant 0 : index
    %c0_59 = arith.constant 0 : index
    %144 = vector.load %arg10[%c0_57, %c0_58, %c0_59] : memref<2x1x32xf32, #tpu.memory_space<vmem>>, vector<1x1x32xf32>
    %145 = vector.shape_cast %144 : vector<1x1x32xf32> to vector<1x32xf32>
    %cst_60 = arith.constant dense<0.000000e+00> : vector<16xf32>
    %146 = vector.multi_reduction <add>, %141, %cst_60 [1] : vector<16x32xf32> to vector<16xf32>
    %147 = vector.shape_cast %146 : vector<16xf32> to vector<16x1xf32>
    %cst_61 = arith.constant 3.200000e+01 : f32
    %148 = vector.broadcast %cst_61 : f32 to vector<16x1xf32>
    %149 = arith.divf %147, %148 : vector<16x1xf32>
    %150 = vector.broadcast %149 : vector<16x1xf32> to vector<16x32xf32>
    %151 = arith.subf %141, %150 : vector<16x32xf32>
    %152 = arith.mulf %151, %151 : vector<16x32xf32>
    %cst_62 = arith.constant dense<0.000000e+00> : vector<16xf32>
    %153 = vector.multi_reduction <add>, %152, %cst_62 [1] : vector<16x32xf32> to vector<16xf32>
    %154 = vector.shape_cast %153 : vector<16xf32> to vector<16x1xf32>
    %cst_63 = arith.constant 3.200000e+01 : f32
    %155 = vector.broadcast %cst_63 : f32 to vector<16x1xf32>
    %156 = arith.divf %154, %155 : vector<16x1xf32>
    %157 = vector.broadcast %149 : vector<16x1xf32> to vector<16x32xf32>
    %158 = arith.subf %141, %157 : vector<16x32xf32>
    %cst_64 = arith.constant 9.99999974E-6 : f32
    %159 = vector.broadcast %cst_64 : f32 to vector<16x1xf32>
    %160 = arith.addf %156, %159 : vector<16x1xf32>
    %161 = math.rsqrt %160 : vector<16x1xf32>
    %162 = vector.broadcast %161 : vector<16x1xf32> to vector<16x32xf32>
    %163 = arith.mulf %158, %162 : vector<16x32xf32>
    %164 = vector.broadcast %143 : vector<1x32xf32> to vector<16x32xf32>
    %165 = arith.mulf %163, %164 : vector<16x32xf32>
    %166 = vector.broadcast %145 : vector<1x32xf32> to vector<16x32xf32>
    %167 = arith.addf %165, %166 : vector<16x32xf32>
    %c0_65 = arith.constant 0 : index
    %c0_66 = arith.constant 0 : index
    %c0_67 = arith.constant 0 : index
    %168 = vector.load %arg11[%c0_65, %c0_66, %c0_67] : memref<2x32x32xf32, #tpu.memory_space<vmem>>, vector<1x32x32xf32>
    %169 = vector.shape_cast %168 : vector<1x32x32xf32> to vector<32x32xf32>
    %cst_68 = arith.constant dense<0.000000e+00> : vector<16x32xf32>
    %170 = tpu.matmul %167, %169, %cst_68 {dimension_numbers = #tpu.dot_dimension_numbers<[1], [0], [0], [1], [0, 0, 1, 1], [], []>} : vector<16x32xf32>, vector<32x32xf32>, vector<16x32xf32> -> vector<16x32xf32>
    %c0_69 = arith.constant 0 : index
    %c0_70 = arith.constant 0 : index
    %c0_71 = arith.constant 0 : index
    %171 = vector.load %arg12[%c0_69, %c0_70, %c0_71] : memref<2x1x32xf32, #tpu.memory_space<vmem>>, vector<1x1x32xf32>
    %172 = vector.shape_cast %171 : vector<1x1x32xf32> to vector<1x32xf32>
    %173 = vector.broadcast %172 : vector<1x32xf32> to vector<16x32xf32>
    %174 = arith.addf %170, %173 : vector<16x32xf32>
    %cst_72 = arith.constant 0.353553385 : f32
    %175 = vector.broadcast %cst_72 : f32 to vector<16x32xf32>
    %176 = arith.mulf %174, %175 : vector<16x32xf32>
    %c0_73 = arith.constant 0 : index
    %c0_74 = arith.constant 0 : index
    %c0_75 = arith.constant 0 : index
    %177 = vector.load %arg13[%c0_73, %c0_74, %c0_75] : memref<2x32x64xf32, #tpu.memory_space<vmem>>, vector<1x32x64xf32>
    %178 = vector.shape_cast %177 : vector<1x32x64xf32> to vector<32x64xf32>
    %cst_76 = arith.constant dense<0.000000e+00> : vector<16x64xf32>
    %179 = tpu.matmul %1, %178, %cst_76 {dimension_numbers = #tpu.dot_dimension_numbers<[1], [0], [0], [1], [0, 0, 1, 1], [], []>} : vector<16x32xf32>, vector<32x64xf32>, vector<16x64xf32> -> vector<16x64xf32>
    %c0_77 = arith.constant 0 : index
    %c0_78 = arith.constant 0 : index
    %c0_79 = arith.constant 0 : index
    %180 = vector.load %arg14[%c0_77, %c0_78, %c0_79] : memref<2x1x64xf32, #tpu.memory_space<vmem>>, vector<1x1x64xf32>
    %181 = vector.shape_cast %180 : vector<1x1x64xf32> to vector<1x64xf32>
    %182 = vector.broadcast %181 : vector<1x64xf32> to vector<16x64xf32>
    %183 = arith.addf %179, %182 : vector<16x64xf32>
    %184 = vector.extract_strided_slice %183 {offsets = [0, 0], sizes = [16, 32], strides = [1, 1]} : vector<16x64xf32> to vector<16x32xf32>
    %185 = vector.extract_strided_slice %183 {offsets = [0, 32], sizes = [16, 32], strides = [1, 1]} : vector<16x64xf32> to vector<16x32xf32>
    %c0_80 = arith.constant 0 : index
    %c0_81 = arith.constant 0 : index
    %c0_82 = arith.constant 0 : index
    %186 = vector.load %arg15[%c0_80, %c0_81, %c0_82] : memref<2x32x32xf32, #tpu.memory_space<vmem>>, vector<1x32x32xf32>
    %187 = vector.shape_cast %186 : vector<1x32x32xf32> to vector<32x32xf32>
    %c0_83 = arith.constant 0 : index
    %c0_84 = arith.constant 0 : index
    %c0_85 = arith.constant 0 : index
    %188 = vector.load %arg16[%c0_83, %c0_84, %c0_85] : memref<2x1x32xf32, #tpu.memory_space<vmem>>, vector<1x1x32xf32>
    %189 = vector.shape_cast %188 : vector<1x1x32xf32> to vector<1x32xf32>
    %cst_86 = arith.constant 0.000000e+00 : f32
    %190 = vector.broadcast %cst_86 : f32 to vector<16x32xf32>
    %191 = vector.extract_strided_slice %176 {offsets = [0, 0], sizes = [16, 8], strides = [1, 1]} : vector<16x32xf32> to vector<16x8xf32>
    %192 = vector.shape_cast %191 : vector<16x8xf32> to vector<2x8x8xf32>
    %193 = vector.extract_strided_slice %184 {offsets = [0, 0], sizes = [16, 8], strides = [1, 1]} : vector<16x32xf32> to vector<16x8xf32>
    %194 = vector.shape_cast %193 : vector<16x8xf32> to vector<2x8x8xf32>
    %195 = vector.extract_strided_slice %185 {offsets = [0, 0], sizes = [16, 8], strides = [1, 1]} : vector<16x32xf32> to vector<16x8xf32>
    %196 = vector.shape_cast %195 : vector<16x8xf32> to vector<2x8x8xf32>
    "tpu.trace_start"() <{level = 10 : i32, message = "bqd,bkd->bqk"}> : () -> ()
    %cst_87 = arith.constant dense<0.000000e+00> : vector<2x8x8xf32>
    %197 = tpu.matmul %192, %194, %cst_87 {dimension_numbers = #tpu.dot_dimension_numbers<[2], [2], [1], [1], [0, 0, 0, 1, 1, 1], [0], [0]>} : vector<2x8x8xf32>, vector<2x8x8xf32>, vector<2x8x8xf32> -> vector<2x8x8xf32>
    "tpu.trace_stop"() : () -> ()
    %198 = vector.broadcast %7 : vector<2x1x8xf32> to vector<2x8x8xf32>
    %199 = arith.addf %197, %198 : vector<2x8x8xf32>
    %cst_88 = arith.constant dense<0xFF800000> : vector<2x8xf32>
    %200 = vector.multi_reduction <maximumf>, %199, %cst_88 [2] : vector<2x8x8xf32> to vector<2x8xf32>
    %201 = vector.shape_cast %200 : vector<2x8xf32> to vector<2x8x1xf32>
    %202 = vector.broadcast %201 : vector<2x8x1xf32> to vector<2x8x8xf32>
    %203 = arith.subf %199, %202 : vector<2x8x8xf32>
    %204 = math.exp %203 : vector<2x8x8xf32>
    %cst_89 = arith.constant dense<0.000000e+00> : vector<2x8xf32>
    %205 = vector.multi_reduction <add>, %204, %cst_89 [2] : vector<2x8x8xf32> to vector<2x8xf32>
    %206 = vector.shape_cast %205 : vector<2x8xf32> to vector<2x8x1xf32>
    %207 = tpu.reciprocal %206 {approx = true} : vector<2x8x1xf32> -> vector<2x8x1xf32>
    %208 = vector.broadcast %207 : vector<2x8x1xf32> to vector<2x8x8xf32>
    %209 = arith.mulf %204, %208 : vector<2x8x8xf32>
    "tpu.trace_start"() <{level = 10 : i32, message = "bqk,bkd->bqd"}> : () -> ()
    %cst_90 = arith.constant dense<0.000000e+00> : vector<2x8x8xf32>
    %210 = tpu.matmul %209, %196, %cst_90 {dimension_numbers = #tpu.dot_dimension_numbers<[2], [1], [1], [2], [0, 0, 0, 1, 1, 2], [0], [0]>} : vector<2x8x8xf32>, vector<2x8x8xf32>, vector<2x8x8xf32> -> vector<2x8x8xf32>
    "tpu.trace_stop"() : () -> ()
    %211 = vector.shape_cast %210 : vector<2x8x8xf32> to vector<16x8xf32>
    %212 = vector.extract_strided_slice %187 {offsets = [0, 0], sizes = [8, 32], strides = [1, 1]} : vector<32x32xf32> to vector<8x32xf32>
    %cst_91 = arith.constant dense<0.000000e+00> : vector<16x32xf32>
    %213 = tpu.matmul %211, %212, %cst_91 {dimension_numbers = #tpu.dot_dimension_numbers<[1], [0], [0], [1], [0, 0, 1, 1], [], []>} : vector<16x8xf32>, vector<8x32xf32>, vector<16x32xf32> -> vector<16x32xf32>
    %214 = arith.addf %190, %213 : vector<16x32xf32>
    %215 = vector.extract_strided_slice %176 {offsets = [0, 8], sizes = [16, 8], strides = [1, 1]} : vector<16x32xf32> to vector<16x8xf32>
    %216 = vector.shape_cast %215 : vector<16x8xf32> to vector<2x8x8xf32>
    %217 = vector.extract_strided_slice %184 {offsets = [0, 8], sizes = [16, 8], strides = [1, 1]} : vector<16x32xf32> to vector<16x8xf32>
    %218 = vector.shape_cast %217 : vector<16x8xf32> to vector<2x8x8xf32>
    %219 = vector.extract_strided_slice %185 {offsets = [0, 8], sizes = [16, 8], strides = [1, 1]} : vector<16x32xf32> to vector<16x8xf32>
    %220 = vector.shape_cast %219 : vector<16x8xf32> to vector<2x8x8xf32>
    "tpu.trace_start"() <{level = 10 : i32, message = "bqd,bkd->bqk"}> : () -> ()
    %cst_92 = arith.constant dense<0.000000e+00> : vector<2x8x8xf32>
    %221 = tpu.matmul %216, %218, %cst_92 {dimension_numbers = #tpu.dot_dimension_numbers<[2], [2], [1], [1], [0, 0, 0, 1, 1, 1], [0], [0]>} : vector<2x8x8xf32>, vector<2x8x8xf32>, vector<2x8x8xf32> -> vector<2x8x8xf32>
    "tpu.trace_stop"() : () -> ()
    %222 = vector.broadcast %7 : vector<2x1x8xf32> to vector<2x8x8xf32>
    %223 = arith.addf %221, %222 : vector<2x8x8xf32>
    %cst_93 = arith.constant dense<0xFF800000> : vector<2x8xf32>
    %224 = vector.multi_reduction <maximumf>, %223, %cst_93 [2] : vector<2x8x8xf32> to vector<2x8xf32>
    %225 = vector.shape_cast %224 : vector<2x8xf32> to vector<2x8x1xf32>
    %226 = vector.broadcast %225 : vector<2x8x1xf32> to vector<2x8x8xf32>
    %227 = arith.subf %223, %226 : vector<2x8x8xf32>
    %228 = math.exp %227 : vector<2x8x8xf32>
    %cst_94 = arith.constant dense<0.000000e+00> : vector<2x8xf32>
    %229 = vector.multi_reduction <add>, %228, %cst_94 [2] : vector<2x8x8xf32> to vector<2x8xf32>
    %230 = vector.shape_cast %229 : vector<2x8xf32> to vector<2x8x1xf32>
    %231 = tpu.reciprocal %230 {approx = true} : vector<2x8x1xf32> -> vector<2x8x1xf32>
    %232 = vector.broadcast %231 : vector<2x8x1xf32> to vector<2x8x8xf32>
    %233 = arith.mulf %228, %232 : vector<2x8x8xf32>
    "tpu.trace_start"() <{level = 10 : i32, message = "bqk,bkd->bqd"}> : () -> ()
    %cst_95 = arith.constant dense<0.000000e+00> : vector<2x8x8xf32>
    %234 = tpu.matmul %233, %220, %cst_95 {dimension_numbers = #tpu.dot_dimension_numbers<[2], [1], [1], [2], [0, 0, 0, 1, 1, 2], [0], [0]>} : vector<2x8x8xf32>, vector<2x8x8xf32>, vector<2x8x8xf32> -> vector<2x8x8xf32>
    "tpu.trace_stop"() : () -> ()
    %235 = vector.shape_cast %234 : vector<2x8x8xf32> to vector<16x8xf32>
    %236 = vector.extract_strided_slice %187 {offsets = [8, 0], sizes = [8, 32], strides = [1, 1]} : vector<32x32xf32> to vector<8x32xf32>
    %cst_96 = arith.constant dense<0.000000e+00> : vector<16x32xf32>
    %237 = tpu.matmul %235, %236, %cst_96 {dimension_numbers = #tpu.dot_dimension_numbers<[1], [0], [0], [1], [0, 0, 1, 1], [], []>} : vector<16x8xf32>, vector<8x32xf32>, vector<16x32xf32> -> vector<16x32xf32>
    %238 = arith.addf %214, %237 : vector<16x32xf32>
    %239 = vector.extract_strided_slice %176 {offsets = [0, 16], sizes = [16, 8], strides = [1, 1]} : vector<16x32xf32> to vector<16x8xf32>
    %240 = vector.shape_cast %239 : vector<16x8xf32> to vector<2x8x8xf32>
    %241 = vector.extract_strided_slice %184 {offsets = [0, 16], sizes = [16, 8], strides = [1, 1]} : vector<16x32xf32> to vector<16x8xf32>
    %242 = vector.shape_cast %241 : vector<16x8xf32> to vector<2x8x8xf32>
    %243 = vector.extract_strided_slice %185 {offsets = [0, 16], sizes = [16, 8], strides = [1, 1]} : vector<16x32xf32> to vector<16x8xf32>
    %244 = vector.shape_cast %243 : vector<16x8xf32> to vector<2x8x8xf32>
    "tpu.trace_start"() <{level = 10 : i32, message = "bqd,bkd->bqk"}> : () -> ()
    %cst_97 = arith.constant dense<0.000000e+00> : vector<2x8x8xf32>
    %245 = tpu.matmul %240, %242, %cst_97 {dimension_numbers = #tpu.dot_dimension_numbers<[2], [2], [1], [1], [0, 0, 0, 1, 1, 1], [0], [0]>} : vector<2x8x8xf32>, vector<2x8x8xf32>, vector<2x8x8xf32> -> vector<2x8x8xf32>
    "tpu.trace_stop"() : () -> ()
    %246 = vector.broadcast %7 : vector<2x1x8xf32> to vector<2x8x8xf32>
    %247 = arith.addf %245, %246 : vector<2x8x8xf32>
    %cst_98 = arith.constant dense<0xFF800000> : vector<2x8xf32>
    %248 = vector.multi_reduction <maximumf>, %247, %cst_98 [2] : vector<2x8x8xf32> to vector<2x8xf32>
    %249 = vector.shape_cast %248 : vector<2x8xf32> to vector<2x8x1xf32>
    %250 = vector.broadcast %249 : vector<2x8x1xf32> to vector<2x8x8xf32>
    %251 = arith.subf %247, %250 : vector<2x8x8xf32>
    %252 = math.exp %251 : vector<2x8x8xf32>
    %cst_99 = arith.constant dense<0.000000e+00> : vector<2x8xf32>
    %253 = vector.multi_reduction <add>, %252, %cst_99 [2] : vector<2x8x8xf32> to vector<2x8xf32>
    %254 = vector.shape_cast %253 : vector<2x8xf32> to vector<2x8x1xf32>
    %255 = tpu.reciprocal %254 {approx = true} : vector<2x8x1xf32> -> vector<2x8x1xf32>
    %256 = vector.broadcast %255 : vector<2x8x1xf32> to vector<2x8x8xf32>
    %257 = arith.mulf %252, %256 : vector<2x8x8xf32>
    "tpu.trace_start"() <{level = 10 : i32, message = "bqk,bkd->bqd"}> : () -> ()
    %cst_100 = arith.constant dense<0.000000e+00> : vector<2x8x8xf32>
    %258 = tpu.matmul %257, %244, %cst_100 {dimension_numbers = #tpu.dot_dimension_numbers<[2], [1], [1], [2], [0, 0, 0, 1, 1, 2], [0], [0]>} : vector<2x8x8xf32>, vector<2x8x8xf32>, vector<2x8x8xf32> -> vector<2x8x8xf32>
    "tpu.trace_stop"() : () -> ()
    %259 = vector.shape_cast %258 : vector<2x8x8xf32> to vector<16x8xf32>
    %260 = vector.extract_strided_slice %187 {offsets = [16, 0], sizes = [8, 32], strides = [1, 1]} : vector<32x32xf32> to vector<8x32xf32>
    %cst_101 = arith.constant dense<0.000000e+00> : vector<16x32xf32>
    %261 = tpu.matmul %259, %260, %cst_101 {dimension_numbers = #tpu.dot_dimension_numbers<[1], [0], [0], [1], [0, 0, 1, 1], [], []>} : vector<16x8xf32>, vector<8x32xf32>, vector<16x32xf32> -> vector<16x32xf32>
    %262 = arith.addf %238, %261 : vector<16x32xf32>
    %263 = vector.extract_strided_slice %176 {offsets = [0, 24], sizes = [16, 8], strides = [1, 1]} : vector<16x32xf32> to vector<16x8xf32>
    %264 = vector.shape_cast %263 : vector<16x8xf32> to vector<2x8x8xf32>
    %265 = vector.extract_strided_slice %184 {offsets = [0, 24], sizes = [16, 8], strides = [1, 1]} : vector<16x32xf32> to vector<16x8xf32>
    %266 = vector.shape_cast %265 : vector<16x8xf32> to vector<2x8x8xf32>
    %267 = vector.extract_strided_slice %185 {offsets = [0, 24], sizes = [16, 8], strides = [1, 1]} : vector<16x32xf32> to vector<16x8xf32>
    %268 = vector.shape_cast %267 : vector<16x8xf32> to vector<2x8x8xf32>
    "tpu.trace_start"() <{level = 10 : i32, message = "bqd,bkd->bqk"}> : () -> ()
    %cst_102 = arith.constant dense<0.000000e+00> : vector<2x8x8xf32>
    %269 = tpu.matmul %264, %266, %cst_102 {dimension_numbers = #tpu.dot_dimension_numbers<[2], [2], [1], [1], [0, 0, 0, 1, 1, 1], [0], [0]>} : vector<2x8x8xf32>, vector<2x8x8xf32>, vector<2x8x8xf32> -> vector<2x8x8xf32>
    "tpu.trace_stop"() : () -> ()
    %270 = vector.broadcast %7 : vector<2x1x8xf32> to vector<2x8x8xf32>
    %271 = arith.addf %269, %270 : vector<2x8x8xf32>
    %cst_103 = arith.constant dense<0xFF800000> : vector<2x8xf32>
    %272 = vector.multi_reduction <maximumf>, %271, %cst_103 [2] : vector<2x8x8xf32> to vector<2x8xf32>
    %273 = vector.shape_cast %272 : vector<2x8xf32> to vector<2x8x1xf32>
    %274 = vector.broadcast %273 : vector<2x8x1xf32> to vector<2x8x8xf32>
    %275 = arith.subf %271, %274 : vector<2x8x8xf32>
    %276 = math.exp %275 : vector<2x8x8xf32>
    %cst_104 = arith.constant dense<0.000000e+00> : vector<2x8xf32>
    %277 = vector.multi_reduction <add>, %276, %cst_104 [2] : vector<2x8x8xf32> to vector<2x8xf32>
    %278 = vector.shape_cast %277 : vector<2x8xf32> to vector<2x8x1xf32>
    %279 = tpu.reciprocal %278 {approx = true} : vector<2x8x1xf32> -> vector<2x8x1xf32>
    %280 = vector.broadcast %279 : vector<2x8x1xf32> to vector<2x8x8xf32>
    %281 = arith.mulf %276, %280 : vector<2x8x8xf32>
    "tpu.trace_start"() <{level = 10 : i32, message = "bqk,bkd->bqd"}> : () -> ()
    %cst_105 = arith.constant dense<0.000000e+00> : vector<2x8x8xf32>
    %282 = tpu.matmul %281, %268, %cst_105 {dimension_numbers = #tpu.dot_dimension_numbers<[2], [1], [1], [2], [0, 0, 0, 1, 1, 2], [0], [0]>} : vector<2x8x8xf32>, vector<2x8x8xf32>, vector<2x8x8xf32> -> vector<2x8x8xf32>
    "tpu.trace_stop"() : () -> ()
    %283 = vector.shape_cast %282 : vector<2x8x8xf32> to vector<16x8xf32>
    %284 = vector.extract_strided_slice %187 {offsets = [24, 0], sizes = [8, 32], strides = [1, 1]} : vector<32x32xf32> to vector<8x32xf32>
    %cst_106 = arith.constant dense<0.000000e+00> : vector<16x32xf32>
    %285 = tpu.matmul %283, %284, %cst_106 {dimension_numbers = #tpu.dot_dimension_numbers<[1], [0], [0], [1], [0, 0, 1, 1], [], []>} : vector<16x8xf32>, vector<8x32xf32>, vector<16x32xf32> -> vector<16x32xf32>
    %286 = arith.addf %262, %285 : vector<16x32xf32>
    %287 = vector.broadcast %189 : vector<1x32xf32> to vector<16x32xf32>
    %288 = arith.addf %286, %287 : vector<16x32xf32>
    %289 = arith.addf %141, %288 : vector<16x32xf32>
    %c0_107 = arith.constant 0 : index
    %c0_108 = arith.constant 0 : index
    %c0_109 = arith.constant 0 : index
    %290 = vector.load %arg17[%c0_107, %c0_108, %c0_109] : memref<2x1x32xf32, #tpu.memory_space<vmem>>, vector<1x1x32xf32>
    %291 = vector.shape_cast %290 : vector<1x1x32xf32> to vector<1x32xf32>
    %c0_110 = arith.constant 0 : index
    %c0_111 = arith.constant 0 : index
    %c0_112 = arith.constant 0 : index
    %292 = vector.load %arg18[%c0_110, %c0_111, %c0_112] : memref<2x1x32xf32, #tpu.memory_space<vmem>>, vector<1x1x32xf32>
    %293 = vector.shape_cast %292 : vector<1x1x32xf32> to vector<1x32xf32>
    %cst_113 = arith.constant dense<0.000000e+00> : vector<16xf32>
    %294 = vector.multi_reduction <add>, %289, %cst_113 [1] : vector<16x32xf32> to vector<16xf32>
    %295 = vector.shape_cast %294 : vector<16xf32> to vector<16x1xf32>
    %cst_114 = arith.constant 3.200000e+01 : f32
    %296 = vector.broadcast %cst_114 : f32 to vector<16x1xf32>
    %297 = arith.divf %295, %296 : vector<16x1xf32>
    %298 = vector.broadcast %297 : vector<16x1xf32> to vector<16x32xf32>
    %299 = arith.subf %289, %298 : vector<16x32xf32>
    %300 = arith.mulf %299, %299 : vector<16x32xf32>
    %cst_115 = arith.constant dense<0.000000e+00> : vector<16xf32>
    %301 = vector.multi_reduction <add>, %300, %cst_115 [1] : vector<16x32xf32> to vector<16xf32>
    %302 = vector.shape_cast %301 : vector<16xf32> to vector<16x1xf32>
    %cst_116 = arith.constant 3.200000e+01 : f32
    %303 = vector.broadcast %cst_116 : f32 to vector<16x1xf32>
    %304 = arith.divf %302, %303 : vector<16x1xf32>
    %305 = vector.broadcast %297 : vector<16x1xf32> to vector<16x32xf32>
    %306 = arith.subf %289, %305 : vector<16x32xf32>
    %cst_117 = arith.constant 9.99999974E-6 : f32
    %307 = vector.broadcast %cst_117 : f32 to vector<16x1xf32>
    %308 = arith.addf %304, %307 : vector<16x1xf32>
    %309 = math.rsqrt %308 : vector<16x1xf32>
    %310 = vector.broadcast %309 : vector<16x1xf32> to vector<16x32xf32>
    %311 = arith.mulf %306, %310 : vector<16x32xf32>
    %312 = vector.broadcast %291 : vector<1x32xf32> to vector<16x32xf32>
    %313 = arith.mulf %311, %312 : vector<16x32xf32>
    %314 = vector.broadcast %293 : vector<1x32xf32> to vector<16x32xf32>
    %315 = arith.addf %313, %314 : vector<16x32xf32>
    %c0_118 = arith.constant 0 : index
    %c0_119 = arith.constant 0 : index
    %c0_120 = arith.constant 0 : index
    %316 = vector.load %arg19[%c0_118, %c0_119, %c0_120] : memref<2x32x64xf32, #tpu.memory_space<vmem>>, vector<1x32x64xf32>
    %317 = vector.shape_cast %316 : vector<1x32x64xf32> to vector<32x64xf32>
    %cst_121 = arith.constant dense<0.000000e+00> : vector<16x64xf32>
    %318 = tpu.matmul %315, %317, %cst_121 {dimension_numbers = #tpu.dot_dimension_numbers<[1], [0], [0], [1], [0, 0, 1, 1], [], []>} : vector<16x32xf32>, vector<32x64xf32>, vector<16x64xf32> -> vector<16x64xf32>
    %c0_122 = arith.constant 0 : index
    %c0_123 = arith.constant 0 : index
    %c0_124 = arith.constant 0 : index
    %319 = vector.load %arg20[%c0_122, %c0_123, %c0_124] : memref<2x1x64xf32, #tpu.memory_space<vmem>>, vector<1x1x64xf32>
    %320 = vector.shape_cast %319 : vector<1x1x64xf32> to vector<1x64xf32>
    %321 = vector.broadcast %320 : vector<1x64xf32> to vector<16x64xf32>
    %322 = arith.addf %318, %321 : vector<16x64xf32>
    %cst_125 = arith.constant 0.000000e+00 : f32
    %323 = vector.broadcast %cst_125 : f32 to vector<16x64xf32>
    %324 = arith.maximumf %322, %323 : vector<16x64xf32>
    %c0_126 = arith.constant 0 : index
    %c0_127 = arith.constant 0 : index
    %c0_128 = arith.constant 0 : index
    %325 = vector.load %arg21[%c0_126, %c0_127, %c0_128] : memref<2x64x32xf32, #tpu.memory_space<vmem>>, vector<1x64x32xf32>
    %326 = vector.shape_cast %325 : vector<1x64x32xf32> to vector<64x32xf32>
    %cst_129 = arith.constant dense<0.000000e+00> : vector<16x32xf32>
    %327 = tpu.matmul %324, %326, %cst_129 {dimension_numbers = #tpu.dot_dimension_numbers<[1], [0], [0], [1], [0, 0, 1, 1], [], []>} : vector<16x64xf32>, vector<64x32xf32>, vector<16x32xf32> -> vector<16x32xf32>
    %328 = arith.addf %289, %327 : vector<16x32xf32>
    %c0_130 = arith.constant 0 : index
    %c0_131 = arith.constant 0 : index
    %c0_132 = arith.constant 0 : index
    %329 = vector.load %arg22[%c0_130, %c0_131, %c0_132] : memref<2x1x32xf32, #tpu.memory_space<vmem>>, vector<1x1x32xf32>
    %330 = vector.shape_cast %329 : vector<1x1x32xf32> to vector<1x32xf32>
    %331 = vector.broadcast %330 : vector<1x32xf32> to vector<16x32xf32>
    %332 = arith.addf %328, %331 : vector<16x32xf32>
    %c1 = arith.constant 1 : index
    %c0_133 = arith.constant 0 : index
    %c0_134 = arith.constant 0 : index
    %333 = vector.load %arg3[%c1, %c0_133, %c0_134] : memref<2x1x32xf32, #tpu.memory_space<vmem>>, vector<1x1x32xf32>
    %334 = vector.shape_cast %333 : vector<1x1x32xf32> to vector<1x32xf32>
    %c1_135 = arith.constant 1 : index
    %c0_136 = arith.constant 0 : index
    %c0_137 = arith.constant 0 : index
    %335 = vector.load %arg4[%c1_135, %c0_136, %c0_137] : memref<2x1x32xf32, #tpu.memory_space<vmem>>, vector<1x1x32xf32>
    %336 = vector.shape_cast %335 : vector<1x1x32xf32> to vector<1x32xf32>
    %cst_138 = arith.constant dense<0.000000e+00> : vector<16xf32>
    %337 = vector.multi_reduction <add>, %332, %cst_138 [1] : vector<16x32xf32> to vector<16xf32>
    %338 = vector.shape_cast %337 : vector<16xf32> to vector<16x1xf32>
    %cst_139 = arith.constant 3.200000e+01 : f32
    %339 = vector.broadcast %cst_139 : f32 to vector<16x1xf32>
    %340 = arith.divf %338, %339 : vector<16x1xf32>
    %341 = vector.broadcast %340 : vector<16x1xf32> to vector<16x32xf32>
    %342 = arith.subf %332, %341 : vector<16x32xf32>
    %343 = arith.mulf %342, %342 : vector<16x32xf32>
    %cst_140 = arith.constant dense<0.000000e+00> : vector<16xf32>
    %344 = vector.multi_reduction <add>, %343, %cst_140 [1] : vector<16x32xf32> to vector<16xf32>
    %345 = vector.shape_cast %344 : vector<16xf32> to vector<16x1xf32>
    %cst_141 = arith.constant 3.200000e+01 : f32
    %346 = vector.broadcast %cst_141 : f32 to vector<16x1xf32>
    %347 = arith.divf %345, %346 : vector<16x1xf32>
    %348 = vector.broadcast %340 : vector<16x1xf32> to vector<16x32xf32>
    %349 = arith.subf %332, %348 : vector<16x32xf32>
    %cst_142 = arith.constant 9.99999974E-6 : f32
    %350 = vector.broadcast %cst_142 : f32 to vector<16x1xf32>
    %351 = arith.addf %347, %350 : vector<16x1xf32>
    %352 = math.rsqrt %351 : vector<16x1xf32>
    %353 = vector.broadcast %352 : vector<16x1xf32> to vector<16x32xf32>
    %354 = arith.mulf %349, %353 : vector<16x32xf32>
    %355 = vector.broadcast %334 : vector<1x32xf32> to vector<16x32xf32>
    %356 = arith.mulf %354, %355 : vector<16x32xf32>
    %357 = vector.broadcast %336 : vector<1x32xf32> to vector<16x32xf32>
    %358 = arith.addf %356, %357 : vector<16x32xf32>
    %c1_143 = arith.constant 1 : index
    %c0_144 = arith.constant 0 : index
    %c0_145 = arith.constant 0 : index
    %359 = vector.load %arg5[%c1_143, %c0_144, %c0_145] : memref<2x32x96xf32, #tpu.memory_space<vmem>>, vector<1x32x96xf32>
    %360 = vector.shape_cast %359 : vector<1x32x96xf32> to vector<32x96xf32>
    %cst_146 = arith.constant dense<0.000000e+00> : vector<16x96xf32>
    %361 = tpu.matmul %358, %360, %cst_146 {dimension_numbers = #tpu.dot_dimension_numbers<[1], [0], [0], [1], [0, 0, 1, 1], [], []>} : vector<16x32xf32>, vector<32x96xf32>, vector<16x96xf32> -> vector<16x96xf32>
    %c1_147 = arith.constant 1 : index
    %c0_148 = arith.constant 0 : index
    %c0_149 = arith.constant 0 : index
    %362 = vector.load %arg6[%c1_147, %c0_148, %c0_149] : memref<2x1x96xf32, #tpu.memory_space<vmem>>, vector<1x1x96xf32>
    %363 = vector.shape_cast %362 : vector<1x1x96xf32> to vector<1x96xf32>
    %364 = vector.broadcast %363 : vector<1x96xf32> to vector<16x96xf32>
    %365 = arith.addf %361, %364 : vector<16x96xf32>
    %366 = vector.extract_strided_slice %365 {offsets = [0, 0], sizes = [16, 32], strides = [1, 1]} : vector<16x96xf32> to vector<16x32xf32>
    %cst_150 = arith.constant 0.353553385 : f32
    %367 = vector.broadcast %cst_150 : f32 to vector<16x32xf32>
    %368 = arith.mulf %366, %367 : vector<16x32xf32>
    %369 = vector.extract_strided_slice %365 {offsets = [0, 32], sizes = [16, 32], strides = [1, 1]} : vector<16x96xf32> to vector<16x32xf32>
    %370 = vector.extract_strided_slice %365 {offsets = [0, 64], sizes = [16, 32], strides = [1, 1]} : vector<16x96xf32> to vector<16x32xf32>
    %c1_151 = arith.constant 1 : index
    %c0_152 = arith.constant 0 : index
    %c0_153 = arith.constant 0 : index
    %371 = vector.load %arg7[%c1_151, %c0_152, %c0_153] : memref<2x32x32xf32, #tpu.memory_space<vmem>>, vector<1x32x32xf32>
    %372 = vector.shape_cast %371 : vector<1x32x32xf32> to vector<32x32xf32>
    %c1_154 = arith.constant 1 : index
    %c0_155 = arith.constant 0 : index
    %c0_156 = arith.constant 0 : index
    %373 = vector.load %arg8[%c1_154, %c0_155, %c0_156] : memref<2x1x32xf32, #tpu.memory_space<vmem>>, vector<1x1x32xf32>
    %374 = vector.shape_cast %373 : vector<1x1x32xf32> to vector<1x32xf32>
    %cst_157 = arith.constant 0.000000e+00 : f32
    %375 = vector.broadcast %cst_157 : f32 to vector<16x32xf32>
    %376 = vector.extract_strided_slice %368 {offsets = [0, 0], sizes = [16, 8], strides = [1, 1]} : vector<16x32xf32> to vector<16x8xf32>
    %377 = vector.shape_cast %376 : vector<16x8xf32> to vector<2x8x8xf32>
    %378 = vector.extract_strided_slice %369 {offsets = [0, 0], sizes = [16, 8], strides = [1, 1]} : vector<16x32xf32> to vector<16x8xf32>
    %379 = vector.shape_cast %378 : vector<16x8xf32> to vector<2x8x8xf32>
    %380 = vector.extract_strided_slice %370 {offsets = [0, 0], sizes = [16, 8], strides = [1, 1]} : vector<16x32xf32> to vector<16x8xf32>
    %381 = vector.shape_cast %380 : vector<16x8xf32> to vector<2x8x8xf32>
    "tpu.trace_start"() <{level = 10 : i32, message = "bqd,bkd->bqk"}> : () -> ()
    %cst_158 = arith.constant dense<0.000000e+00> : vector<2x8x8xf32>
    %382 = tpu.matmul %377, %379, %cst_158 {dimension_numbers = #tpu.dot_dimension_numbers<[2], [2], [1], [1], [0, 0, 0, 1, 1, 1], [0], [0]>} : vector<2x8x8xf32>, vector<2x8x8xf32>, vector<2x8x8xf32> -> vector<2x8x8xf32>
    "tpu.trace_stop"() : () -> ()
    %cst_159 = arith.constant dense<0xFF800000> : vector<2x8xf32>
    %383 = vector.multi_reduction <maximumf>, %382, %cst_159 [2] : vector<2x8x8xf32> to vector<2x8xf32>
    %384 = vector.shape_cast %383 : vector<2x8xf32> to vector<2x8x1xf32>
    %385 = vector.broadcast %384 : vector<2x8x1xf32> to vector<2x8x8xf32>
    %386 = arith.subf %382, %385 : vector<2x8x8xf32>
    %387 = math.exp %386 : vector<2x8x8xf32>
    %cst_160 = arith.constant dense<0.000000e+00> : vector<2x8xf32>
    %388 = vector.multi_reduction <add>, %387, %cst_160 [2] : vector<2x8x8xf32> to vector<2x8xf32>
    %389 = vector.shape_cast %388 : vector<2x8xf32> to vector<2x8x1xf32>
    %390 = tpu.reciprocal %389 {approx = true} : vector<2x8x1xf32> -> vector<2x8x1xf32>
    %391 = vector.broadcast %390 : vector<2x8x1xf32> to vector<2x8x8xf32>
    %392 = arith.mulf %387, %391 : vector<2x8x8xf32>
    "tpu.trace_start"() <{level = 10 : i32, message = "bqk,bkd->bqd"}> : () -> ()
    %cst_161 = arith.constant dense<0.000000e+00> : vector<2x8x8xf32>
    %393 = tpu.matmul %392, %381, %cst_161 {dimension_numbers = #tpu.dot_dimension_numbers<[2], [1], [1], [2], [0, 0, 0, 1, 1, 2], [0], [0]>} : vector<2x8x8xf32>, vector<2x8x8xf32>, vector<2x8x8xf32> -> vector<2x8x8xf32>
    "tpu.trace_stop"() : () -> ()
    %394 = vector.shape_cast %393 : vector<2x8x8xf32> to vector<16x8xf32>
    %395 = vector.extract_strided_slice %372 {offsets = [0, 0], sizes = [8, 32], strides = [1, 1]} : vector<32x32xf32> to vector<8x32xf32>
    %cst_162 = arith.constant dense<0.000000e+00> : vector<16x32xf32>
    %396 = tpu.matmul %394, %395, %cst_162 {dimension_numbers = #tpu.dot_dimension_numbers<[1], [0], [0], [1], [0, 0, 1, 1], [], []>} : vector<16x8xf32>, vector<8x32xf32>, vector<16x32xf32> -> vector<16x32xf32>
    %397 = arith.addf %375, %396 : vector<16x32xf32>
    %398 = vector.extract_strided_slice %368 {offsets = [0, 8], sizes = [16, 8], strides = [1, 1]} : vector<16x32xf32> to vector<16x8xf32>
    %399 = vector.shape_cast %398 : vector<16x8xf32> to vector<2x8x8xf32>
    %400 = vector.extract_strided_slice %369 {offsets = [0, 8], sizes = [16, 8], strides = [1, 1]} : vector<16x32xf32> to vector<16x8xf32>
    %401 = vector.shape_cast %400 : vector<16x8xf32> to vector<2x8x8xf32>
    %402 = vector.extract_strided_slice %370 {offsets = [0, 8], sizes = [16, 8], strides = [1, 1]} : vector<16x32xf32> to vector<16x8xf32>
    %403 = vector.shape_cast %402 : vector<16x8xf32> to vector<2x8x8xf32>
    "tpu.trace_start"() <{level = 10 : i32, message = "bqd,bkd->bqk"}> : () -> ()
    %cst_163 = arith.constant dense<0.000000e+00> : vector<2x8x8xf32>
    %404 = tpu.matmul %399, %401, %cst_163 {dimension_numbers = #tpu.dot_dimension_numbers<[2], [2], [1], [1], [0, 0, 0, 1, 1, 1], [0], [0]>} : vector<2x8x8xf32>, vector<2x8x8xf32>, vector<2x8x8xf32> -> vector<2x8x8xf32>
    "tpu.trace_stop"() : () -> ()
    %cst_164 = arith.constant dense<0xFF800000> : vector<2x8xf32>
    %405 = vector.multi_reduction <maximumf>, %404, %cst_164 [2] : vector<2x8x8xf32> to vector<2x8xf32>
    %406 = vector.shape_cast %405 : vector<2x8xf32> to vector<2x8x1xf32>
    %407 = vector.broadcast %406 : vector<2x8x1xf32> to vector<2x8x8xf32>
    %408 = arith.subf %404, %407 : vector<2x8x8xf32>
    %409 = math.exp %408 : vector<2x8x8xf32>
    %cst_165 = arith.constant dense<0.000000e+00> : vector<2x8xf32>
    %410 = vector.multi_reduction <add>, %409, %cst_165 [2] : vector<2x8x8xf32> to vector<2x8xf32>
    %411 = vector.shape_cast %410 : vector<2x8xf32> to vector<2x8x1xf32>
    %412 = tpu.reciprocal %411 {approx = true} : vector<2x8x1xf32> -> vector<2x8x1xf32>
    %413 = vector.broadcast %412 : vector<2x8x1xf32> to vector<2x8x8xf32>
    %414 = arith.mulf %409, %413 : vector<2x8x8xf32>
    "tpu.trace_start"() <{level = 10 : i32, message = "bqk,bkd->bqd"}> : () -> ()
    %cst_166 = arith.constant dense<0.000000e+00> : vector<2x8x8xf32>
    %415 = tpu.matmul %414, %403, %cst_166 {dimension_numbers = #tpu.dot_dimension_numbers<[2], [1], [1], [2], [0, 0, 0, 1, 1, 2], [0], [0]>} : vector<2x8x8xf32>, vector<2x8x8xf32>, vector<2x8x8xf32> -> vector<2x8x8xf32>
    "tpu.trace_stop"() : () -> ()
    %416 = vector.shape_cast %415 : vector<2x8x8xf32> to vector<16x8xf32>
    %417 = vector.extract_strided_slice %372 {offsets = [8, 0], sizes = [8, 32], strides = [1, 1]} : vector<32x32xf32> to vector<8x32xf32>
    %cst_167 = arith.constant dense<0.000000e+00> : vector<16x32xf32>
    %418 = tpu.matmul %416, %417, %cst_167 {dimension_numbers = #tpu.dot_dimension_numbers<[1], [0], [0], [1], [0, 0, 1, 1], [], []>} : vector<16x8xf32>, vector<8x32xf32>, vector<16x32xf32> -> vector<16x32xf32>
    %419 = arith.addf %397, %418 : vector<16x32xf32>
    %420 = vector.extract_strided_slice %368 {offsets = [0, 16], sizes = [16, 8], strides = [1, 1]} : vector<16x32xf32> to vector<16x8xf32>
    %421 = vector.shape_cast %420 : vector<16x8xf32> to vector<2x8x8xf32>
    %422 = vector.extract_strided_slice %369 {offsets = [0, 16], sizes = [16, 8], strides = [1, 1]} : vector<16x32xf32> to vector<16x8xf32>
    %423 = vector.shape_cast %422 : vector<16x8xf32> to vector<2x8x8xf32>
    %424 = vector.extract_strided_slice %370 {offsets = [0, 16], sizes = [16, 8], strides = [1, 1]} : vector<16x32xf32> to vector<16x8xf32>
    %425 = vector.shape_cast %424 : vector<16x8xf32> to vector<2x8x8xf32>
    "tpu.trace_start"() <{level = 10 : i32, message = "bqd,bkd->bqk"}> : () -> ()
    %cst_168 = arith.constant dense<0.000000e+00> : vector<2x8x8xf32>
    %426 = tpu.matmul %421, %423, %cst_168 {dimension_numbers = #tpu.dot_dimension_numbers<[2], [2], [1], [1], [0, 0, 0, 1, 1, 1], [0], [0]>} : vector<2x8x8xf32>, vector<2x8x8xf32>, vector<2x8x8xf32> -> vector<2x8x8xf32>
    "tpu.trace_stop"() : () -> ()
    %cst_169 = arith.constant dense<0xFF800000> : vector<2x8xf32>
    %427 = vector.multi_reduction <maximumf>, %426, %cst_169 [2] : vector<2x8x8xf32> to vector<2x8xf32>
    %428 = vector.shape_cast %427 : vector<2x8xf32> to vector<2x8x1xf32>
    %429 = vector.broadcast %428 : vector<2x8x1xf32> to vector<2x8x8xf32>
    %430 = arith.subf %426, %429 : vector<2x8x8xf32>
    %431 = math.exp %430 : vector<2x8x8xf32>
    %cst_170 = arith.constant dense<0.000000e+00> : vector<2x8xf32>
    %432 = vector.multi_reduction <add>, %431, %cst_170 [2] : vector<2x8x8xf32> to vector<2x8xf32>
    %433 = vector.shape_cast %432 : vector<2x8xf32> to vector<2x8x1xf32>
    %434 = tpu.reciprocal %433 {approx = true} : vector<2x8x1xf32> -> vector<2x8x1xf32>
    %435 = vector.broadcast %434 : vector<2x8x1xf32> to vector<2x8x8xf32>
    %436 = arith.mulf %431, %435 : vector<2x8x8xf32>
    "tpu.trace_start"() <{level = 10 : i32, message = "bqk,bkd->bqd"}> : () -> ()
    %cst_171 = arith.constant dense<0.000000e+00> : vector<2x8x8xf32>
    %437 = tpu.matmul %436, %425, %cst_171 {dimension_numbers = #tpu.dot_dimension_numbers<[2], [1], [1], [2], [0, 0, 0, 1, 1, 2], [0], [0]>} : vector<2x8x8xf32>, vector<2x8x8xf32>, vector<2x8x8xf32> -> vector<2x8x8xf32>
    "tpu.trace_stop"() : () -> ()
    %438 = vector.shape_cast %437 : vector<2x8x8xf32> to vector<16x8xf32>
    %439 = vector.extract_strided_slice %372 {offsets = [16, 0], sizes = [8, 32], strides = [1, 1]} : vector<32x32xf32> to vector<8x32xf32>
    %cst_172 = arith.constant dense<0.000000e+00> : vector<16x32xf32>
    %440 = tpu.matmul %438, %439, %cst_172 {dimension_numbers = #tpu.dot_dimension_numbers<[1], [0], [0], [1], [0, 0, 1, 1], [], []>} : vector<16x8xf32>, vector<8x32xf32>, vector<16x32xf32> -> vector<16x32xf32>
    %441 = arith.addf %419, %440 : vector<16x32xf32>
    %442 = vector.extract_strided_slice %368 {offsets = [0, 24], sizes = [16, 8], strides = [1, 1]} : vector<16x32xf32> to vector<16x8xf32>
    %443 = vector.shape_cast %442 : vector<16x8xf32> to vector<2x8x8xf32>
    %444 = vector.extract_strided_slice %369 {offsets = [0, 24], sizes = [16, 8], strides = [1, 1]} : vector<16x32xf32> to vector<16x8xf32>
    %445 = vector.shape_cast %444 : vector<16x8xf32> to vector<2x8x8xf32>
    %446 = vector.extract_strided_slice %370 {offsets = [0, 24], sizes = [16, 8], strides = [1, 1]} : vector<16x32xf32> to vector<16x8xf32>
    %447 = vector.shape_cast %446 : vector<16x8xf32> to vector<2x8x8xf32>
    "tpu.trace_start"() <{level = 10 : i32, message = "bqd,bkd->bqk"}> : () -> ()
    %cst_173 = arith.constant dense<0.000000e+00> : vector<2x8x8xf32>
    %448 = tpu.matmul %443, %445, %cst_173 {dimension_numbers = #tpu.dot_dimension_numbers<[2], [2], [1], [1], [0, 0, 0, 1, 1, 1], [0], [0]>} : vector<2x8x8xf32>, vector<2x8x8xf32>, vector<2x8x8xf32> -> vector<2x8x8xf32>
    "tpu.trace_stop"() : () -> ()
    %cst_174 = arith.constant dense<0xFF800000> : vector<2x8xf32>
    %449 = vector.multi_reduction <maximumf>, %448, %cst_174 [2] : vector<2x8x8xf32> to vector<2x8xf32>
    %450 = vector.shape_cast %449 : vector<2x8xf32> to vector<2x8x1xf32>
    %451 = vector.broadcast %450 : vector<2x8x1xf32> to vector<2x8x8xf32>
    %452 = arith.subf %448, %451 : vector<2x8x8xf32>
    %453 = math.exp %452 : vector<2x8x8xf32>
    %cst_175 = arith.constant dense<0.000000e+00> : vector<2x8xf32>
    %454 = vector.multi_reduction <add>, %453, %cst_175 [2] : vector<2x8x8xf32> to vector<2x8xf32>
    %455 = vector.shape_cast %454 : vector<2x8xf32> to vector<2x8x1xf32>
    %456 = tpu.reciprocal %455 {approx = true} : vector<2x8x1xf32> -> vector<2x8x1xf32>
    %457 = vector.broadcast %456 : vector<2x8x1xf32> to vector<2x8x8xf32>
    %458 = arith.mulf %453, %457 : vector<2x8x8xf32>
    "tpu.trace_start"() <{level = 10 : i32, message = "bqk,bkd->bqd"}> : () -> ()
    %cst_176 = arith.constant dense<0.000000e+00> : vector<2x8x8xf32>
    %459 = tpu.matmul %458, %447, %cst_176 {dimension_numbers = #tpu.dot_dimension_numbers<[2], [1], [1], [2], [0, 0, 0, 1, 1, 2], [0], [0]>} : vector<2x8x8xf32>, vector<2x8x8xf32>, vector<2x8x8xf32> -> vector<2x8x8xf32>
    "tpu.trace_stop"() : () -> ()
    %460 = vector.shape_cast %459 : vector<2x8x8xf32> to vector<16x8xf32>
    %461 = vector.extract_strided_slice %372 {offsets = [24, 0], sizes = [8, 32], strides = [1, 1]} : vector<32x32xf32> to vector<8x32xf32>
    %cst_177 = arith.constant dense<0.000000e+00> : vector<16x32xf32>
    %462 = tpu.matmul %460, %461, %cst_177 {dimension_numbers = #tpu.dot_dimension_numbers<[1], [0], [0], [1], [0, 0, 1, 1], [], []>} : vector<16x8xf32>, vector<8x32xf32>, vector<16x32xf32> -> vector<16x32xf32>
    %463 = arith.addf %441, %462 : vector<16x32xf32>
    %464 = vector.broadcast %374 : vector<1x32xf32> to vector<16x32xf32>
    %465 = arith.addf %463, %464 : vector<16x32xf32>
    %466 = arith.addf %332, %465 : vector<16x32xf32>
    %c1_178 = arith.constant 1 : index
    %c0_179 = arith.constant 0 : index
    %c0_180 = arith.constant 0 : index
    %467 = vector.load %arg9[%c1_178, %c0_179, %c0_180] : memref<2x1x32xf32, #tpu.memory_space<vmem>>, vector<1x1x32xf32>
    %468 = vector.shape_cast %467 : vector<1x1x32xf32> to vector<1x32xf32>
    %c1_181 = arith.constant 1 : index
    %c0_182 = arith.constant 0 : index
    %c0_183 = arith.constant 0 : index
    %469 = vector.load %arg10[%c1_181, %c0_182, %c0_183] : memref<2x1x32xf32, #tpu.memory_space<vmem>>, vector<1x1x32xf32>
    %470 = vector.shape_cast %469 : vector<1x1x32xf32> to vector<1x32xf32>
    %cst_184 = arith.constant dense<0.000000e+00> : vector<16xf32>
    %471 = vector.multi_reduction <add>, %466, %cst_184 [1] : vector<16x32xf32> to vector<16xf32>
    %472 = vector.shape_cast %471 : vector<16xf32> to vector<16x1xf32>
    %cst_185 = arith.constant 3.200000e+01 : f32
    %473 = vector.broadcast %cst_185 : f32 to vector<16x1xf32>
    %474 = arith.divf %472, %473 : vector<16x1xf32>
    %475 = vector.broadcast %474 : vector<16x1xf32> to vector<16x32xf32>
    %476 = arith.subf %466, %475 : vector<16x32xf32>
    %477 = arith.mulf %476, %476 : vector<16x32xf32>
    %cst_186 = arith.constant dense<0.000000e+00> : vector<16xf32>
    %478 = vector.multi_reduction <add>, %477, %cst_186 [1] : vector<16x32xf32> to vector<16xf32>
    %479 = vector.shape_cast %478 : vector<16xf32> to vector<16x1xf32>
    %cst_187 = arith.constant 3.200000e+01 : f32
    %480 = vector.broadcast %cst_187 : f32 to vector<16x1xf32>
    %481 = arith.divf %479, %480 : vector<16x1xf32>
    %482 = vector.broadcast %474 : vector<16x1xf32> to vector<16x32xf32>
    %483 = arith.subf %466, %482 : vector<16x32xf32>
    %cst_188 = arith.constant 9.99999974E-6 : f32
    %484 = vector.broadcast %cst_188 : f32 to vector<16x1xf32>
    %485 = arith.addf %481, %484 : vector<16x1xf32>
    %486 = math.rsqrt %485 : vector<16x1xf32>
    %487 = vector.broadcast %486 : vector<16x1xf32> to vector<16x32xf32>
    %488 = arith.mulf %483, %487 : vector<16x32xf32>
    %489 = vector.broadcast %468 : vector<1x32xf32> to vector<16x32xf32>
    %490 = arith.mulf %488, %489 : vector<16x32xf32>
    %491 = vector.broadcast %470 : vector<1x32xf32> to vector<16x32xf32>
    %492 = arith.addf %490, %491 : vector<16x32xf32>
    %c1_189 = arith.constant 1 : index
    %c0_190 = arith.constant 0 : index
    %c0_191 = arith.constant 0 : index
    %493 = vector.load %arg11[%c1_189, %c0_190, %c0_191] : memref<2x32x32xf32, #tpu.memory_space<vmem>>, vector<1x32x32xf32>
    %494 = vector.shape_cast %493 : vector<1x32x32xf32> to vector<32x32xf32>
    %cst_192 = arith.constant dense<0.000000e+00> : vector<16x32xf32>
    %495 = tpu.matmul %492, %494, %cst_192 {dimension_numbers = #tpu.dot_dimension_numbers<[1], [0], [0], [1], [0, 0, 1, 1], [], []>} : vector<16x32xf32>, vector<32x32xf32>, vector<16x32xf32> -> vector<16x32xf32>
    %c1_193 = arith.constant 1 : index
    %c0_194 = arith.constant 0 : index
    %c0_195 = arith.constant 0 : index
    %496 = vector.load %arg12[%c1_193, %c0_194, %c0_195] : memref<2x1x32xf32, #tpu.memory_space<vmem>>, vector<1x1x32xf32>
    %497 = vector.shape_cast %496 : vector<1x1x32xf32> to vector<1x32xf32>
    %498 = vector.broadcast %497 : vector<1x32xf32> to vector<16x32xf32>
    %499 = arith.addf %495, %498 : vector<16x32xf32>
    %cst_196 = arith.constant 0.353553385 : f32
    %500 = vector.broadcast %cst_196 : f32 to vector<16x32xf32>
    %501 = arith.mulf %499, %500 : vector<16x32xf32>
    %c1_197 = arith.constant 1 : index
    %c0_198 = arith.constant 0 : index
    %c0_199 = arith.constant 0 : index
    %502 = vector.load %arg13[%c1_197, %c0_198, %c0_199] : memref<2x32x64xf32, #tpu.memory_space<vmem>>, vector<1x32x64xf32>
    %503 = vector.shape_cast %502 : vector<1x32x64xf32> to vector<32x64xf32>
    %cst_200 = arith.constant dense<0.000000e+00> : vector<16x64xf32>
    %504 = tpu.matmul %1, %503, %cst_200 {dimension_numbers = #tpu.dot_dimension_numbers<[1], [0], [0], [1], [0, 0, 1, 1], [], []>} : vector<16x32xf32>, vector<32x64xf32>, vector<16x64xf32> -> vector<16x64xf32>
    %c1_201 = arith.constant 1 : index
    %c0_202 = arith.constant 0 : index
    %c0_203 = arith.constant 0 : index
    %505 = vector.load %arg14[%c1_201, %c0_202, %c0_203] : memref<2x1x64xf32, #tpu.memory_space<vmem>>, vector<1x1x64xf32>
    %506 = vector.shape_cast %505 : vector<1x1x64xf32> to vector<1x64xf32>
    %507 = vector.broadcast %506 : vector<1x64xf32> to vector<16x64xf32>
    %508 = arith.addf %504, %507 : vector<16x64xf32>
    %509 = vector.extract_strided_slice %508 {offsets = [0, 0], sizes = [16, 32], strides = [1, 1]} : vector<16x64xf32> to vector<16x32xf32>
    %510 = vector.extract_strided_slice %508 {offsets = [0, 32], sizes = [16, 32], strides = [1, 1]} : vector<16x64xf32> to vector<16x32xf32>
    %c1_204 = arith.constant 1 : index
    %c0_205 = arith.constant 0 : index
    %c0_206 = arith.constant 0 : index
    %511 = vector.load %arg15[%c1_204, %c0_205, %c0_206] : memref<2x32x32xf32, #tpu.memory_space<vmem>>, vector<1x32x32xf32>
    %512 = vector.shape_cast %511 : vector<1x32x32xf32> to vector<32x32xf32>
    %c1_207 = arith.constant 1 : index
    %c0_208 = arith.constant 0 : index
    %c0_209 = arith.constant 0 : index
    %513 = vector.load %arg16[%c1_207, %c0_208, %c0_209] : memref<2x1x32xf32, #tpu.memory_space<vmem>>, vector<1x1x32xf32>
    %514 = vector.shape_cast %513 : vector<1x1x32xf32> to vector<1x32xf32>
    %cst_210 = arith.constant 0.000000e+00 : f32
    %515 = vector.broadcast %cst_210 : f32 to vector<16x32xf32>
    %516 = vector.extract_strided_slice %501 {offsets = [0, 0], sizes = [16, 8], strides = [1, 1]} : vector<16x32xf32> to vector<16x8xf32>
    %517 = vector.shape_cast %516 : vector<16x8xf32> to vector<2x8x8xf32>
    %518 = vector.extract_strided_slice %509 {offsets = [0, 0], sizes = [16, 8], strides = [1, 1]} : vector<16x32xf32> to vector<16x8xf32>
    %519 = vector.shape_cast %518 : vector<16x8xf32> to vector<2x8x8xf32>
    %520 = vector.extract_strided_slice %510 {offsets = [0, 0], sizes = [16, 8], strides = [1, 1]} : vector<16x32xf32> to vector<16x8xf32>
    %521 = vector.shape_cast %520 : vector<16x8xf32> to vector<2x8x8xf32>
    "tpu.trace_start"() <{level = 10 : i32, message = "bqd,bkd->bqk"}> : () -> ()
    %cst_211 = arith.constant dense<0.000000e+00> : vector<2x8x8xf32>
    %522 = tpu.matmul %517, %519, %cst_211 {dimension_numbers = #tpu.dot_dimension_numbers<[2], [2], [1], [1], [0, 0, 0, 1, 1, 1], [0], [0]>} : vector<2x8x8xf32>, vector<2x8x8xf32>, vector<2x8x8xf32> -> vector<2x8x8xf32>
    "tpu.trace_stop"() : () -> ()
    %523 = vector.broadcast %7 : vector<2x1x8xf32> to vector<2x8x8xf32>
    %524 = arith.addf %522, %523 : vector<2x8x8xf32>
    %cst_212 = arith.constant dense<0xFF800000> : vector<2x8xf32>
    %525 = vector.multi_reduction <maximumf>, %524, %cst_212 [2] : vector<2x8x8xf32> to vector<2x8xf32>
    %526 = vector.shape_cast %525 : vector<2x8xf32> to vector<2x8x1xf32>
    %527 = vector.broadcast %526 : vector<2x8x1xf32> to vector<2x8x8xf32>
    %528 = arith.subf %524, %527 : vector<2x8x8xf32>
    %529 = math.exp %528 : vector<2x8x8xf32>
    %cst_213 = arith.constant dense<0.000000e+00> : vector<2x8xf32>
    %530 = vector.multi_reduction <add>, %529, %cst_213 [2] : vector<2x8x8xf32> to vector<2x8xf32>
    %531 = vector.shape_cast %530 : vector<2x8xf32> to vector<2x8x1xf32>
    %532 = tpu.reciprocal %531 {approx = true} : vector<2x8x1xf32> -> vector<2x8x1xf32>
    %533 = vector.broadcast %532 : vector<2x8x1xf32> to vector<2x8x8xf32>
    %534 = arith.mulf %529, %533 : vector<2x8x8xf32>
    "tpu.trace_start"() <{level = 10 : i32, message = "bqk,bkd->bqd"}> : () -> ()
    %cst_214 = arith.constant dense<0.000000e+00> : vector<2x8x8xf32>
    %535 = tpu.matmul %534, %521, %cst_214 {dimension_numbers = #tpu.dot_dimension_numbers<[2], [1], [1], [2], [0, 0, 0, 1, 1, 2], [0], [0]>} : vector<2x8x8xf32>, vector<2x8x8xf32>, vector<2x8x8xf32> -> vector<2x8x8xf32>
    "tpu.trace_stop"() : () -> ()
    %536 = vector.shape_cast %535 : vector<2x8x8xf32> to vector<16x8xf32>
    %537 = vector.extract_strided_slice %512 {offsets = [0, 0], sizes = [8, 32], strides = [1, 1]} : vector<32x32xf32> to vector<8x32xf32>
    %cst_215 = arith.constant dense<0.000000e+00> : vector<16x32xf32>
    %538 = tpu.matmul %536, %537, %cst_215 {dimension_numbers = #tpu.dot_dimension_numbers<[1], [0], [0], [1], [0, 0, 1, 1], [], []>} : vector<16x8xf32>, vector<8x32xf32>, vector<16x32xf32> -> vector<16x32xf32>
    %539 = arith.addf %515, %538 : vector<16x32xf32>
    %540 = vector.extract_strided_slice %501 {offsets = [0, 8], sizes = [16, 8], strides = [1, 1]} : vector<16x32xf32> to vector<16x8xf32>
    %541 = vector.shape_cast %540 : vector<16x8xf32> to vector<2x8x8xf32>
    %542 = vector.extract_strided_slice %509 {offsets = [0, 8], sizes = [16, 8], strides = [1, 1]} : vector<16x32xf32> to vector<16x8xf32>
    %543 = vector.shape_cast %542 : vector<16x8xf32> to vector<2x8x8xf32>
    %544 = vector.extract_strided_slice %510 {offsets = [0, 8], sizes = [16, 8], strides = [1, 1]} : vector<16x32xf32> to vector<16x8xf32>
    %545 = vector.shape_cast %544 : vector<16x8xf32> to vector<2x8x8xf32>
    "tpu.trace_start"() <{level = 10 : i32, message = "bqd,bkd->bqk"}> : () -> ()
    %cst_216 = arith.constant dense<0.000000e+00> : vector<2x8x8xf32>
    %546 = tpu.matmul %541, %543, %cst_216 {dimension_numbers = #tpu.dot_dimension_numbers<[2], [2], [1], [1], [0, 0, 0, 1, 1, 1], [0], [0]>} : vector<2x8x8xf32>, vector<2x8x8xf32>, vector<2x8x8xf32> -> vector<2x8x8xf32>
    "tpu.trace_stop"() : () -> ()
    %547 = vector.broadcast %7 : vector<2x1x8xf32> to vector<2x8x8xf32>
    %548 = arith.addf %546, %547 : vector<2x8x8xf32>
    %cst_217 = arith.constant dense<0xFF800000> : vector<2x8xf32>
    %549 = vector.multi_reduction <maximumf>, %548, %cst_217 [2] : vector<2x8x8xf32> to vector<2x8xf32>
    %550 = vector.shape_cast %549 : vector<2x8xf32> to vector<2x8x1xf32>
    %551 = vector.broadcast %550 : vector<2x8x1xf32> to vector<2x8x8xf32>
    %552 = arith.subf %548, %551 : vector<2x8x8xf32>
    %553 = math.exp %552 : vector<2x8x8xf32>
    %cst_218 = arith.constant dense<0.000000e+00> : vector<2x8xf32>
    %554 = vector.multi_reduction <add>, %553, %cst_218 [2] : vector<2x8x8xf32> to vector<2x8xf32>
    %555 = vector.shape_cast %554 : vector<2x8xf32> to vector<2x8x1xf32>
    %556 = tpu.reciprocal %555 {approx = true} : vector<2x8x1xf32> -> vector<2x8x1xf32>
    %557 = vector.broadcast %556 : vector<2x8x1xf32> to vector<2x8x8xf32>
    %558 = arith.mulf %553, %557 : vector<2x8x8xf32>
    "tpu.trace_start"() <{level = 10 : i32, message = "bqk,bkd->bqd"}> : () -> ()
    %cst_219 = arith.constant dense<0.000000e+00> : vector<2x8x8xf32>
    %559 = tpu.matmul %558, %545, %cst_219 {dimension_numbers = #tpu.dot_dimension_numbers<[2], [1], [1], [2], [0, 0, 0, 1, 1, 2], [0], [0]>} : vector<2x8x8xf32>, vector<2x8x8xf32>, vector<2x8x8xf32> -> vector<2x8x8xf32>
    "tpu.trace_stop"() : () -> ()
    %560 = vector.shape_cast %559 : vector<2x8x8xf32> to vector<16x8xf32>
    %561 = vector.extract_strided_slice %512 {offsets = [8, 0], sizes = [8, 32], strides = [1, 1]} : vector<32x32xf32> to vector<8x32xf32>
    %cst_220 = arith.constant dense<0.000000e+00> : vector<16x32xf32>
    %562 = tpu.matmul %560, %561, %cst_220 {dimension_numbers = #tpu.dot_dimension_numbers<[1], [0], [0], [1], [0, 0, 1, 1], [], []>} : vector<16x8xf32>, vector<8x32xf32>, vector<16x32xf32> -> vector<16x32xf32>
    %563 = arith.addf %539, %562 : vector<16x32xf32>
    %564 = vector.extract_strided_slice %501 {offsets = [0, 16], sizes = [16, 8], strides = [1, 1]} : vector<16x32xf32> to vector<16x8xf32>
    %565 = vector.shape_cast %564 : vector<16x8xf32> to vector<2x8x8xf32>
    %566 = vector.extract_strided_slice %509 {offsets = [0, 16], sizes = [16, 8], strides = [1, 1]} : vector<16x32xf32> to vector<16x8xf32>
    %567 = vector.shape_cast %566 : vector<16x8xf32> to vector<2x8x8xf32>
    %568 = vector.extract_strided_slice %510 {offsets = [0, 16], sizes = [16, 8], strides = [1, 1]} : vector<16x32xf32> to vector<16x8xf32>
    %569 = vector.shape_cast %568 : vector<16x8xf32> to vector<2x8x8xf32>
    "tpu.trace_start"() <{level = 10 : i32, message = "bqd,bkd->bqk"}> : () -> ()
    %cst_221 = arith.constant dense<0.000000e+00> : vector<2x8x8xf32>
    %570 = tpu.matmul %565, %567, %cst_221 {dimension_numbers = #tpu.dot_dimension_numbers<[2], [2], [1], [1], [0, 0, 0, 1, 1, 1], [0], [0]>} : vector<2x8x8xf32>, vector<2x8x8xf32>, vector<2x8x8xf32> -> vector<2x8x8xf32>
    "tpu.trace_stop"() : () -> ()
    %571 = vector.broadcast %7 : vector<2x1x8xf32> to vector<2x8x8xf32>
    %572 = arith.addf %570, %571 : vector<2x8x8xf32>
    %cst_222 = arith.constant dense<0xFF800000> : vector<2x8xf32>
    %573 = vector.multi_reduction <maximumf>, %572, %cst_222 [2] : vector<2x8x8xf32> to vector<2x8xf32>
    %574 = vector.shape_cast %573 : vector<2x8xf32> to vector<2x8x1xf32>
    %575 = vector.broadcast %574 : vector<2x8x1xf32> to vector<2x8x8xf32>
    %576 = arith.subf %572, %575 : vector<2x8x8xf32>
    %577 = math.exp %576 : vector<2x8x8xf32>
    %cst_223 = arith.constant dense<0.000000e+00> : vector<2x8xf32>
    %578 = vector.multi_reduction <add>, %577, %cst_223 [2] : vector<2x8x8xf32> to vector<2x8xf32>
    %579 = vector.shape_cast %578 : vector<2x8xf32> to vector<2x8x1xf32>
    %580 = tpu.reciprocal %579 {approx = true} : vector<2x8x1xf32> -> vector<2x8x1xf32>
    %581 = vector.broadcast %580 : vector<2x8x1xf32> to vector<2x8x8xf32>
    %582 = arith.mulf %577, %581 : vector<2x8x8xf32>
    "tpu.trace_start"() <{level = 10 : i32, message = "bqk,bkd->bqd"}> : () -> ()
    %cst_224 = arith.constant dense<0.000000e+00> : vector<2x8x8xf32>
    %583 = tpu.matmul %582, %569, %cst_224 {dimension_numbers = #tpu.dot_dimension_numbers<[2], [1], [1], [2], [0, 0, 0, 1, 1, 2], [0], [0]>} : vector<2x8x8xf32>, vector<2x8x8xf32>, vector<2x8x8xf32> -> vector<2x8x8xf32>
    "tpu.trace_stop"() : () -> ()
    %584 = vector.shape_cast %583 : vector<2x8x8xf32> to vector<16x8xf32>
    %585 = vector.extract_strided_slice %512 {offsets = [16, 0], sizes = [8, 32], strides = [1, 1]} : vector<32x32xf32> to vector<8x32xf32>
    %cst_225 = arith.constant dense<0.000000e+00> : vector<16x32xf32>
    %586 = tpu.matmul %584, %585, %cst_225 {dimension_numbers = #tpu.dot_dimension_numbers<[1], [0], [0], [1], [0, 0, 1, 1], [], []>} : vector<16x8xf32>, vector<8x32xf32>, vector<16x32xf32> -> vector<16x32xf32>
    %587 = arith.addf %563, %586 : vector<16x32xf32>
    %588 = vector.extract_strided_slice %501 {offsets = [0, 24], sizes = [16, 8], strides = [1, 1]} : vector<16x32xf32> to vector<16x8xf32>
    %589 = vector.shape_cast %588 : vector<16x8xf32> to vector<2x8x8xf32>
    %590 = vector.extract_strided_slice %509 {offsets = [0, 24], sizes = [16, 8], strides = [1, 1]} : vector<16x32xf32> to vector<16x8xf32>
    %591 = vector.shape_cast %590 : vector<16x8xf32> to vector<2x8x8xf32>
    %592 = vector.extract_strided_slice %510 {offsets = [0, 24], sizes = [16, 8], strides = [1, 1]} : vector<16x32xf32> to vector<16x8xf32>
    %593 = vector.shape_cast %592 : vector<16x8xf32> to vector<2x8x8xf32>
    "tpu.trace_start"() <{level = 10 : i32, message = "bqd,bkd->bqk"}> : () -> ()
    %cst_226 = arith.constant dense<0.000000e+00> : vector<2x8x8xf32>
    %594 = tpu.matmul %589, %591, %cst_226 {dimension_numbers = #tpu.dot_dimension_numbers<[2], [2], [1], [1], [0, 0, 0, 1, 1, 1], [0], [0]>} : vector<2x8x8xf32>, vector<2x8x8xf32>, vector<2x8x8xf32> -> vector<2x8x8xf32>
    "tpu.trace_stop"() : () -> ()
    %595 = vector.broadcast %7 : vector<2x1x8xf32> to vector<2x8x8xf32>
    %596 = arith.addf %594, %595 : vector<2x8x8xf32>
    %cst_227 = arith.constant dense<0xFF800000> : vector<2x8xf32>
    %597 = vector.multi_reduction <maximumf>, %596, %cst_227 [2] : vector<2x8x8xf32> to vector<2x8xf32>
    %598 = vector.shape_cast %597 : vector<2x8xf32> to vector<2x8x1xf32>
    %599 = vector.broadcast %598 : vector<2x8x1xf32> to vector<2x8x8xf32>
    %600 = arith.subf %596, %599 : vector<2x8x8xf32>
    %601 = math.exp %600 : vector<2x8x8xf32>
    %cst_228 = arith.constant dense<0.000000e+00> : vector<2x8xf32>
    %602 = vector.multi_reduction <add>, %601, %cst_228 [2] : vector<2x8x8xf32> to vector<2x8xf32>
    %603 = vector.shape_cast %602 : vector<2x8xf32> to vector<2x8x1xf32>
    %604 = tpu.reciprocal %603 {approx = true} : vector<2x8x1xf32> -> vector<2x8x1xf32>
    %605 = vector.broadcast %604 : vector<2x8x1xf32> to vector<2x8x8xf32>
    %606 = arith.mulf %601, %605 : vector<2x8x8xf32>
    "tpu.trace_start"() <{level = 10 : i32, message = "bqk,bkd->bqd"}> : () -> ()
    %cst_229 = arith.constant dense<0.000000e+00> : vector<2x8x8xf32>
    %607 = tpu.matmul %606, %593, %cst_229 {dimension_numbers = #tpu.dot_dimension_numbers<[2], [1], [1], [2], [0, 0, 0, 1, 1, 2], [0], [0]>} : vector<2x8x8xf32>, vector<2x8x8xf32>, vector<2x8x8xf32> -> vector<2x8x8xf32>
    "tpu.trace_stop"() : () -> ()
    %608 = vector.shape_cast %607 : vector<2x8x8xf32> to vector<16x8xf32>
    %609 = vector.extract_strided_slice %512 {offsets = [24, 0], sizes = [8, 32], strides = [1, 1]} : vector<32x32xf32> to vector<8x32xf32>
    %cst_230 = arith.constant dense<0.000000e+00> : vector<16x32xf32>
    %610 = tpu.matmul %608, %609, %cst_230 {dimension_numbers = #tpu.dot_dimension_numbers<[1], [0], [0], [1], [0, 0, 1, 1], [], []>} : vector<16x8xf32>, vector<8x32xf32>, vector<16x32xf32> -> vector<16x32xf32>
    %611 = arith.addf %587, %610 : vector<16x32xf32>
    %612 = vector.broadcast %514 : vector<1x32xf32> to vector<16x32xf32>
    %613 = arith.addf %611, %612 : vector<16x32xf32>
    %614 = arith.addf %466, %613 : vector<16x32xf32>
    %c1_231 = arith.constant 1 : index
    %c0_232 = arith.constant 0 : index
    %c0_233 = arith.constant 0 : index
    %615 = vector.load %arg17[%c1_231, %c0_232, %c0_233] : memref<2x1x32xf32, #tpu.memory_space<vmem>>, vector<1x1x32xf32>
    %616 = vector.shape_cast %615 : vector<1x1x32xf32> to vector<1x32xf32>
    %c1_234 = arith.constant 1 : index
    %c0_235 = arith.constant 0 : index
    %c0_236 = arith.constant 0 : index
    %617 = vector.load %arg18[%c1_234, %c0_235, %c0_236] : memref<2x1x32xf32, #tpu.memory_space<vmem>>, vector<1x1x32xf32>
    %618 = vector.shape_cast %617 : vector<1x1x32xf32> to vector<1x32xf32>
    %cst_237 = arith.constant dense<0.000000e+00> : vector<16xf32>
    %619 = vector.multi_reduction <add>, %614, %cst_237 [1] : vector<16x32xf32> to vector<16xf32>
    %620 = vector.shape_cast %619 : vector<16xf32> to vector<16x1xf32>
    %cst_238 = arith.constant 3.200000e+01 : f32
    %621 = vector.broadcast %cst_238 : f32 to vector<16x1xf32>
    %622 = arith.divf %620, %621 : vector<16x1xf32>
    %623 = vector.broadcast %622 : vector<16x1xf32> to vector<16x32xf32>
    %624 = arith.subf %614, %623 : vector<16x32xf32>
    %625 = arith.mulf %624, %624 : vector<16x32xf32>
    %cst_239 = arith.constant dense<0.000000e+00> : vector<16xf32>
    %626 = vector.multi_reduction <add>, %625, %cst_239 [1] : vector<16x32xf32> to vector<16xf32>
    %627 = vector.shape_cast %626 : vector<16xf32> to vector<16x1xf32>
    %cst_240 = arith.constant 3.200000e+01 : f32
    %628 = vector.broadcast %cst_240 : f32 to vector<16x1xf32>
    %629 = arith.divf %627, %628 : vector<16x1xf32>
    %630 = vector.broadcast %622 : vector<16x1xf32> to vector<16x32xf32>
    %631 = arith.subf %614, %630 : vector<16x32xf32>
    %cst_241 = arith.constant 9.99999974E-6 : f32
    %632 = vector.broadcast %cst_241 : f32 to vector<16x1xf32>
    %633 = arith.addf %629, %632 : vector<16x1xf32>
    %634 = math.rsqrt %633 : vector<16x1xf32>
    %635 = vector.broadcast %634 : vector<16x1xf32> to vector<16x32xf32>
    %636 = arith.mulf %631, %635 : vector<16x32xf32>
    %637 = vector.broadcast %616 : vector<1x32xf32> to vector<16x32xf32>
    %638 = arith.mulf %636, %637 : vector<16x32xf32>
    %639 = vector.broadcast %618 : vector<1x32xf32> to vector<16x32xf32>
    %640 = arith.addf %638, %639 : vector<16x32xf32>
    %c1_242 = arith.constant 1 : index
    %c0_243 = arith.constant 0 : index
    %c0_244 = arith.constant 0 : index
    %641 = vector.load %arg19[%c1_242, %c0_243, %c0_244] : memref<2x32x64xf32, #tpu.memory_space<vmem>>, vector<1x32x64xf32>
    %642 = vector.shape_cast %641 : vector<1x32x64xf32> to vector<32x64xf32>
    %cst_245 = arith.constant dense<0.000000e+00> : vector<16x64xf32>
    %643 = tpu.matmul %640, %642, %cst_245 {dimension_numbers = #tpu.dot_dimension_numbers<[1], [0], [0], [1], [0, 0, 1, 1], [], []>} : vector<16x32xf32>, vector<32x64xf32>, vector<16x64xf32> -> vector<16x64xf32>
    %c1_246 = arith.constant 1 : index
    %c0_247 = arith.constant 0 : index
    %c0_248 = arith.constant 0 : index
    %644 = vector.load %arg20[%c1_246, %c0_247, %c0_248] : memref<2x1x64xf32, #tpu.memory_space<vmem>>, vector<1x1x64xf32>
    %645 = vector.shape_cast %644 : vector<1x1x64xf32> to vector<1x64xf32>
    %646 = vector.broadcast %645 : vector<1x64xf32> to vector<16x64xf32>
    %647 = arith.addf %643, %646 : vector<16x64xf32>
    %cst_249 = arith.constant 0.000000e+00 : f32
    %648 = vector.broadcast %cst_249 : f32 to vector<16x64xf32>
    %649 = arith.maximumf %647, %648 : vector<16x64xf32>
    %c1_250 = arith.constant 1 : index
    %c0_251 = arith.constant 0 : index
    %c0_252 = arith.constant 0 : index
    %650 = vector.load %arg21[%c1_250, %c0_251, %c0_252] : memref<2x64x32xf32, #tpu.memory_space<vmem>>, vector<1x64x32xf32>
    %651 = vector.shape_cast %650 : vector<1x64x32xf32> to vector<64x32xf32>
    %cst_253 = arith.constant dense<0.000000e+00> : vector<16x32xf32>
    %652 = tpu.matmul %649, %651, %cst_253 {dimension_numbers = #tpu.dot_dimension_numbers<[1], [0], [0], [1], [0, 0, 1, 1], [], []>} : vector<16x64xf32>, vector<64x32xf32>, vector<16x32xf32> -> vector<16x32xf32>
    %653 = arith.addf %614, %652 : vector<16x32xf32>
    %c1_254 = arith.constant 1 : index
    %c0_255 = arith.constant 0 : index
    %c0_256 = arith.constant 0 : index
    %654 = vector.load %arg22[%c1_254, %c0_255, %c0_256] : memref<2x1x32xf32, #tpu.memory_space<vmem>>, vector<1x1x32xf32>
    %655 = vector.shape_cast %654 : vector<1x1x32xf32> to vector<1x32xf32>
    %656 = vector.broadcast %655 : vector<1x32xf32> to vector<16x32xf32>
    %657 = arith.addf %653, %656 : vector<16x32xf32>
    %c0_257 = arith.constant 0 : index
    %c0_258 = arith.constant 0 : index
    %658 = vector.load %arg23[%c0_257, %c0_258] : memref<1x32xf32, #tpu.memory_space<vmem>>, vector<1x32xf32>
    %c0_259 = arith.constant 0 : index
    %c0_260 = arith.constant 0 : index
    %659 = vector.load %arg24[%c0_259, %c0_260] : memref<1x32xf32, #tpu.memory_space<vmem>>, vector<1x32xf32>
    %cst_261 = arith.constant dense<0.000000e+00> : vector<16xf32>
    %660 = vector.multi_reduction <add>, %657, %cst_261 [1] : vector<16x32xf32> to vector<16xf32>
    %661 = vector.shape_cast %660 : vector<16xf32> to vector<16x1xf32>
    %cst_262 = arith.constant 3.200000e+01 : f32
    %662 = vector.broadcast %cst_262 : f32 to vector<16x1xf32>
    %663 = arith.divf %661, %662 : vector<16x1xf32>
    %664 = vector.broadcast %663 : vector<16x1xf32> to vector<16x32xf32>
    %665 = arith.subf %657, %664 : vector<16x32xf32>
    %666 = arith.mulf %665, %665 : vector<16x32xf32>
    %cst_263 = arith.constant dense<0.000000e+00> : vector<16xf32>
    %667 = vector.multi_reduction <add>, %666, %cst_263 [1] : vector<16x32xf32> to vector<16xf32>
    %668 = vector.shape_cast %667 : vector<16xf32> to vector<16x1xf32>
    %cst_264 = arith.constant 3.200000e+01 : f32
    %669 = vector.broadcast %cst_264 : f32 to vector<16x1xf32>
    %670 = arith.divf %668, %669 : vector<16x1xf32>
    %671 = vector.broadcast %663 : vector<16x1xf32> to vector<16x32xf32>
    %672 = arith.subf %657, %671 : vector<16x32xf32>
    %cst_265 = arith.constant 9.99999974E-6 : f32
    %673 = vector.broadcast %cst_265 : f32 to vector<16x1xf32>
    %674 = arith.addf %670, %673 : vector<16x1xf32>
    %675 = math.rsqrt %674 : vector<16x1xf32>
    %676 = vector.broadcast %675 : vector<16x1xf32> to vector<16x32xf32>
    %677 = arith.mulf %672, %676 : vector<16x32xf32>
    %678 = vector.broadcast %658 : vector<1x32xf32> to vector<16x32xf32>
    %679 = arith.mulf %677, %678 : vector<16x32xf32>
    %680 = vector.broadcast %659 : vector<1x32xf32> to vector<16x32xf32>
    %681 = arith.addf %679, %680 : vector<16x32xf32>
    %c0_266 = arith.constant 0 : index
    %c0_267 = arith.constant 0 : index
    %682 = vector.load %arg25[%c0_266, %c0_267] : memref<16x32xf32, #tpu.memory_space<vmem>>, vector<16x32xf32>
    tpu.vector_store %arg25[%c0_266, %c0_267], %681 {strides = array<i32>} : memref<16x32xf32, #tpu.memory_space<vmem>>, vector<16x32xf32>,
    return
  }
}

</mosaic_0001>

<llo_original>
// kernel: decoder_forward.1
$region0: #{decoder_forward.1}
  #allocation0 [shape = 'u32[]', space=smem, size = 0x4, offset = 0x4, fixed_abs, tag = 'smem constant byte address 0x4 - core index']
  #allocation1 [shape = 'u32[144,128]{1,0:T(1,128)}', space=vmem, size = 0x12000, scoped, tag = 'internal scratch']
  %s0 = inlined_call_operand.vmem [shape: f32[16,32], index: 0, kind: input, shape index: {}]
  %s1 = inlined_call_operand.vmem [shape: f32[16,32], index: 1, kind: input, shape index: {}]
  %s2 = inlined_call_operand.vmem [shape: f32[2,1,8], index: 2, kind: input, shape index: {}]
  %s3 = inlined_call_operand.vmem [shape: f32[2,1,32], index: 3, kind: input, shape index: {}]
  %s4 = inlined_call_operand.vmem [shape: f32[2,1,32], index: 4, kind: input, shape index: {}]
  %s5 = inlined_call_operand.vmem [shape: f32[2,32,96], index: 5, kind: input, shape index: {}]
  %s6 = inlined_call_operand.vmem [shape: f32[2,1,96], index: 6, kind: input, shape index: {}]
  %s7 = inlined_call_operand.vmem [shape: f32[2,32,32], index: 7, kind: input, shape index: {}]
  %s8 = inlined_call_operand.vmem [shape: f32[2,1,32], index: 8, kind: input, shape index: {}]
  %s9 = inlined_call_operand.vmem [shape: f32[2,1,32], index: 9, kind: input, shape index: {}]
  %s10 = inlined_call_operand.vmem [shape: f32[2,1,32], index: 10, kind: input, shape index: {}]
  %s11 = inlined_call_operand.vmem [shape: f32[2,32,32], index: 11, kind: input, shape index: {}]
  %s12 = inlined_call_operand.vmem [shape: f32[2,1,32], index: 12, kind: input, shape index: {}]
  %s13 = inlined_call_operand.vmem [shape: f32[2,32,64], index: 13, kind: input, shape index: {}]
  %s14 = inlined_call_operand.vmem [shape: f32[2,1,64], index: 14, kind: input, shape index: {}]
  %s15 = inlined_call_operand.vmem [shape: f32[2,32,32], index: 15, kind: input, shape index: {}]
  %s16 = inlined_call_operand.vmem [shape: f32[2,1,32], index: 16, kind: input, shape index: {}]
  %s17 = inlined_call_operand.vmem [shape: f32[2,1,32], index: 17, kind: input, shape index: {}]
  %s18 = inlined_call_operand.vmem [shape: f32[2,1,32], index: 18, kind: input, shape index: {}]
  %s19 = inlined_call_operand.vmem [shape: f32[2,32,64], index: 19, kind: input, shape index: {}]
  %s20 = inlined_call_operand.vmem [shape: f32[2,1,64], index: 20, kind: input, shape index: {}]
  %s21 = inlined_call_operand.vmem [shape: f32[2,64,32], index: 21, kind: input, shape index: {}]
  %s22 = inlined_call_operand.vmem [shape: f32[2,1,32], index: 22, kind: input, shape index: {}]
  %s23 = inlined_call_operand.vmem [shape: f32[1,32], index: 23, kind: input, shape index: {}]
  %s24 = inlined_call_operand.vmem [shape: f32[1,32], index: 24, kind: input, shape index: {}]
  %s25 = inlined_call_operand.hbm [shape: f32[16,32], index: 25, kind: output, shape index: {}]
  %s26 = sld [smem:[#allocation0]]
  $region110: #{decoder_forward.1} parent=0
    _
  %s28 = ssub.s32 1, %s26
  %s29 = scalar_select 0, %s28, %s26
  $region1: #{decoder_forward.1} parent=0
    #allocation2 [shape = 'u8[8192]{0}', space=vmem, size = 0x2000, scoped, tag = 'output window, operand 0, single buffered']
    #allocation3 [shape = 's32[1]{0}', space=sflag, size = 0x4, scoped, tag = 'scoped memory for decoder_forward.1']
    %30 = vsyncpa [#allocation3], 0
    // Predicated region
    $region2: #{decoder_forward.1} parent=1 // pred_check
      _
    $region3: #{decoder_forward.1} parent=1 // pred_check_branch
      %32 = sbr.rel (0) target = $region5
    $region4: #{decoder_forward.1} parent=1 // pred_region
      _
    $region5: #{decoder_forward.1} parent=1 // pred_fallthru
      _
    // Predicated region
    $region6: #{decoder_forward.1} parent=1 // pred_check
      _
    $region7: #{decoder_forward.1} parent=1 // pred_check_branch
      %34 = sbr.rel (0) target = $region9
    $region8: #{decoder_forward.1} parent=1 // pred_region
      _
    $region9: #{decoder_forward.1} parent=1 // pred_fallthru
      _
    // Predicated region
    $region10: #{decoder_forward.1} parent=1 // pred_check
      _
    $region11: #{decoder_forward.1} parent=1 // pred_check_branch
      %36 = sbr.rel (0) target = $region13
    $region12: #{decoder_forward.1} parent=1 // pred_region
      _
    $region13: #{decoder_forward.1} parent=1 // pred_fallthru
      _
    // Predicated region
    $region14: #{decoder_forward.1} parent=1 // pred_check
      _
    $region15: #{decoder_forward.1} parent=1 // pred_check_branch
      %38 = sbr.rel (0) target = $region17
    $region16: #{decoder_forward.1} parent=1 // pred_region
      _
    $region17: #{decoder_forward.1} parent=1 // pred_fallthru
      _
    // Predicated region
    $region18: #{decoder_forward.1} parent=1 // pred_check
      _
    $region19: #{decoder_forward.1} parent=1 // pred_check_branch
      %40 = sbr.rel (0) target = $region21
    $region20: #{decoder_forward.1} parent=1 // pred_region
      _
    $region21: #{decoder_forward.1} parent=1 // pred_fallthru
      _
    // Predicated region
    $region22: #{decoder_forward.1} parent=1 // pred_check
      _
    $region23: #{decoder_forward.1} parent=1 // pred_check_branch
      %42 = sbr.rel (0) target = $region25
    $region24: #{decoder_forward.1} parent=1 // pred_region
      _
    $region25: #{decoder_forward.1} parent=1 // pred_fallthru
      _
    // Predicated region
    $region26: #{decoder_forward.1} parent=1 // pred_check
      _
    $region27: #{decoder_forward.1} parent=1 // pred_check_branch
      %44 = sbr.rel (0) target = $region29
    $region28: #{decoder_forward.1} parent=1 // pred_region
      _
    $region29: #{decoder_forward.1} parent=1 // pred_fallthru
      _
    // Predicated region
    $region30: #{decoder_forward.1} parent=1 // pred_check
      _
    $region31: #{decoder_forward.1} parent=1 // pred_check_branch
      %46 = sbr.rel (0) target = $region33
    $region32: #{decoder_forward.1} parent=1 // pred_region
      _
    $region33: #{decoder_forward.1} parent=1 // pred_fallthru
      _
    // Predicated region
    $region34: #{decoder_forward.1} parent=1 // pred_check
      _
    $region35: #{decoder_forward.1} parent=1 // pred_check_branch
      %48 = sbr.rel (0) target = $region37
    $region36: #{decoder_forward.1} parent=1 // pred_region
      _
    $region37: #{decoder_forward.1} parent=1 // pred_fallthru
      _
    // Predicated region
    $region38: #{decoder_forward.1} parent=1 // pred_check
      _
    $region39: #{decoder_forward.1} parent=1 // pred_check_branch
      %50 = sbr.rel (0) target = $region41
    $region40: #{decoder_forward.1} parent=1 // pred_region
      _
    $region41: #{decoder_forward.1} parent=1 // pred_fallthru
      _
    // Predicated region
    $region42: #{decoder_forward.1} parent=1 // pred_check
      _
    $region43: #{decoder_forward.1} parent=1 // pred_check_branch
      %52 = sbr.rel (0) target = $region45
    $region44: #{decoder_forward.1} parent=1 // pred_region
      _
    $region45: #{decoder_forward.1} parent=1 // pred_fallthru
      _
    // Predicated region
    $region46: #{decoder_forward.1} parent=1 // pred_check
      _
    $region47: #{decoder_forward.1} parent=1 // pred_check_branch
      %54 = sbr.rel (0) target = $region49
    $region48: #{decoder_forward.1} parent=1 // pred_region
      _
    $region49: #{decoder_forward.1} parent=1 // pred_fallthru
      _
    // Predicated region
    $region50: #{decoder_forward.1} parent=1 // pred_check
      _
    $region51: #{decoder_forward.1} parent=1 // pred_check_branch
      %56 = sbr.rel (0) target = $region53
    $region52: #{decoder_forward.1} parent=1 // pred_region
      _
    $region53: #{decoder_forward.1} parent=1 // pred_fallthru
      _
    // Predicated region
    $region54: #{decoder_forward.1} parent=1 // pred_check
      _
    $region55: #{decoder_forward.1} parent=1 // pred_check_branch
      %58 = sbr.rel (0) target = $region57
    $region56: #{decoder_forward.1} parent=1 // pred_region
      _
    $region57: #{decoder_forward.1} parent=1 // pred_fallthru
      _
    // Predicated region
    $region58: #{decoder_forward.1} parent=1 // pred_check
      _
    $region59: #{decoder_forward.1} parent=1 // pred_check_branch
      %60 = sbr.rel (0) target = $region61
    $region60: #{decoder_forward.1} parent=1 // pred_region
      _
    $region61: #{decoder_forward.1} parent=1 // pred_fallthru
      _
    // Predicated region
    $region62: #{decoder_forward.1} parent=1 // pred_check
      _
    $region63: #{decoder_forward.1} parent=1 // pred_check_branch
      %62 = sbr.rel (0) target = $region65
    $region64: #{decoder_forward.1} parent=1 // pred_region
      _
    $region65: #{decoder_forward.1} parent=1 // pred_fallthru
      _
    // Predicated region
    $region66: #{decoder_forward.1} parent=1 // pred_check
      _
    $region67: #{decoder_forward.1} parent=1 // pred_check_branch
      %64 = sbr.rel (0) target = $region69
    $region68: #{decoder_forward.1} parent=1 // pred_region
      _
    $region69: #{decoder_forward.1} parent=1 // pred_fallthru
      _
    // Predicated region
    $region70: #{decoder_forward.1} parent=1 // pred_check
      _
    $region71: #{decoder_forward.1} parent=1 // pred_check_branch
      %66 = sbr.rel (0) target = $region73
    $region72: #{decoder_forward.1} parent=1 // pred_region
      _
    $region73: #{decoder_forward.1} parent=1 // pred_fallthru
      _
    // Predicated region
    $region74: #{decoder_forward.1} parent=1 // pred_check
      _
    $region75: #{decoder_forward.1} parent=1 // pred_check_branch
      %68 = sbr.rel (0) target = $region77
    $region76: #{decoder_forward.1} parent=1 // pred_region
      _
    $region77: #{decoder_forward.1} parent=1 // pred_fallthru
      _
    // Predicated region
    $region78: #{decoder_forward.1} parent=1 // pred_check
      _
    $region79: #{decoder_forward.1} parent=1 // pred_check_branch
      %70 = sbr.rel (0) target = $region81
    $region80: #{decoder_forward.1} parent=1 // pred_region
      _
    $region81: #{decoder_forward.1} parent=1 // pred_fallthru
      _
    // Predicated region
    $region82: #{decoder_forward.1} parent=1 // pred_check
      _
    $region83: #{decoder_forward.1} parent=1 // pred_check_branch
      %72 = sbr.rel (0) target = $region85
    $region84: #{decoder_forward.1} parent=1 // pred_region
      _
    $region85: #{decoder_forward.1} parent=1 // pred_fallthru
      _
    // Predicated region
    $region86: #{decoder_forward.1} parent=1 // pred_check
      _
    $region87: #{decoder_forward.1} parent=1 // pred_check_branch
      %74 = sbr.rel (0) target = $region89
    $region88: #{decoder_forward.1} parent=1 // pred_region
      _
    $region89: #{decoder_forward.1} parent=1 // pred_fallthru
      _
    // Predicated region
    $region90: #{decoder_forward.1} parent=1 // pred_check
      _
    $region91: #{decoder_forward.1} parent=1 // pred_check_branch
      %76 = sbr.rel (0) target = $region93
    $region92: #{decoder_forward.1} parent=1 // pred_region
      _
    $region93: #{decoder_forward.1} parent=1 // pred_fallthru
      _
    // Predicated region
    $region94: #{decoder_forward.1} parent=1 // pred_check
      _
    $region95: #{decoder_forward.1} parent=1 // pred_check_branch
      %78 = sbr.rel (0) target = $region97
    $region96: #{decoder_forward.1} parent=1 // pred_region
      _
    $region97: #{decoder_forward.1} parent=1 // pred_fallthru
      _
    // Predicated region
    $region98: #{decoder_forward.1} parent=1 // pred_check
      _
    $region99: #{decoder_forward.1} parent=1 // pred_check_branch
      %80 = sbr.rel (0) target = $region101
    $region100: #{decoder_forward.1} parent=1 // pred_region
      _
    $region101: #{decoder_forward.1} parent=1 // pred_fallthru
      _
    %v81 = vld [vmem:[%s0] sm:$0xff]
    %v82 = vld [vmem:[%s0 + $0x8] sm:$0xff]
    %v83 = vld [vmem:[%s1] sm:$0xff]
    %v84 = vld [vmem:[%s1 + $0x8] sm:$0xff]
    %v85 = vld [vmem:[%s2] sm:$0x1]
    %v86 = vld [vmem:[%s2 + $0x1] sm:$0x1]
    %vm87 = vcmp.eq.f32.partialorder %v85, 0.0
    %vm88 = vcmp.eq.f32.partialorder %v86, 0.0
    %v89 = vsel %vm87, -1e+09, 0.0
    %v90 = vsel %vm88, -1e+09, 0.0
    %v91 = vld [vmem:[%s3] sm:$0x1]
    %v92 = vld [vmem:[%s4] sm:$0x1]
    %vm93 = vcmask 261120
    %v94 = vsel %vm93, %v81, 0.0
    %95 = vadd.xlane.f32.xlu0 %v94
    %v96 = vpop.xlane.xlu0 %95
    %v97 = vsel %vm93, %v82, 0.0
    %98 = vadd.xlane.f32.xlu0 %v97
    %v99 = vpop.xlane.xlu0 %98
    %v100 = vrcp.pop 32.0
    %v101 = vmul.f32 %v96, %v100
    %v102 = vmul.f32 %v99, %v100
    %v103 = vsub.f32 %v81, %v101
    %v104 = vsub.f32 %v82, %v102
    %v105 = vmul.f32 %v103, %v103
    %v106 = vmul.f32 %v104, %v104
    %v107 = vsel %vm93, %v105, 0.0
    %108 = vadd.xlane.f32.xlu0 %v107
    %v109 = vpop.xlane.xlu0 %108
    %v110 = vsel %vm93, %v106, 0.0
    %111 = vadd.xlane.f32.xlu0 %v110
    %v112 = vpop.xlane.xlu0 %111
    %v113 = vmul.f32 %v109, %v100
    %v114 = vmul.f32 %v112, %v100
    %v115 = vadd.f32 %v113, 1e-05
    %v116 = vadd.f32 %v114, 1e-05
    %v117 = vrsqrt.pop %v115
    %v118 = vrsqrt.pop %v116
    %v119 = vmul.f32 %v103, %v117
    %v120 = vmul.f32 %v104, %v118
    %v122 = vlaneseq
    %v123 = vshrl.u32 %v122, 7
    %v124 = vsub.s32 0, %v123
    %v125 = vrot.slane %v91, %v124
    %v127 = vmul.f32 %v119, %v125
    %v128 = vmul.f32 %v120, %v125
    %v130 = vlaneseq
    %v131 = vshrl.u32 %v130, 7
    %v132 = vsub.s32 0, %v131
    %v133 = vrot.slane %v92, %v132
    %v135 = vadd.f32 %v127, %v133
    %v136 = vadd.f32 %v128, %v133
    %v137 = vld [vmem:[%s5] sm:$0xff]
    %v138 = vld [vmem:[%s5 + $0x8] sm:$0xff]
    %v139 = vld [vmem:[%s5 + $0x10] sm:$0xff]
    %v140 = vld [vmem:[%s5 + $0x18] sm:$0xff]
    %v141 = vld [vmem:[%s6] sm:$0x1]
    %v143 = vlaneseq
    %v144 = vshrl.u32 %v143, 7
    %v145 = vsub.s32 0, %v144
    %v146 = vrot.slane %v141, %v145
    %v149 = vsel %vm93, %v135, 0
    %v152 = vsel %vm93, %v136, 0
    %154 = vmatprep.subr.mxu0 0.0
    %155 = vmatpush1.msra.mxu0 %v137
    %156 = vmatprep.subr.mxu0 0.0
    %157 = vmatpush1.msra.mxu0 %v138
    %158 = vmatprep.subr.mxu0 0.0
    %159 = vmatpush1.msra.mxu0 %v139
    %160 = vmatprep.subr.mxu0 0.0
    %161 = vmatpush1.msra.mxu0 %v140
    %162 = vmatprep.subr.mxu0 0.0
    %163 = vmatpush1.msra.mxu0 0.0
    %164 = vmatprep.subr.mxu0 0.0
    %165 = vmatpush1.msra.mxu0 0.0
    %166 = vmatprep.subr.mxu0 0.0
    %167 = vmatpush1.msra.mxu0 0.0
    %168 = vmatprep.subr.mxu0 0.0
    %169 = vmatpush1.msra.mxu0 0.0
    %170 = vmatprep.subr.mxu0 0.0
    %171 = vmatpush1.msra.mxu0 0.0
    %172 = vmatprep.subr.mxu0 0.0
    %173 = vmatpush1.msra.mxu0 0.0
    %174 = vmatprep.subr.mxu0 0.0
    %175 = vmatpush1.msra.mxu0 0.0
    %176 = vmatprep.subr.mxu0 0.0
    %177 = vmatpush1.msra.mxu0 0.0
    %178 = vmatprep.subr.mxu0 0.0
    %179 = vmatpush1.msra.mxu0 0.0
    %180 = vmatprep.subr.mxu0 0.0
    %181 = vmatpush1.msra.mxu0 0.0
    %182 = vmatprep.subr.mxu0 0.0
    %183 = vmatpush1.msra.mxu0 0.0
    %184 = vmatprep.subr.mxu0 0.0
    %185 = vmatpush1.msra.mxu0 0.0
    %186 = vmatprep.subr.mxu0 0.0
    %187 = vmatpush1.msra.mxu0 0.0
    %188 = vmatprep.subr.mxu0 0.0
    %189 = vmatpush1.msra.mxu0 0.0
    %190 = vmatprep.subr.mxu0 0.0
    %191 = vmatpush1.msra.mxu0 0.0
    %192 = vmatprep.subr.mxu0 0.0
    %193 = vmatpush1.msra.mxu0 0.0
    %194 = vmatprep.subr.mxu0 0.0
    %195 = vmatpush1.msra.mxu0 0.0
    %196 = vmatprep.subr.mxu0 0.0
    %197 = vmatpush1.msra.mxu0 0.0
    %198 = vmatprep.subr.mxu0 0.0
    %199 = vmatpush1.msra.mxu0 0.0
    %200 = vmatprep.subr.mxu0 0.0
    %201 = vmatpush1.msra.mxu0 0.0
    %202 = vmatprep.subr.mxu0 0.0
    %203 = vmatpush1.msra.mxu0 0.0
    %204 = vmatprep.subr.mxu0 0.0
    %205 = vmatpush1.msra.mxu0 0.0
    %206 = vmatprep.subr.mxu0 0.0
    %207 = vmatpush1.msra.mxu0 0.0
    %208 = vmatprep.subr.mxu0 0.0
    %209 = vmatpush1.msra.mxu0 0.0
    %210 = vmatprep.subr.mxu0 0.0
    %211 = vmatpush1.msra.mxu0 0.0
    %212 = vmatprep.subr.mxu0 0.0
    %213 = vmatpush1.msra.mxu0 0.0
    %214 = vmatprep.subr.mxu0 0.0
    %215 = vmatpush1.msra.mxu0 0.0
    %216 = vmatprep.subr.mxu0 0.0
    %217 = vmatpush1.msra.mxu0 0.0
    %218 = vmatprep.mubr.f32.mxu0 0.0
    %219 = vmatmul.mubr.f32.gmra.mrb[0].mxu0 %v149
    %v220 = vpop.f32.mrb[0].mxu0
    %v221 = vadd.f32 %v146, %v220
    %v222 = vpop.f32.mrb[0].mxu0
    %223 = vmatprep.mubr.f32.mxu0 0.0
    %224 = vmatmul.mubr.f32.gmra.mrb[0].mxu0 %v152
    %v225 = vpop.f32.mrb[0].mxu0
    %v226 = vadd.f32 %v146, %v225
    %v227 = vpop.f32.mrb[0].mxu0
    %228 = vdwg.mxu0
    %v229 = vmul.f32 %v221, 0.35355338
    %v230 = vmul.f32 %v226, 0.35355338
    %v231 = vld [vmem:[%s7] sm:$0xff]
    %v232 = vld [vmem:[%s7 + $0x8] sm:$0xff]
    %v233 = vld [vmem:[%s7 + $0x10] sm:$0xff]
    %v234 = vld [vmem:[%s7 + $0x18] sm:$0xff]
    %v235 = vld [vmem:[%s8] sm:$0x1]
    %237 = vrot.lane.b32.xlu0 %v221, 96
    %v238 = vpop.permute.xlu0 %237
    %vm239 = vcmask 64512
    %v241 = vsel %vm239, %v229, 0
    %v243 = vsel %vm239, %v238, 0
    %245 = vmatprep.subr.mxu0 0.0
    %246 = vmatpush1.xpose.msra.mxu0 %v243
    %247 = vmatprep.subr.mxu0 0.0
    %248 = vmatpush1.xpose.msra.mxu0 0.0
    %249 = vmatprep.subr.mxu0 0.0
    %250 = vmatpush1.xpose.msra.mxu0 0.0
    %251 = vmatprep.subr.mxu0 0.0
    %252 = vmatpush1.xpose.msra.mxu0 0.0
    %253 = vmatprep.subr.mxu0 0.0
    %254 = vmatpush1.xpose.msra.mxu0 0.0
    %255 = vmatprep.subr.mxu0 0.0
    %256 = vmatpush1.xpose.msra.mxu0 0.0
    %257 = vmatprep.subr.mxu0 0.0
    %258 = vmatpush1.xpose.msra.mxu0 0.0
    %259 = vmatprep.subr.mxu0 0.0
    %260 = vmatpush1.xpose.msra.mxu0 0.0
    %261 = vmatprep.subr.mxu0 0.0
    %262 = vmatpush1.xpose.msra.mxu0 0.0
    %263 = vmatprep.subr.mxu0 0.0
    %264 = vmatpush1.xpose.msra.mxu0 0.0
    %265 = vmatprep.subr.mxu0 0.0
    %266 = vmatpush1.xpose.msra.mxu0 0.0
    %267 = vmatprep.subr.mxu0 0.0
    %268 = vmatpush1.xpose.msra.mxu0 0.0
    %269 = vmatprep.subr.mxu0 0.0
    %270 = vmatpush1.xpose.msra.mxu0 0.0
    %271 = vmatprep.subr.mxu0 0.0
    %272 = vmatpush1.xpose.msra.mxu0 0.0
    %273 = vmatprep.subr.mxu0 0.0
    %274 = vmatpush1.xpose.msra.mxu0 0.0
    %275 = vmatprep.subr.mxu0 0.0
    %276 = vmatpush1.xpose.msra.mxu0 0.0
    %277 = vmatprep.subr.mxu0 0.0
    %278 = vmatpush1.xpose.msra.mxu0 0.0
    %279 = vmatprep.subr.mxu0 0.0
    %280 = vmatpush1.xpose.msra.mxu0 0.0
    %281 = vmatprep.subr.mxu0 0.0
    %282 = vmatpush1.xpose.msra.mxu0 0.0
    %283 = vmatprep.subr.mxu0 0.0
    %284 = vmatpush1.xpose.msra.mxu0 0.0
    %285 = vmatprep.subr.mxu0 0.0
    %286 = vmatpush1.xpose.msra.mxu0 0.0
    %287 = vmatprep.subr.mxu0 0.0
    %288 = vmatpush1.xpose.msra.mxu0 0.0
    %289 = vmatprep.subr.mxu0 0.0
    %290 = vmatpush1.xpose.msra.mxu0 0.0
    %291 = vmatprep.subr.mxu0 0.0
    %292 = vmatpush1.xpose.msra.mxu0 0.0
    %293 = vmatprep.subr.mxu0 0.0
    %294 = vmatpush1.xpose.msra.mxu0 0.0
    %295 = vmatprep.subr.mxu0 0.0
    %296 = vmatpush1.xpose.msra.mxu0 0.0
    %297 = vmatprep.subr.mxu0 0.0
    %298 = vmatpush1.xpose.msra.mxu0 0.0
    %299 = vmatprep.subr.mxu0 0.0
    %300 = vmatpush1.xpose.msra.mxu0 0.0
    %301 = vmatprep.subr.mxu0 0.0
    %302 = vmatpush1.xpose.msra.mxu0 0.0
    %303 = vmatprep.subr.mxu0 0.0
    %304 = vmatpush1.xpose.msra.mxu0 0.0
    %305 = vmatprep.subr.mxu0 0.0
    %306 = vmatpush1.xpose.msra.mxu0 0.0
    %307 = vmatprep.subr.mxu0 0.0
    %308 = vmatpush1.xpose.msra.mxu0 0.0
    %309 = vmatprep.mubr.f32.mxu0 0.0
    %310 = vmatmul.mubr.f32.gmra.mrb[0].mxu0 %v241
    %v311 = vpop.f32.mrb[0].mxu0
    %v312 = vadd.f32 0.0, %v311
    %v313 = vpop.f32.mrb[0].mxu0
    %314 = vdwg.mxu0
    %316 = vrot.lane.b32.xlu0 %v226, 96
    %v317 = vpop.permute.xlu0 %316
    %v319 = vsel %vm239, %v230, 0
    %v321 = vsel %vm239, %v317, 0
    %323 = vmatprep.subr.mxu0 0.0
    %324 = vmatpush1.xpose.msra.mxu0 %v321
    %325 = vmatprep.subr.mxu0 0.0
    %326 = vmatpush1.xpose.msra.mxu0 0.0
    %327 = vmatprep.subr.mxu0 0.0
    %328 = vmatpush1.xpose.msra.mxu0 0.0
    %329 = vmatprep.subr.mxu0 0.0
    %330 = vmatpush1.xpose.msra.mxu0 0.0
    %331 = vmatprep.subr.mxu0 0.0
    %332 = vmatpush1.xpose.msra.mxu0 0.0
    %333 = vmatprep.subr.mxu0 0.0
    %334 = vmatpush1.xpose.msra.mxu0 0.0
    %335 = vmatprep.subr.mxu0 0.0
    %336 = vmatpush1.xpose.msra.mxu0 0.0
    %337 = vmatprep.subr.mxu0 0.0
    %338 = vmatpush1.xpose.msra.mxu0 0.0
    %339 = vmatprep.subr.mxu0 0.0
    %340 = vmatpush1.xpose.msra.mxu0 0.0
    %341 = vmatprep.subr.mxu0 0.0
    %342 = vmatpush1.xpose.msra.mxu0 0.0
    %343 = vmatprep.subr.mxu0 0.0
    %344 = vmatpush1.xpose.msra.mxu0 0.0
    %345 = vmatprep.subr.mxu0 0.0
    %346 = vmatpush1.xpose.msra.mxu0 0.0
    %347 = vmatprep.subr.mxu0 0.0
    %348 = vmatpush1.xpose.msra.mxu0 0.0
    %349 = vmatprep.subr.mxu0 0.0
    %350 = vmatpush1.xpose.msra.mxu0 0.0
    %351 = vmatprep.subr.mxu0 0.0
    %352 = vmatpush1.xpose.msra.mxu0 0.0
    %353 = vmatprep.subr.mxu0 0.0
    %354 = vmatpush1.xpose.msra.mxu0 0.0
    %355 = vmatprep.subr.mxu0 0.0
    %356 = vmatpush1.xpose.msra.mxu0 0.0
    %357 = vmatprep.subr.mxu0 0.0
    %358 = vmatpush1.xpose.msra.mxu0 0.0
    %359 = vmatprep.subr.mxu0 0.0
    %360 = vmatpush1.xpose.msra.mxu0 0.0
    %361 = vmatprep.subr.mxu0 0.0
    %362 = vmatpush1.xpose.msra.mxu0 0.0
    %363 = vmatprep.subr.mxu0 0.0
    %364 = vmatpush1.xpose.msra.mxu0 0.0
    %365 = vmatprep.subr.mxu0 0.0
    %366 = vmatpush1.xpose.msra.mxu0 0.0
    %367 = vmatprep.subr.mxu0 0.0
    %368 = vmatpush1.xpose.msra.mxu0 0.0
    %369 = vmatprep.subr.mxu0 0.0
    %370 = vmatpush1.xpose.msra.mxu0 0.0
    %371 = vmatprep.subr.mxu0 0.0
    %372 = vmatpush1.xpose.msra.mxu0 0.0
    %373 = vmatprep.subr.mxu0 0.0
    %374 = vmatpush1.xpose.msra.mxu0 0.0
    %375 = vmatprep.subr.mxu0 0.0
    %376 = vmatpush1.xpose.msra.mxu0 0.0
    %377 = vmatprep.subr.mxu0 0.0
    %378 = vmatpush1.xpose.msra.mxu0 0.0
    %379 = vmatprep.subr.mxu0 0.0
    %380 = vmatpush1.xpose.msra.mxu0 0.0
    %381 = vmatprep.subr.mxu0 0.0
    %382 = vmatpush1.xpose.msra.mxu0 0.0
    %383 = vmatprep.subr.mxu0 0.0
    %384 = vmatpush1.xpose.msra.mxu0 0.0
    %385 = vmatprep.subr.mxu0 0.0
    %386 = vmatpush1.xpose.msra.mxu0 0.0
    %387 = vmatprep.mubr.f32.mxu0 0.0
    %388 = vmatmul.mubr.f32.gmra.mrb[0].mxu0 %v319
    %v389 = vpop.f32.mrb[0].mxu0
    %v390 = vadd.f32 0.0, %v389
    %v391 = vpop.f32.mrb[0].mxu0
    %392 = vdwg.mxu0
    %v393 = vsel %vm239, %v312, -inf
    %394 = vmax.xlane.f32.xlu0 %v393
    %v395 = vpop.xlane.xlu0 %394
    %v396 = vsel %vm239, %v390, -inf
    %397 = vmax.xlane.f32.xlu0 %v396
    %v398 = vpop.xlane.xlu0 %397
    %v399 = vsub.f32 %v312, %v395
    %v400 = vsub.f32 %v390, %v398
    %v401 = vmul.f32 %v399, 1.442695
    %v402 = vpow.pop %v401
    %v403 = vmul.f32 %v400, 1.442695
    %v404 = vpow.pop %v403
    %v405 = vsel %vm239, %v402, 0.0
    %406 = vadd.xlane.f32.xlu0 %v405
    %v407 = vpop.xlane.xlu0 %406
    %v408 = vsel %vm239, %v404, 0.0
    %409 = vadd.xlane.f32.xlu0 %v408
    %v410 = vpop.xlane.xlu0 %409
    %v411 = vrcp.pop %v407
    %v412 = vrcp.pop %v410
    %v413 = vmul.f32 %v402, %v411
    %v414 = vmul.f32 %v404, %v412
    %415 = vrot.lane.b32.xlu0 %v221, 64
    %v416 = vpop.permute.xlu0 %415
    %v419 = vsel %vm239, %v413, 0
    %421 = vmatprep.subr.mxu0 0.0
    %422 = vmatpush1.msra.mxu0 %v416
    %423 = vmatprep.subr.mxu0 0.0
    %424 = vmatpush1.msra.mxu0 0.0
    %425 = vmatprep.subr.mxu0 0.0
    %426 = vmatpush1.msra.mxu0 0.0
    %427 = vmatprep.subr.mxu0 0.0
    %428 = vmatpush1.msra.mxu0 0.0
    %429 = vmatprep.subr.mxu0 0.0
    %430 = vmatpush1.msra.mxu0 0.0
    %431 = vmatprep.subr.mxu0 0.0
    %432 = vmatpush1.msra.mxu0 0.0
    %433 = vmatprep.subr.mxu0 0.0
    %434 = vmatpush1.msra.mxu0 0.0
    %435 = vmatprep.subr.mxu0 0.0
    %436 = vmatpush1.msra.mxu0 0.0
    %437 = vmatprep.subr.mxu0 0.0
    %438 = vmatpush1.msra.mxu0 0.0
    %439 = vmatprep.subr.mxu0 0.0
    %440 = vmatpush1.msra.mxu0 0.0
    %441 = vmatprep.subr.mxu0 0.0
    %442 = vmatpush1.msra.mxu0 0.0
    %443 = vmatprep.subr.mxu0 0.0
    %444 = vmatpush1.msra.mxu0 0.0
    %445 = vmatprep.subr.mxu0 0.0
    %446 = vmatpush1.msra.mxu0 0.0
    %447 = vmatprep.subr.mxu0 0.0
    %448 = vmatpush1.msra.mxu0 0.0
    %449 = vmatprep.subr.mxu0 0.0
    %450 = vmatpush1.msra.mxu0 0.0
    %451 = vmatprep.subr.mxu0 0.0
    %452 = vmatpush1.msra.mxu0 0.0
    %453 = vmatprep.subr.mxu0 0.0
    %454 = vmatpush1.msra.mxu0 0.0
    %455 = vmatprep.subr.mxu0 0.0
    %456 = vmatpush1.msra.mxu0 0.0
    %457 = vmatprep.subr.mxu0 0.0
    %458 = vmatpush1.msra.mxu0 0.0
    %459 = vmatprep.subr.mxu0 0.0
    %460 = vmatpush1.msra.mxu0 0.0
    %461 = vmatprep.subr.mxu0 0.0
    %462 = vmatpush1.msra.mxu0 0.0
    %463 = vmatprep.subr.mxu0 0.0
    %464 = vmatpush1.msra.mxu0 0.0
    %465 = vmatprep.subr.mxu0 0.0
    %466 = vmatpush1.msra.mxu0 0.0
    %467 = vmatprep.subr.mxu0 0.0
    %468 = vmatpush1.msra.mxu0 0.0
    %469 = vmatprep.subr.mxu0 0.0
    %470 = vmatpush1.msra.mxu0 0.0
    %471 = vmatprep.subr.mxu0 0.0
    %472 = vmatpush1.msra.mxu0 0.0
    %473 = vmatprep.subr.mxu0 0.0
    %474 = vmatpush1.msra.mxu0 0.0
    %475 = vmatprep.subr.mxu0 0.0
    %476 = vmatpush1.msra.mxu0 0.0
    %477 = vmatprep.subr.mxu0 0.0
    %478 = vmatpush1.msra.mxu0 0.0
    %479 = vmatprep.subr.mxu0 0.0
    %480 = vmatpush1.msra.mxu0 0.0
    %481 = vmatprep.subr.mxu0 0.0
    %482 = vmatpush1.msra.mxu0 0.0
    %483 = vmatprep.subr.mxu0 0.0
    %484 = vmatpush1.msra.mxu0 0.0
    %485 = vmatprep.mubr.f32.mxu0 0.0
    %486 = vmatmul.mubr.f32.gmra.mrb[0].mxu0 %v419
    %v487 = vpop.f32.mrb[0].mxu0
    %v488 = vadd.f32 0.0, %v487
    %v489 = vpop.f32.mrb[0].mxu0
    %490 = vdwg.mxu0
    %491 = vrot.lane.b32.xlu0 %v226, 64
    %v492 = vpop.permute.xlu0 %491
    %v495 = vsel %vm239, %v414, 0
    %497 = vmatprep.subr.mxu0 0.0
    %498 = vmatpush1.msra.mxu0 %v492
    %499 = vmatprep.subr.mxu0 0.0
    %500 = vmatpush1.msra.mxu0 0.0
    %501 = vmatprep.subr.mxu0 0.0
    %502 = vmatpush1.msra.mxu0 0.0
    %503 = vmatprep.subr.mxu0 0.0
    %504 = vmatpush1.msra.mxu0 0.0
    %505 = vmatprep.subr.mxu0 0.0
    %506 = vmatpush1.msra.mxu0 0.0
    %507 = vmatprep.subr.mxu0 0.0
    %508 = vmatpush1.msra.mxu0 0.0
    %509 = vmatprep.subr.mxu0 0.0
    %510 = vmatpush1.msra.mxu0 0.0
    %511 = vmatprep.subr.mxu0 0.0
    %512 = vmatpush1.msra.mxu0 0.0
    %513 = vmatprep.subr.mxu0 0.0
    %514 = vmatpush1.msra.mxu0 0.0
    %515 = vmatprep.subr.mxu0 0.0
    %516 = vmatpush1.msra.mxu0 0.0
    %517 = vmatprep.subr.mxu0 0.0
    %518 = vmatpush1.msra.mxu0 0.0
    %519 = vmatprep.subr.mxu0 0.0
    %520 = vmatpush1.msra.mxu0 0.0
    %521 = vmatprep.subr.mxu0 0.0
    %522 = vmatpush1.msra.mxu0 0.0
    %523 = vmatprep.subr.mxu0 0.0
    %524 = vmatpush1.msra.mxu0 0.0
    %525 = vmatprep.subr.mxu0 0.0
    %526 = vmatpush1.msra.mxu0 0.0
    %527 = vmatprep.subr.mxu0 0.0
    %528 = vmatpush1.msra.mxu0 0.0
    %529 = vmatprep.subr.mxu0 0.0
    %530 = vmatpush1.msra.mxu0 0.0
    %531 = vmatprep.subr.mxu0 0.0
    %532 = vmatpush1.msra.mxu0 0.0
    %533 = vmatprep.subr.mxu0 0.0
    %534 = vmatpush1.msra.mxu0 0.0
    %535 = vmatprep.subr.mxu0 0.0
    %536 = vmatpush1.msra.mxu0 0.0
    %537 = vmatprep.subr.mxu0 0.0
    %538 = vmatpush1.msra.mxu0 0.0
    %539 = vmatprep.subr.mxu0 0.0
    %540 = vmatpush1.msra.mxu0 0.0
    %541 = vmatprep.subr.mxu0 0.0
    %542 = vmatpush1.msra.mxu0 0.0
    %543 = vmatprep.subr.mxu0 0.0
    %544 = vmatpush1.msra.mxu0 0.0
    %545 = vmatprep.subr.mxu0 0.0
    %546 = vmatpush1.msra.mxu0 0.0
    %547 = vmatprep.subr.mxu0 0.0
    %548 = vmatpush1.msra.mxu0 0.0
    %549 = vmatprep.subr.mxu0 0.0
    %550 = vmatpush1.msra.mxu0 0.0
    %551 = vmatprep.subr.mxu0 0.0
    %552 = vmatpush1.msra.mxu0 0.0
    %553 = vmatprep.subr.mxu0 0.0
    %554 = vmatpush1.msra.mxu0 0.0
    %555 = vmatprep.subr.mxu0 0.0
    %556 = vmatpush1.msra.mxu0 0.0
    %557 = vmatprep.subr.mxu0 0.0
    %558 = vmatpush1.msra.mxu0 0.0
    %559 = vmatprep.subr.mxu0 0.0
    %560 = vmatpush1.msra.mxu0 0.0
    %561 = vmatprep.mubr.f32.mxu0 0.0
    %562 = vmatmul.mubr.f32.gmra.mrb[0].mxu0 %v495
    %v563 = vpop.f32.mrb[0].mxu0
    %v564 = vadd.f32 0.0, %v563
    %v565 = vpop.f32.mrb[0].mxu0
    %566 = vdwg.mxu0
    %567 = vrot.lane.b32.xlu0 %v229, 120
    %v568 = vpop.permute.xlu0 %567
    %569 = vrot.lane.b32.xlu0 %v221, 88
    %v570 = vpop.permute.xlu0 %569
    %v571 = vsel %vm239, %v568, 0
    %v573 = vsel %vm239, %v570, 0
    %575 = vmatprep.subr.mxu0 0.0
    %576 = vmatpush1.xpose.msra.mxu0 %v573
    %577 = vmatprep.subr.mxu0 0.0
    %578 = vmatpush1.xpose.msra.mxu0 0.0
    %579 = vmatprep.subr.mxu0 0.0
    %580 = vmatpush1.xpose.msra.mxu0 0.0
    %581 = vmatprep.subr.mxu0 0.0
    %582 = vmatpush1.xpose.msra.mxu0 0.0
    %583 = vmatprep.subr.mxu0 0.0
    %584 = vmatpush1.xpose.msra.mxu0 0.0
    %585 = vmatprep.subr.mxu0 0.0
    %586 = vmatpush1.xpose.msra.mxu0 0.0
    %587 = vmatprep.subr.mxu0 0.0
    %588 = vmatpush1.xpose.msra.mxu0 0.0
    %589 = vmatprep.subr.mxu0 0.0
    %590 = vmatpush1.xpose.msra.mxu0 0.0
    %591 = vmatprep.subr.mxu0 0.0
    %592 = vmatpush1.xpose.msra.mxu0 0.0
    %593 = vmatprep.subr.mxu0 0.0
    %594 = vmatpush1.xpose.msra.mxu0 0.0
    %595 = vmatprep.subr.mxu0 0.0
    %596 = vmatpush1.xpose.msra.mxu0 0.0
    %597 = vmatprep.subr.mxu0 0.0
    %598 = vmatpush1.xpose.msra.mxu0 0.0
    %599 = vmatprep.subr.mxu0 0.0
    %600 = vmatpush1.xpose.msra.mxu0 0.0
    %601 = vmatprep.subr.mxu0 0.0
    %602 = vmatpush1.xpose.msra.mxu0 0.0
    %603 = vmatprep.subr.mxu0 0.0
    %604 = vmatpush1.xpose.msra.mxu0 0.0
    %605 = vmatprep.subr.mxu0 0.0
    %606 = vmatpush1.xpose.msra.mxu0 0.0
    %607 = vmatprep.subr.mxu0 0.0
    %608 = vmatpush1.xpose.msra.mxu0 0.0
    %609 = vmatprep.subr.mxu0 0.0
    %610 = vmatpush1.xpose.msra.mxu0 0.0
    %611 = vmatprep.subr.mxu0 0.0
    %612 = vmatpush1.xpose.msra.mxu0 0.0
    %613 = vmatprep.subr.mxu0 0.0
    %614 = vmatpush1.xpose.msra.mxu0 0.0
    %615 = vmatprep.subr.mxu0 0.0
    %616 = vmatpush1.xpose.msra.mxu0 0.0
    %617 = vmatprep.subr.mxu0 0.0
    %618 = vmatpush1.xpose.msra.mxu0 0.0
    %619 = vmatprep.subr.mxu0 0.0
    %620 = vmatpush1.xpose.msra.mxu0 0.0
    %621 = vmatprep.subr.mxu0 0.0
    %622 = vmatpush1.xpose.msra.mxu0 0.0
    %623 = vmatprep.subr.mxu0 0.0
    %624 = vmatpush1.xpose.msra.mxu0 0.0
    %625 = vmatprep.subr.mxu0 0.0
    %626 = vmatpush1.xpose.msra.mxu0 0.0
    %627 = vmatprep.subr.mxu0 0.0
    %628 = vmatpush1.xpose.msra.mxu0 0.0
    %629 = vmatprep.subr.mxu0 0.0
    %630 = vmatpush1.xpose.msra.mxu0 0.0
    %631 = vmatprep.subr.mxu0 0.0
    %632 = vmatpush1.xpose.msra.mxu0 0.0
    %633 = vmatprep.subr.mxu0 0.0
    %634 = vmatpush1.xpose.msra.mxu0 0.0
    %635 = vmatprep.subr.mxu0 0.0
    %636 = vmatpush1.xpose.msra.mxu0 0.0
    %637 = vmatprep.subr.mxu0 0.0
    %638 = vmatpush1.xpose.msra.mxu0 0.0
    %639 = vmatprep.mubr.f32.mxu0 0.0
    %640 = vmatmul.mubr.f32.gmra.mrb[0].mxu0 %v571
    %v641 = vpop.f32.mrb[0].mxu0
    %v642 = vadd.f32 0.0, %v641
    %v643 = vpop.f32.mrb[0].mxu0
    %644 = vdwg.mxu0
    %645 = vrot.lane.b32.xlu0 %v230, 120
    %v646 = vpop.permute.xlu0 %645
    %647 = vrot.lane.b32.xlu0 %v226, 88
    %v648 = vpop.permute.xlu0 %647
    %v649 = vsel %vm239, %v646, 0
    %v651 = vsel %vm239, %v648, 0
    %653 = vmatprep.subr.mxu0 0.0
    %654 = vmatpush1.xpose.msra.mxu0 %v651
    %655 = vmatprep.subr.mxu0 0.0
    %656 = vmatpush1.xpose.msra.mxu0 0.0
    %657 = vmatprep.subr.mxu0 0.0
    %658 = vmatpush1.xpose.msra.mxu0 0.0
    %659 = vmatprep.subr.mxu0 0.0
    %660 = vmatpush1.xpose.msra.mxu0 0.0
    %661 = vmatprep.subr.mxu0 0.0
    %662 = vmatpush1.xpose.msra.mxu0 0.0
    %663 = vmatprep.subr.mxu0 0.0
    %664 = vmatpush1.xpose.msra.mxu0 0.0
    %665 = vmatprep.subr.mxu0 0.0
    %666 = vmatpush1.xpose.msra.mxu0 0.0
    %667 = vmatprep.subr.mxu0 0.0
    %668 = vmatpush1.xpose.msra.mxu0 0.0
    %669 = vmatprep.subr.mxu0 0.0
    %670 = vmatpush1.xpose.msra.mxu0 0.0
    %671 = vmatprep.subr.mxu0 0.0
    %672 = vmatpush1.xpose.msra.mxu0 0.0
    %673 = vmatprep.subr.mxu0 0.0
    %674 = vmatpush1.xpose.msra.mxu0 0.0
    %675 = vmatprep.subr.mxu0 0.0
    %676 = vmatpush1.xpose.msra.mxu0 0.0
    %677 = vmatprep.subr.mxu0 0.0
    %678 = vmatpush1.xpose.msra.mxu0 0.0
    %679 = vmatprep.subr.mxu0 0.0
    %680 = vmatpush1.xpose.msra.mxu0 0.0
    %681 = vmatprep.subr.mxu0 0.0
    %682 = vmatpush1.xpose.msra.mxu0 0.0
    %683 = vmatprep.subr.mxu0 0.0
    %684 = vmatpush1.xpose.msra.mxu0 0.0
    %685 = vmatprep.subr.mxu0 0.0
    %686 = vmatpush1.xpose.msra.mxu0 0.0
    %687 = vmatprep.subr.mxu0 0.0
    %688 = vmatpush1.xpose.msra.mxu0 0.0
    %689 = vmatprep.subr.mxu0 0.0
    %690 = vmatpush1.xpose.msra.mxu0 0.0
    %691 = vmatprep.subr.mxu0 0.0
    %692 = vmatpush1.xpose.msra.mxu0 0.0
    %693 = vmatprep.subr.mxu0 0.0
    %694 = vmatpush1.xpose.msra.mxu0 0.0
    %695 = vmatprep.subr.mxu0 0.0
    %696 = vmatpush1.xpose.msra.mxu0 0.0
    %697 = vmatprep.subr.mxu0 0.0
    %698 = vmatpush1.xpose.msra.mxu0 0.0
    %699 = vmatprep.subr.mxu0 0.0
    %700 = vmatpush1.xpose.msra.mxu0 0.0
    %701 = vmatprep.subr.mxu0 0.0
    %702 = vmatpush1.xpose.msra.mxu0 0.0
    %703 = vmatprep.subr.mxu0 0.0
    %704 = vmatpush1.xpose.msra.mxu0 0.0
    %705 = vmatprep.subr.mxu0 0.0
    %706 = vmatpush1.xpose.msra.mxu0 0.0
    %707 = vmatprep.subr.mxu0 0.0
    %708 = vmatpush1.xpose.msra.mxu0 0.0
    %709 = vmatprep.subr.mxu0 0.0
    %710 = vmatpush1.xpose.msra.mxu0 0.0
    %711 = vmatprep.subr.mxu0 0.0
    %712 = vmatpush1.xpose.msra.mxu0 0.0
    %713 = vmatprep.subr.mxu0 0.0
    %714 = vmatpush1.xpose.msra.mxu0 0.0
    %715 = vmatprep.subr.mxu0 0.0
    %716 = vmatpush1.xpose.msra.mxu0 0.0
    %717 = vmatprep.mubr.f32.mxu0 0.0
    %718 = vmatmul.mubr.f32.gmra.mrb[0].mxu0 %v649
    %v719 = vpop.f32.mrb[0].mxu0
    %v720 = vadd.f32 0.0, %v719
    %v721 = vpop.f32.mrb[0].mxu0
    %722 = vdwg.mxu0
    %v723 = vsel %vm239, %v642, -inf
    %724 = vmax.xlane.f32.xlu0 %v723
    %v725 = vpop.xlane.xlu0 %724
    %v726 = vsel %vm239, %v720, -inf
    %727 = vmax.xlane.f32.xlu0 %v726
    %v728 = vpop.xlane.xlu0 %727
    %v729 = vsub.f32 %v642, %v725
    %v730 = vsub.f32 %v720, %v728
    %v731 = vmul.f32 %v729, 1.442695
    %v732 = vpow.pop %v731
    %v733 = vmul.f32 %v730, 1.442695
    %v734 = vpow.pop %v733
    %v735 = vsel %vm239, %v732, 0.0
    %736 = vadd.xlane.f32.xlu0 %v735
    %v737 = vpop.xlane.xlu0 %736
    %v738 = vsel %vm239, %v734, 0.0
    %739 = vadd.xlane.f32.xlu0 %v738
    %v740 = vpop.xlane.xlu0 %739
    %v741 = vrcp.pop %v737
    %v742 = vrcp.pop %v740
    %v743 = vmul.f32 %v732, %v741
    %v744 = vmul.f32 %v734, %v742
    %745 = vrot.lane.b32.xlu0 %v221, 56
    %v746 = vpop.permute.xlu0 %745
    %v749 = vsel %vm239, %v743, 0
    %751 = vmatprep.subr.mxu0 0.0
    %752 = vmatpush1.msra.mxu0 %v746
    %753 = vmatprep.subr.mxu0 0.0
    %754 = vmatpush1.msra.mxu0 0.0
    %755 = vmatprep.subr.mxu0 0.0
    %756 = vmatpush1.msra.mxu0 0.0
    %757 = vmatprep.subr.mxu0 0.0
    %758 = vmatpush1.msra.mxu0 0.0
    %759 = vmatprep.subr.mxu0 0.0
    %760 = vmatpush1.msra.mxu0 0.0
    %761 = vmatprep.subr.mxu0 0.0
    %762 = vmatpush1.msra.mxu0 0.0
    %763 = vmatprep.subr.mxu0 0.0
    %764 = vmatpush1.msra.mxu0 0.0
    %765 = vmatprep.subr.mxu0 0.0
    %766 = vmatpush1.msra.mxu0 0.0
    %767 = vmatprep.subr.mxu0 0.0
    %768 = vmatpush1.msra.mxu0 0.0
    %769 = vmatprep.subr.mxu0 0.0
    %770 = vmatpush1.msra.mxu0 0.0
    %771 = vmatprep.subr.mxu0 0.0
    %772 = vmatpush1.msra.mxu0 0.0
    %773 = vmatprep.subr.mxu0 0.0
    %774 = vmatpush1.msra.mxu0 0.0
    %775 = vmatprep.subr.mxu0 0.0
    %776 = vmatpush1.msra.mxu0 0.0
    %777 = vmatprep.subr.mxu0 0.0
    %778 = vmatpush1.msra.mxu0 0.0
    %779 = vmatprep.subr.mxu0 0.0
    %780 = vmatpush1.msra.mxu0 0.0
    %781 = vmatprep.subr.mxu0 0.0
    %782 = vmatpush1.msra.mxu0 0.0
    %783 = vmatprep.subr.mxu0 0.0
    %784 = vmatpush1.msra.mxu0 0.0
    %785 = vmatprep.subr.mxu0 0.0
    %786 = vmatpush1.msra.mxu0 0.0
    %787 = vmatprep.subr.mxu0 0.0
    %788 = vmatpush1.msra.mxu0 0.0
    %789 = vmatprep.subr.mxu0 0.0
    %790 = vmatpush1.msra.mxu0 0.0
    %791 = vmatprep.subr.mxu0 0.0
    %792 = vmatpush1.msra.mxu0 0.0
    %793 = vmatprep.subr.mxu0 0.0
    %794 = vmatpush1.msra.mxu0 0.0
    %795 = vmatprep.subr.mxu0 0.0
    %796 = vmatpush1.msra.mxu0 0.0
    %797 = vmatprep.subr.mxu0 0.0
    %798 = vmatpush1.msra.mxu0 0.0
    %799 = vmatprep.subr.mxu0 0.0
    %800 = vmatpush1.msra.mxu0 0.0
    %801 = vmatprep.subr.mxu0 0.0
    %802 = vmatpush1.msra.mxu0 0.0
    %803 = vmatprep.subr.mxu0 0.0
    %804 = vmatpush1.msra.mxu0 0.0
    %805 = vmatprep.subr.mxu0 0.0
    %806 = vmatpush1.msra.mxu0 0.0
    %807 = vmatprep.subr.mxu0 0.0
    %808 = vmatpush1.msra.mxu0 0.0
    %809 = vmatprep.subr.mxu0 0.0
    %810 = vmatpush1.msra.mxu0 0.0
    %811 = vmatprep.subr.mxu0 0.0
    %812 = vmatpush1.msra.mxu0 0.0
    %813 = vmatprep.subr.mxu0 0.0
    %814 = vmatpush1.msra.mxu0 0.0
    %815 = vmatprep.mubr.f32.mxu0 0.0
    %816 = vmatmul.mubr.f32.gmra.mrb[0].mxu0 %v749
    %v817 = vpop.f32.mrb[0].mxu0
    %v818 = vadd.f32 0.0, %v817
    %v819 = vpop.f32.mrb[0].mxu0
    %820 = vdwg.mxu0
    %821 = vrot.lane.b32.xlu0 %v226, 56
    %v822 = vpop.permute.xlu0 %821
    %v825 = vsel %vm239, %v744, 0
    %827 = vmatprep.subr.mxu0 0.0
    %828 = vmatpush1.msra.mxu0 %v822
    %829 = vmatprep.subr.mxu0 0.0
    %830 = vmatpush1.msra.mxu0 0.0
    %831 = vmatprep.subr.mxu0 0.0
    %832 = vmatpush1.msra.mxu0 0.0
    %833 = vmatprep.subr.mxu0 0.0
    %834 = vmatpush1.msra.mxu0 0.0
    %835 = vmatprep.subr.mxu0 0.0
    %836 = vmatpush1.msra.mxu0 0.0
    %837 = vmatprep.subr.mxu0 0.0
    %838 = vmatpush1.msra.mxu0 0.0
    %839 = vmatprep.subr.mxu0 0.0
    %840 = vmatpush1.msra.mxu0 0.0
    %841 = vmatprep.subr.mxu0 0.0
    %842 = vmatpush1.msra.mxu0 0.0
    %843 = vmatprep.subr.mxu0 0.0
    %844 = vmatpush1.msra.mxu0 0.0
    %845 = vmatprep.subr.mxu0 0.0
    %846 = vmatpush1.msra.mxu0 0.0
    %847 = vmatprep.subr.mxu0 0.0
    %848 = vmatpush1.msra.mxu0 0.0
    %849 = vmatprep.subr.mxu0 0.0
    %850 = vmatpush1.msra.mxu0 0.0
    %851 = vmatprep.subr.mxu0 0.0
    %852 = vmatpush1.msra.mxu0 0.0
    %853 = vmatprep.subr.mxu0 0.0
    %854 = vmatpush1.msra.mxu0 0.0
    %855 = vmatprep.subr.mxu0 0.0
    %856 = vmatpush1.msra.mxu0 0.0
    %857 = vmatprep.subr.mxu0 0.0
    %858 = vmatpush1.msra.mxu0 0.0
    %859 = vmatprep.subr.mxu0 0.0
    %860 = vmatpush1.msra.mxu0 0.0
    %861 = vmatprep.subr.mxu0 0.0
    %862 = vmatpush1.msra.mxu0 0.0
    %863 = vmatprep.subr.mxu0 0.0
    %864 = vmatpush1.msra.mxu0 0.0
    %865 = vmatprep.subr.mxu0 0.0
    %866 = vmatpush1.msra.mxu0 0.0
    %867 = vmatprep.subr.mxu0 0.0
    %868 = vmatpush1.msra.mxu0 0.0
    %869 = vmatprep.subr.mxu0 0.0
    %870 = vmatpush1.msra.mxu0 0.0
    %871 = vmatprep.subr.mxu0 0.0
    %872 = vmatpush1.msra.mxu0 0.0
    %873 = vmatprep.subr.mxu0 0.0
    %874 = vmatpush1.msra.mxu0 0.0
    %875 = vmatprep.subr.mxu0 0.0
    %876 = vmatpush1.msra.mxu0 0.0
    %877 = vmatprep.subr.mxu0 0.0
    %878 = vmatpush1.msra.mxu0 0.0
    %879 = vmatprep.subr.mxu0 0.0
    %880 = vmatpush1.msra.mxu0 0.0
    %881 = vmatprep.subr.mxu0 0.0
    %882 = vmatpush1.msra.mxu0 0.0
    %883 = vmatprep.subr.mxu0 0.0
    %884 = vmatpush1.msra.mxu0 0.0
    %885 = vmatprep.subr.mxu0 0.0
    %886 = vmatpush1.msra.mxu0 0.0
    %887 = vmatprep.subr.mxu0 0.0
    %888 = vmatpush1.msra.mxu0 0.0
    %889 = vmatprep.subr.mxu0 0.0
    %890 = vmatpush1.msra.mxu0 0.0
    %891 = vmatprep.mubr.f32.mxu0 0.0
    %892 = vmatmul.mubr.f32.gmra.mrb[0].mxu0 %v825
    %v893 = vpop.f32.mrb[0].mxu0
    %v894 = vadd.f32 0.0, %v893
    %v895 = vpop.f32.mrb[0].mxu0
    %896 = vdwg.mxu0
    %v898 = vsel %vm239, %v818, 0
    %v901 = vsel %vm239, %v894, 0
    %903 = vmatprep.subr.mxu0 0.0
    %904 = vmatpush1.msra.mxu0 %v232
    %905 = vmatprep.subr.mxu0 0.0
    %906 = vmatpush1.msra.mxu0 0.0
    %907 = vmatprep.subr.mxu0 0.0
    %908 = vmatpush1.msra.mxu0 0.0
    %909 = vmatprep.subr.mxu0 0.0
    %910 = vmatpush1.msra.mxu0 0.0
    %911 = vmatprep.subr.mxu0 0.0
    %912 = vmatpush1.msra.mxu0 0.0
    %913 = vmatprep.subr.mxu0 0.0
    %914 = vmatpush1.msra.mxu0 0.0
    %915 = vmatprep.subr.mxu0 0.0
    %916 = vmatpush1.msra.mxu0 0.0
    %917 = vmatprep.subr.mxu0 0.0
    %918 = vmatpush1.msra.mxu0 0.0
    %919 = vmatprep.subr.mxu0 0.0
    %920 = vmatpush1.msra.mxu0 0.0
    %921 = vmatprep.subr.mxu0 0.0
    %922 = vmatpush1.msra.mxu0 0.0
    %923 = vmatprep.subr.mxu0 0.0
    %924 = vmatpush1.msra.mxu0 0.0
    %925 = vmatprep.subr.mxu0 0.0
    %926 = vmatpush1.msra.mxu0 0.0
    %927 = vmatprep.subr.mxu0 0.0
    %928 = vmatpush1.msra.mxu0 0.0
    %929 = vmatprep.subr.mxu0 0.0
    %930 = vmatpush1.msra.mxu0 0.0
    %931 = vmatprep.subr.mxu0 0.0
    %932 = vmatpush1.msra.mxu0 0.0
    %933 = vmatprep.subr.mxu0 0.0
    %934 = vmatpush1.msra.mxu0 0.0
    %935 = vmatprep.subr.mxu0 0.0
    %936 = vmatpush1.msra.mxu0 0.0
    %937 = vmatprep.subr.mxu0 0.0
    %938 = vmatpush1.msra.mxu0 0.0
    %939 = vmatprep.subr.mxu0 0.0
    %940 = vmatpush1.msra.mxu0 0.0
    %941 = vmatprep.subr.mxu0 0.0
    %942 = vmatpush1.msra.mxu0 0.0
    %943 = vmatprep.subr.mxu0 0.0
    %944 = vmatpush1.msra.mxu0 0.0
    %945 = vmatprep.subr.mxu0 0.0
    %946 = vmatpush1.msra.mxu0 0.0
    %947 = vmatprep.subr.mxu0 0.0
    %948 = vmatpush1.msra.mxu0 0.0
    %949 = vmatprep.subr.mxu0 0.0
    %950 = vmatpush1.msra.mxu0 0.0
    %951 = vmatprep.subr.mxu0 0.0
    %952 = vmatpush1.msra.mxu0 0.0
    %953 = vmatprep.subr.mxu0 0.0
    %954 = vmatpush1.msra.mxu0 0.0
    %955 = vmatprep.subr.mxu0 0.0
    %956 = vmatpush1.msra.mxu0 0.0
    %957 = vmatprep.subr.mxu0 0.0
    %958 = vmatpush1.msra.mxu0 0.0
    %959 = vmatprep.subr.mxu0 0.0
    %960 = vmatpush1.msra.mxu0 0.0
    %961 = vmatprep.subr.mxu0 0.0
    %962 = vmatpush1.msra.mxu0 0.0
    %963 = vmatprep.subr.mxu0 0.0
    %964 = vmatpush1.msra.mxu0 0.0
    %965 = vmatprep.subr.mxu0 0.0
    %966 = vmatpush1.msra.mxu0 0.0
    %967 = vmatprep.mubr.f32.mxu0 0.0
    %968 = vmatmul.mubr.f32.gmra.mrb[0].mxu0 %v898
    %v969 = vpop.f32.mrb[0].mxu0
    %v970 = vadd.f32 0.0, %v969
    %v971 = vpop.f32.mrb[0].mxu0
    %972 = vmatprep.mubr.f32.mxu0 0.0
    %973 = vmatmul.mubr.f32.gmra.mrb[0].mxu0 %v901
    %v974 = vpop.f32.mrb[0].mxu0
    %v975 = vadd.f32 0.0, %v974
    %v976 = vpop.f32.mrb[0].mxu0
    %977 = vdwg.mxu0
    %v979 = vsel %vm239, %v488, 0
    %v982 = vsel %vm239, %v564, 0
    %984 = vmatprep.subr.mxu0 0.0
    %985 = vmatpush1.msra.mxu0 %v231
    %986 = vmatprep.subr.mxu0 0.0
    %987 = vmatpush1.msra.mxu0 0.0
    %988 = vmatprep.subr.mxu0 0.0
    %989 = vmatpush1.msra.mxu0 0.0
    %990 = vmatprep.subr.mxu0 0.0
    %991 = vmatpush1.msra.mxu0 0.0
    %992 = vmatprep.subr.mxu0 0.0
    %993 = vmatpush1.msra.mxu0 0.0
    %994 = vmatprep.subr.mxu0 0.0
    %995 = vmatpush1.msra.mxu0 0.0
    %996 = vmatprep.subr.mxu0 0.0
    %997 = vmatpush1.msra.mxu0 0.0
    %998 = vmatprep.subr.mxu0 0.0
    %999 = vmatpush1.msra.mxu0 0.0
    %1000 = vmatprep.subr.mxu0 0.0
    %1001 = vmatpush1.msra.mxu0 0.0
    %1002 = vmatprep.subr.mxu0 0.0
    %1003 = vmatpush1.msra.mxu0 0.0
    %1004 = vmatprep.subr.mxu0 0.0
    %1005 = vmatpush1.msra.mxu0 0.0
    %1006 = vmatprep.subr.mxu0 0.0
    %1007 = vmatpush1.msra.mxu0 0.0
    %1008 = vmatprep.subr.mxu0 0.0
    %1009 = vmatpush1.msra.mxu0 0.0
    %1010 = vmatprep.subr.mxu0 0.0
    %1011 = vmatpush1.msra.mxu0 0.0
    %1012 = vmatprep.subr.mxu0 0.0
    %1013 = vmatpush1.msra.mxu0 0.0
    %1014 = vmatprep.subr.mxu0 0.0
    %1015 = vmatpush1.msra.mxu0 0.0
    %1016 = vmatprep.subr.mxu0 0.0
    %1017 = vmatpush1.msra.mxu0 0.0
    %1018 = vmatprep.subr.mxu0 0.0
    %1019 = vmatpush1.msra.mxu0 0.0
    %1020 = vmatprep.subr.mxu0 0.0
    %1021 = vmatpush1.msra.mxu0 0.0
    %1022 = vmatprep.subr.mxu0 0.0
    %1023 = vmatpush1.msra.mxu0 0.0
    %1024 = vmatprep.subr.mxu0 0.0
    %1025 = vmatpush1.msra.mxu0 0.0
    %1026 = vmatprep.subr.mxu0 0.0
    %1027 = vmatpush1.msra.mxu0 0.0
    %1028 = vmatprep.subr.mxu0 0.0
    %1029 = vmatpush1.msra.mxu0 0.0
    %1030 = vmatprep.subr.mxu0 0.0
    %1031 = vmatpush1.msra.mxu0 0.0
    %1032 = vmatprep.subr.mxu0 0.0
    %1033 = vmatpush1.msra.mxu0 0.0
    %1034 = vmatprep.subr.mxu0 0.0
    %1035 = vmatpush1.msra.mxu0 0.0
    %1036 = vmatprep.subr.mxu0 0.0
    %1037 = vmatpush1.msra.mxu0 0.0
    %1038 = vmatprep.subr.mxu0 0.0
    %1039 = vmatpush1.msra.mxu0 0.0
    %1040 = vmatprep.subr.mxu0 0.0
    %1041 = vmatpush1.msra.mxu0 0.0
    %1042 = vmatprep.subr.mxu0 0.0
    %1043 = vmatpush1.msra.mxu0 0.0
    %1044 = vmatprep.subr.mxu0 0.0
    %1045 = vmatpush1.msra.mxu0 0.0
    %1046 = vmatprep.subr.mxu0 0.0
    %1047 = vmatpush1.msra.mxu0 0.0
    %1048 = vmatprep.mubr.f32.mxu0 0.0
    %1049 = vmatmul.mubr.f32.gmra.mrb[0].mxu0 %v979
    %v1050 = vpop.f32.mrb[0].mxu0
    %v1051 = vadd.f32 %v970, %v1050
    %v1052 = vpop.f32.mrb[0].mxu0
    %1053 = vmatprep.mubr.f32.mxu0 0.0
    %1054 = vmatmul.mubr.f32.gmra.mrb[0].mxu0 %v982
    %v1055 = vpop.f32.mrb[0].mxu0
    %v1056 = vadd.f32 %v975, %v1055
    %v1057 = vpop.f32.mrb[0].mxu0
    %1058 = vdwg.mxu0
    %1059 = vrot.lane.b32.xlu0 %v229, 112
    %v1060 = vpop.permute.xlu0 %1059
    %1061 = vrot.lane.b32.xlu0 %v221, 80
    %v1062 = vpop.permute.xlu0 %1061
    %v1063 = vsel %vm239, %v1060, 0
    %v1065 = vsel %vm239, %v1062, 0
    %1067 = vmatprep.subr.mxu0 0.0
    %1068 = vmatpush1.xpose.msra.mxu0 %v1065
    %1069 = vmatprep.subr.mxu0 0.0
    %1070 = vmatpush1.xpose.msra.mxu0 0.0
    %1071 = vmatprep.subr.mxu0 0.0
    %1072 = vmatpush1.xpose.msra.mxu0 0.0
    %1073 = vmatprep.subr.mxu0 0.0
    %1074 = vmatpush1.xpose.msra.mxu0 0.0
    %1075 = vmatprep.subr.mxu0 0.0
    %1076 = vmatpush1.xpose.msra.mxu0 0.0
    %1077 = vmatprep.subr.mxu0 0.0
    %1078 = vmatpush1.xpose.msra.mxu0 0.0
    %1079 = vmatprep.subr.mxu0 0.0
    %1080 = vmatpush1.xpose.msra.mxu0 0.0
    %1081 = vmatprep.subr.mxu0 0.0
    %1082 = vmatpush1.xpose.msra.mxu0 0.0
    %1083 = vmatprep.subr.mxu0 0.0
    %1084 = vmatpush1.xpose.msra.mxu0 0.0
    %1085 = vmatprep.subr.mxu0 0.0
    %1086 = vmatpush1.xpose.msra.mxu0 0.0
    %1087 = vmatprep.subr.mxu0 0.0
    %1088 = vmatpush1.xpose.msra.mxu0 0.0
    %1089 = vmatprep.subr.mxu0 0.0
    %1090 = vmatpush1.xpose.msra.mxu0 0.0
    %1091 = vmatprep.subr.mxu0 0.0
    %1092 = vmatpush1.xpose.msra.mxu0 0.0
    %1093 = vmatprep.subr.mxu0 0.0
    %1094 = vmatpush1.xpose.msra.mxu0 0.0
    %1095 = vmatprep.subr.mxu0 0.0
    %1096 = vmatpush1.xpose.msra.mxu0 0.0
    %1097 = vmatprep.subr.mxu0 0.0
    %1098 = vmatpush1.xpose.msra.mxu0 0.0
    %1099 = vmatprep.subr.mxu0 0.0
    %1100 = vmatpush1.xpose.msra.mxu0 0.0
    %1101 = vmatprep.subr.mxu0 0.0
    %1102 = vmatpush1.xpose.msra.mxu0 0.0
    %1103 = vmatprep.subr.mxu0 0.0
    %1104 = vmatpush1.xpose.msra.mxu0 0.0
    %1105 = vmatprep.subr.mxu0 0.0
    %1106 = vmatpush1.xpose.msra.mxu0 0.0
    %1107 = vmatprep.subr.mxu0 0.0
    %1108 = vmatpush1.xpose.msra.mxu0 0.0
    %1109 = vmatprep.subr.mxu0 0.0
    %1110 = vmatpush1.xpose.msra.mxu0 0.0
    %1111 = vmatprep.subr.mxu0 0.0
    %1112 = vmatpush1.xpose.msra.mxu0 0.0
    %1113 = vmatprep.subr.mxu0 0.0
    %1114 = vmatpush1.xpose.msra.mxu0 0.0
    %1115 = vmatprep.subr.mxu0 0.0
    %1116 = vmatpush1.xpose.msra.mxu0 0.0
    %1117 = vmatprep.subr.mxu0 0.0
    %1118 = vmatpush1.xpose.msra.mxu0 0.0
    %1119 = vmatprep.subr.mxu0 0.0
    %1120 = vmatpush1.xpose.msra.mxu0 0.0
    %1121 = vmatprep.subr.mxu0 0.0
    %1122 = vmatpush1.xpose.msra.mxu0 0.0
    %1123 = vmatprep.subr.mxu0 0.0
    %1124 = vmatpush1.xpose.msra.mxu0 0.0
    %1125 = vmatprep.subr.mxu0 0.0
    %1126 = vmatpush1.xpose.msra.mxu0 0.0
    %1127 = vmatprep.subr.mxu0 0.0
    %1128 = vmatpush1.xpose.msra.mxu0 0.0
    %1129 = vmatprep.subr.mxu0 0.0
    %1130 = vmatpush1.xpose.msra.mxu0 0.0
    %1131 = vmatprep.mubr.f32.mxu0 0.0
    %1132 = vmatmul.mubr.f32.gmra.mrb[0].mxu0 %v1063
    %v1133 = vpop.f32.mrb[0].mxu0
    %v1134 = vadd.f32 0.0, %v1133
    %v1135 = vpop.f32.mrb[0].mxu0
    %1136 = vdwg.mxu0
    %1137 = vrot.lane.b32.xlu0 %v230, 112
    %v1138 = vpop.permute.xlu0 %1137
    %1139 = vrot.lane.b32.xlu0 %v226, 80
    %v1140 = vpop.permute.xlu0 %1139
    %v1141 = vsel %vm239, %v1138, 0
    %v1143 = vsel %vm239, %v1140, 0
    %1145 = vmatprep.subr.mxu0 0.0
    %1146 = vmatpush1.xpose.msra.mxu0 %v1143
    %1147 = vmatprep.subr.mxu0 0.0
    %1148 = vmatpush1.xpose.msra.mxu0 0.0
    %1149 = vmatprep.subr.mxu0 0.0
    %1150 = vmatpush1.xpose.msra.mxu0 0.0
    %1151 = vmatprep.subr.mxu0 0.0
    %1152 = vmatpush1.xpose.msra.mxu0 0.0
    %1153 = vmatprep.subr.mxu0 0.0
    %1154 = vmatpush1.xpose.msra.mxu0 0.0
    %1155 = vmatprep.subr.mxu0 0.0
    %1156 = vmatpush1.xpose.msra.mxu0 0.0
    %1157 = vmatprep.subr.mxu0 0.0
    %1158 = vmatpush1.xpose.msra.mxu0 0.0
    %1159 = vmatprep.subr.mxu0 0.0
    %1160 = vmatpush1.xpose.msra.mxu0 0.0
    %1161 = vmatprep.subr.mxu0 0.0
    %1162 = vmatpush1.xpose.msra.mxu0 0.0
    %1163 = vmatprep.subr.mxu0 0.0
    %1164 = vmatpush1.xpose.msra.mxu0 0.0
    %1165 = vmatprep.subr.mxu0 0.0
    %1166 = vmatpush1.xpose.msra.mxu0 0.0
    %1167 = vmatprep.subr.mxu0 0.0
    %1168 = vmatpush1.xpose.msra.mxu0 0.0
    %1169 = vmatprep.subr.mxu0 0.0
    %1170 = vmatpush1.xpose.msra.mxu0 0.0
    %1171 = vmatprep.subr.mxu0 0.0
    %1172 = vmatpush1.xpose.msra.mxu0 0.0
    %1173 = vmatprep.subr.mxu0 0.0
    %1174 = vmatpush1.xpose.msra.mxu0 0.0
    %1175 = vmatprep.subr.mxu0 0.0
    %1176 = vmatpush1.xpose.msra.mxu0 0.0
    %1177 = vmatprep.subr.mxu0 0.0
    %1178 = vmatpush1.xpose.msra.mxu0 0.0
    %1179 = vmatprep.subr.mxu0 0.0
    %1180 = vmatpush1.xpose.msra.mxu0 0.0
    %1181 = vmatprep.subr.mxu0 0.0
    %1182 = vmatpush1.xpose.msra.mxu0 0.0
    %1183 = vmatprep.subr.mxu0 0.0
    %1184 = vmatpush1.xpose.msra.mxu0 0.0
    %1185 = vmatprep.subr.mxu0 0.0
    %1186 = vmatpush1.xpose.msra.mxu0 0.0
    %1187 = vmatprep.subr.mxu0 0.0
    %1188 = vmatpush1.xpose.msra.mxu0 0.0
    %1189 = vmatprep.subr.mxu0 0.0
    %1190 = vmatpush1.xpose.msra.mxu0 0.0
    %1191 = vmatprep.subr.mxu0 0.0
    %1192 = vmatpush1.xpose.msra.mxu0 0.0
    %1193 = vmatprep.subr.mxu0 0.0
    %1194 = vmatpush1.xpose.msra.mxu0 0.0
    %1195 = vmatprep.subr.mxu0 0.0
    %1196 = vmatpush1.xpose.msra.mxu0 0.0
    %1197 = vmatprep.subr.mxu0 0.0
    %1198 = vmatpush1.xpose.msra.mxu0 0.0
    %1199 = vmatprep.subr.mxu0 0.0
    %1200 = vmatpush1.xpose.msra.mxu0 0.0
    %1201 = vmatprep.subr.mxu0 0.0
    %1202 = vmatpush1.xpose.msra.mxu0 0.0
    %1203 = vmatprep.subr.mxu0 0.0
    %1204 = vmatpush1.xpose.msra.mxu0 0.0
    %1205 = vmatprep.subr.mxu0 0.0
    %1206 = vmatpush1.xpose.msra.mxu0 0.0
    %1207 = vmatprep.subr.mxu0 0.0
    %1208 = vmatpush1.xpose.msra.mxu0 0.0
    %1209 = vmatprep.mubr.f32.mxu0 0.0
    %1210 = vmatmul.mubr.f32.gmra.mrb[0].mxu0 %v1141
    %v1211 = vpop.f32.mrb[0].mxu0
    %v1212 = vadd.f32 0.0, %v1211
    %v1213 = vpop.f32.mrb[0].mxu0
    %1214 = vdwg.mxu0
    %v1215 = vsel %vm239, %v1134, -inf
    %1216 = vmax.xlane.f32.xlu0 %v1215
    %v1217 = vpop.xlane.xlu0 %1216
    %v1218 = vsel %vm239, %v1212, -inf
    %1219 = vmax.xlane.f32.xlu0 %v1218
    %v1220 = vpop.xlane.xlu0 %1219
    %v1221 = vsub.f32 %v1134, %v1217
    %v1222 = vsub.f32 %v1212, %v1220
    %v1223 = vmul.f32 %v1221, 1.442695
    %v1224 = vpow.pop %v1223
    %v1225 = vmul.f32 %v1222, 1.442695
    %v1226 = vpow.pop %v1225
    %v1227 = vsel %vm239, %v1224, 0.0
    %1228 = vadd.xlane.f32.xlu0 %v1227
    %v1229 = vpop.xlane.xlu0 %1228
    %v1230 = vsel %vm239, %v1226, 0.0
    %1231 = vadd.xlane.f32.xlu0 %v1230
    %v1232 = vpop.xlane.xlu0 %1231
    %v1233 = vrcp.pop %v1229
    %v1234 = vrcp.pop %v1232
    %v1235 = vmul.f32 %v1224, %v1233
    %v1236 = vmul.f32 %v1226, %v1234
    %1237 = vrot.lane.b32.xlu0 %v221, 48
    %v1238 = vpop.permute.xlu0 %1237
    %v1241 = vsel %vm239, %v1235, 0
    %1243 = vmatprep.subr.mxu0 0.0
    %1244 = vmatpush1.msra.mxu0 %v1238
    %1245 = vmatprep.subr.mxu0 0.0
    %1246 = vmatpush1.msra.mxu0 0.0
    %1247 = vmatprep.subr.mxu0 0.0
    %1248 = vmatpush1.msra.mxu0 0.0
    %1249 = vmatprep.subr.mxu0 0.0
    %1250 = vmatpush1.msra.mxu0 0.0
    %1251 = vmatprep.subr.mxu0 0.0
    %1252 = vmatpush1.msra.mxu0 0.0
    %1253 = vmatprep.subr.mxu0 0.0
    %1254 = vmatpush1.msra.mxu0 0.0
    %1255 = vmatprep.subr.mxu0 0.0
    %1256 = vmatpush1.msra.mxu0 0.0
    %1257 = vmatprep.subr.mxu0 0.0
    %1258 = vmatpush1.msra.mxu0 0.0
    %1259 = vmatprep.subr.mxu0 0.0
    %1260 = vmatpush1.msra.mxu0 0.0
    %1261 = vmatprep.subr.mxu0 0.0
    %1262 = vmatpush1.msra.mxu0 0.0
    %1263 = vmatprep.subr.mxu0 0.0
    %1264 = vmatpush1.msra.mxu0 0.0
    %1265 = vmatprep.subr.mxu0 0.0
    %1266 = vmatpush1.msra.mxu0 0.0
    %1267 = vmatprep.subr.mxu0 0.0
    %1268 = vmatpush1.msra.mxu0 0.0
    %1269 = vmatprep.subr.mxu0 0.0
    %1270 = vmatpush1.msra.mxu0 0.0
    %1271 = vmatprep.subr.mxu0 0.0
    %1272 = vmatpush1.msra.mxu0 0.0
    %1273 = vmatprep.subr.mxu0 0.0
    %1274 = vmatpush1.msra.mxu0 0.0
    %1275 = vmatprep.subr.mxu0 0.0
    %1276 = vmatpush1.msra.mxu0 0.0
    %1277 = vmatprep.subr.mxu0 0.0
    %1278 = vmatpush1.msra.mxu0 0.0
    %1279 = vmatprep.subr.mxu0 0.0
    %1280 = vmatpush1.msra.mxu0 0.0
    %1281 = vmatprep.subr.mxu0 0.0
    %1282 = vmatpush1.msra.mxu0 0.0
    %1283 = vmatprep.subr.mxu0 0.0
    %1284 = vmatpush1.msra.mxu0 0.0
    %1285 = vmatprep.subr.mxu0 0.0
    %1286 = vmatpush1.msra.mxu0 0.0
    %1287 = vmatprep.subr.mxu0 0.0
    %1288 = vmatpush1.msra.mxu0 0.0
    %1289 = vmatprep.subr.mxu0 0.0
    %1290 = vmatpush1.msra.mxu0 0.0
    %1291 = vmatprep.subr.mxu0 0.0
    %1292 = vmatpush1.msra.mxu0 0.0
    %1293 = vmatprep.subr.mxu0 0.0
    %1294 = vmatpush1.msra.mxu0 0.0
    %1295 = vmatprep.subr.mxu0 0.0
    %1296 = vmatpush1.msra.mxu0 0.0
    %1297 = vmatprep.subr.mxu0 0.0
    %1298 = vmatpush1.msra.mxu0 0.0
    %1299 = vmatprep.subr.mxu0 0.0
    %1300 = vmatpush1.msra.mxu0 0.0
    %1301 = vmatprep.subr.mxu0 0.0
    %1302 = vmatpush1.msra.mxu0 0.0
    %1303 = vmatprep.subr.mxu0 0.0
    %1304 = vmatpush1.msra.mxu0 0.0
    %1305 = vmatprep.subr.mxu0 0.0
    %1306 = vmatpush1.msra.mxu0 0.0
    %1307 = vmatprep.mubr.f32.mxu0 0.0
    %1308 = vmatmul.mubr.f32.gmra.mrb[0].mxu0 %v1241
    %v1309 = vpop.f32.mrb[0].mxu0
    %v1310 = vadd.f32 0.0, %v1309
    %v1311 = vpop.f32.mrb[0].mxu0
    %1312 = vdwg.mxu0
    %1313 = vrot.lane.b32.xlu0 %v226, 48
    %v1314 = vpop.permute.xlu0 %1313
    %v1317 = vsel %vm239, %v1236, 0
    %1319 = vmatprep.subr.mxu0 0.0
    %1320 = vmatpush1.msra.mxu0 %v1314
    %1321 = vmatprep.subr.mxu0 0.0
    %1322 = vmatpush1.msra.mxu0 0.0
    %1323 = vmatprep.subr.mxu0 0.0
    %1324 = vmatpush1.msra.mxu0 0.0
    %1325 = vmatprep.subr.mxu0 0.0
    %1326 = vmatpush1.msra.mxu0 0.0
    %1327 = vmatprep.subr.mxu0 0.0
    %1328 = vmatpush1.msra.mxu0 0.0
    %1329 = vmatprep.subr.mxu0 0.0
    %1330 = vmatpush1.msra.mxu0 0.0
    %1331 = vmatprep.subr.mxu0 0.0
    %1332 = vmatpush1.msra.mxu0 0.0
    %1333 = vmatprep.subr.mxu0 0.0
    %1334 = vmatpush1.msra.mxu0 0.0
    %1335 = vmatprep.subr.mxu0 0.0
    %1336 = vmatpush1.msra.mxu0 0.0
    %1337 = vmatprep.subr.mxu0 0.0
    %1338 = vmatpush1.msra.mxu0 0.0
    %1339 = vmatprep.subr.mxu0 0.0
    %1340 = vmatpush1.msra.mxu0 0.0
    %1341 = vmatprep.subr.mxu0 0.0
    %1342 = vmatpush1.msra.mxu0 0.0
    %1343 = vmatprep.subr.mxu0 0.0
    %1344 = vmatpush1.msra.mxu0 0.0
    %1345 = vmatprep.subr.mxu0 0.0
    %1346 = vmatpush1.msra.mxu0 0.0
    %1347 = vmatprep.subr.mxu0 0.0
    %1348 = vmatpush1.msra.mxu0 0.0
    %1349 = vmatprep.subr.mxu0 0.0
    %1350 = vmatpush1.msra.mxu0 0.0
    %1351 = vmatprep.subr.mxu0 0.0
    %1352 = vmatpush1.msra.mxu0 0.0
    %1353 = vmatprep.subr.mxu0 0.0
    %1354 = vmatpush1.msra.mxu0 0.0
    %1355 = vmatprep.subr.mxu0 0.0
    %1356 = vmatpush1.msra.mxu0 0.0
    %1357 = vmatprep.subr.mxu0 0.0
    %1358 = vmatpush1.msra.mxu0 0.0
    %1359 = vmatprep.subr.mxu0 0.0
    %1360 = vmatpush1.msra.mxu0 0.0
    %1361 = vmatprep.subr.mxu0 0.0
    %1362 = vmatpush1.msra.mxu0 0.0
    %1363 = vmatprep.subr.mxu0 0.0
    %1364 = vmatpush1.msra.mxu0 0.0
    %1365 = vmatprep.subr.mxu0 0.0
    %1366 = vmatpush1.msra.mxu0 0.0
    %1367 = vmatprep.subr.mxu0 0.0
    %1368 = vmatpush1.msra.mxu0 0.0
    %1369 = vmatprep.subr.mxu0 0.0
    %1370 = vmatpush1.msra.mxu0 0.0
    %1371 = vmatprep.subr.mxu0 0.0
    %1372 = vmatpush1.msra.mxu0 0.0
    %1373 = vmatprep.subr.mxu0 0.0
    %1374 = vmatpush1.msra.mxu0 0.0
    %1375 = vmatprep.subr.mxu0 0.0
    %1376 = vmatpush1.msra.mxu0 0.0
    %1377 = vmatprep.subr.mxu0 0.0
    %1378 = vmatpush1.msra.mxu0 0.0
    %1379 = vmatprep.subr.mxu0 0.0
    %1380 = vmatpush1.msra.mxu0 0.0
    %1381 = vmatprep.subr.mxu0 0.0
    %1382 = vmatpush1.msra.mxu0 0.0
    %1383 = vmatprep.mubr.f32.mxu0 0.0
    %1384 = vmatmul.mubr.f32.gmra.mrb[0].mxu0 %v1317
    %v1385 = vpop.f32.mrb[0].mxu0
    %v1386 = vadd.f32 0.0, %v1385
    %v1387 = vpop.f32.mrb[0].mxu0
    %1388 = vdwg.mxu0
    %v1390 = vsel %vm239, %v1310, 0
    %v1393 = vsel %vm239, %v1386, 0
    %1395 = vmatprep.subr.mxu0 0.0
    %1396 = vmatpush1.msra.mxu0 %v233
    %1397 = vmatprep.subr.mxu0 0.0
    %1398 = vmatpush1.msra.mxu0 0.0
    %1399 = vmatprep.subr.mxu0 0.0
    %1400 = vmatpush1.msra.mxu0 0.0
    %1401 = vmatprep.subr.mxu0 0.0
    %1402 = vmatpush1.msra.mxu0 0.0
    %1403 = vmatprep.subr.mxu0 0.0
    %1404 = vmatpush1.msra.mxu0 0.0
    %1405 = vmatprep.subr.mxu0 0.0
    %1406 = vmatpush1.msra.mxu0 0.0
    %1407 = vmatprep.subr.mxu0 0.0
    %1408 = vmatpush1.msra.mxu0 0.0
    %1409 = vmatprep.subr.mxu0 0.0
    %1410 = vmatpush1.msra.mxu0 0.0
    %1411 = vmatprep.subr.mxu0 0.0
    %1412 = vmatpush1.msra.mxu0 0.0
    %1413 = vmatprep.subr.mxu0 0.0
    %1414 = vmatpush1.msra.mxu0 0.0
    %1415 = vmatprep.subr.mxu0 0.0
    %1416 = vmatpush1.msra.mxu0 0.0
    %1417 = vmatprep.subr.mxu0 0.0
    %1418 = vmatpush1.msra.mxu0 0.0
    %1419 = vmatprep.subr.mxu0 0.0
    %1420 = vmatpush1.msra.mxu0 0.0
    %1421 = vmatprep.subr.mxu0 0.0
    %1422 = vmatpush1.msra.mxu0 0.0
    %1423 = vmatprep.subr.mxu0 0.0
    %1424 = vmatpush1.msra.mxu0 0.0
    %1425 = vmatprep.subr.mxu0 0.0
    %1426 = vmatpush1.msra.mxu0 0.0
    %1427 = vmatprep.subr.mxu0 0.0
    %1428 = vmatpush1.msra.mxu0 0.0
    %1429 = vmatprep.subr.mxu0 0.0
    %1430 = vmatpush1.msra.mxu0 0.0
    %1431 = vmatprep.subr.mxu0 0.0
    %1432 = vmatpush1.msra.mxu0 0.0
    %1433 = vmatprep.subr.mxu0 0.0
    %1434 = vmatpush1.msra.mxu0 0.0
    %1435 = vmatprep.subr.mxu0 0.0
    %1436 = vmatpush1.msra.mxu0 0.0
    %1437 = vmatprep.subr.mxu0 0.0
    %1438 = vmatpush1.msra.mxu0 0.0
    %1439 = vmatprep.subr.mxu0 0.0
    %1440 = vmatpush1.msra.mxu0 0.0
    %1441 = vmatprep.subr.mxu0 0.0
    %1442 = vmatpush1.msra.mxu0 0.0
    %1443 = vmatprep.subr.mxu0 0.0
    %1444 = vmatpush1.msra.mxu0 0.0
    %1445 = vmatprep.subr.mxu0 0.0
    %1446 = vmatpush1.msra.mxu0 0.0
    %1447 = vmatprep.subr.mxu0 0.0
    %1448 = vmatpush1.msra.mxu0 0.0
    %1449 = vmatprep.subr.mxu0 0.0
    %1450 = vmatpush1.msra.mxu0 0.0
    %1451 = vmatprep.subr.mxu0 0.0
    %1452 = vmatpush1.msra.mxu0 0.0
    %1453 = vmatprep.subr.mxu0 0.0
    %1454 = vmatpush1.msra.mxu0 0.0
    %1455 = vmatprep.subr.mxu0 0.0
    %1456 = vmatpush1.msra.mxu0 0.0
    %1457 = vmatprep.subr.mxu0 0.0
    %1458 = vmatpush1.msra.mxu0 0.0
    %1459 = vmatprep.mubr.f32.mxu0 0.0
    %1460 = vmatmul.mubr.f32.gmra.mrb[0].mxu0 %v1390
    %v1461 = vpop.f32.mrb[0].mxu0
    %v1462 = vadd.f32 0.0, %v1461
    %v1463 = vpop.f32.mrb[0].mxu0
    %1464 = vmatprep.mubr.f32.mxu0 0.0
    %1465 = vmatmul.mubr.f32.gmra.mrb[0].mxu0 %v1393
    %v1466 = vpop.f32.mrb[0].mxu0
    %v1467 = vadd.f32 0.0, %v1466
    %v1468 = vpop.f32.mrb[0].mxu0
    %1469 = vdwg.mxu0
    %v1470 = vadd.f32 %v1051, %v1462
    %v1471 = vadd.f32 %v1056, %v1467
    %1472 = vrot.lane.b32.xlu0 %v229, 104
    %v1473 = vpop.permute.xlu0 %1472
    %1474 = vrot.lane.b32.xlu0 %v221, 72
    %v1475 = vpop.permute.xlu0 %1474
    %v1476 = vsel %vm239, %v1473, 0
    %v1478 = vsel %vm239, %v1475, 0
    %1480 = vmatprep.subr.mxu0 0.0
    %1481 = vmatpush1.xpose.msra.mxu0 %v1478
    %1482 = vmatprep.subr.mxu0 0.0
    %1483 = vmatpush1.xpose.msra.mxu0 0.0
    %1484 = vmatprep.subr.mxu0 0.0
    %1485 = vmatpush1.xpose.msra.mxu0 0.0
    %1486 = vmatprep.subr.mxu0 0.0
    %1487 = vmatpush1.xpose.msra.mxu0 0.0
    %1488 = vmatprep.subr.mxu0 0.0
    %1489 = vmatpush1.xpose.msra.mxu0 0.0
    %1490 = vmatprep.subr.mxu0 0.0
    %1491 = vmatpush1.xpose.msra.mxu0 0.0
    %1492 = vmatprep.subr.mxu0 0.0
    %1493 = vmatpush1.xpose.msra.mxu0 0.0
    %1494 = vmatprep.subr.mxu0 0.0
    %1495 = vmatpush1.xpose.msra.mxu0 0.0
    %1496 = vmatprep.subr.mxu0 0.0
    %1497 = vmatpush1.xpose.msra.mxu0 0.0
    %1498 = vmatprep.subr.mxu0 0.0
    %1499 = vmatpush1.xpose.msra.mxu0 0.0
    %1500 = vmatprep.subr.mxu0 0.0
    %1501 = vmatpush1.xpose.msra.mxu0 0.0
    %1502 = vmatprep.subr.mxu0 0.0
    %1503 = vmatpush1.xpose.msra.mxu0 0.0
    %1504 = vmatprep.subr.mxu0 0.0
    %1505 = vmatpush1.xpose.msra.mxu0 0.0
    %1506 = vmatprep.subr.mxu0 0.0
    %1507 = vmatpush1.xpose.msra.mxu0 0.0
    %1508 = vmatprep.subr.mxu0 0.0
    %1509 = vmatpush1.xpose.msra.mxu0 0.0
    %1510 = vmatprep.subr.mxu0 0.0
    %1511 = vmatpush1.xpose.msra.mxu0 0.0
    %1512 = vmatprep.subr.mxu0 0.0
    %1513 = vmatpush1.xpose.msra.mxu0 0.0
    %1514 = vmatprep.subr.mxu0 0.0
    %1515 = vmatpush1.xpose.msra.mxu0 0.0
    %1516 = vmatprep.subr.mxu0 0.0
    %1517 = vmatpush1.xpose.msra.mxu0 0.0
    %1518 = vmatprep.subr.mxu0 0.0
    %1519 = vmatpush1.xpose.msra.mxu0 0.0
    %1520 = vmatprep.subr.mxu0 0.0
    %1521 = vmatpush1.xpose.msra.mxu0 0.0
    %1522 = vmatprep.subr.mxu0 0.0
    %1523 = vmatpush1.xpose.msra.mxu0 0.0
    %1524 = vmatprep.subr.mxu0 0.0
    %1525 = vmatpush1.xpose.msra.mxu0 0.0
    %1526 = vmatprep.subr.mxu0 0.0
    %1527 = vmatpush1.xpose.msra.mxu0 0.0
    %1528 = vmatprep.subr.mxu0 0.0
    %1529 = vmatpush1.xpose.msra.mxu0 0.0
    %1530 = vmatprep.subr.mxu0 0.0
    %1531 = vmatpush1.xpose.msra.mxu0 0.0
    %1532 = vmatprep.subr.mxu0 0.0
    %1533 = vmatpush1.xpose.msra.mxu0 0.0
    %1534 = vmatprep.subr.mxu0 0.0
    %1535 = vmatpush1.xpose.msra.mxu0 0.0
    %1536 = vmatprep.subr.mxu0 0.0
    %1537 = vmatpush1.xpose.msra.mxu0 0.0
    %1538 = vmatprep.subr.mxu0 0.0
    %1539 = vmatpush1.xpose.msra.mxu0 0.0
    %1540 = vmatprep.subr.mxu0 0.0
    %1541 = vmatpush1.xpose.msra.mxu0 0.0
    %1542 = vmatprep.subr.mxu0 0.0
    %1543 = vmatpush1.xpose.msra.mxu0 0.0
    %1544 = vmatprep.mubr.f32.mxu0 0.0
    %1545 = vmatmul.mubr.f32.gmra.mrb[0].mxu0 %v1476
    %v1546 = vpop.f32.mrb[0].mxu0
    %v1547 = vadd.f32 0.0, %v1546
    %v1548 = vpop.f32.mrb[0].mxu0
    %1549 = vdwg.mxu0
    %1550 = vrot.lane.b32.xlu0 %v230, 104
    %v1551 = vpop.permute.xlu0 %1550
    %1552 = vrot.lane.b32.xlu0 %v226, 72
    %v1553 = vpop.permute.xlu0 %1552
    %v1554 = vsel %vm239, %v1551, 0
    %v1556 = vsel %vm239, %v1553, 0
    %1558 = vmatprep.subr.mxu0 0.0
    %1559 = vmatpush1.xpose.msra.mxu0 %v1556
    %1560 = vmatprep.subr.mxu0 0.0
    %1561 = vmatpush1.xpose.msra.mxu0 0.0
    %1562 = vmatprep.subr.mxu0 0.0
    %1563 = vmatpush1.xpose.msra.mxu0 0.0
    %1564 = vmatprep.subr.mxu0 0.0
    %1565 = vmatpush1.xpose.msra.mxu0 0.0
    %1566 = vmatprep.subr.mxu0 0.0
    %1567 = vmatpush1.xpose.msra.mxu0 0.0
    %1568 = vmatprep.subr.mxu0 0.0
    %1569 = vmatpush1.xpose.msra.mxu0 0.0
    %1570 = vmatprep.subr.mxu0 0.0
    %1571 = vmatpush1.xpose.msra.mxu0 0.0
    %1572 = vmatprep.subr.mxu0 0.0
    %1573 = vmatpush1.xpose.msra.mxu0 0.0
    %1574 = vmatprep.subr.mxu0 0.0
    %1575 = vmatpush1.xpose.msra.mxu0 0.0
    %1576 = vmatprep.subr.mxu0 0.0
    %1577 = vmatpush1.xpose.msra.mxu0 0.0
    %1578 = vmatprep.subr.mxu0 0.0
    %1579 = vmatpush1.xpose.msra.mxu0 0.0
    %1580 = vmatprep.subr.mxu0 0.0
    %1581 = vmatpush1.xpose.msra.mxu0 0.0
    %1582 = vmatprep.subr.mxu0 0.0
    %1583 = vmatpush1.xpose.msra.mxu0 0.0
    %1584 = vmatprep.subr.mxu0 0.0
    %1585 = vmatpush1.xpose.msra.mxu0 0.0
    %1586 = vmatprep.subr.mxu0 0.0
    %1587 = vmatpush1.xpose.msra.mxu0 0.0
    %1588 = vmatprep.subr.mxu0 0.0
    %1589 = vmatpush1.xpose.msra.mxu0 0.0
    %1590 = vmatprep.subr.mxu0 0.0
    %1591 = vmatpush1.xpose.msra.mxu0 0.0
    %1592 = vmatprep.subr.mxu0 0.0
    %1593 = vmatpush1.xpose.msra.mxu0 0.0
    %1594 = vmatprep.subr.mxu0 0.0
    %1595 = vmatpush1.xpose.msra.mxu0 0.0
    %1596 = vmatprep.subr.mxu0 0.0
    %1597 = vmatpush1.xpose.msra.mxu0 0.0
    %1598 = vmatprep.subr.mxu0 0.0
    %1599 = vmatpush1.xpose.msra.mxu0 0.0
    %1600 = vmatprep.subr.mxu0 0.0
    %1601 = vmatpush1.xpose.msra.mxu0 0.0
    %1602 = vmatprep.subr.mxu0 0.0
    %1603 = vmatpush1.xpose.msra.mxu0 0.0
    %1604 = vmatprep.subr.mxu0 0.0
    %1605 = vmatpush1.xpose.msra.mxu0 0.0
    %1606 = vmatprep.subr.mxu0 0.0
    %1607 = vmatpush1.xpose.msra.mxu0 0.0
    %1608 = vmatprep.subr.mxu0 0.0
    %1609 = vmatpush1.xpose.msra.mxu0 0.0
    %1610 = vmatprep.subr.mxu0 0.0
    %1611 = vmatpush1.xpose.msra.mxu0 0.0
    %1612 = vmatprep.subr.mxu0 0.0
    %1613 = vmatpush1.xpose.msra.mxu0 0.0
    %1614 = vmatprep.subr.mxu0 0.0
    %1615 = vmatpush1.xpose.msra.mxu0 0.0
    %1616 = vmatprep.subr.mxu0 0.0
    %1617 = vmatpush1.xpose.msra.mxu0 0.0
    %1618 = vmatprep.subr.mxu0 0.0
    %1619 = vmatpush1.xpose.msra.mxu0 0.0
    %1620 = vmatprep.subr.mxu0 0.0
    %1621 = vmatpush1.xpose.msra.mxu0 0.0
    %1622 = vmatprep.mubr.f32.mxu0 0.0
    %1623 = vmatmul.mubr.f32.gmra.mrb[0].mxu0 %v1554
    %v1624 = vpop.f32.mrb[0].mxu0
    %v1625 = vadd.f32 0.0, %v1624
    %v1626 = vpop.f32.mrb[0].mxu0
    %1627 = vdwg.mxu0
    %v1628 = vsel %vm239, %v1547, -inf
    %1629 = vmax.xlane.f32.xlu0 %v1628
    %v1630 = vpop.xlane.xlu0 %1629
    %v1631 = vsel %vm239, %v1625, -inf
    %1632 = vmax.xlane.f32.xlu0 %v1631
    %v1633 = vpop.xlane.xlu0 %1632
    %v1634 = vsub.f32 %v1547, %v1630
    %v1635 = vsub.f32 %v1625, %v1633
    %v1636 = vmul.f32 %v1634, 1.442695
    %v1637 = vpow.pop %v1636
    %v1638 = vmul.f32 %v1635, 1.442695
    %v1639 = vpow.pop %v1638
    %v1640 = vsel %vm239, %v1637, 0.0
    %1641 = vadd.xlane.f32.xlu0 %v1640
    %v1642 = vpop.xlane.xlu0 %1641
    %v1643 = vsel %vm239, %v1639, 0.0
    %1644 = vadd.xlane.f32.xlu0 %v1643
    %v1645 = vpop.xlane.xlu0 %1644
    %v1646 = vrcp.pop %v1642
    %v1647 = vrcp.pop %v1645
    %v1648 = vmul.f32 %v1637, %v1646
    %v1649 = vmul.f32 %v1639, %v1647
    %1650 = vrot.lane.b32.xlu0 %v221, 40
    %v1651 = vpop.permute.xlu0 %1650
    %v1654 = vsel %vm239, %v1648, 0
    %1656 = vmatprep.subr.mxu0 0.0
    %1657 = vmatpush1.msra.mxu0 %v1651
    %1658 = vmatprep.subr.mxu0 0.0
    %1659 = vmatpush1.msra.mxu0 0.0
    %1660 = vmatprep.subr.mxu0 0.0
    %1661 = vmatpush1.msra.mxu0 0.0
    %1662 = vmatprep.subr.mxu0 0.0
    %1663 = vmatpush1.msra.mxu0 0.0
    %1664 = vmatprep.subr.mxu0 0.0
    %1665 = vmatpush1.msra.mxu0 0.0
    %1666 = vmatprep.subr.mxu0 0.0
    %1667 = vmatpush1.msra.mxu0 0.0
    %1668 = vmatprep.subr.mxu0 0.0
    %1669 = vmatpush1.msra.mxu0 0.0
    %1670 = vmatprep.subr.mxu0 0.0
    %1671 = vmatpush1.msra.mxu0 0.0
    %1672 = vmatprep.subr.mxu0 0.0
    %1673 = vmatpush1.msra.mxu0 0.0
    %1674 = vmatprep.subr.mxu0 0.0
    %1675 = vmatpush1.msra.mxu0 0.0
    %1676 = vmatprep.subr.mxu0 0.0
    %1677 = vmatpush1.msra.mxu0 0.0
    %1678 = vmatprep.subr.mxu0 0.0
    %1679 = vmatpush1.msra.mxu0 0.0
    %1680 = vmatprep.subr.mxu0 0.0
    %1681 = vmatpush1.msra.mxu0 0.0
    %1682 = vmatprep.subr.mxu0 0.0
    %1683 = vmatpush1.msra.mxu0 0.0
    %1684 = vmatprep.subr.mxu0 0.0
    %1685 = vmatpush1.msra.mxu0 0.0
    %1686 = vmatprep.subr.mxu0 0.0
    %1687 = vmatpush1.msra.mxu0 0.0
    %1688 = vmatprep.subr.mxu0 0.0
    %1689 = vmatpush1.msra.mxu0 0.0
    %1690 = vmatprep.subr.mxu0 0.0
    %1691 = vmatpush1.msra.mxu0 0.0
    %1692 = vmatprep.subr.mxu0 0.0
    %1693 = vmatpush1.msra.mxu0 0.0
    %1694 = vmatprep.subr.mxu0 0.0
    %1695 = vmatpush1.msra.mxu0 0.0
    %1696 = vmatprep.subr.mxu0 0.0
    %1697 = vmatpush1.msra.mxu0 0.0
    %1698 = vmatprep.subr.mxu0 0.0
    %1699 = vmatpush1.msra.mxu0 0.0
    %1700 = vmatprep.subr.mxu0 0.0
    %1701 = vmatpush1.msra.mxu0 0.0
    %1702 = vmatprep.subr.mxu0 0.0
    %1703 = vmatpush1.msra.mxu0 0.0
    %1704 = vmatprep.subr.mxu0 0.0
    %1705 = vmatpush1.msra.mxu0 0.0
    %1706 = vmatprep.subr.mxu0 0.0
    %1707 = vmatpush1.msra.mxu0 0.0
    %1708 = vmatprep.subr.mxu0 0.0
    %1709 = vmatpush1.msra.mxu0 0.0
    %1710 = vmatprep.subr.mxu0 0.0
    %1711 = vmatpush1.msra.mxu0 0.0
    %1712 = vmatprep.subr.mxu0 0.0
    %1713 = vmatpush1.msra.mxu0 0.0
    %1714 = vmatprep.subr.mxu0 0.0
    %1715 = vmatpush1.msra.mxu0 0.0
    %1716 = vmatprep.subr.mxu0 0.0
    %1717 = vmatpush1.msra.mxu0 0.0
    %1718 = vmatprep.subr.mxu0 0.0
    %1719 = vmatpush1.msra.mxu0 0.0
    %1720 = vmatprep.mubr.f32.mxu0 0.0
    %1721 = vmatmul.mubr.f32.gmra.mrb[0].mxu0 %v1654
    %v1722 = vpop.f32.mrb[0].mxu0
    %v1723 = vadd.f32 0.0, %v1722
    %v1724 = vpop.f32.mrb[0].mxu0
    %1725 = vdwg.mxu0
    %1726 = vrot.lane.b32.xlu0 %v226, 40
    %v1727 = vpop.permute.xlu0 %1726
    %v1730 = vsel %vm239, %v1649, 0
    %1732 = vmatprep.subr.mxu0 0.0
    %1733 = vmatpush1.msra.mxu0 %v1727
    %1734 = vmatprep.subr.mxu0 0.0
    %1735 = vmatpush1.msra.mxu0 0.0
    %1736 = vmatprep.subr.mxu0 0.0
    %1737 = vmatpush1.msra.mxu0 0.0
    %1738 = vmatprep.subr.mxu0 0.0
    %1739 = vmatpush1.msra.mxu0 0.0
    %1740 = vmatprep.subr.mxu0 0.0
    %1741 = vmatpush1.msra.mxu0 0.0
    %1742 = vmatprep.subr.mxu0 0.0
    %1743 = vmatpush1.msra.mxu0 0.0
    %1744 = vmatprep.subr.mxu0 0.0
    %1745 = vmatpush1.msra.mxu0 0.0
    %1746 = vmatprep.subr.mxu0 0.0
    %1747 = vmatpush1.msra.mxu0 0.0
    %1748 = vmatprep.subr.mxu0 0.0
    %1749 = vmatpush1.msra.mxu0 0.0
    %1750 = vmatprep.subr.mxu0 0.0
    %1751 = vmatpush1.msra.mxu0 0.0
    %1752 = vmatprep.subr.mxu0 0.0
    %1753 = vmatpush1.msra.mxu0 0.0
    %1754 = vmatprep.subr.mxu0 0.0
    %1755 = vmatpush1.msra.mxu0 0.0
    %1756 = vmatprep.subr.mxu0 0.0
    %1757 = vmatpush1.msra.mxu0 0.0
    %1758 = vmatprep.subr.mxu0 0.0
    %1759 = vmatpush1.msra.mxu0 0.0
    %1760 = vmatprep.subr.mxu0 0.0
    %1761 = vmatpush1.msra.mxu0 0.0
    %1762 = vmatprep.subr.mxu0 0.0
    %1763 = vmatpush1.msra.mxu0 0.0
    %1764 = vmatprep.subr.mxu0 0.0
    %1765 = vmatpush1.msra.mxu0 0.0
    %1766 = vmatprep.subr.mxu0 0.0
    %1767 = vmatpush1.msra.mxu0 0.0
    %1768 = vmatprep.subr.mxu0 0.0
    %1769 = vmatpush1.msra.mxu0 0.0
    %1770 = vmatprep.subr.mxu0 0.0
    %1771 = vmatpush1.msra.mxu0 0.0
    %1772 = vmatprep.subr.mxu0 0.0
    %1773 = vmatpush1.msra.mxu0 0.0
    %1774 = vmatprep.subr.mxu0 0.0
    %1775 = vmatpush1.msra.mxu0 0.0
    %1776 = vmatprep.subr.mxu0 0.0
    %1777 = vmatpush1.msra.mxu0 0.0
    %1778 = vmatprep.subr.mxu0 0.0
    %1779 = vmatpush1.msra.mxu0 0.0
    %1780 = vmatprep.subr.mxu0 0.0
    %1781 = vmatpush1.msra.mxu0 0.0
    %1782 = vmatprep.subr.mxu0 0.0
    %1783 = vmatpush1.msra.mxu0 0.0
    %1784 = vmatprep.subr.mxu0 0.0
    %1785 = vmatpush1.msra.mxu0 0.0
    %1786 = vmatprep.subr.mxu0 0.0
    %1787 = vmatpush1.msra.mxu0 0.0
    %1788 = vmatprep.subr.mxu0 0.0
    %1789 = vmatpush1.msra.mxu0 0.0
    %1790 = vmatprep.subr.mxu0 0.0
    %1791 = vmatpush1.msra.mxu0 0.0
    %1792 = vmatprep.subr.mxu0 0.0
    %1793 = vmatpush1.msra.mxu0 0.0
    %1794 = vmatprep.subr.mxu0 0.0
    %1795 = vmatpush1.msra.mxu0 0.0
    %1796 = vmatprep.mubr.f32.mxu0 0.0
    %1797 = vmatmul.mubr.f32.gmra.mrb[0].mxu0 %v1730
    %v1798 = vpop.f32.mrb[0].mxu0
    %v1799 = vadd.f32 0.0, %v1798
    %v1800 = vpop.f32.mrb[0].mxu0
    %1801 = vdwg.mxu0
    %v1803 = vsel %vm239, %v1723, 0
    %v1806 = vsel %vm239, %v1799, 0
    %1808 = vmatprep.subr.mxu0 0.0
    %1809 = vmatpush1.msra.mxu0 %v234
    %1810 = vmatprep.subr.mxu0 0.0
    %1811 = vmatpush1.msra.mxu0 0.0
    %1812 = vmatprep.subr.mxu0 0.0
    %1813 = vmatpush1.msra.mxu0 0.0
    %1814 = vmatprep.subr.mxu0 0.0
    %1815 = vmatpush1.msra.mxu0 0.0
    %1816 = vmatprep.subr.mxu0 0.0
    %1817 = vmatpush1.msra.mxu0 0.0
    %1818 = vmatprep.subr.mxu0 0.0
    %1819 = vmatpush1.msra.mxu0 0.0
    %1820 = vmatprep.subr.mxu0 0.0
    %1821 = vmatpush1.msra.mxu0 0.0
    %1822 = vmatprep.subr.mxu0 0.0
    %1823 = vmatpush1.msra.mxu0 0.0
    %1824 = vmatprep.subr.mxu0 0.0
    %1825 = vmatpush1.msra.mxu0 0.0
    %1826 = vmatprep.subr.mxu0 0.0
    %1827 = vmatpush1.msra.mxu0 0.0
    %1828 = vmatprep.subr.mxu0 0.0
    %1829 = vmatpush1.msra.mxu0 0.0
    %1830 = vmatprep.subr.mxu0 0.0
    %1831 = vmatpush1.msra.mxu0 0.0
    %1832 = vmatprep.subr.mxu0 0.0
    %1833 = vmatpush1.msra.mxu0 0.0
    %1834 = vmatprep.subr.mxu0 0.0
    %1835 = vmatpush1.msra.mxu0 0.0
    %1836 = vmatprep.subr.mxu0 0.0
    %1837 = vmatpush1.msra.mxu0 0.0
    %1838 = vmatprep.subr.mxu0 0.0
    %1839 = vmatpush1.msra.mxu0 0.0
    %1840 = vmatprep.subr.mxu0 0.0
    %1841 = vmatpush1.msra.mxu0 0.0
    %1842 = vmatprep.subr.mxu0 0.0
    %1843 = vmatpush1.msra.mxu0 0.0
    %1844 = vmatprep.subr.mxu0 0.0
    %1845 = vmatpush1.msra.mxu0 0.0
    %1846 = vmatprep.subr.mxu0 0.0
    %1847 = vmatpush1.msra.mxu0 0.0
    %1848 = vmatprep.subr.mxu0 0.0
    %1849 = vmatpush1.msra.mxu0 0.0
    %1850 = vmatprep.subr.mxu0 0.0
    %1851 = vmatpush1.msra.mxu0 0.0
    %1852 = vmatprep.subr.mxu0 0.0
    %1853 = vmatpush1.msra.mxu0 0.0
    %1854 = vmatprep.subr.mxu0 0.0
    %1855 = vmatpush1.msra.mxu0 0.0
    %1856 = vmatprep.subr.mxu0 0.0
    %1857 = vmatpush1.msra.mxu0 0.0
    %1858 = vmatprep.subr.mxu0 0.0
    %1859 = vmatpush1.msra.mxu0 0.0
    %1860 = vmatprep.subr.mxu0 0.0
    %1861 = vmatpush1.msra.mxu0 0.0
    %1862 = vmatprep.subr.mxu0 0.0
    %1863 = vmatpush1.msra.mxu0 0.0
    %1864 = vmatprep.subr.mxu0 0.0
    %1865 = vmatpush1.msra.mxu0 0.0
    %1866 = vmatprep.subr.mxu0 0.0
    %1867 = vmatpush1.msra.mxu0 0.0
    %1868 = vmatprep.subr.mxu0 0.0
    %1869 = vmatpush1.msra.mxu0 0.0
    %1870 = vmatprep.subr.mxu0 0.0
    %1871 = vmatpush1.msra.mxu0 0.0
    %1872 = vmatprep.mubr.f32.mxu0 0.0
    %1873 = vmatmul.mubr.f32.gmra.mrb[0].mxu0 %v1803
    %v1874 = vpop.f32.mrb[0].mxu0
    %v1875 = vadd.f32 0.0, %v1874
    %v1876 = vpop.f32.mrb[0].mxu0
    %1877 = vmatprep.mubr.f32.mxu0 0.0
    %1878 = vmatmul.mubr.f32.gmra.mrb[0].mxu0 %v1806
    %v1879 = vpop.f32.mrb[0].mxu0
    %v1880 = vadd.f32 0.0, %v1879
    %v1881 = vpop.f32.mrb[0].mxu0
    %1882 = vdwg.mxu0
    %v1883 = vadd.f32 %v1470, %v1875
    %v1884 = vadd.f32 %v1471, %v1880
    %v1886 = vlaneseq
    %v1887 = vshrl.u32 %v1886, 7
    %v1888 = vsub.s32 0, %v1887
    %v1889 = vrot.slane %v235, %v1888
    %v1891 = vadd.f32 %v1883, %v1889
    %v1892 = vadd.f32 %v1884, %v1889
    %v1893 = vadd.f32 %v81, %v1891
    %v1894 = vadd.f32 %v82, %v1892
    %v1895 = vld [vmem:[%s9] sm:$0x1]
    %v1896 = vld [vmem:[%s10] sm:$0x1]
    %v1897 = vsel %vm93, %v1893, 0.0
    %1898 = vadd.xlane.f32.xlu0 %v1897
    %v1899 = vpop.xlane.xlu0 %1898
    %v1900 = vsel %vm93, %v1894, 0.0
    %1901 = vadd.xlane.f32.xlu0 %v1900
    %v1902 = vpop.xlane.xlu0 %1901
    %v1903 = vmul.f32 %v1899, %v100
    %v1904 = vmul.f32 %v1902, %v100
    %v1905 = vsub.f32 %v1893, %v1903
    %v1906 = vsub.f32 %v1894, %v1904
    %v1907 = vmul.f32 %v1905, %v1905
    %v1908 = vmul.f32 %v1906, %v1906
    %v1909 = vsel %vm93, %v1907, 0.0
    %1910 = vadd.xlane.f32.xlu0 %v1909
    %v1911 = vpop.xlane.xlu0 %1910
    %v1912 = vsel %vm93, %v1908, 0.0
    %1913 = vadd.xlane.f32.xlu0 %v1912
    %v1914 = vpop.xlane.xlu0 %1913
    %v1915 = vmul.f32 %v1911, %v100
    %v1916 = vmul.f32 %v1914, %v100
    %v1917 = vadd.f32 %v1915, 1e-05
    %v1918 = vadd.f32 %v1916, 1e-05
    %v1919 = vrsqrt.pop %v1917
    %v1920 = vrsqrt.pop %v1918
    %v1921 = vmul.f32 %v1905, %v1919
    %v1922 = vmul.f32 %v1906, %v1920
    %v1924 = vlaneseq
    %v1925 = vshrl.u32 %v1924, 7
    %v1926 = vsub.s32 0, %v1925
    %v1927 = vrot.slane %v1895, %v1926
    %v1929 = vmul.f32 %v1921, %v1927
    %v1930 = vmul.f32 %v1922, %v1927
    %v1932 = vlaneseq
    %v1933 = vshrl.u32 %v1932, 7
    %v1934 = vsub.s32 0, %v1933
    %v1935 = vrot.slane %v1896, %v1934
    %v1937 = vadd.f32 %v1929, %v1935
    %v1938 = vadd.f32 %v1930, %v1935
    %v1939 = vld [vmem:[%s11] sm:$0xff]
    %v1940 = vld [vmem:[%s11 + $0x8] sm:$0xff]
    %v1941 = vld [vmem:[%s11 + $0x10] sm:$0xff]
    %v1942 = vld [vmem:[%s11 + $0x18] sm:$0xff]
    %v1943 = vld [vmem:[%s12] sm:$0x1]
    %v1945 = vlaneseq
    %v1946 = vshrl.u32 %v1945, 7
    %v1947 = vsub.s32 0, %v1946
    %v1948 = vrot.slane %v1943, %v1947
    %v1951 = vsel %vm93, %v1937, 0
    %v1954 = vsel %vm93, %v1938, 0
    %1956 = vmatprep.subr.mxu0 0.0
    %1957 = vmatpush1.msra.mxu0 %v1939
    %1958 = vmatprep.subr.mxu0 0.0
    %1959 = vmatpush1.msra.mxu0 %v1940
    %1960 = vmatprep.subr.mxu0 0.0
    %1961 = vmatpush1.msra.mxu0 %v1941
    %1962 = vmatprep.subr.mxu0 0.0
    %1963 = vmatpush1.msra.mxu0 %v1942
    %1964 = vmatprep.subr.mxu0 0.0
    %1965 = vmatpush1.msra.mxu0 0.0
    %1966 = vmatprep.subr.mxu0 0.0
    %1967 = vmatpush1.msra.mxu0 0.0
    %1968 = vmatprep.subr.mxu0 0.0
    %1969 = vmatpush1.msra.mxu0 0.0
    %1970 = vmatprep.subr.mxu0 0.0
    %1971 = vmatpush1.msra.mxu0 0.0
    %1972 = vmatprep.subr.mxu0 0.0
    %1973 = vmatpush1.msra.mxu0 0.0
    %1974 = vmatprep.subr.mxu0 0.0
    %1975 = vmatpush1.msra.mxu0 0.0
    %1976 = vmatprep.subr.mxu0 0.0
    %1977 = vmatpush1.msra.mxu0 0.0
    %1978 = vmatprep.subr.mxu0 0.0
    %1979 = vmatpush1.msra.mxu0 0.0
    %1980 = vmatprep.subr.mxu0 0.0
    %1981 = vmatpush1.msra.mxu0 0.0
    %1982 = vmatprep.subr.mxu0 0.0
    %1983 = vmatpush1.msra.mxu0 0.0
    %1984 = vmatprep.subr.mxu0 0.0
    %1985 = vmatpush1.msra.mxu0 0.0
    %1986 = vmatprep.subr.mxu0 0.0
    %1987 = vmatpush1.msra.mxu0 0.0
    %1988 = vmatprep.subr.mxu0 0.0
    %1989 = vmatpush1.msra.mxu0 0.0
    %1990 = vmatprep.subr.mxu0 0.0
    %1991 = vmatpush1.msra.mxu0 0.0
    %1992 = vmatprep.subr.mxu0 0.0
    %1993 = vmatpush1.msra.mxu0 0.0
    %1994 = vmatprep.subr.mxu0 0.0
    %1995 = vmatpush1.msra.mxu0 0.0
    %1996 = vmatprep.subr.mxu0 0.0
    %1997 = vmatpush1.msra.mxu0 0.0
    %1998 = vmatprep.subr.mxu0 0.0
    %1999 = vmatpush1.msra.mxu0 0.0
    %2000 = vmatprep.subr.mxu0 0.0
    %2001 = vmatpush1.msra.mxu0 0.0
    %2002 = vmatprep.subr.mxu0 0.0
    %2003 = vmatpush1.msra.mxu0 0.0
    %2004 = vmatprep.subr.mxu0 0.0
    %2005 = vmatpush1.msra.mxu0 0.0
    %2006 = vmatprep.subr.mxu0 0.0
    %2007 = vmatpush1.msra.mxu0 0.0
    %2008 = vmatprep.subr.mxu0 0.0
    %2009 = vmatpush1.msra.mxu0 0.0
    %2010 = vmatprep.subr.mxu0 0.0
    %2011 = vmatpush1.msra.mxu0 0.0
    %2012 = vmatprep.subr.mxu0 0.0
    %2013 = vmatpush1.msra.mxu0 0.0
    %2014 = vmatprep.subr.mxu0 0.0
    %2015 = vmatpush1.msra.mxu0 0.0
    %2016 = vmatprep.subr.mxu0 0.0
    %2017 = vmatpush1.msra.mxu0 0.0
    %2018 = vmatprep.subr.mxu0 0.0
    %2019 = vmatpush1.msra.mxu0 0.0
    %2020 = vmatprep.mubr.f32.mxu0 0.0
    %2021 = vmatmul.mubr.f32.gmra.mrb[0].mxu0 %v1951
    %v2022 = vpop.f32.mrb[0].mxu0
    %v2023 = vadd.f32 %v1948, %v2022
    %v2024 = vpop.f32.mrb[0].mxu0
    %2025 = vmatprep.mubr.f32.mxu0 0.0
    %2026 = vmatmul.mubr.f32.gmra.mrb[0].mxu0 %v1954
    %v2027 = vpop.f32.mrb[0].mxu0
    %v2028 = vadd.f32 %v1948, %v2027
    %v2029 = vpop.f32.mrb[0].mxu0
    %2030 = vdwg.mxu0
    %v2031 = vmul.f32 %v2023, 0.35355338
    %v2032 = vmul.f32 %v2028, 0.35355338
    %v2033 = vld [vmem:[%s13] sm:$0xff]
    %v2034 = vld [vmem:[%s13 + $0x8] sm:$0xff]
    %v2035 = vld [vmem:[%s13 + $0x10] sm:$0xff]
    %v2036 = vld [vmem:[%s13 + $0x18] sm:$0xff]
    %v2037 = vld [vmem:[%s14] sm:$0x1]
    %v2039 = vlaneseq
    %v2040 = vshrl.u32 %v2039, 7
    %v2041 = vsub.s32 0, %v2040
    %v2042 = vrot.slane %v2037, %v2041
    %v2045 = vsel %vm93, %v83, 0
    %v2048 = vsel %vm93, %v84, 0
    %2050 = vmatprep.subr.mxu0 0.0
    %2051 = vmatpush1.msra.mxu0 %v2033
    %2052 = vmatprep.subr.mxu0 0.0
    %2053 = vmatpush1.msra.mxu0 %v2034
    %2054 = vmatprep.subr.mxu0 0.0
    %2055 = vmatpush1.msra.mxu0 %v2035
    %2056 = vmatprep.subr.mxu0 0.0
    %2057 = vmatpush1.msra.mxu0 %v2036
    %2058 = vmatprep.subr.mxu0 0.0
    %2059 = vmatpush1.msra.mxu0 0.0
    %2060 = vmatprep.subr.mxu0 0.0
    %2061 = vmatpush1.msra.mxu0 0.0
    %2062 = vmatprep.subr.mxu0 0.0
    %2063 = vmatpush1.msra.mxu0 0.0
    %2064 = vmatprep.subr.mxu0 0.0
    %2065 = vmatpush1.msra.mxu0 0.0
    %2066 = vmatprep.subr.mxu0 0.0
    %2067 = vmatpush1.msra.mxu0 0.0
    %2068 = vmatprep.subr.mxu0 0.0
    %2069 = vmatpush1.msra.mxu0 0.0
    %2070 = vmatprep.subr.mxu0 0.0
    %2071 = vmatpush1.msra.mxu0 0.0
    %2072 = vmatprep.subr.mxu0 0.0
    %2073 = vmatpush1.msra.mxu0 0.0
    %2074 = vmatprep.subr.mxu0 0.0
    %2075 = vmatpush1.msra.mxu0 0.0
    %2076 = vmatprep.subr.mxu0 0.0
    %2077 = vmatpush1.msra.mxu0 0.0
    %2078 = vmatprep.subr.mxu0 0.0
    %2079 = vmatpush1.msra.mxu0 0.0
    %2080 = vmatprep.subr.mxu0 0.0
    %2081 = vmatpush1.msra.mxu0 0.0
    %2082 = vmatprep.subr.mxu0 0.0
    %2083 = vmatpush1.msra.mxu0 0.0
    %2084 = vmatprep.subr.mxu0 0.0
    %2085 = vmatpush1.msra.mxu0 0.0
    %2086 = vmatprep.subr.mxu0 0.0
    %2087 = vmatpush1.msra.mxu0 0.0
    %2088 = vmatprep.subr.mxu0 0.0
    %2089 = vmatpush1.msra.mxu0 0.0
    %2090 = vmatprep.subr.mxu0 0.0
    %2091 = vmatpush1.msra.mxu0 0.0
    %2092 = vmatprep.subr.mxu0 0.0
    %2093 = vmatpush1.msra.mxu0 0.0
    %2094 = vmatprep.subr.mxu0 0.0
    %2095 = vmatpush1.msra.mxu0 0.0
    %2096 = vmatprep.subr.mxu0 0.0
    %2097 = vmatpush1.msra.mxu0 0.0
    %2098 = vmatprep.subr.mxu0 0.0
    %2099 = vmatpush1.msra.mxu0 0.0
    %2100 = vmatprep.subr.mxu0 0.0
    %2101 = vmatpush1.msra.mxu0 0.0
    %2102 = vmatprep.subr.mxu0 0.0
    %2103 = vmatpush1.msra.mxu0 0.0
    %2104 = vmatprep.subr.mxu0 0.0
    %2105 = vmatpush1.msra.mxu0 0.0
    %2106 = vmatprep.subr.mxu0 0.0
    %2107 = vmatpush1.msra.mxu0 0.0
    %2108 = vmatprep.subr.mxu0 0.0
    %2109 = vmatpush1.msra.mxu0 0.0
    %2110 = vmatprep.subr.mxu0 0.0
    %2111 = vmatpush1.msra.mxu0 0.0
    %2112 = vmatprep.subr.mxu0 0.0
    %2113 = vmatpush1.msra.mxu0 0.0
    %2114 = vmatprep.mubr.f32.mxu0 0.0
    %2115 = vmatmul.mubr.f32.gmra.mrb[0].mxu0 %v2045
    %v2116 = vpop.f32.mrb[0].mxu0
    %v2117 = vadd.f32 %v2042, %v2116
    %v2118 = vpop.f32.mrb[0].mxu0
    %2119 = vmatprep.mubr.f32.mxu0 0.0
    %2120 = vmatmul.mubr.f32.gmra.mrb[0].mxu0 %v2048
    %v2121 = vpop.f32.mrb[0].mxu0
    %v2122 = vadd.f32 %v2042, %v2121
    %v2123 = vpop.f32.mrb[0].mxu0
    %2124 = vdwg.mxu0
    %v2125 = vld [vmem:[%s15] sm:$0xff]
    %v2126 = vld [vmem:[%s15 + $0x8] sm:$0xff]
    %v2127 = vld [vmem:[%s15 + $0x10] sm:$0xff]
    %v2128 = vld [vmem:[%s15 + $0x18] sm:$0xff]
    %v2129 = vld [vmem:[%s16] sm:$0x1]
    %v2132 = vlaneseq
    %v2133 = vshrl.u32 %v2132, 7
    %v2134 = vsub.s32 0, %v2133
    %v2135 = vrot.slane %v89, %v2134
    %v2136 = vlaneseq
    %v2137 = vshrl.u32 %v2136, 7
    %v2138 = vsub.s32 0, %v2137
    %v2139 = vrot.slane %v90, %v2138
    %v2143 = vsel %vm239, %v2031, 0
    %v2146 = vsel %vm239, %v2117, 0
    %2148 = vmatprep.subr.mxu0 0.0
    %2149 = vmatpush1.xpose.msra.mxu0 %v2146
    %2150 = vmatprep.subr.mxu0 0.0
    %2151 = vmatpush1.xpose.msra.mxu0 0.0
    %2152 = vmatprep.subr.mxu0 0.0
    %2153 = vmatpush1.xpose.msra.mxu0 0.0
    %2154 = vmatprep.subr.mxu0 0.0
    %2155 = vmatpush1.xpose.msra.mxu0 0.0
    %2156 = vmatprep.subr.mxu0 0.0
    %2157 = vmatpush1.xpose.msra.mxu0 0.0
    %2158 = vmatprep.subr.mxu0 0.0
    %2159 = vmatpush1.xpose.msra.mxu0 0.0
    %2160 = vmatprep.subr.mxu0 0.0
    %2161 = vmatpush1.xpose.msra.mxu0 0.0
    %2162 = vmatprep.subr.mxu0 0.0
    %2163 = vmatpush1.xpose.msra.mxu0 0.0
    %2164 = vmatprep.subr.mxu0 0.0
    %2165 = vmatpush1.xpose.msra.mxu0 0.0
    %2166 = vmatprep.subr.mxu0 0.0
    %2167 = vmatpush1.xpose.msra.mxu0 0.0
    %2168 = vmatprep.subr.mxu0 0.0
    %2169 = vmatpush1.xpose.msra.mxu0 0.0
    %2170 = vmatprep.subr.mxu0 0.0
    %2171 = vmatpush1.xpose.msra.mxu0 0.0
    %2172 = vmatprep.subr.mxu0 0.0
    %2173 = vmatpush1.xpose.msra.mxu0 0.0
    %2174 = vmatprep.subr.mxu0 0.0
    %2175 = vmatpush1.xpose.msra.mxu0 0.0
    %2176 = vmatprep.subr.mxu0 0.0
    %2177 = vmatpush1.xpose.msra.mxu0 0.0
    %2178 = vmatprep.subr.mxu0 0.0
    %2179 = vmatpush1.xpose.msra.mxu0 0.0
    %2180 = vmatprep.subr.mxu0 0.0
    %2181 = vmatpush1.xpose.msra.mxu0 0.0
    %2182 = vmatprep.subr.mxu0 0.0
    %2183 = vmatpush1.xpose.msra.mxu0 0.0
    %2184 = vmatprep.subr.mxu0 0.0
    %2185 = vmatpush1.xpose.msra.mxu0 0.0
    %2186 = vmatprep.subr.mxu0 0.0
    %2187 = vmatpush1.xpose.msra.mxu0 0.0
    %2188 = vmatprep.subr.mxu0 0.0
    %2189 = vmatpush1.xpose.msra.mxu0 0.0
    %2190 = vmatprep.subr.mxu0 0.0
    %2191 = vmatpush1.xpose.msra.mxu0 0.0
    %2192 = vmatprep.subr.mxu0 0.0
    %2193 = vmatpush1.xpose.msra.mxu0 0.0
    %2194 = vmatprep.subr.mxu0 0.0
    %2195 = vmatpush1.xpose.msra.mxu0 0.0
    %2196 = vmatprep.subr.mxu0 0.0
    %2197 = vmatpush1.xpose.msra.mxu0 0.0
    %2198 = vmatprep.subr.mxu0 0.0
    %2199 = vmatpush1.xpose.msra.mxu0 0.0
    %2200 = vmatprep.subr.mxu0 0.0
    %2201 = vmatpush1.xpose.msra.mxu0 0.0
    %2202 = vmatprep.subr.mxu0 0.0
    %2203 = vmatpush1.xpose.msra.mxu0 0.0
    %2204 = vmatprep.subr.mxu0 0.0
    %2205 = vmatpush1.xpose.msra.mxu0 0.0
    %2206 = vmatprep.subr.mxu0 0.0
    %2207 = vmatpush1.xpose.msra.mxu0 0.0
    %2208 = vmatprep.subr.mxu0 0.0
    %2209 = vmatpush1.xpose.msra.mxu0 0.0
    %2210 = vmatprep.subr.mxu0 0.0
    %2211 = vmatpush1.xpose.msra.mxu0 0.0
    %2212 = vmatprep.mubr.f32.mxu0 0.0
    %2213 = vmatmul.mubr.f32.gmra.mrb[0].mxu0 %v2143
    %v2214 = vpop.f32.mrb[0].mxu0
    %v2215 = vadd.f32 %v2135, %v2214
    %v2216 = vpop.f32.mrb[0].mxu0
    %2217 = vdwg.mxu0
    %v2219 = vsel %vm239, %v2032, 0
    %v2222 = vsel %vm239, %v2122, 0
    %2224 = vmatprep.subr.mxu0 0.0
    %2225 = vmatpush1.xpose.msra.mxu0 %v2222
    %2226 = vmatprep.subr.mxu0 0.0
    %2227 = vmatpush1.xpose.msra.mxu0 0.0
    %2228 = vmatprep.subr.mxu0 0.0
    %2229 = vmatpush1.xpose.msra.mxu0 0.0
    %2230 = vmatprep.subr.mxu0 0.0
    %2231 = vmatpush1.xpose.msra.mxu0 0.0
    %2232 = vmatprep.subr.mxu0 0.0
    %2233 = vmatpush1.xpose.msra.mxu0 0.0
    %2234 = vmatprep.subr.mxu0 0.0
    %2235 = vmatpush1.xpose.msra.mxu0 0.0
    %2236 = vmatprep.subr.mxu0 0.0
    %2237 = vmatpush1.xpose.msra.mxu0 0.0
    %2238 = vmatprep.subr.mxu0 0.0
    %2239 = vmatpush1.xpose.msra.mxu0 0.0
    %2240 = vmatprep.subr.mxu0 0.0
    %2241 = vmatpush1.xpose.msra.mxu0 0.0
    %2242 = vmatprep.subr.mxu0 0.0
    %2243 = vmatpush1.xpose.msra.mxu0 0.0
    %2244 = vmatprep.subr.mxu0 0.0
    %2245 = vmatpush1.xpose.msra.mxu0 0.0
    %2246 = vmatprep.subr.mxu0 0.0
    %2247 = vmatpush1.xpose.msra.mxu0 0.0
    %2248 = vmatprep.subr.mxu0 0.0
    %2249 = vmatpush1.xpose.msra.mxu0 0.0
    %2250 = vmatprep.subr.mxu0 0.0
    %2251 = vmatpush1.xpose.msra.mxu0 0.0
    %2252 = vmatprep.subr.mxu0 0.0
    %2253 = vmatpush1.xpose.msra.mxu0 0.0
    %2254 = vmatprep.subr.mxu0 0.0
    %2255 = vmatpush1.xpose.msra.mxu0 0.0
    %2256 = vmatprep.subr.mxu0 0.0
    %2257 = vmatpush1.xpose.msra.mxu0 0.0
    %2258 = vmatprep.subr.mxu0 0.0
    %2259 = vmatpush1.xpose.msra.mxu0 0.0
    %2260 = vmatprep.subr.mxu0 0.0
    %2261 = vmatpush1.xpose.msra.mxu0 0.0
    %2262 = vmatprep.subr.mxu0 0.0
    %2263 = vmatpush1.xpose.msra.mxu0 0.0
    %2264 = vmatprep.subr.mxu0 0.0
    %2265 = vmatpush1.xpose.msra.mxu0 0.0
    %2266 = vmatprep.subr.mxu0 0.0
    %2267 = vmatpush1.xpose.msra.mxu0 0.0
    %2268 = vmatprep.subr.mxu0 0.0
    %2269 = vmatpush1.xpose.msra.mxu0 0.0
    %2270 = vmatprep.subr.mxu0 0.0
    %2271 = vmatpush1.xpose.msra.mxu0 0.0
    %2272 = vmatprep.subr.mxu0 0.0
    %2273 = vmatpush1.xpose.msra.mxu0 0.0
    %2274 = vmatprep.subr.mxu0 0.0
    %2275 = vmatpush1.xpose.msra.mxu0 0.0
    %2276 = vmatprep.subr.mxu0 0.0
    %2277 = vmatpush1.xpose.msra.mxu0 0.0
    %2278 = vmatprep.subr.mxu0 0.0
    %2279 = vmatpush1.xpose.msra.mxu0 0.0
    %2280 = vmatprep.subr.mxu0 0.0
    %2281 = vmatpush1.xpose.msra.mxu0 0.0
    %2282 = vmatprep.subr.mxu0 0.0
    %2283 = vmatpush1.xpose.msra.mxu0 0.0
    %2284 = vmatprep.subr.mxu0 0.0
    %2285 = vmatpush1.xpose.msra.mxu0 0.0
    %2286 = vmatprep.subr.mxu0 0.0
    %2287 = vmatpush1.xpose.msra.mxu0 0.0
    %2288 = vmatprep.mubr.f32.mxu0 0.0
    %2289 = vmatmul.mubr.f32.gmra.mrb[0].mxu0 %v2219
    %v2290 = vpop.f32.mrb[0].mxu0
    %v2291 = vadd.f32 %v2139, %v2290
    %v2292 = vpop.f32.mrb[0].mxu0
    %2293 = vdwg.mxu0
    %v2294 = vsel %vm239, %v2215, -inf
    %2295 = vmax.xlane.f32.xlu0 %v2294
    %v2296 = vpop.xlane.xlu0 %2295
    %v2297 = vsel %vm239, %v2291, -inf
    %2298 = vmax.xlane.f32.xlu0 %v2297
    %v2299 = vpop.xlane.xlu0 %2298
    %v2300 = vsub.f32 %v2215, %v2296
    %v2301 = vsub.f32 %v2291, %v2299
    %v2302 = vmul.f32 %v2300, 1.442695
    %v2303 = vpow.pop %v2302
    %v2304 = vmul.f32 %v2301, 1.442695
    %v2305 = vpow.pop %v2304
    %v2306 = vsel %vm239, %v2303, 0.0
    %2307 = vadd.xlane.f32.xlu0 %v2306
    %v2308 = vpop.xlane.xlu0 %2307
    %v2309 = vsel %vm239, %v2305, 0.0
    %2310 = vadd.xlane.f32.xlu0 %v2309
    %v2311 = vpop.xlane.xlu0 %2310
    %v2312 = vrcp.pop %v2308
    %v2313 = vrcp.pop %v2311
    %v2314 = vmul.f32 %v2303, %v2312
    %v2315 = vmul.f32 %v2305, %v2313
    %2316 = vrot.lane.b32.xlu0 %v2117, 96
    %v2317 = vpop.permute.xlu0 %2316
    %v2320 = vsel %vm239, %v2314, 0
    %2322 = vmatprep.subr.mxu0 0.0
    %2323 = vmatpush1.msra.mxu0 %v2317
    %2324 = vmatprep.subr.mxu0 0.0
    %2325 = vmatpush1.msra.mxu0 0.0
    %2326 = vmatprep.subr.mxu0 0.0
    %2327 = vmatpush1.msra.mxu0 0.0
    %2328 = vmatprep.subr.mxu0 0.0
    %2329 = vmatpush1.msra.mxu0 0.0
    %2330 = vmatprep.subr.mxu0 0.0
    %2331 = vmatpush1.msra.mxu0 0.0
    %2332 = vmatprep.subr.mxu0 0.0
    %2333 = vmatpush1.msra.mxu0 0.0
    %2334 = vmatprep.subr.mxu0 0.0
    %2335 = vmatpush1.msra.mxu0 0.0
    %2336 = vmatprep.subr.mxu0 0.0
    %2337 = vmatpush1.msra.mxu0 0.0
    %2338 = vmatprep.subr.mxu0 0.0
    %2339 = vmatpush1.msra.mxu0 0.0
    %2340 = vmatprep.subr.mxu0 0.0
    %2341 = vmatpush1.msra.mxu0 0.0
    %2342 = vmatprep.subr.mxu0 0.0
    %2343 = vmatpush1.msra.mxu0 0.0
    %2344 = vmatprep.subr.mxu0 0.0
    %2345 = vmatpush1.msra.mxu0 0.0
    %2346 = vmatprep.subr.mxu0 0.0
    %2347 = vmatpush1.msra.mxu0 0.0
    %2348 = vmatprep.subr.mxu0 0.0
    %2349 = vmatpush1.msra.mxu0 0.0
    %2350 = vmatprep.subr.mxu0 0.0
    %2351 = vmatpush1.msra.mxu0 0.0
    %2352 = vmatprep.subr.mxu0 0.0
    %2353 = vmatpush1.msra.mxu0 0.0
    %2354 = vmatprep.subr.mxu0 0.0
    %2355 = vmatpush1.msra.mxu0 0.0
    %2356 = vmatprep.subr.mxu0 0.0
    %2357 = vmatpush1.msra.mxu0 0.0
    %2358 = vmatprep.subr.mxu0 0.0
    %2359 = vmatpush1.msra.mxu0 0.0
    %2360 = vmatprep.subr.mxu0 0.0
    %2361 = vmatpush1.msra.mxu0 0.0
    %2362 = vmatprep.subr.mxu0 0.0
    %2363 = vmatpush1.msra.mxu0 0.0
    %2364 = vmatprep.subr.mxu0 0.0
    %2365 = vmatpush1.msra.mxu0 0.0
    %2366 = vmatprep.subr.mxu0 0.0
    %2367 = vmatpush1.msra.mxu0 0.0
    %2368 = vmatprep.subr.mxu0 0.0
    %2369 = vmatpush1.msra.mxu0 0.0
    %2370 = vmatprep.subr.mxu0 0.0
    %2371 = vmatpush1.msra.mxu0 0.0
    %2372 = vmatprep.subr.mxu0 0.0
    %2373 = vmatpush1.msra.mxu0 0.0
    %2374 = vmatprep.subr.mxu0 0.0
    %2375 = vmatpush1.msra.mxu0 0.0
    %2376 = vmatprep.subr.mxu0 0.0
    %2377 = vmatpush1.msra.mxu0 0.0
    %2378 = vmatprep.subr.mxu0 0.0
    %2379 = vmatpush1.msra.mxu0 0.0
    %2380 = vmatprep.subr.mxu0 0.0
    %2381 = vmatpush1.msra.mxu0 0.0
    %2382 = vmatprep.subr.mxu0 0.0
    %2383 = vmatpush1.msra.mxu0 0.0
    %2384 = vmatprep.subr.mxu0 0.0
    %2385 = vmatpush1.msra.mxu0 0.0
    %2386 = vmatprep.mubr.f32.mxu0 0.0
    %2387 = vmatmul.mubr.f32.gmra.mrb[0].mxu0 %v2320
    %v2388 = vpop.f32.mrb[0].mxu0
    %v2389 = vadd.f32 0.0, %v2388
    %v2390 = vpop.f32.mrb[0].mxu0
    %2391 = vdwg.mxu0
    %2392 = vrot.lane.b32.xlu0 %v2122, 96
    %v2393 = vpop.permute.xlu0 %2392
    %v2396 = vsel %vm239, %v2315, 0
    %2398 = vmatprep.subr.mxu0 0.0
    %2399 = vmatpush1.msra.mxu0 %v2393
    %2400 = vmatprep.subr.mxu0 0.0
    %2401 = vmatpush1.msra.mxu0 0.0
    %2402 = vmatprep.subr.mxu0 0.0
    %2403 = vmatpush1.msra.mxu0 0.0
    %2404 = vmatprep.subr.mxu0 0.0
    %2405 = vmatpush1.msra.mxu0 0.0
    %2406 = vmatprep.subr.mxu0 0.0
    %2407 = vmatpush1.msra.mxu0 0.0
    %2408 = vmatprep.subr.mxu0 0.0
    %2409 = vmatpush1.msra.mxu0 0.0
    %2410 = vmatprep.subr.mxu0 0.0
    %2411 = vmatpush1.msra.mxu0 0.0
    %2412 = vmatprep.subr.mxu0 0.0
    %2413 = vmatpush1.msra.mxu0 0.0
    %2414 = vmatprep.subr.mxu0 0.0
    %2415 = vmatpush1.msra.mxu0 0.0
    %2416 = vmatprep.subr.mxu0 0.0
    %2417 = vmatpush1.msra.mxu0 0.0
    %2418 = vmatprep.subr.mxu0 0.0
    %2419 = vmatpush1.msra.mxu0 0.0
    %2420 = vmatprep.subr.mxu0 0.0
    %2421 = vmatpush1.msra.mxu0 0.0
    %2422 = vmatprep.subr.mxu0 0.0
    %2423 = vmatpush1.msra.mxu0 0.0
    %2424 = vmatprep.subr.mxu0 0.0
    %2425 = vmatpush1.msra.mxu0 0.0
    %2426 = vmatprep.subr.mxu0 0.0
    %2427 = vmatpush1.msra.mxu0 0.0
    %2428 = vmatprep.subr.mxu0 0.0
    %2429 = vmatpush1.msra.mxu0 0.0
    %2430 = vmatprep.subr.mxu0 0.0
    %2431 = vmatpush1.msra.mxu0 0.0
    %2432 = vmatprep.subr.mxu0 0.0
    %2433 = vmatpush1.msra.mxu0 0.0
    %2434 = vmatprep.subr.mxu0 0.0
    %2435 = vmatpush1.msra.mxu0 0.0
    %2436 = vmatprep.subr.mxu0 0.0
    %2437 = vmatpush1.msra.mxu0 0.0
    %2438 = vmatprep.subr.mxu0 0.0
    %2439 = vmatpush1.msra.mxu0 0.0
    %2440 = vmatprep.subr.mxu0 0.0
    %2441 = vmatpush1.msra.mxu0 0.0
    %2442 = vmatprep.subr.mxu0 0.0
    %2443 = vmatpush1.msra.mxu0 0.0
    %2444 = vmatprep.subr.mxu0 0.0
    %2445 = vmatpush1.msra.mxu0 0.0
    %2446 = vmatprep.subr.mxu0 0.0
    %2447 = vmatpush1.msra.mxu0 0.0
    %2448 = vmatprep.subr.mxu0 0.0
    %2449 = vmatpush1.msra.mxu0 0.0
    %2450 = vmatprep.subr.mxu0 0.0
    %2451 = vmatpush1.msra.mxu0 0.0
    %2452 = vmatprep.subr.mxu0 0.0
    %2453 = vmatpush1.msra.mxu0 0.0
    %2454 = vmatprep.subr.mxu0 0.0
    %2455 = vmatpush1.msra.mxu0 0.0
    %2456 = vmatprep.subr.mxu0 0.0
    %2457 = vmatpush1.msra.mxu0 0.0
    %2458 = vmatprep.subr.mxu0 0.0
    %2459 = vmatpush1.msra.mxu0 0.0
    %2460 = vmatprep.subr.mxu0 0.0
    %2461 = vmatpush1.msra.mxu0 0.0
    %2462 = vmatprep.mubr.f32.mxu0 0.0
    %2463 = vmatmul.mubr.f32.gmra.mrb[0].mxu0 %v2396
    %v2464 = vpop.f32.mrb[0].mxu0
    %v2465 = vadd.f32 0.0, %v2464
    %v2466 = vpop.f32.mrb[0].mxu0
    %2467 = vdwg.mxu0
    %2468 = vrot.lane.b32.xlu0 %v2031, 120
    %v2469 = vpop.permute.xlu0 %2468
    %2470 = vrot.lane.b32.xlu0 %v2117, 120
    %v2471 = vpop.permute.xlu0 %2470
    %v2472 = vsel %vm239, %v2469, 0
    %v2474 = vsel %vm239, %v2471, 0
    %2476 = vmatprep.subr.mxu0 0.0
    %2477 = vmatpush1.xpose.msra.mxu0 %v2474
    %2478 = vmatprep.subr.mxu0 0.0
    %2479 = vmatpush1.xpose.msra.mxu0 0.0
    %2480 = vmatprep.subr.mxu0 0.0
    %2481 = vmatpush1.xpose.msra.mxu0 0.0
    %2482 = vmatprep.subr.mxu0 0.0
    %2483 = vmatpush1.xpose.msra.mxu0 0.0
    %2484 = vmatprep.subr.mxu0 0.0
    %2485 = vmatpush1.xpose.msra.mxu0 0.0
    %2486 = vmatprep.subr.mxu0 0.0
    %2487 = vmatpush1.xpose.msra.mxu0 0.0
    %2488 = vmatprep.subr.mxu0 0.0
    %2489 = vmatpush1.xpose.msra.mxu0 0.0
    %2490 = vmatprep.subr.mxu0 0.0
    %2491 = vmatpush1.xpose.msra.mxu0 0.0
    %2492 = vmatprep.subr.mxu0 0.0
    %2493 = vmatpush1.xpose.msra.mxu0 0.0
    %2494 = vmatprep.subr.mxu0 0.0
    %2495 = vmatpush1.xpose.msra.mxu0 0.0
    %2496 = vmatprep.subr.mxu0 0.0
    %2497 = vmatpush1.xpose.msra.mxu0 0.0
    %2498 = vmatprep.subr.mxu0 0.0
    %2499 = vmatpush1.xpose.msra.mxu0 0.0
    %2500 = vmatprep.subr.mxu0 0.0
    %2501 = vmatpush1.xpose.msra.mxu0 0.0
    %2502 = vmatprep.subr.mxu0 0.0
    %2503 = vmatpush1.xpose.msra.mxu0 0.0
    %2504 = vmatprep.subr.mxu0 0.0
    %2505 = vmatpush1.xpose.msra.mxu0 0.0
    %2506 = vmatprep.subr.mxu0 0.0
    %2507 = vmatpush1.xpose.msra.mxu0 0.0
    %2508 = vmatprep.subr.mxu0 0.0
    %2509 = vmatpush1.xpose.msra.mxu0 0.0
    %2510 = vmatprep.subr.mxu0 0.0
    %2511 = vmatpush1.xpose.msra.mxu0 0.0
    %2512 = vmatprep.subr.mxu0 0.0
    %2513 = vmatpush1.xpose.msra.mxu0 0.0
    %2514 = vmatprep.subr.mxu0 0.0
    %2515 = vmatpush1.xpose.msra.mxu0 0.0
    %2516 = vmatprep.subr.mxu0 0.0
    %2517 = vmatpush1.xpose.msra.mxu0 0.0
    %2518 = vmatprep.subr.mxu0 0.0
    %2519 = vmatpush1.xpose.msra.mxu0 0.0
    %2520 = vmatprep.subr.mxu0 0.0
    %2521 = vmatpush1.xpose.msra.mxu0 0.0
    %2522 = vmatprep.subr.mxu0 0.0
    %2523 = vmatpush1.xpose.msra.mxu0 0.0
    %2524 = vmatprep.subr.mxu0 0.0
    %2525 = vmatpush1.xpose.msra.mxu0 0.0
    %2526 = vmatprep.subr.mxu0 0.0
    %2527 = vmatpush1.xpose.msra.mxu0 0.0
    %2528 = vmatprep.subr.mxu0 0.0
    %2529 = vmatpush1.xpose.msra.mxu0 0.0
    %2530 = vmatprep.subr.mxu0 0.0
    %2531 = vmatpush1.xpose.msra.mxu0 0.0
    %2532 = vmatprep.subr.mxu0 0.0
    %2533 = vmatpush1.xpose.msra.mxu0 0.0
    %2534 = vmatprep.subr.mxu0 0.0
    %2535 = vmatpush1.xpose.msra.mxu0 0.0
    %2536 = vmatprep.subr.mxu0 0.0
    %2537 = vmatpush1.xpose.msra.mxu0 0.0
    %2538 = vmatprep.subr.mxu0 0.0
    %2539 = vmatpush1.xpose.msra.mxu0 0.0
    %2540 = vmatprep.mubr.f32.mxu0 0.0
    %2541 = vmatmul.mubr.f32.gmra.mrb[0].mxu0 %v2472
    %v2542 = vpop.f32.mrb[0].mxu0
    %v2543 = vadd.f32 %v2135, %v2542
    %v2544 = vpop.f32.mrb[0].mxu0
    %2545 = vdwg.mxu0
    %2546 = vrot.lane.b32.xlu0 %v2032, 120
    %v2547 = vpop.permute.xlu0 %2546
    %2548 = vrot.lane.b32.xlu0 %v2122, 120
    %v2549 = vpop.permute.xlu0 %2548
    %v2550 = vsel %vm239, %v2547, 0
    %v2552 = vsel %vm239, %v2549, 0
    %2554 = vmatprep.subr.mxu0 0.0
    %2555 = vmatpush1.xpose.msra.mxu0 %v2552
    %2556 = vmatprep.subr.mxu0 0.0
    %2557 = vmatpush1.xpose.msra.mxu0 0.0
    %2558 = vmatprep.subr.mxu0 0.0
    %2559 = vmatpush1.xpose.msra.mxu0 0.0
    %2560 = vmatprep.subr.mxu0 0.0
    %2561 = vmatpush1.xpose.msra.mxu0 0.0
    %2562 = vmatprep.subr.mxu0 0.0
    %2563 = vmatpush1.xpose.msra.mxu0 0.0
    %2564 = vmatprep.subr.mxu0 0.0
    %2565 = vmatpush1.xpose.msra.mxu0 0.0
    %2566 = vmatprep.subr.mxu0 0.0
    %2567 = vmatpush1.xpose.msra.mxu0 0.0
    %2568 = vmatprep.subr.mxu0 0.0
    %2569 = vmatpush1.xpose.msra.mxu0 0.0
    %2570 = vmatprep.subr.mxu0 0.0
    %2571 = vmatpush1.xpose.msra.mxu0 0.0
    %2572 = vmatprep.subr.mxu0 0.0
    %2573 = vmatpush1.xpose.msra.mxu0 0.0
    %2574 = vmatprep.subr.mxu0 0.0
    %2575 = vmatpush1.xpose.msra.mxu0 0.0
    %2576 = vmatprep.subr.mxu0 0.0
    %2577 = vmatpush1.xpose.msra.mxu0 0.0
    %2578 = vmatprep.subr.mxu0 0.0
    %2579 = vmatpush1.xpose.msra.mxu0 0.0
    %2580 = vmatprep.subr.mxu0 0.0
    %2581 = vmatpush1.xpose.msra.mxu0 0.0
    %2582 = vmatprep.subr.mxu0 0.0
    %2583 = vmatpush1.xpose.msra.mxu0 0.0
    %2584 = vmatprep.subr.mxu0 0.0
    %2585 = vmatpush1.xpose.msra.mxu0 0.0
    %2586 = vmatprep.subr.mxu0 0.0
    %2587 = vmatpush1.xpose.msra.mxu0 0.0
    %2588 = vmatprep.subr.mxu0 0.0
    %2589 = vmatpush1.xpose.msra.mxu0 0.0
    %2590 = vmatprep.subr.mxu0 0.0
    %2591 = vmatpush1.xpose.msra.mxu0 0.0
    %2592 = vmatprep.subr.mxu0 0.0
    %2593 = vmatpush1.xpose.msra.mxu0 0.0
    %2594 = vmatprep.subr.mxu0 0.0
    %2595 = vmatpush1.xpose.msra.mxu0 0.0
    %2596 = vmatprep.subr.mxu0 0.0
    %2597 = vmatpush1.xpose.msra.mxu0 0.0
    %2598 = vmatprep.subr.mxu0 0.0
    %2599 = vmatpush1.xpose.msra.mxu0 0.0
    %2600 = vmatprep.subr.mxu0 0.0
    %2601 = vmatpush1.xpose.msra.mxu0 0.0
    %2602 = vmatprep.subr.mxu0 0.0
    %2603 = vmatpush1.xpose.msra.mxu0 0.0
    %2604 = vmatprep.subr.mxu0 0.0
    %2605 = vmatpush1.xpose.msra.mxu0 0.0
    %2606 = vmatprep.subr.mxu0 0.0
    %2607 = vmatpush1.xpose.msra.mxu0 0.0
    %2608 = vmatprep.subr.mxu0 0.0
    %2609 = vmatpush1.xpose.msra.mxu0 0.0
    %2610 = vmatprep.subr.mxu0 0.0
    %2611 = vmatpush1.xpose.msra.mxu0 0.0
    %2612 = vmatprep.subr.mxu0 0.0
    %2613 = vmatpush1.xpose.msra.mxu0 0.0
    %2614 = vmatprep.subr.mxu0 0.0
    %2615 = vmatpush1.xpose.msra.mxu0 0.0
    %2616 = vmatprep.subr.mxu0 0.0
    %2617 = vmatpush1.xpose.msra.mxu0 0.0
    %2618 = vmatprep.mubr.f32.mxu0 0.0
    %2619 = vmatmul.mubr.f32.gmra.mrb[0].mxu0 %v2550
    %v2620 = vpop.f32.mrb[0].mxu0
    %v2621 = vadd.f32 %v2139, %v2620
    %v2622 = vpop.f32.mrb[0].mxu0
    %2623 = vdwg.mxu0
    %v2624 = vsel %vm239, %v2543, -inf
    %2625 = vmax.xlane.f32.xlu0 %v2624
    %v2626 = vpop.xlane.xlu0 %2625
    %v2627 = vsel %vm239, %v2621, -inf
    %2628 = vmax.xlane.f32.xlu0 %v2627
    %v2629 = vpop.xlane.xlu0 %2628
    %v2630 = vsub.f32 %v2543, %v2626
    %v2631 = vsub.f32 %v2621, %v2629
    %v2632 = vmul.f32 %v2630, 1.442695
    %v2633 = vpow.pop %v2632
    %v2634 = vmul.f32 %v2631, 1.442695
    %v2635 = vpow.pop %v2634
    %v2636 = vsel %vm239, %v2633, 0.0
    %2637 = vadd.xlane.f32.xlu0 %v2636
    %v2638 = vpop.xlane.xlu0 %2637
    %v2639 = vsel %vm239, %v2635, 0.0
    %2640 = vadd.xlane.f32.xlu0 %v2639
    %v2641 = vpop.xlane.xlu0 %2640
    %v2642 = vrcp.pop %v2638
    %v2643 = vrcp.pop %v2641
    %v2644 = vmul.f32 %v2633, %v2642
    %v2645 = vmul.f32 %v2635, %v2643
    %2646 = vrot.lane.b32.xlu0 %v2117, 88
    %v2647 = vpop.permute.xlu0 %2646
    %v2650 = vsel %vm239, %v2644, 0
    %2652 = vmatprep.subr.mxu0 0.0
    %2653 = vmatpush1.msra.mxu0 %v2647
    %2654 = vmatprep.subr.mxu0 0.0
    %2655 = vmatpush1.msra.mxu0 0.0
    %2656 = vmatprep.subr.mxu0 0.0
    %2657 = vmatpush1.msra.mxu0 0.0
    %2658 = vmatprep.subr.mxu0 0.0
    %2659 = vmatpush1.msra.mxu0 0.0
    %2660 = vmatprep.subr.mxu0 0.0
    %2661 = vmatpush1.msra.mxu0 0.0
    %2662 = vmatprep.subr.mxu0 0.0
    %2663 = vmatpush1.msra.mxu0 0.0
    %2664 = vmatprep.subr.mxu0 0.0
    %2665 = vmatpush1.msra.mxu0 0.0
    %2666 = vmatprep.subr.mxu0 0.0
    %2667 = vmatpush1.msra.mxu0 0.0
    %2668 = vmatprep.subr.mxu0 0.0
    %2669 = vmatpush1.msra.mxu0 0.0
    %2670 = vmatprep.subr.mxu0 0.0
    %2671 = vmatpush1.msra.mxu0 0.0
    %2672 = vmatprep.subr.mxu0 0.0
    %2673 = vmatpush1.msra.mxu0 0.0
    %2674 = vmatprep.subr.mxu0 0.0
    %2675 = vmatpush1.msra.mxu0 0.0
    %2676 = vmatprep.subr.mxu0 0.0
    %2677 = vmatpush1.msra.mxu0 0.0
    %2678 = vmatprep.subr.mxu0 0.0
    %2679 = vmatpush1.msra.mxu0 0.0
    %2680 = vmatprep.subr.mxu0 0.0
    %2681 = vmatpush1.msra.mxu0 0.0
    %2682 = vmatprep.subr.mxu0 0.0
    %2683 = vmatpush1.msra.mxu0 0.0
    %2684 = vmatprep.subr.mxu0 0.0
    %2685 = vmatpush1.msra.mxu0 0.0
    %2686 = vmatprep.subr.mxu0 0.0
    %2687 = vmatpush1.msra.mxu0 0.0
    %2688 = vmatprep.subr.mxu0 0.0
    %2689 = vmatpush1.msra.mxu0 0.0
    %2690 = vmatprep.subr.mxu0 0.0
    %2691 = vmatpush1.msra.mxu0 0.0
    %2692 = vmatprep.subr.mxu0 0.0
    %2693 = vmatpush1.msra.mxu0 0.0
    %2694 = vmatprep.subr.mxu0 0.0
    %2695 = vmatpush1.msra.mxu0 0.0
    %2696 = vmatprep.subr.mxu0 0.0
    %2697 = vmatpush1.msra.mxu0 0.0
    %2698 = vmatprep.subr.mxu0 0.0
    %2699 = vmatpush1.msra.mxu0 0.0
    %2700 = vmatprep.subr.mxu0 0.0
    %2701 = vmatpush1.msra.mxu0 0.0
    %2702 = vmatprep.subr.mxu0 0.0
    %2703 = vmatpush1.msra.mxu0 0.0
    %2704 = vmatprep.subr.mxu0 0.0
    %2705 = vmatpush1.msra.mxu0 0.0
    %2706 = vmatprep.subr.mxu0 0.0
    %2707 = vmatpush1.msra.mxu0 0.0
    %2708 = vmatprep.subr.mxu0 0.0
    %2709 = vmatpush1.msra.mxu0 0.0
    %2710 = vmatprep.subr.mxu0 0.0
    %2711 = vmatpush1.msra.mxu0 0.0
    %2712 = vmatprep.subr.mxu0 0.0
    %2713 = vmatpush1.msra.mxu0 0.0
    %2714 = vmatprep.subr.mxu0 0.0
    %2715 = vmatpush1.msra.mxu0 0.0
    %2716 = vmatprep.mubr.f32.mxu0 0.0
    %2717 = vmatmul.mubr.f32.gmra.mrb[0].mxu0 %v2650
    %v2718 = vpop.f32.mrb[0].mxu0
    %v2719 = vadd.f32 0.0, %v2718
    %v2720 = vpop.f32.mrb[0].mxu0
    %2721 = vdwg.mxu0
    %2722 = vrot.lane.b32.xlu0 %v2122, 88
    %v2723 = vpop.permute.xlu0 %2722
    %v2726 = vsel %vm239, %v2645, 0
    %2728 = vmatprep.subr.mxu0 0.0
    %2729 = vmatpush1.msra.mxu0 %v2723
    %2730 = vmatprep.subr.mxu0 0.0
    %2731 = vmatpush1.msra.mxu0 0.0
    %2732 = vmatprep.subr.mxu0 0.0
    %2733 = vmatpush1.msra.mxu0 0.0
    %2734 = vmatprep.subr.mxu0 0.0
    %2735 = vmatpush1.msra.mxu0 0.0
    %2736 = vmatprep.subr.mxu0 0.0
    %2737 = vmatpush1.msra.mxu0 0.0
    %2738 = vmatprep.subr.mxu0 0.0
    %2739 = vmatpush1.msra.mxu0 0.0
    %2740 = vmatprep.subr.mxu0 0.0
    %2741 = vmatpush1.msra.mxu0 0.0
    %2742 = vmatprep.subr.mxu0 0.0
    %2743 = vmatpush1.msra.mxu0 0.0
    %2744 = vmatprep.subr.mxu0 0.0
    %2745 = vmatpush1.msra.mxu0 0.0
    %2746 = vmatprep.subr.mxu0 0.0
    %2747 = vmatpush1.msra.mxu0 0.0
    %2748 = vmatprep.subr.mxu0 0.0
    %2749 = vmatpush1.msra.mxu0 0.0
    %2750 = vmatprep.subr.mxu0 0.0
    %2751 = vmatpush1.msra.mxu0 0.0
    %2752 = vmatprep.subr.mxu0 0.0
    %2753 = vmatpush1.msra.mxu0 0.0
    %2754 = vmatprep.subr.mxu0 0.0
    %2755 = vmatpush1.msra.mxu0 0.0
    %2756 = vmatprep.subr.mxu0 0.0
    %2757 = vmatpush1.msra.mxu0 0.0
    %2758 = vmatprep.subr.mxu0 0.0
    %2759 = vmatpush1.msra.mxu0 0.0
    %2760 = vmatprep.subr.mxu0 0.0
    %2761 = vmatpush1.msra.mxu0 0.0
    %2762 = vmatprep.subr.mxu0 0.0
    %2763 = vmatpush1.msra.mxu0 0.0
    %2764 = vmatprep.subr.mxu0 0.0
    %2765 = vmatpush1.msra.mxu0 0.0
    %2766 = vmatprep.subr.mxu0 0.0
    %2767 = vmatpush1.msra.mxu0 0.0
    %2768 = vmatprep.subr.mxu0 0.0
    %2769 = vmatpush1.msra.mxu0 0.0
    %2770 = vmatprep.subr.mxu0 0.0
    %2771 = vmatpush1.msra.mxu0 0.0
    %2772 = vmatprep.subr.mxu0 0.0
    %2773 = vmatpush1.msra.mxu0 0.0
    %2774 = vmatprep.subr.mxu0 0.0
    %2775 = vmatpush1.msra.mxu0 0.0
    %2776 = vmatprep.subr.mxu0 0.0
    %2777 = vmatpush1.msra.mxu0 0.0
    %2778 = vmatprep.subr.mxu0 0.0
    %2779 = vmatpush1.msra.mxu0 0.0
    %2780 = vmatprep.subr.mxu0 0.0
    %2781 = vmatpush1.msra.mxu0 0.0
    %2782 = vmatprep.subr.mxu0 0.0
    %2783 = vmatpush1.msra.mxu0 0.0
    %2784 = vmatprep.subr.mxu0 0.0
    %2785 = vmatpush1.msra.mxu0 0.0
    %2786 = vmatprep.subr.mxu0 0.0
    %2787 = vmatpush1.msra.mxu0 0.0
    %2788 = vmatprep.subr.mxu0 0.0
    %2789 = vmatpush1.msra.mxu0 0.0
    %2790 = vmatprep.subr.mxu0 0.0
    %2791 = vmatpush1.msra.mxu0 0.0
    %2792 = vmatprep.mubr.f32.mxu0 0.0
    %2793 = vmatmul.mubr.f32.gmra.mrb[0].mxu0 %v2726
    %v2794 = vpop.f32.mrb[0].mxu0
    %v2795 = vadd.f32 0.0, %v2794
    %v2796 = vpop.f32.mrb[0].mxu0
    %2797 = vdwg.mxu0
    %v2799 = vsel %vm239, %v2719, 0
    %v2802 = vsel %vm239, %v2795, 0
    %2804 = vmatprep.subr.mxu0 0.0
    %2805 = vmatpush1.msra.mxu0 %v2126
    %2806 = vmatprep.subr.mxu0 0.0
    %2807 = vmatpush1.msra.mxu0 0.0
    %2808 = vmatprep.subr.mxu0 0.0
    %2809 = vmatpush1.msra.mxu0 0.0
    %2810 = vmatprep.subr.mxu0 0.0
    %2811 = vmatpush1.msra.mxu0 0.0
    %2812 = vmatprep.subr.mxu0 0.0
    %2813 = vmatpush1.msra.mxu0 0.0
    %2814 = vmatprep.subr.mxu0 0.0
    %2815 = vmatpush1.msra.mxu0 0.0
    %2816 = vmatprep.subr.mxu0 0.0
    %2817 = vmatpush1.msra.mxu0 0.0
    %2818 = vmatprep.subr.mxu0 0.0
    %2819 = vmatpush1.msra.mxu0 0.0
    %2820 = vmatprep.subr.mxu0 0.0
    %2821 = vmatpush1.msra.mxu0 0.0
    %2822 = vmatprep.subr.mxu0 0.0
    %2823 = vmatpush1.msra.mxu0 0.0
    %2824 = vmatprep.subr.mxu0 0.0
    %2825 = vmatpush1.msra.mxu0 0.0
    %2826 = vmatprep.subr.mxu0 0.0
    %2827 = vmatpush1.msra.mxu0 0.0
    %2828 = vmatprep.subr.mxu0 0.0
    %2829 = vmatpush1.msra.mxu0 0.0
    %2830 = vmatprep.subr.mxu0 0.0
    %2831 = vmatpush1.msra.mxu0 0.0
    %2832 = vmatprep.subr.mxu0 0.0
    %2833 = vmatpush1.msra.mxu0 0.0
    %2834 = vmatprep.subr.mxu0 0.0
    %2835 = vmatpush1.msra.mxu0 0.0
    %2836 = vmatprep.subr.mxu0 0.0
    %2837 = vmatpush1.msra.mxu0 0.0
    %2838 = vmatprep.subr.mxu0 0.0
    %2839 = vmatpush1.msra.mxu0 0.0
    %2840 = vmatprep.subr.mxu0 0.0
    %2841 = vmatpush1.msra.mxu0 0.0
    %2842 = vmatprep.subr.mxu0 0.0
    %2843 = vmatpush1.msra.mxu0 0.0
    %2844 = vmatprep.subr.mxu0 0.0
    %2845 = vmatpush1.msra.mxu0 0.0
    %2846 = vmatprep.subr.mxu0 0.0
    %2847 = vmatpush1.msra.mxu0 0.0
    %2848 = vmatprep.subr.mxu0 0.0
    %2849 = vmatpush1.msra.mxu0 0.0
    %2850 = vmatprep.subr.mxu0 0.0
    %2851 = vmatpush1.msra.mxu0 0.0
    %2852 = vmatprep.subr.mxu0 0.0
    %2853 = vmatpush1.msra.mxu0 0.0
    %2854 = vmatprep.subr.mxu0 0.0
    %2855 = vmatpush1.msra.mxu0 0.0
    %2856 = vmatprep.subr.mxu0 0.0
    %2857 = vmatpush1.msra.mxu0 0.0
    %2858 = vmatprep.subr.mxu0 0.0
    %2859 = vmatpush1.msra.mxu0 0.0
    %2860 = vmatprep.subr.mxu0 0.0
    %2861 = vmatpush1.msra.mxu0 0.0
    %2862 = vmatprep.subr.mxu0 0.0
    %2863 = vmatpush1.msra.mxu0 0.0
    %2864 = vmatprep.subr.mxu0 0.0
    %2865 = vmatpush1.msra.mxu0 0.0
    %2866 = vmatprep.subr.mxu0 0.0
    %2867 = vmatpush1.msra.mxu0 0.0
    %2868 = vmatprep.mubr.f32.mxu0 0.0
    %2869 = vmatmul.mubr.f32.gmra.mrb[0].mxu0 %v2799
    %v2870 = vpop.f32.mrb[0].mxu0
    %v2871 = vadd.f32 0.0, %v2870
    %v2872 = vpop.f32.mrb[0].mxu0
    %2873 = vmatprep.mubr.f32.mxu0 0.0
    %2874 = vmatmul.mubr.f32.gmra.mrb[0].mxu0 %v2802
    %v2875 = vpop.f32.mrb[0].mxu0
    %v2876 = vadd.f32 0.0, %v2875
    %v2877 = vpop.f32.mrb[0].mxu0
    %2878 = vdwg.mxu0
    %v2880 = vsel %vm239, %v2389, 0
    %v2883 = vsel %vm239, %v2465, 0
    %2885 = vmatprep.subr.mxu0 0.0
    %2886 = vmatpush1.msra.mxu0 %v2125
    %2887 = vmatprep.subr.mxu0 0.0
    %2888 = vmatpush1.msra.mxu0 0.0
    %2889 = vmatprep.subr.mxu0 0.0
    %2890 = vmatpush1.msra.mxu0 0.0
    %2891 = vmatprep.subr.mxu0 0.0
    %2892 = vmatpush1.msra.mxu0 0.0
    %2893 = vmatprep.subr.mxu0 0.0
    %2894 = vmatpush1.msra.mxu0 0.0
    %2895 = vmatprep.subr.mxu0 0.0
    %2896 = vmatpush1.msra.mxu0 0.0
    %2897 = vmatprep.subr.mxu0 0.0
    %2898 = vmatpush1.msra.mxu0 0.0
    %2899 = vmatprep.subr.mxu0 0.0
    %2900 = vmatpush1.msra.mxu0 0.0
    %2901 = vmatprep.subr.mxu0 0.0
    %2902 = vmatpush1.msra.mxu0 0.0
    %2903 = vmatprep.subr.mxu0 0.0
    %2904 = vmatpush1.msra.mxu0 0.0
    %2905 = vmatprep.subr.mxu0 0.0
    %2906 = vmatpush1.msra.mxu0 0.0
    %2907 = vmatprep.subr.mxu0 0.0
    %2908 = vmatpush1.msra.mxu0 0.0
    %2909 = vmatprep.subr.mxu0 0.0
    %2910 = vmatpush1.msra.mxu0 0.0
    %2911 = vmatprep.subr.mxu0 0.0
    %2912 = vmatpush1.msra.mxu0 0.0
    %2913 = vmatprep.subr.mxu0 0.0
    %2914 = vmatpush1.msra.mxu0 0.0
    %2915 = vmatprep.subr.mxu0 0.0
    %2916 = vmatpush1.msra.mxu0 0.0
    %2917 = vmatprep.subr.mxu0 0.0
    %2918 = vmatpush1.msra.mxu0 0.0
    %2919 = vmatprep.subr.mxu0 0.0
    %2920 = vmatpush1.msra.mxu0 0.0
    %2921 = vmatprep.subr.mxu0 0.0
    %2922 = vmatpush1.msra.mxu0 0.0
    %2923 = vmatprep.subr.mxu0 0.0
    %2924 = vmatpush1.msra.mxu0 0.0
    %2925 = vmatprep.subr.mxu0 0.0
    %2926 = vmatpush1.msra.mxu0 0.0
    %2927 = vmatprep.subr.mxu0 0.0
    %2928 = vmatpush1.msra.mxu0 0.0
    %2929 = vmatprep.subr.mxu0 0.0
    %2930 = vmatpush1.msra.mxu0 0.0
    %2931 = vmatprep.subr.mxu0 0.0
    %2932 = vmatpush1.msra.mxu0 0.0
    %2933 = vmatprep.subr.mxu0 0.0
    %2934 = vmatpush1.msra.mxu0 0.0
    %2935 = vmatprep.subr.mxu0 0.0
    %2936 = vmatpush1.msra.mxu0 0.0
    %2937 = vmatprep.subr.mxu0 0.0
    %2938 = vmatpush1.msra.mxu0 0.0
    %2939 = vmatprep.subr.mxu0 0.0
    %2940 = vmatpush1.msra.mxu0 0.0
    %2941 = vmatprep.subr.mxu0 0.0
    %2942 = vmatpush1.msra.mxu0 0.0
    %2943 = vmatprep.subr.mxu0 0.0
    %2944 = vmatpush1.msra.mxu0 0.0
    %2945 = vmatprep.subr.mxu0 0.0
    %2946 = vmatpush1.msra.mxu0 0.0
    %2947 = vmatprep.subr.mxu0 0.0
    %2948 = vmatpush1.msra.mxu0 0.0
    %2949 = vmatprep.mubr.f32.mxu0 0.0
    %2950 = vmatmul.mubr.f32.gmra.mrb[0].mxu0 %v2880
    %v2951 = vpop.f32.mrb[0].mxu0
    %v2952 = vadd.f32 %v2871, %v2951
    %v2953 = vpop.f32.mrb[0].mxu0
    %2954 = vmatprep.mubr.f32.mxu0 0.0
    %2955 = vmatmul.mubr.f32.gmra.mrb[0].mxu0 %v2883
    %v2956 = vpop.f32.mrb[0].mxu0
    %v2957 = vadd.f32 %v2876, %v2956
    %v2958 = vpop.f32.mrb[0].mxu0
    %2959 = vdwg.mxu0
    %2960 = vrot.lane.b32.xlu0 %v2031, 112
    %v2961 = vpop.permute.xlu0 %2960
    %2962 = vrot.lane.b32.xlu0 %v2117, 112
    %v2963 = vpop.permute.xlu0 %2962
    %v2964 = vsel %vm239, %v2961, 0
    %v2966 = vsel %vm239, %v2963, 0
    %2968 = vmatprep.subr.mxu0 0.0
    %2969 = vmatpush1.xpose.msra.mxu0 %v2966
    %2970 = vmatprep.subr.mxu0 0.0
    %2971 = vmatpush1.xpose.msra.mxu0 0.0
    %2972 = vmatprep.subr.mxu0 0.0
    %2973 = vmatpush1.xpose.msra.mxu0 0.0
    %2974 = vmatprep.subr.mxu0 0.0
    %2975 = vmatpush1.xpose.msra.mxu0 0.0
    %2976 = vmatprep.subr.mxu0 0.0
    %2977 = vmatpush1.xpose.msra.mxu0 0.0
    %2978 = vmatprep.subr.mxu0 0.0
    %2979 = vmatpush1.xpose.msra.mxu0 0.0
    %2980 = vmatprep.subr.mxu0 0.0
    %2981 = vmatpush1.xpose.msra.mxu0 0.0
    %2982 = vmatprep.subr.mxu0 0.0
    %2983 = vmatpush1.xpose.msra.mxu0 0.0
    %2984 = vmatprep.subr.mxu0 0.0
    %2985 = vmatpush1.xpose.msra.mxu0 0.0
    %2986 = vmatprep.subr.mxu0 0.0
    %2987 = vmatpush1.xpose.msra.mxu0 0.0
    %2988 = vmatprep.subr.mxu0 0.0
    %2989 = vmatpush1.xpose.msra.mxu0 0.0
    %2990 = vmatprep.subr.mxu0 0.0
    %2991 = vmatpush1.xpose.msra.mxu0 0.0
    %2992 = vmatprep.subr.mxu0 0.0
    %2993 = vmatpush1.xpose.msra.mxu0 0.0
    %2994 = vmatprep.subr.mxu0 0.0
    %2995 = vmatpush1.xpose.msra.mxu0 0.0
    %2996 = vmatprep.subr.mxu0 0.0
    %2997 = vmatpush1.xpose.msra.mxu0 0.0
    %2998 = vmatprep.subr.mxu0 0.0
    %2999 = vmatpush1.xpose.msra.mxu0 0.0
    %3000 = vmatprep.subr.mxu0 0.0
    %3001 = vmatpush1.xpose.msra.mxu0 0.0
    %3002 = vmatprep.subr.mxu0 0.0
    %3003 = vmatpush1.xpose.msra.mxu0 0.0
    %3004 = vmatprep.subr.mxu0 0.0
    %3005 = vmatpush1.xpose.msra.mxu0 0.0
    %3006 = vmatprep.subr.mxu0 0.0
    %3007 = vmatpush1.xpose.msra.mxu0 0.0
    %3008 = vmatprep.subr.mxu0 0.0
    %3009 = vmatpush1.xpose.msra.mxu0 0.0
    %3010 = vmatprep.subr.mxu0 0.0
    %3011 = vmatpush1.xpose.msra.mxu0 0.0
    %3012 = vmatprep.subr.mxu0 0.0
    %3013 = vmatpush1.xpose.msra.mxu0 0.0
    %3014 = vmatprep.subr.mxu0 0.0
    %3015 = vmatpush1.xpose.msra.mxu0 0.0
    %3016 = vmatprep.subr.mxu0 0.0
    %3017 = vmatpush1.xpose.msra.mxu0 0.0
    %3018 = vmatprep.subr.mxu0 0.0
    %3019 = vmatpush1.xpose.msra.mxu0 0.0
    %3020 = vmatprep.subr.mxu0 0.0
    %3021 = vmatpush1.xpose.msra.mxu0 0.0
    %3022 = vmatprep.subr.mxu0 0.0
    %3023 = vmatpush1.xpose.msra.mxu0 0.0
    %3024 = vmatprep.subr.mxu0 0.0
    %3025 = vmatpush1.xpose.msra.mxu0 0.0
    %3026 = vmatprep.subr.mxu0 0.0
    %3027 = vmatpush1.xpose.msra.mxu0 0.0
    %3028 = vmatprep.subr.mxu0 0.0
    %3029 = vmatpush1.xpose.msra.mxu0 0.0
    %3030 = vmatprep.subr.mxu0 0.0
    %3031 = vmatpush1.xpose.msra.mxu0 0.0
    %3032 = vmatprep.mubr.f32.mxu0 0.0
    %3033 = vmatmul.mubr.f32.gmra.mrb[0].mxu0 %v2964
    %v3034 = vpop.f32.mrb[0].mxu0
    %v3035 = vadd.f32 %v2135, %v3034
    %v3036 = vpop.f32.mrb[0].mxu0
    %3037 = vdwg.mxu0
    %3038 = vrot.lane.b32.xlu0 %v2032, 112
    %v3039 = vpop.permute.xlu0 %3038
    %3040 = vrot.lane.b32.xlu0 %v2122, 112
    %v3041 = vpop.permute.xlu0 %3040
    %v3042 = vsel %vm239, %v3039, 0
    %v3044 = vsel %vm239, %v3041, 0
    %3046 = vmatprep.subr.mxu0 0.0
    %3047 = vmatpush1.xpose.msra.mxu0 %v3044
    %3048 = vmatprep.subr.mxu0 0.0
    %3049 = vmatpush1.xpose.msra.mxu0 0.0
    %3050 = vmatprep.subr.mxu0 0.0
    %3051 = vmatpush1.xpose.msra.mxu0 0.0
    %3052 = vmatprep.subr.mxu0 0.0
    %3053 = vmatpush1.xpose.msra.mxu0 0.0
    %3054 = vmatprep.subr.mxu0 0.0
    %3055 = vmatpush1.xpose.msra.mxu0 0.0
    %3056 = vmatprep.subr.mxu0 0.0
    %3057 = vmatpush1.xpose.msra.mxu0 0.0
    %3058 = vmatprep.subr.mxu0 0.0
    %3059 = vmatpush1.xpose.msra.mxu0 0.0
    %3060 = vmatprep.subr.mxu0 0.0
    %3061 = vmatpush1.xpose.msra.mxu0 0.0
    %3062 = vmatprep.subr.mxu0 0.0
    %3063 = vmatpush1.xpose.msra.mxu0 0.0
    %3064 = vmatprep.subr.mxu0 0.0
    %3065 = vmatpush1.xpose.msra.mxu0 0.0
    %3066 = vmatprep.subr.mxu0 0.0
    %3067 = vmatpush1.xpose.msra.mxu0 0.0
    %3068 = vmatprep.subr.mxu0 0.0
    %3069 = vmatpush1.xpose.msra.mxu0 0.0
    %3070 = vmatprep.subr.mxu0 0.0
    %3071 = vmatpush1.xpose.msra.mxu0 0.0
    %3072 = vmatprep.subr.mxu0 0.0
    %3073 = vmatpush1.xpose.msra.mxu0 0.0
    %3074 = vmatprep.subr.mxu0 0.0
    %3075 = vmatpush1.xpose.msra.mxu0 0.0
    %3076 = vmatprep.subr.mxu0 0.0
    %3077 = vmatpush1.xpose.msra.mxu0 0.0
    %3078 = vmatprep.subr.mxu0 0.0
    %3079 = vmatpush1.xpose.msra.mxu0 0.0
    %3080 = vmatprep.subr.mxu0 0.0
    %3081 = vmatpush1.xpose.msra.mxu0 0.0
    %3082 = vmatprep.subr.mxu0 0.0
    %3083 = vmatpush1.xpose.msra.mxu0 0.0
    %3084 = vmatprep.subr.mxu0 0.0
    %3085 = vmatpush1.xpose.msra.mxu0 0.0
    %3086 = vmatprep.subr.mxu0 0.0
    %3087 = vmatpush1.xpose.msra.mxu0 0.0
    %3088 = vmatprep.subr.mxu0 0.0
    %3089 = vmatpush1.xpose.msra.mxu0 0.0
    %3090 = vmatprep.subr.mxu0 0.0
    %3091 = vmatpush1.xpose.msra.mxu0 0.0
    %3092 = vmatprep.subr.mxu0 0.0
    %3093 = vmatpush1.xpose.msra.mxu0 0.0
    %3094 = vmatprep.subr.mxu0 0.0
    %3095 = vmatpush1.xpose.msra.mxu0 0.0
    %3096 = vmatprep.subr.mxu0 0.0
    %3097 = vmatpush1.xpose.msra.mxu0 0.0
    %3098 = vmatprep.subr.mxu0 0.0
    %3099 = vmatpush1.xpose.msra.mxu0 0.0
    %3100 = vmatprep.subr.mxu0 0.0
    %3101 = vmatpush1.xpose.msra.mxu0 0.0
    %3102 = vmatprep.subr.mxu0 0.0
    %3103 = vmatpush1.xpose.msra.mxu0 0.0
    %3104 = vmatprep.subr.mxu0 0.0
    %3105 = vmatpush1.xpose.msra.mxu0 0.0
    %3106 = vmatprep.subr.mxu0 0.0
    %3107 = vmatpush1.xpose.msra.mxu0 0.0
    %3108 = vmatprep.subr.mxu0 0.0
    %3109 = vmatpush1.xpose.msra.mxu0 0.0
    %3110 = vmatprep.mubr.f32.mxu0 0.0
    %3111 = vmatmul.mubr.f32.gmra.mrb[0].mxu0 %v3042
    %v3112 = vpop.f32.mrb[0].mxu0
    %v3113 = vadd.f32 %v2139, %v3112
    %v3114 = vpop.f32.mrb[0].mxu0
    %3115 = vdwg.mxu0
    %v3116 = vsel %vm239, %v3035, -inf
    %3117 = vmax.xlane.f32.xlu0 %v3116
    %v3118 = vpop.xlane.xlu0 %3117
    %v3119 = vsel %vm239, %v3113, -inf
    %3120 = vmax.xlane.f32.xlu0 %v3119
    %v3121 = vpop.xlane.xlu0 %3120
    %v3122 = vsub.f32 %v3035, %v3118
    %v3123 = vsub.f32 %v3113, %v3121
    %v3124 = vmul.f32 %v3122, 1.442695
    %v3125 = vpow.pop %v3124
    %v3126 = vmul.f32 %v3123, 1.442695
    %v3127 = vpow.pop %v3126
    %v3128 = vsel %vm239, %v3125, 0.0
    %3129 = vadd.xlane.f32.xlu0 %v3128
    %v3130 = vpop.xlane.xlu0 %3129
    %v3131 = vsel %vm239, %v3127, 0.0
    %3132 = vadd.xlane.f32.xlu0 %v3131
    %v3133 = vpop.xlane.xlu0 %3132
    %v3134 = vrcp.pop %v3130
    %v3135 = vrcp.pop %v3133
    %v3136 = vmul.f32 %v3125, %v3134
    %v3137 = vmul.f32 %v3127, %v3135
    %3138 = vrot.lane.b32.xlu0 %v2117, 80
    %v3139 = vpop.permute.xlu0 %3138
    %v3142 = vsel %vm239, %v3136, 0
    %3144 = vmatprep.subr.mxu0 0.0
    %3145 = vmatpush1.msra.mxu0 %v3139
    %3146 = vmatprep.subr.mxu0 0.0
    %3147 = vmatpush1.msra.mxu0 0.0
    %3148 = vmatprep.subr.mxu0 0.0
    %3149 = vmatpush1.msra.mxu0 0.0
    %3150 = vmatprep.subr.mxu0 0.0
    %3151 = vmatpush1.msra.mxu0 0.0
    %3152 = vmatprep.subr.mxu0 0.0
    %3153 = vmatpush1.msra.mxu0 0.0
    %3154 = vmatprep.subr.mxu0 0.0
    %3155 = vmatpush1.msra.mxu0 0.0
    %3156 = vmatprep.subr.mxu0 0.0
    %3157 = vmatpush1.msra.mxu0 0.0
    %3158 = vmatprep.subr.mxu0 0.0
    %3159 = vmatpush1.msra.mxu0 0.0
    %3160 = vmatprep.subr.mxu0 0.0
    %3161 = vmatpush1.msra.mxu0 0.0
    %3162 = vmatprep.subr.mxu0 0.0
    %3163 = vmatpush1.msra.mxu0 0.0
    %3164 = vmatprep.subr.mxu0 0.0
    %3165 = vmatpush1.msra.mxu0 0.0
    %3166 = vmatprep.subr.mxu0 0.0
    %3167 = vmatpush1.msra.mxu0 0.0
    %3168 = vmatprep.subr.mxu0 0.0
    %3169 = vmatpush1.msra.mxu0 0.0
    %3170 = vmatprep.subr.mxu0 0.0
    %3171 = vmatpush1.msra.mxu0 0.0
    %3172 = vmatprep.subr.mxu0 0.0
    %3173 = vmatpush1.msra.mxu0 0.0
    %3174 = vmatprep.subr.mxu0 0.0
    %3175 = vmatpush1.msra.mxu0 0.0
    %3176 = vmatprep.subr.mxu0 0.0
    %3177 = vmatpush1.msra.mxu0 0.0
    %3178 = vmatprep.subr.mxu0 0.0
    %3179 = vmatpush1.msra.mxu0 0.0
    %3180 = vmatprep.subr.mxu0 0.0
    %3181 = vmatpush1.msra.mxu0 0.0
    %3182 = vmatprep.subr.mxu0 0.0
    %3183 = vmatpush1.msra.mxu0 0.0
    %3184 = vmatprep.subr.mxu0 0.0
    %3185 = vmatpush1.msra.mxu0 0.0
    %3186 = vmatprep.subr.mxu0 0.0
    %3187 = vmatpush1.msra.mxu0 0.0
    %3188 = vmatprep.subr.mxu0 0.0
    %3189 = vmatpush1.msra.mxu0 0.0
    %3190 = vmatprep.subr.mxu0 0.0
    %3191 = vmatpush1.msra.mxu0 0.0
    %3192 = vmatprep.subr.mxu0 0.0
    %3193 = vmatpush1.msra.mxu0 0.0
    %3194 = vmatprep.subr.mxu0 0.0
    %3195 = vmatpush1.msra.mxu0 0.0
    %3196 = vmatprep.subr.mxu0 0.0
    %3197 = vmatpush1.msra.mxu0 0.0
    %3198 = vmatprep.subr.mxu0 0.0
    %3199 = vmatpush1.msra.mxu0 0.0
    %3200 = vmatprep.subr.mxu0 0.0
    %3201 = vmatpush1.msra.mxu0 0.0
    %3202 = vmatprep.subr.mxu0 0.0
    %3203 = vmatpush1.msra.mxu0 0.0
    %3204 = vmatprep.subr.mxu0 0.0
    %3205 = vmatpush1.msra.mxu0 0.0
    %3206 = vmatprep.subr.mxu0 0.0
    %3207 = vmatpush1.msra.mxu0 0.0
    %3208 = vmatprep.mubr.f32.mxu0 0.0
    %3209 = vmatmul.mubr.f32.gmra.mrb[0].mxu0 %v3142
    %v3210 = vpop.f32.mrb[0].mxu0
    %v3211 = vadd.f32 0.0, %v3210
    %v3212 = vpop.f32.mrb[0].mxu0
    %3213 = vdwg.mxu0
    %3214 = vrot.lane.b32.xlu0 %v2122, 80
    %v3215 = vpop.permute.xlu0 %3214
    %v3218 = vsel %vm239, %v3137, 0
    %3220 = vmatprep.subr.mxu0 0.0
    %3221 = vmatpush1.msra.mxu0 %v3215
    %3222 = vmatprep.subr.mxu0 0.0
    %3223 = vmatpush1.msra.mxu0 0.0
    %3224 = vmatprep.subr.mxu0 0.0
    %3225 = vmatpush1.msra.mxu0 0.0
    %3226 = vmatprep.subr.mxu0 0.0
    %3227 = vmatpush1.msra.mxu0 0.0
    %3228 = vmatprep.subr.mxu0 0.0
    %3229 = vmatpush1.msra.mxu0 0.0
    %3230 = vmatprep.subr.mxu0 0.0
    %3231 = vmatpush1.msra.mxu0 0.0
    %3232 = vmatprep.subr.mxu0 0.0
    %3233 = vmatpush1.msra.mxu0 0.0
    %3234 = vmatprep.subr.mxu0 0.0
    %3235 = vmatpush1.msra.mxu0 0.0
    %3236 = vmatprep.subr.mxu0 0.0
    %3237 = vmatpush1.msra.mxu0 0.0
    %3238 = vmatprep.subr.mxu0 0.0
    %3239 = vmatpush1.msra.mxu0 0.0
    %3240 = vmatprep.subr.mxu0 0.0
    %3241 = vmatpush1.msra.mxu0 0.0
    %3242 = vmatprep.subr.mxu0 0.0
    %3243 = vmatpush1.msra.mxu0 0.0
    %3244 = vmatprep.subr.mxu0 0.0
    %3245 = vmatpush1.msra.mxu0 0.0
    %3246 = vmatprep.subr.mxu0 0.0
    %3247 = vmatpush1.msra.mxu0 0.0
    %3248 = vmatprep.subr.mxu0 0.0
    %3249 = vmatpush1.msra.mxu0 0.0
    %3250 = vmatprep.subr.mxu0 0.0
    %3251 = vmatpush1.msra.mxu0 0.0
    %3252 = vmatprep.subr.mxu0 0.0
    %3253 = vmatpush1.msra.mxu0 0.0
    %3254 = vmatprep.subr.mxu0 0.0
    %3255 = vmatpush1.msra.mxu0 0.0
    %3256 = vmatprep.subr.mxu0 0.0
    %3257 = vmatpush1.msra.mxu0 0.0
    %3258 = vmatprep.subr.mxu0 0.0
    %3259 = vmatpush1.msra.mxu0 0.0
    %3260 = vmatprep.subr.mxu0 0.0
    %3261 = vmatpush1.msra.mxu0 0.0
    %3262 = vmatprep.subr.mxu0 0.0
    %3263 = vmatpush1.msra.mxu0 0.0
    %3264 = vmatprep.subr.mxu0 0.0
    %3265 = vmatpush1.msra.mxu0 0.0
    %3266 = vmatprep.subr.mxu0 0.0
    %3267 = vmatpush1.msra.mxu0 0.0
    %3268 = vmatprep.subr.mxu0 0.0
    %3269 = vmatpush1.msra.mxu0 0.0
    %3270 = vmatprep.subr.mxu0 0.0
    %3271 = vmatpush1.msra.mxu0 0.0
    %3272 = vmatprep.subr.mxu0 0.0
    %3273 = vmatpush1.msra.mxu0 0.0
    %3274 = vmatprep.subr.mxu0 0.0
    %3275 = vmatpush1.msra.mxu0 0.0
    %3276 = vmatprep.subr.mxu0 0.0
    %3277 = vmatpush1.msra.mxu0 0.0
    %3278 = vmatprep.subr.mxu0 0.0
    %3279 = vmatpush1.msra.mxu0 0.0
    %3280 = vmatprep.subr.mxu0 0.0
    %3281 = vmatpush1.msra.mxu0 0.0
    %3282 = vmatprep.subr.mxu0 0.0
    %3283 = vmatpush1.msra.mxu0 0.0
    %3284 = vmatprep.mubr.f32.mxu0 0.0
    %3285 = vmatmul.mubr.f32.gmra.mrb[0].mxu0 %v3218
    %v3286 = vpop.f32.mrb[0].mxu0
    %v3287 = vadd.f32 0.0, %v3286
    %v3288 = vpop.f32.mrb[0].mxu0
    %3289 = vdwg.mxu0
    %v3291 = vsel %vm239, %v3211, 0
    %v3294 = vsel %vm239, %v3287, 0
    %3296 = vmatprep.subr.mxu0 0.0
    %3297 = vmatpush1.msra.mxu0 %v2127
    %3298 = vmatprep.subr.mxu0 0.0
    %3299 = vmatpush1.msra.mxu0 0.0
    %3300 = vmatprep.subr.mxu0 0.0
    %3301 = vmatpush1.msra.mxu0 0.0
    %3302 = vmatprep.subr.mxu0 0.0
    %3303 = vmatpush1.msra.mxu0 0.0
    %3304 = vmatprep.subr.mxu0 0.0
    %3305 = vmatpush1.msra.mxu0 0.0
    %3306 = vmatprep.subr.mxu0 0.0
    %3307 = vmatpush1.msra.mxu0 0.0
    %3308 = vmatprep.subr.mxu0 0.0
    %3309 = vmatpush1.msra.mxu0 0.0
    %3310 = vmatprep.subr.mxu0 0.0
    %3311 = vmatpush1.msra.mxu0 0.0
    %3312 = vmatprep.subr.mxu0 0.0
    %3313 = vmatpush1.msra.mxu0 0.0
    %3314 = vmatprep.subr.mxu0 0.0
    %3315 = vmatpush1.msra.mxu0 0.0
    %3316 = vmatprep.subr.mxu0 0.0
    %3317 = vmatpush1.msra.mxu0 0.0
    %3318 = vmatprep.subr.mxu0 0.0
    %3319 = vmatpush1.msra.mxu0 0.0
    %3320 = vmatprep.subr.mxu0 0.0
    %3321 = vmatpush1.msra.mxu0 0.0
    %3322 = vmatprep.subr.mxu0 0.0
    %3323 = vmatpush1.msra.mxu0 0.0
    %3324 = vmatprep.subr.mxu0 0.0
    %3325 = vmatpush1.msra.mxu0 0.0
    %3326 = vmatprep.subr.mxu0 0.0
    %3327 = vmatpush1.msra.mxu0 0.0
    %3328 = vmatprep.subr.mxu0 0.0
    %3329 = vmatpush1.msra.mxu0 0.0
    %3330 = vmatprep.subr.mxu0 0.0
    %3331 = vmatpush1.msra.mxu0 0.0
    %3332 = vmatprep.subr.mxu0 0.0
    %3333 = vmatpush1.msra.mxu0 0.0
    %3334 = vmatprep.subr.mxu0 0.0
    %3335 = vmatpush1.msra.mxu0 0.0
    %3336 = vmatprep.subr.mxu0 0.0
    %3337 = vmatpush1.msra.mxu0 0.0
    %3338 = vmatprep.subr.mxu0 0.0
    %3339 = vmatpush1.msra.mxu0 0.0
    %3340 = vmatprep.subr.mxu0 0.0
    %3341 = vmatpush1.msra.mxu0 0.0
    %3342 = vmatprep.subr.mxu0 0.0
    %3343 = vmatpush1.msra.mxu0 0.0
    %3344 = vmatprep.subr.mxu0 0.0
    %3345 = vmatpush1.msra.mxu0 0.0
    %3346 = vmatprep.subr.mxu0 0.0
    %3347 = vmatpush1.msra.mxu0 0.0
    %3348 = vmatprep.subr.mxu0 0.0
    %3349 = vmatpush1.msra.mxu0 0.0
    %3350 = vmatprep.subr.mxu0 0.0
    %3351 = vmatpush1.msra.mxu0 0.0
    %3352 = vmatprep.subr.mxu0 0.0
    %3353 = vmatpush1.msra.mxu0 0.0
    %3354 = vmatprep.subr.mxu0 0.0
    %3355 = vmatpush1.msra.mxu0 0.0
    %3356 = vmatprep.subr.mxu0 0.0
    %3357 = vmatpush1.msra.mxu0 0.0
    %3358 = vmatprep.subr.mxu0 0.0
    %3359 = vmatpush1.msra.mxu0 0.0
    %3360 = vmatprep.mubr.f32.mxu0 0.0
    %3361 = vmatmul.mubr.f32.gmra.mrb[0].mxu0 %v3291
    %v3362 = vpop.f32.mrb[0].mxu0
    %v3363 = vadd.f32 0.0, %v3362
    %v3364 = vpop.f32.mrb[0].mxu0
    %3365 = vmatprep.mubr.f32.mxu0 0.0
    %3366 = vmatmul.mubr.f32.gmra.mrb[0].mxu0 %v3294
    %v3367 = vpop.f32.mrb[0].mxu0
    %v3368 = vadd.f32 0.0, %v3367
    %v3369 = vpop.f32.mrb[0].mxu0
    %3370 = vdwg.mxu0
    %v3371 = vadd.f32 %v2952, %v3363
    %v3372 = vadd.f32 %v2957, %v3368
    %3373 = vrot.lane.b32.xlu0 %v2031, 104
    %v3374 = vpop.permute.xlu0 %3373
    %3375 = vrot.lane.b32.xlu0 %v2117, 104
    %v3376 = vpop.permute.xlu0 %3375
    %v3377 = vsel %vm239, %v3374, 0
    %v3379 = vsel %vm239, %v3376, 0
    %3381 = vmatprep.subr.mxu0 0.0
    %3382 = vmatpush1.xpose.msra.mxu0 %v3379
    %3383 = vmatprep.subr.mxu0 0.0
    %3384 = vmatpush1.xpose.msra.mxu0 0.0
    %3385 = vmatprep.subr.mxu0 0.0
    %3386 = vmatpush1.xpose.msra.mxu0 0.0
    %3387 = vmatprep.subr.mxu0 0.0
    %3388 = vmatpush1.xpose.msra.mxu0 0.0
    %3389 = vmatprep.subr.mxu0 0.0
    %3390 = vmatpush1.xpose.msra.mxu0 0.0
    %3391 = vmatprep.subr.mxu0 0.0
    %3392 = vmatpush1.xpose.msra.mxu0 0.0
    %3393 = vmatprep.subr.mxu0 0.0
    %3394 = vmatpush1.xpose.msra.mxu0 0.0
    %3395 = vmatprep.subr.mxu0 0.0
    %3396 = vmatpush1.xpose.msra.mxu0 0.0
    %3397 = vmatprep.subr.mxu0 0.0
    %3398 = vmatpush1.xpose.msra.mxu0 0.0
    %3399 = vmatprep.subr.mxu0 0.0
    %3400 = vmatpush1.xpose.msra.mxu0 0.0
    %3401 = vmatprep.subr.mxu0 0.0
    %3402 = vmatpush1.xpose.msra.mxu0 0.0
    %3403 = vmatprep.subr.mxu0 0.0
    %3404 = vmatpush1.xpose.msra.mxu0 0.0
    %3405 = vmatprep.subr.mxu0 0.0
    %3406 = vmatpush1.xpose.msra.mxu0 0.0
    %3407 = vmatprep.subr.mxu0 0.0
    %3408 = vmatpush1.xpose.msra.mxu0 0.0
    %3409 = vmatprep.subr.mxu0 0.0
    %3410 = vmatpush1.xpose.msra.mxu0 0.0
    %3411 = vmatprep.subr.mxu0 0.0
    %3412 = vmatpush1.xpose.msra.mxu0 0.0
    %3413 = vmatprep.subr.mxu0 0.0
    %3414 = vmatpush1.xpose.msra.mxu0 0.0
    %3415 = vmatprep.subr.mxu0 0.0
    %3416 = vmatpush1.xpose.msra.mxu0 0.0
    %3417 = vmatprep.subr.mxu0 0.0
    %3418 = vmatpush1.xpose.msra.mxu0 0.0
    %3419 = vmatprep.subr.mxu0 0.0
    %3420 = vmatpush1.xpose.msra.mxu0 0.0
    %3421 = vmatprep.subr.mxu0 0.0
    %3422 = vmatpush1.xpose.msra.mxu0 0.0
    %3423 = vmatprep.subr.mxu0 0.0
    %3424 = vmatpush1.xpose.msra.mxu0 0.0
    %3425 = vmatprep.subr.mxu0 0.0
    %3426 = vmatpush1.xpose.msra.mxu0 0.0
    %3427 = vmatprep.subr.mxu0 0.0
    %3428 = vmatpush1.xpose.msra.mxu0 0.0
    %3429 = vmatprep.subr.mxu0 0.0
    %3430 = vmatpush1.xpose.msra.mxu0 0.0
    %3431 = vmatprep.subr.mxu0 0.0
    %3432 = vmatpush1.xpose.msra.mxu0 0.0
    %3433 = vmatprep.subr.mxu0 0.0
    %3434 = vmatpush1.xpose.msra.mxu0 0.0
    %3435 = vmatprep.subr.mxu0 0.0
    %3436 = vmatpush1.xpose.msra.mxu0 0.0
    %3437 = vmatprep.subr.mxu0 0.0
    %3438 = vmatpush1.xpose.msra.mxu0 0.0
    %3439 = vmatprep.subr.mxu0 0.0
    %3440 = vmatpush1.xpose.msra.mxu0 0.0
    %3441 = vmatprep.subr.mxu0 0.0
    %3442 = vmatpush1.xpose.msra.mxu0 0.0
    %3443 = vmatprep.subr.mxu0 0.0
    %3444 = vmatpush1.xpose.msra.mxu0 0.0
    %3445 = vmatprep.mubr.f32.mxu0 0.0
    %3446 = vmatmul.mubr.f32.gmra.mrb[0].mxu0 %v3377
    %v3447 = vpop.f32.mrb[0].mxu0
    %v3448 = vadd.f32 %v2135, %v3447
    %v3449 = vpop.f32.mrb[0].mxu0
    %3450 = vdwg.mxu0
    %3451 = vrot.lane.b32.xlu0 %v2032, 104
    %v3452 = vpop.permute.xlu0 %3451
    %3453 = vrot.lane.b32.xlu0 %v2122, 104
    %v3454 = vpop.permute.xlu0 %3453
    %v3455 = vsel %vm239, %v3452, 0
    %v3457 = vsel %vm239, %v3454, 0
    %3459 = vmatprep.subr.mxu0 0.0
    %3460 = vmatpush1.xpose.msra.mxu0 %v3457
    %3461 = vmatprep.subr.mxu0 0.0
    %3462 = vmatpush1.xpose.msra.mxu0 0.0
    %3463 = vmatprep.subr.mxu0 0.0
    %3464 = vmatpush1.xpose.msra.mxu0 0.0
    %3465 = vmatprep.subr.mxu0 0.0
    %3466 = vmatpush1.xpose.msra.mxu0 0.0
    %3467 = vmatprep.subr.mxu0 0.0
    %3468 = vmatpush1.xpose.msra.mxu0 0.0
    %3469 = vmatprep.subr.mxu0 0.0
    %3470 = vmatpush1.xpose.msra.mxu0 0.0
    %3471 = vmatprep.subr.mxu0 0.0
    %3472 = vmatpush1.xpose.msra.mxu0 0.0
    %3473 = vmatprep.subr.mxu0 0.0
    %3474 = vmatpush1.xpose.msra.mxu0 0.0
    %3475 = vmatprep.subr.mxu0 0.0
    %3476 = vmatpush1.xpose.msra.mxu0 0.0
    %3477 = vmatprep.subr.mxu0 0.0
    %3478 = vmatpush1.xpose.msra.mxu0 0.0
    %3479 = vmatprep.subr.mxu0 0.0
    %3480 = vmatpush1.xpose.msra.mxu0 0.0
    %3481 = vmatprep.subr.mxu0 0.0
    %3482 = vmatpush1.xpose.msra.mxu0 0.0
    %3483 = vmatprep.subr.mxu0 0.0
    %3484 = vmatpush1.xpose.msra.mxu0 0.0
    %3485 = vmatprep.subr.mxu0 0.0
    %3486 = vmatpush1.xpose.msra.mxu0 0.0
    %3487 = vmatprep.subr.mxu0 0.0
    %3488 = vmatpush1.xpose.msra.mxu0 0.0
    %3489 = vmatprep.subr.mxu0 0.0
    %3490 = vmatpush1.xpose.msra.mxu0 0.0
    %3491 = vmatprep.subr.mxu0 0.0
    %3492 = vmatpush1.xpose.msra.mxu0 0.0
    %3493 = vmatprep.subr.mxu0 0.0
    %3494 = vmatpush1.xpose.msra.mxu0 0.0
    %3495 = vmatprep.subr.mxu0 0.0
    %3496 = vmatpush1.xpose.msra.mxu0 0.0
    %3497 = vmatprep.subr.mxu0 0.0
    %3498 = vmatpush1.xpose.msra.mxu0 0.0
    %3499 = vmatprep.subr.mxu0 0.0
    %3500 = vmatpush1.xpose.msra.mxu0 0.0
    %3501 = vmatprep.subr.mxu0 0.0
    %3502 = vmatpush1.xpose.msra.mxu0 0.0
    %3503 = vmatprep.subr.mxu0 0.0
    %3504 = vmatpush1.xpose.msra.mxu0 0.0
    %3505 = vmatprep.subr.mxu0 0.0
    %3506 = vmatpush1.xpose.msra.mxu0 0.0
    %3507 = vmatprep.subr.mxu0 0.0
    %3508 = vmatpush1.xpose.msra.mxu0 0.0
    %3509 = vmatprep.subr.mxu0 0.0
    %3510 = vmatpush1.xpose.msra.mxu0 0.0
    %3511 = vmatprep.subr.mxu0 0.0
    %3512 = vmatpush1.xpose.msra.mxu0 0.0
    %3513 = vmatprep.subr.mxu0 0.0
    %3514 = vmatpush1.xpose.msra.mxu0 0.0
    %3515 = vmatprep.subr.mxu0 0.0
    %3516 = vmatpush1.xpose.msra.mxu0 0.0
    %3517 = vmatprep.subr.mxu0 0.0
    %3518 = vmatpush1.xpose.msra.mxu0 0.0
    %3519 = vmatprep.subr.mxu0 0.0
    %3520 = vmatpush1.xpose.msra.mxu0 0.0
    %3521 = vmatprep.subr.mxu0 0.0
    %3522 = vmatpush1.xpose.msra.mxu0 0.0
    %3523 = vmatprep.mubr.f32.mxu0 0.0
    %3524 = vmatmul.mubr.f32.gmra.mrb[0].mxu0 %v3455
    %v3525 = vpop.f32.mrb[0].mxu0
    %v3526 = vadd.f32 %v2139, %v3525
    %v3527 = vpop.f32.mrb[0].mxu0
    %3528 = vdwg.mxu0
    %v3529 = vsel %vm239, %v3448, -inf
    %3530 = vmax.xlane.f32.xlu0 %v3529
    %v3531 = vpop.xlane.xlu0 %3530
    %v3532 = vsel %vm239, %v3526, -inf
    %3533 = vmax.xlane.f32.xlu0 %v3532
    %v3534 = vpop.xlane.xlu0 %3533
    %v3535 = vsub.f32 %v3448, %v3531
    %v3536 = vsub.f32 %v3526, %v3534
    %v3537 = vmul.f32 %v3535, 1.442695
    %v3538 = vpow.pop %v3537
    %v3539 = vmul.f32 %v3536, 1.442695
    %v3540 = vpow.pop %v3539
    %v3541 = vsel %vm239, %v3538, 0.0
    %3542 = vadd.xlane.f32.xlu0 %v3541
    %v3543 = vpop.xlane.xlu0 %3542
    %v3544 = vsel %vm239, %v3540, 0.0
    %3545 = vadd.xlane.f32.xlu0 %v3544
    %v3546 = vpop.xlane.xlu0 %3545
    %v3547 = vrcp.pop %v3543
    %v3548 = vrcp.pop %v3546
    %v3549 = vmul.f32 %v3538, %v3547
    %v3550 = vmul.f32 %v3540, %v3548
    %3551 = vrot.lane.b32.xlu0 %v2117, 72
    %v3552 = vpop.permute.xlu0 %3551
    %v3555 = vsel %vm239, %v3549, 0
    %3557 = vmatprep.subr.mxu0 0.0
    %3558 = vmatpush1.msra.mxu0 %v3552
    %3559 = vmatprep.subr.mxu0 0.0
    %3560 = vmatpush1.msra.mxu0 0.0
    %3561 = vmatprep.subr.mxu0 0.0
    %3562 = vmatpush1.msra.mxu0 0.0
    %3563 = vmatprep.subr.mxu0 0.0
    %3564 = vmatpush1.msra.mxu0 0.0
    %3565 = vmatprep.subr.mxu0 0.0
    %3566 = vmatpush1.msra.mxu0 0.0
    %3567 = vmatprep.subr.mxu0 0.0
    %3568 = vmatpush1.msra.mxu0 0.0
    %3569 = vmatprep.subr.mxu0 0.0
    %3570 = vmatpush1.msra.mxu0 0.0
    %3571 = vmatprep.subr.mxu0 0.0
    %3572 = vmatpush1.msra.mxu0 0.0
    %3573 = vmatprep.subr.mxu0 0.0
    %3574 = vmatpush1.msra.mxu0 0.0
    %3575 = vmatprep.subr.mxu0 0.0
    %3576 = vmatpush1.msra.mxu0 0.0
    %3577 = vmatprep.subr.mxu0 0.0
    %3578 = vmatpush1.msra.mxu0 0.0
    %3579 = vmatprep.subr.mxu0 0.0
    %3580 = vmatpush1.msra.mxu0 0.0
    %3581 = vmatprep.subr.mxu0 0.0
    %3582 = vmatpush1.msra.mxu0 0.0
    %3583 = vmatprep.subr.mxu0 0.0
    %3584 = vmatpush1.msra.mxu0 0.0
    %3585 = vmatprep.subr.mxu0 0.0
    %3586 = vmatpush1.msra.mxu0 0.0
    %3587 = vmatprep.subr.mxu0 0.0
    %3588 = vmatpush1.msra.mxu0 0.0
    %3589 = vmatprep.subr.mxu0 0.0
    %3590 = vmatpush1.msra.mxu0 0.0
    %3591 = vmatprep.subr.mxu0 0.0
    %3592 = vmatpush1.msra.mxu0 0.0
    %3593 = vmatprep.subr.mxu0 0.0
    %3594 = vmatpush1.msra.mxu0 0.0
    %3595 = vmatprep.subr.mxu0 0.0
    %3596 = vmatpush1.msra.mxu0 0.0
    %3597 = vmatprep.subr.mxu0 0.0
    %3598 = vmatpush1.msra.mxu0 0.0
    %3599 = vmatprep.subr.mxu0 0.0
    %3600 = vmatpush1.msra.mxu0 0.0
    %3601 = vmatprep.subr.mxu0 0.0
    %3602 = vmatpush1.msra.mxu0 0.0
    %3603 = vmatprep.subr.mxu0 0.0
    %3604 = vmatpush1.msra.mxu0 0.0
    %3605 = vmatprep.subr.mxu0 0.0
    %3606 = vmatpush1.msra.mxu0 0.0
    %3607 = vmatprep.subr.mxu0 0.0
    %3608 = vmatpush1.msra.mxu0 0.0
    %3609 = vmatprep.subr.mxu0 0.0
    %3610 = vmatpush1.msra.mxu0 0.0
    %3611 = vmatprep.subr.mxu0 0.0
    %3612 = vmatpush1.msra.mxu0 0.0
    %3613 = vmatprep.subr.mxu0 0.0
    %3614 = vmatpush1.msra.mxu0 0.0
    %3615 = vmatprep.subr.mxu0 0.0
    %3616 = vmatpush1.msra.mxu0 0.0
    %3617 = vmatprep.subr.mxu0 0.0
    %3618 = vmatpush1.msra.mxu0 0.0
    %3619 = vmatprep.subr.mxu0 0.0
    %3620 = vmatpush1.msra.mxu0 0.0
    %3621 = vmatprep.mubr.f32.mxu0 0.0
    %3622 = vmatmul.mubr.f32.gmra.mrb[0].mxu0 %v3555
    %v3623 = vpop.f32.mrb[0].mxu0
    %v3624 = vadd.f32 0.0, %v3623
    %v3625 = vpop.f32.mrb[0].mxu0
    %3626 = vdwg.mxu0
    %3627 = vrot.lane.b32.xlu0 %v2122, 72
    %v3628 = vpop.permute.xlu0 %3627
    %v3631 = vsel %vm239, %v3550, 0
    %3633 = vmatprep.subr.mxu0 0.0
    %3634 = vmatpush1.msra.mxu0 %v3628
    %3635 = vmatprep.subr.mxu0 0.0
    %3636 = vmatpush1.msra.mxu0 0.0
    %3637 = vmatprep.subr.mxu0 0.0
    %3638 = vmatpush1.msra.mxu0 0.0
    %3639 = vmatprep.subr.mxu0 0.0
    %3640 = vmatpush1.msra.mxu0 0.0
    %3641 = vmatprep.subr.mxu0 0.0
    %3642 = vmatpush1.msra.mxu0 0.0
    %3643 = vmatprep.subr.mxu0 0.0
    %3644 = vmatpush1.msra.mxu0 0.0
    %3645 = vmatprep.subr.mxu0 0.0
    %3646 = vmatpush1.msra.mxu0 0.0
    %3647 = vmatprep.subr.mxu0 0.0
    %3648 = vmatpush1.msra.mxu0 0.0
    %3649 = vmatprep.subr.mxu0 0.0
    %3650 = vmatpush1.msra.mxu0 0.0
    %3651 = vmatprep.subr.mxu0 0.0
    %3652 = vmatpush1.msra.mxu0 0.0
    %3653 = vmatprep.subr.mxu0 0.0
    %3654 = vmatpush1.msra.mxu0 0.0
    %3655 = vmatprep.subr.mxu0 0.0
    %3656 = vmatpush1.msra.mxu0 0.0
    %3657 = vmatprep.subr.mxu0 0.0
    %3658 = vmatpush1.msra.mxu0 0.0
    %3659 = vmatprep.subr.mxu0 0.0
    %3660 = vmatpush1.msra.mxu0 0.0
    %3661 = vmatprep.subr.mxu0 0.0
    %3662 = vmatpush1.msra.mxu0 0.0
    %3663 = vmatprep.subr.mxu0 0.0
    %3664 = vmatpush1.msra.mxu0 0.0
    %3665 = vmatprep.subr.mxu0 0.0
    %3666 = vmatpush1.msra.mxu0 0.0
    %3667 = vmatprep.subr.mxu0 0.0
    %3668 = vmatpush1.msra.mxu0 0.0
    %3669 = vmatprep.subr.mxu0 0.0
    %3670 = vmatpush1.msra.mxu0 0.0
    %3671 = vmatprep.subr.mxu0 0.0
    %3672 = vmatpush1.msra.mxu0 0.0
    %3673 = vmatprep.subr.mxu0 0.0
    %3674 = vmatpush1.msra.mxu0 0.0
    %3675 = vmatprep.subr.mxu0 0.0
    %3676 = vmatpush1.msra.mxu0 0.0
    %3677 = vmatprep.subr.mxu0 0.0
    %3678 = vmatpush1.msra.mxu0 0.0
    %3679 = vmatprep.subr.mxu0 0.0
    %3680 = vmatpush1.msra.mxu0 0.0
    %3681 = vmatprep.subr.mxu0 0.0
    %3682 = vmatpush1.msra.mxu0 0.0
    %3683 = vmatprep.subr.mxu0 0.0
    %3684 = vmatpush1.msra.mxu0 0.0
    %3685 = vmatprep.subr.mxu0 0.0
    %3686 = vmatpush1.msra.mxu0 0.0
    %3687 = vmatprep.subr.mxu0 0.0
    %3688 = vmatpush1.msra.mxu0 0.0
    %3689 = vmatprep.subr.mxu0 0.0
    %3690 = vmatpush1.msra.mxu0 0.0
    %3691 = vmatprep.subr.mxu0 0.0
    %3692 = vmatpush1.msra.mxu0 0.0
    %3693 = vmatprep.subr.mxu0 0.0
    %3694 = vmatpush1.msra.mxu0 0.0
    %3695 = vmatprep.subr.mxu0 0.0
    %3696 = vmatpush1.msra.mxu0 0.0
    %3697 = vmatprep.mubr.f32.mxu0 0.0
    %3698 = vmatmul.mubr.f32.gmra.mrb[0].mxu0 %v3631
    %v3699 = vpop.f32.mrb[0].mxu0
    %v3700 = vadd.f32 0.0, %v3699
    %v3701 = vpop.f32.mrb[0].mxu0
    %3702 = vdwg.mxu0
    %v3704 = vsel %vm239, %v3624, 0
    %v3707 = vsel %vm239, %v3700, 0
    %3709 = vmatprep.subr.mxu0 0.0
    %3710 = vmatpush1.msra.mxu0 %v2128
    %3711 = vmatprep.subr.mxu0 0.0
    %3712 = vmatpush1.msra.mxu0 0.0
    %3713 = vmatprep.subr.mxu0 0.0
    %3714 = vmatpush1.msra.mxu0 0.0
    %3715 = vmatprep.subr.mxu0 0.0
    %3716 = vmatpush1.msra.mxu0 0.0
    %3717 = vmatprep.subr.mxu0 0.0
    %3718 = vmatpush1.msra.mxu0 0.0
    %3719 = vmatprep.subr.mxu0 0.0
    %3720 = vmatpush1.msra.mxu0 0.0
    %3721 = vmatprep.subr.mxu0 0.0
    %3722 = vmatpush1.msra.mxu0 0.0
    %3723 = vmatprep.subr.mxu0 0.0
    %3724 = vmatpush1.msra.mxu0 0.0
    %3725 = vmatprep.subr.mxu0 0.0
    %3726 = vmatpush1.msra.mxu0 0.0
    %3727 = vmatprep.subr.mxu0 0.0
    %3728 = vmatpush1.msra.mxu0 0.0
    %3729 = vmatprep.subr.mxu0 0.0
    %3730 = vmatpush1.msra.mxu0 0.0
    %3731 = vmatprep.subr.mxu0 0.0
    %3732 = vmatpush1.msra.mxu0 0.0
    %3733 = vmatprep.subr.mxu0 0.0
    %3734 = vmatpush1.msra.mxu0 0.0
    %3735 = vmatprep.subr.mxu0 0.0
    %3736 = vmatpush1.msra.mxu0 0.0
    %3737 = vmatprep.subr.mxu0 0.0
    %3738 = vmatpush1.msra.mxu0 0.0
    %3739 = vmatprep.subr.mxu0 0.0
    %3740 = vmatpush1.msra.mxu0 0.0
    %3741 = vmatprep.subr.mxu0 0.0
    %3742 = vmatpush1.msra.mxu0 0.0
    %3743 = vmatprep.subr.mxu0 0.0
    %3744 = vmatpush1.msra.mxu0 0.0
    %3745 = vmatprep.subr.mxu0 0.0
    %3746 = vmatpush1.msra.mxu0 0.0
    %3747 = vmatprep.subr.mxu0 0.0
    %3748 = vmatpush1.msra.mxu0 0.0
    %3749 = vmatprep.subr.mxu0 0.0
    %3750 = vmatpush1.msra.mxu0 0.0
    %3751 = vmatprep.subr.mxu0 0.0
    %3752 = vmatpush1.msra.mxu0 0.0
    %3753 = vmatprep.subr.mxu0 0.0
    %3754 = vmatpush1.msra.mxu0 0.0
    %3755 = vmatprep.subr.mxu0 0.0
    %3756 = vmatpush1.msra.mxu0 0.0
    %3757 = vmatprep.subr.mxu0 0.0
    %3758 = vmatpush1.msra.mxu0 0.0
    %3759 = vmatprep.subr.mxu0 0.0
    %3760 = vmatpush1.msra.mxu0 0.0
    %3761 = vmatprep.subr.mxu0 0.0
    %3762 = vmatpush1.msra.mxu0 0.0
    %3763 = vmatprep.subr.mxu0 0.0
    %3764 = vmatpush1.msra.mxu0 0.0
    %3765 = vmatprep.subr.mxu0 0.0
    %3766 = vmatpush1.msra.mxu0 0.0
    %3767 = vmatprep.subr.mxu0 0.0
    %3768 = vmatpush1.msra.mxu0 0.0
    %3769 = vmatprep.subr.mxu0 0.0
    %3770 = vmatpush1.msra.mxu0 0.0
    %3771 = vmatprep.subr.mxu0 0.0
    %3772 = vmatpush1.msra.mxu0 0.0
    %3773 = vmatprep.mubr.f32.mxu0 0.0
    %3774 = vmatmul.mubr.f32.gmra.mrb[0].mxu0 %v3704
    %v3775 = vpop.f32.mrb[0].mxu0
    %v3776 = vadd.f32 0.0, %v3775
    %v3777 = vpop.f32.mrb[0].mxu0
    %3778 = vmatprep.mubr.f32.mxu0 0.0
    %3779 = vmatmul.mubr.f32.gmra.mrb[0].mxu0 %v3707
    %v3780 = vpop.f32.mrb[0].mxu0
    %v3781 = vadd.f32 0.0, %v3780
    %v3782 = vpop.f32.mrb[0].mxu0
    %3783 = vdwg.mxu0
    %v3784 = vadd.f32 %v3371, %v3776
    %v3785 = vadd.f32 %v3372, %v3781
    %v3787 = vlaneseq
    %v3788 = vshrl.u32 %v3787, 7
    %v3789 = vsub.s32 0, %v3788
    %v3790 = vrot.slane %v2129, %v3789
    %v3792 = vadd.f32 %v3784, %v3790
    %v3793 = vadd.f32 %v3785, %v3790
    %v3794 = vadd.f32 %v1893, %v3792
    %v3795 = vadd.f32 %v1894, %v3793
    %v3796 = vld [vmem:[%s17] sm:$0x1]
    %v3797 = vld [vmem:[%s18] sm:$0x1]
    %v3798 = vsel %vm93, %v3794, 0.0
    %3799 = vadd.xlane.f32.xlu0 %v3798
    %v3800 = vpop.xlane.xlu0 %3799
    %v3801 = vsel %vm93, %v3795, 0.0
    %3802 = vadd.xlane.f32.xlu0 %v3801
    %v3803 = vpop.xlane.xlu0 %3802
    %v3804 = vmul.f32 %v3800, %v100
    %v3805 = vmul.f32 %v3803, %v100
    %v3806 = vsub.f32 %v3794, %v3804
    %v3807 = vsub.f32 %v3795, %v3805
    %v3808 = vmul.f32 %v3806, %v3806
    %v3809 = vmul.f32 %v3807, %v3807
    %v3810 = vsel %vm93, %v3808, 0.0
    %3811 = vadd.xlane.f32.xlu0 %v3810
    %v3812 = vpop.xlane.xlu0 %3811
    %v3813 = vsel %vm93, %v3809, 0.0
    %3814 = vadd.xlane.f32.xlu0 %v3813
    %v3815 = vpop.xlane.xlu0 %3814
    %v3816 = vmul.f32 %v3812, %v100
    %v3817 = vmul.f32 %v3815, %v100
    %v3818 = vadd.f32 %v3816, 1e-05
    %v3819 = vadd.f32 %v3817, 1e-05
    %v3820 = vrsqrt.pop %v3818
    %v3821 = vrsqrt.pop %v3819
    %v3822 = vmul.f32 %v3806, %v3820
    %v3823 = vmul.f32 %v3807, %v3821
    %v3825 = vlaneseq
    %v3826 = vshrl.u32 %v3825, 7
    %v3827 = vsub.s32 0, %v3826
    %v3828 = vrot.slane %v3796, %v3827
    %v3830 = vmul.f32 %v3822, %v3828
    %v3831 = vmul.f32 %v3823, %v3828
    %v3833 = vlaneseq
    %v3834 = vshrl.u32 %v3833, 7
    %v3835 = vsub.s32 0, %v3834
    %v3836 = vrot.slane %v3797, %v3835
    %v3838 = vadd.f32 %v3830, %v3836
    %v3839 = vadd.f32 %v3831, %v3836
    %v3840 = vld [vmem:[%s19] sm:$0xff]
    %v3841 = vld [vmem:[%s19 + $0x8] sm:$0xff]
    %v3842 = vld [vmem:[%s19 + $0x10] sm:$0xff]
    %v3843 = vld [vmem:[%s19 + $0x18] sm:$0xff]
    %v3844 = vld [vmem:[%s20] sm:$0x1]
    %v3846 = vlaneseq
    %v3847 = vshrl.u32 %v3846, 7
    %v3848 = vsub.s32 0, %v3847
    %v3849 = vrot.slane %v3844, %v3848
    %v3852 = vsel %vm93, %v3838, 0
    %v3855 = vsel %vm93, %v3839, 0
    %3857 = vmatprep.subr.mxu0 0.0
    %3858 = vmatpush1.msra.mxu0 %v3840
    %3859 = vmatprep.subr.mxu0 0.0
    %3860 = vmatpush1.msra.mxu0 %v3841
    %3861 = vmatprep.subr.mxu0 0.0
    %3862 = vmatpush1.msra.mxu0 %v3842
    %3863 = vmatprep.subr.mxu0 0.0
    %3864 = vmatpush1.msra.mxu0 %v3843
    %3865 = vmatprep.subr.mxu0 0.0
    %3866 = vmatpush1.msra.mxu0 0.0
    %3867 = vmatprep.subr.mxu0 0.0
    %3868 = vmatpush1.msra.mxu0 0.0
    %3869 = vmatprep.subr.mxu0 0.0
    %3870 = vmatpush1.msra.mxu0 0.0
    %3871 = vmatprep.subr.mxu0 0.0
    %3872 = vmatpush1.msra.mxu0 0.0
    %3873 = vmatprep.subr.mxu0 0.0
    %3874 = vmatpush1.msra.mxu0 0.0
    %3875 = vmatprep.subr.mxu0 0.0
    %3876 = vmatpush1.msra.mxu0 0.0
    %3877 = vmatprep.subr.mxu0 0.0
    %3878 = vmatpush1.msra.mxu0 0.0
    %3879 = vmatprep.subr.mxu0 0.0
    %3880 = vmatpush1.msra.mxu0 0.0
    %3881 = vmatprep.subr.mxu0 0.0
    %3882 = vmatpush1.msra.mxu0 0.0
    %3883 = vmatprep.subr.mxu0 0.0
    %3884 = vmatpush1.msra.mxu0 0.0
    %3885 = vmatprep.subr.mxu0 0.0
    %3886 = vmatpush1.msra.mxu0 0.0
    %3887 = vmatprep.subr.mxu0 0.0
    %3888 = vmatpush1.msra.mxu0 0.0
    %3889 = vmatprep.subr.mxu0 0.0
    %3890 = vmatpush1.msra.mxu0 0.0
    %3891 = vmatprep.subr.mxu0 0.0
    %3892 = vmatpush1.msra.mxu0 0.0
    %3893 = vmatprep.subr.mxu0 0.0
    %3894 = vmatpush1.msra.mxu0 0.0
    %3895 = vmatprep.subr.mxu0 0.0
    %3896 = vmatpush1.msra.mxu0 0.0
    %3897 = vmatprep.subr.mxu0 0.0
    %3898 = vmatpush1.msra.mxu0 0.0
    %3899 = vmatprep.subr.mxu0 0.0
    %3900 = vmatpush1.msra.mxu0 0.0
    %3901 = vmatprep.subr.mxu0 0.0
    %3902 = vmatpush1.msra.mxu0 0.0
    %3903 = vmatprep.subr.mxu0 0.0
    %3904 = vmatpush1.msra.mxu0 0.0
    %3905 = vmatprep.subr.mxu0 0.0
    %3906 = vmatpush1.msra.mxu0 0.0
    %3907 = vmatprep.subr.mxu0 0.0
    %3908 = vmatpush1.msra.mxu0 0.0
    %3909 = vmatprep.subr.mxu0 0.0
    %3910 = vmatpush1.msra.mxu0 0.0
    %3911 = vmatprep.subr.mxu0 0.0
    %3912 = vmatpush1.msra.mxu0 0.0
    %3913 = vmatprep.subr.mxu0 0.0
    %3914 = vmatpush1.msra.mxu0 0.0
    %3915 = vmatprep.subr.mxu0 0.0
    %3916 = vmatpush1.msra.mxu0 0.0
    %3917 = vmatprep.subr.mxu0 0.0
    %3918 = vmatpush1.msra.mxu0 0.0
    %3919 = vmatprep.subr.mxu0 0.0
    %3920 = vmatpush1.msra.mxu0 0.0
    %3921 = vmatprep.mubr.f32.mxu0 0.0
    %3922 = vmatmul.mubr.f32.gmra.mrb[0].mxu0 %v3852
    %v3923 = vpop.f32.mrb[0].mxu0
    %v3924 = vadd.f32 %v3849, %v3923
    %v3925 = vpop.f32.mrb[0].mxu0
    %3926 = vmatprep.mubr.f32.mxu0 0.0
    %3927 = vmatmul.mubr.f32.gmra.mrb[0].mxu0 %v3855
    %v3928 = vpop.f32.mrb[0].mxu0
    %v3929 = vadd.f32 %v3849, %v3928
    %v3930 = vpop.f32.mrb[0].mxu0
    %3931 = vdwg.mxu0
    %v3932 = vmax.f32 %v3924, 0.0
    %v3933 = vmax.f32 %v3929, 0.0
    %v3934 = vld [vmem:[%s21] sm:$0xff]
    %v3935 = vld [vmem:[%s21 + $0x8] sm:$0xff]
    %v3936 = vld [vmem:[%s21 + $0x10] sm:$0xff]
    %v3937 = vld [vmem:[%s21 + $0x18] sm:$0xff]
    %v3938 = vld [vmem:[%s21 + $0x20] sm:$0xff]
    %v3939 = vld [vmem:[%s21 + $0x28] sm:$0xff]
    %v3940 = vld [vmem:[%s21 + $0x30] sm:$0xff]
    %v3941 = vld [vmem:[%s21 + $0x38] sm:$0xff]
    %vm3942 = vcmask 523264
    %v3944 = vsel %vm3942, %v3932, 0
    %v3947 = vsel %vm3942, %v3933, 0
    %3949 = vmatprep.subr.mxu0 0.0
    %3950 = vmatpush1.msra.mxu0 %v3934
    %3951 = vmatprep.subr.mxu0 0.0
    %3952 = vmatpush1.msra.mxu0 %v3935
    %3953 = vmatprep.subr.mxu0 0.0
    %3954 = vmatpush1.msra.mxu0 %v3936
    %3955 = vmatprep.subr.mxu0 0.0
    %3956 = vmatpush1.msra.mxu0 %v3937
    %3957 = vmatprep.subr.mxu0 0.0
    %3958 = vmatpush1.msra.mxu0 %v3938
    %3959 = vmatprep.subr.mxu0 0.0
    %3960 = vmatpush1.msra.mxu0 %v3939
    %3961 = vmatprep.subr.mxu0 0.0
    %3962 = vmatpush1.msra.mxu0 %v3940
    %3963 = vmatprep.subr.mxu0 0.0
    %3964 = vmatpush1.msra.mxu0 %v3941
    %3965 = vmatprep.subr.mxu0 0.0
    %3966 = vmatpush1.msra.mxu0 0.0
    %3967 = vmatprep.subr.mxu0 0.0
    %3968 = vmatpush1.msra.mxu0 0.0
    %3969 = vmatprep.subr.mxu0 0.0
    %3970 = vmatpush1.msra.mxu0 0.0
    %3971 = vmatprep.subr.mxu0 0.0
    %3972 = vmatpush1.msra.mxu0 0.0
    %3973 = vmatprep.subr.mxu0 0.0
    %3974 = vmatpush1.msra.mxu0 0.0
    %3975 = vmatprep.subr.mxu0 0.0
    %3976 = vmatpush1.msra.mxu0 0.0
    %3977 = vmatprep.subr.mxu0 0.0
    %3978 = vmatpush1.msra.mxu0 0.0
    %3979 = vmatprep.subr.mxu0 0.0
    %3980 = vmatpush1.msra.mxu0 0.0
    %3981 = vmatprep.subr.mxu0 0.0
    %3982 = vmatpush1.msra.mxu0 0.0
    %3983 = vmatprep.subr.mxu0 0.0
    %3984 = vmatpush1.msra.mxu0 0.0
    %3985 = vmatprep.subr.mxu0 0.0
    %3986 = vmatpush1.msra.mxu0 0.0
    %3987 = vmatprep.subr.mxu0 0.0
    %3988 = vmatpush1.msra.mxu0 0.0
    %3989 = vmatprep.subr.mxu0 0.0
    %3990 = vmatpush1.msra.mxu0 0.0
    %3991 = vmatprep.subr.mxu0 0.0
    %3992 = vmatpush1.msra.mxu0 0.0
    %3993 = vmatprep.subr.mxu0 0.0
    %3994 = vmatpush1.msra.mxu0 0.0
    %3995 = vmatprep.subr.mxu0 0.0
    %3996 = vmatpush1.msra.mxu0 0.0
    %3997 = vmatprep.subr.mxu0 0.0
    %3998 = vmatpush1.msra.mxu0 0.0
    %3999 = vmatprep.subr.mxu0 0.0
    %4000 = vmatpush1.msra.mxu0 0.0
    %4001 = vmatprep.subr.mxu0 0.0
    %4002 = vmatpush1.msra.mxu0 0.0
    %4003 = vmatprep.subr.mxu0 0.0
    %4004 = vmatpush1.msra.mxu0 0.0
    %4005 = vmatprep.subr.mxu0 0.0
    %4006 = vmatpush1.msra.mxu0 0.0
    %4007 = vmatprep.subr.mxu0 0.0
    %4008 = vmatpush1.msra.mxu0 0.0
    %4009 = vmatprep.subr.mxu0 0.0
    %4010 = vmatpush1.msra.mxu0 0.0
    %4011 = vmatprep.subr.mxu0 0.0
    %4012 = vmatpush1.msra.mxu0 0.0
    %4013 = vmatprep.mubr.f32.mxu0 0.0
    %4014 = vmatmul.mubr.f32.gmra.mrb[0].mxu0 %v3944
    %v4015 = vpop.f32.mrb[0].mxu0
    %v4016 = vadd.f32 0.0, %v4015
    %v4017 = vpop.f32.mrb[0].mxu0
    %4018 = vmatprep.mubr.f32.mxu0 0.0
    %4019 = vmatmul.mubr.f32.gmra.mrb[0].mxu0 %v3947
    %v4020 = vpop.f32.mrb[0].mxu0
    %v4021 = vadd.f32 0.0, %v4020
    %v4022 = vpop.f32.mrb[0].mxu0
    %4023 = vdwg.mxu0
    %v4024 = vadd.f32 %v3794, %v4016
    %v4025 = vadd.f32 %v3795, %v4021
    %v4026 = vld [vmem:[%s22] sm:$0x1]
    %v4028 = vlaneseq
    %v4029 = vshrl.u32 %v4028, 7
    %v4030 = vsub.s32 0, %v4029
    %v4031 = vrot.slane %v4026, %v4030
    %v4033 = vadd.f32 %v4024, %v4031
    %v4034 = vadd.f32 %v4025, %v4031
    %s4035 = scalar_lea.vmem %s3, 1
    %v4036 = vld [vmem:[%s4035] sm:$0x1]
    %s4037 = scalar_lea.vmem %s4, 1
    %v4038 = vld [vmem:[%s4037] sm:$0x1]
    %v4039 = vsel %vm93, %v4033, 0.0
    %4040 = vadd.xlane.f32.xlu0 %v4039
    %v4041 = vpop.xlane.xlu0 %4040
    %v4042 = vsel %vm93, %v4034, 0.0
    %4043 = vadd.xlane.f32.xlu0 %v4042
    %v4044 = vpop.xlane.xlu0 %4043
    %v4045 = vmul.f32 %v4041, %v100
    %v4046 = vmul.f32 %v4044, %v100
    %v4047 = vsub.f32 %v4033, %v4045
    %v4048 = vsub.f32 %v4034, %v4046
    %v4049 = vmul.f32 %v4047, %v4047
    %v4050 = vmul.f32 %v4048, %v4048
    %v4051 = vsel %vm93, %v4049, 0.0
    %4052 = vadd.xlane.f32.xlu0 %v4051
    %v4053 = vpop.xlane.xlu0 %4052
    %v4054 = vsel %vm93, %v4050, 0.0
    %4055 = vadd.xlane.f32.xlu0 %v4054
    %v4056 = vpop.xlane.xlu0 %4055
    %v4057 = vmul.f32 %v4053, %v100
    %v4058 = vmul.f32 %v4056, %v100
    %v4059 = vadd.f32 %v4057, 1e-05
    %v4060 = vadd.f32 %v4058, 1e-05
    %v4061 = vrsqrt.pop %v4059
    %v4062 = vrsqrt.pop %v4060
    %v4063 = vmul.f32 %v4047, %v4061
    %v4064 = vmul.f32 %v4048, %v4062
    %v4066 = vlaneseq
    %v4067 = vshrl.u32 %v4066, 7
    %v4068 = vsub.s32 0, %v4067
    %v4069 = vrot.slane %v4036, %v4068
    %v4071 = vmul.f32 %v4063, %v4069
    %v4072 = vmul.f32 %v4064, %v4069
    %v4074 = vlaneseq
    %v4075 = vshrl.u32 %v4074, 7
    %v4076 = vsub.s32 0, %v4075
    %v4077 = vrot.slane %v4038, %v4076
    %v4079 = vadd.f32 %v4071, %v4077
    %v4080 = vadd.f32 %v4072, %v4077
    %s4081 = scalar_lea.vmem %s5, 32
    %v4082 = vld [vmem:[%s4081] sm:$0xff]
    %v4083 = vld [vmem:[%s4081 + $0x8] sm:$0xff]
    %v4084 = vld [vmem:[%s4081 + $0x10] sm:$0xff]
    %v4085 = vld [vmem:[%s4081 + $0x18] sm:$0xff]
    %s4086 = scalar_lea.vmem %s6, 1
    %v4087 = vld [vmem:[%s4086] sm:$0x1]
    %v4089 = vlaneseq
    %v4090 = vshrl.u32 %v4089, 7
    %v4091 = vsub.s32 0, %v4090
    %v4092 = vrot.slane %v4087, %v4091
    %v4095 = vsel %vm93, %v4079, 0
    %v4098 = vsel %vm93, %v4080, 0
    %4100 = vmatprep.subr.mxu0 0.0
    %4101 = vmatpush1.msra.mxu0 %v4082
    %4102 = vmatprep.subr.mxu0 0.0
    %4103 = vmatpush1.msra.mxu0 %v4083
    %4104 = vmatprep.subr.mxu0 0.0
    %4105 = vmatpush1.msra.mxu0 %v4084
    %4106 = vmatprep.subr.mxu0 0.0
    %4107 = vmatpush1.msra.mxu0 %v4085
    %4108 = vmatprep.subr.mxu0 0.0
    %4109 = vmatpush1.msra.mxu0 0.0
    %4110 = vmatprep.subr.mxu0 0.0
    %4111 = vmatpush1.msra.mxu0 0.0
    %4112 = vmatprep.subr.mxu0 0.0
    %4113 = vmatpush1.msra.mxu0 0.0
    %4114 = vmatprep.subr.mxu0 0.0
    %4115 = vmatpush1.msra.mxu0 0.0
    %4116 = vmatprep.subr.mxu0 0.0
    %4117 = vmatpush1.msra.mxu0 0.0
    %4118 = vmatprep.subr.mxu0 0.0
    %4119 = vmatpush1.msra.mxu0 0.0
    %4120 = vmatprep.subr.mxu0 0.0
    %4121 = vmatpush1.msra.mxu0 0.0
    %4122 = vmatprep.subr.mxu0 0.0
    %4123 = vmatpush1.msra.mxu0 0.0
    %4124 = vmatprep.subr.mxu0 0.0
    %4125 = vmatpush1.msra.mxu0 0.0
    %4126 = vmatprep.subr.mxu0 0.0
    %4127 = vmatpush1.msra.mxu0 0.0
    %4128 = vmatprep.subr.mxu0 0.0
    %4129 = vmatpush1.msra.mxu0 0.0
    %4130 = vmatprep.subr.mxu0 0.0
    %4131 = vmatpush1.msra.mxu0 0.0
    %4132 = vmatprep.subr.mxu0 0.0
    %4133 = vmatpush1.msra.mxu0 0.0
    %4134 = vmatprep.subr.mxu0 0.0
    %4135 = vmatpush1.msra.mxu0 0.0
    %4136 = vmatprep.subr.mxu0 0.0
    %4137 = vmatpush1.msra.mxu0 0.0
    %4138 = vmatprep.subr.mxu0 0.0
    %4139 = vmatpush1.msra.mxu0 0.0
    %4140 = vmatprep.subr.mxu0 0.0
    %4141 = vmatpush1.msra.mxu0 0.0
    %4142 = vmatprep.subr.mxu0 0.0
    %4143 = vmatpush1.msra.mxu0 0.0
    %4144 = vmatprep.subr.mxu0 0.0
    %4145 = vmatpush1.msra.mxu0 0.0
    %4146 = vmatprep.subr.mxu0 0.0
    %4147 = vmatpush1.msra.mxu0 0.0
    %4148 = vmatprep.subr.mxu0 0.0
    %4149 = vmatpush1.msra.mxu0 0.0
    %4150 = vmatprep.subr.mxu0 0.0
    %4151 = vmatpush1.msra.mxu0 0.0
    %4152 = vmatprep.subr.mxu0 0.0
    %4153 = vmatpush1.msra.mxu0 0.0
    %4154 = vmatprep.subr.mxu0 0.0
    %4155 = vmatpush1.msra.mxu0 0.0
    %4156 = vmatprep.subr.mxu0 0.0
    %4157 = vmatpush1.msra.mxu0 0.0
    %4158 = vmatprep.subr.mxu0 0.0
    %4159 = vmatpush1.msra.mxu0 0.0
    %4160 = vmatprep.subr.mxu0 0.0
    %4161 = vmatpush1.msra.mxu0 0.0
    %4162 = vmatprep.subr.mxu0 0.0
    %4163 = vmatpush1.msra.mxu0 0.0
    %4164 = vmatprep.mubr.f32.mxu0 0.0
    %4165 = vmatmul.mubr.f32.gmra.mrb[0].mxu0 %v4095
    %v4166 = vpop.f32.mrb[0].mxu0
    %v4167 = vadd.f32 %v4092, %v4166
    %v4168 = vpop.f32.mrb[0].mxu0
    %4169 = vmatprep.mubr.f32.mxu0 0.0
    %4170 = vmatmul.mubr.f32.gmra.mrb[0].mxu0 %v4098
    %v4171 = vpop.f32.mrb[0].mxu0
    %v4172 = vadd.f32 %v4092, %v4171
    %v4173 = vpop.f32.mrb[0].mxu0
    %4174 = vdwg.mxu0
    %v4175 = vmul.f32 %v4167, 0.35355338
    %v4176 = vmul.f32 %v4172, 0.35355338
    %s4177 = scalar_lea.vmem %s7, 32
    %v4178 = vld [vmem:[%s4177] sm:$0xff]
    %v4179 = vld [vmem:[%s4177 + $0x8] sm:$0xff]
    %v4180 = vld [vmem:[%s4177 + $0x10] sm:$0xff]
    %v4181 = vld [vmem:[%s4177 + $0x18] sm:$0xff]
    %s4182 = scalar_lea.vmem %s8, 1
    %v4183 = vld [vmem:[%s4182] sm:$0x1]
    %4185 = vrot.lane.b32.xlu0 %v4167, 96
    %v4186 = vpop.permute.xlu0 %4185
    %v4188 = vsel %vm239, %v4175, 0
    %v4190 = vsel %vm239, %v4186, 0
    %4192 = vmatprep.subr.mxu0 0.0
    %4193 = vmatpush1.xpose.msra.mxu0 %v4190
    %4194 = vmatprep.subr.mxu0 0.0
    %4195 = vmatpush1.xpose.msra.mxu0 0.0
    %4196 = vmatprep.subr.mxu0 0.0
    %4197 = vmatpush1.xpose.msra.mxu0 0.0
    %4198 = vmatprep.subr.mxu0 0.0
    %4199 = vmatpush1.xpose.msra.mxu0 0.0
    %4200 = vmatprep.subr.mxu0 0.0
    %4201 = vmatpush1.xpose.msra.mxu0 0.0
    %4202 = vmatprep.subr.mxu0 0.0
    %4203 = vmatpush1.xpose.msra.mxu0 0.0
    %4204 = vmatprep.subr.mxu0 0.0
    %4205 = vmatpush1.xpose.msra.mxu0 0.0
    %4206 = vmatprep.subr.mxu0 0.0
    %4207 = vmatpush1.xpose.msra.mxu0 0.0
    %4208 = vmatprep.subr.mxu0 0.0
    %4209 = vmatpush1.xpose.msra.mxu0 0.0
    %4210 = vmatprep.subr.mxu0 0.0
    %4211 = vmatpush1.xpose.msra.mxu0 0.0
    %4212 = vmatprep.subr.mxu0 0.0
    %4213 = vmatpush1.xpose.msra.mxu0 0.0
    %4214 = vmatprep.subr.mxu0 0.0
    %4215 = vmatpush1.xpose.msra.mxu0 0.0
    %4216 = vmatprep.subr.mxu0 0.0
    %4217 = vmatpush1.xpose.msra.mxu0 0.0
    %4218 = vmatprep.subr.mxu0 0.0
    %4219 = vmatpush1.xpose.msra.mxu0 0.0
    %4220 = vmatprep.subr.mxu0 0.0
    %4221 = vmatpush1.xpose.msra.mxu0 0.0
    %4222 = vmatprep.subr.mxu0 0.0
    %4223 = vmatpush1.xpose.msra.mxu0 0.0
    %4224 = vmatprep.subr.mxu0 0.0
    %4225 = vmatpush1.xpose.msra.mxu0 0.0
    %4226 = vmatprep.subr.mxu0 0.0
    %4227 = vmatpush1.xpose.msra.mxu0 0.0
    %4228 = vmatprep.subr.mxu0 0.0
    %4229 = vmatpush1.xpose.msra.mxu0 0.0
    %4230 = vmatprep.subr.mxu0 0.0
    %4231 = vmatpush1.xpose.msra.mxu0 0.0
    %4232 = vmatprep.subr.mxu0 0.0
    %4233 = vmatpush1.xpose.msra.mxu0 0.0
    %4234 = vmatprep.subr.mxu0 0.0
    %4235 = vmatpush1.xpose.msra.mxu0 0.0
    %4236 = vmatprep.subr.mxu0 0.0
    %4237 = vmatpush1.xpose.msra.mxu0 0.0
    %4238 = vmatprep.subr.mxu0 0.0
    %4239 = vmatpush1.xpose.msra.mxu0 0.0
    %4240 = vmatprep.subr.mxu0 0.0
    %4241 = vmatpush1.xpose.msra.mxu0 0.0
    %4242 = vmatprep.subr.mxu0 0.0
    %4243 = vmatpush1.xpose.msra.mxu0 0.0
    %4244 = vmatprep.subr.mxu0 0.0
    %4245 = vmatpush1.xpose.msra.mxu0 0.0
    %4246 = vmatprep.subr.mxu0 0.0
    %4247 = vmatpush1.xpose.msra.mxu0 0.0
    %4248 = vmatprep.subr.mxu0 0.0
    %4249 = vmatpush1.xpose.msra.mxu0 0.0
    %4250 = vmatprep.subr.mxu0 0.0
    %4251 = vmatpush1.xpose.msra.mxu0 0.0
    %4252 = vmatprep.subr.mxu0 0.0
    %4253 = vmatpush1.xpose.msra.mxu0 0.0
    %4254 = vmatprep.subr.mxu0 0.0
    %4255 = vmatpush1.xpose.msra.mxu0 0.0
    %4256 = vmatprep.mubr.f32.mxu0 0.0
    %4257 = vmatmul.mubr.f32.gmra.mrb[0].mxu0 %v4188
    %v4258 = vpop.f32.mrb[0].mxu0
    %v4259 = vadd.f32 0.0, %v4258
    %v4260 = vpop.f32.mrb[0].mxu0
    %4261 = vdwg.mxu0
    %4263 = vrot.lane.b32.xlu0 %v4172, 96
    %v4264 = vpop.permute.xlu0 %4263
    %v4266 = vsel %vm239, %v4176, 0
    %v4268 = vsel %vm239, %v4264, 0
    %4270 = vmatprep.subr.mxu0 0.0
    %4271 = vmatpush1.xpose.msra.mxu0 %v4268
    %4272 = vmatprep.subr.mxu0 0.0
    %4273 = vmatpush1.xpose.msra.mxu0 0.0
    %4274 = vmatprep.subr.mxu0 0.0
    %4275 = vmatpush1.xpose.msra.mxu0 0.0
    %4276 = vmatprep.subr.mxu0 0.0
    %4277 = vmatpush1.xpose.msra.mxu0 0.0
    %4278 = vmatprep.subr.mxu0 0.0
    %4279 = vmatpush1.xpose.msra.mxu0 0.0
    %4280 = vmatprep.subr.mxu0 0.0
    %4281 = vmatpush1.xpose.msra.mxu0 0.0
    %4282 = vmatprep.subr.mxu0 0.0
    %4283 = vmatpush1.xpose.msra.mxu0 0.0
    %4284 = vmatprep.subr.mxu0 0.0
    %4285 = vmatpush1.xpose.msra.mxu0 0.0
    %4286 = vmatprep.subr.mxu0 0.0
    %4287 = vmatpush1.xpose.msra.mxu0 0.0
    %4288 = vmatprep.subr.mxu0 0.0
    %4289 = vmatpush1.xpose.msra.mxu0 0.0
    %4290 = vmatprep.subr.mxu0 0.0
    %4291 = vmatpush1.xpose.msra.mxu0 0.0
    %4292 = vmatprep.subr.mxu0 0.0
    %4293 = vmatpush1.xpose.msra.mxu0 0.0
    %4294 = vmatprep.subr.mxu0 0.0
    %4295 = vmatpush1.xpose.msra.mxu0 0.0
    %4296 = vmatprep.subr.mxu0 0.0
    %4297 = vmatpush1.xpose.msra.mxu0 0.0
    %4298 = vmatprep.subr.mxu0 0.0
    %4299 = vmatpush1.xpose.msra.mxu0 0.0
    %4300 = vmatprep.subr.mxu0 0.0
    %4301 = vmatpush1.xpose.msra.mxu0 0.0
    %4302 = vmatprep.subr.mxu0 0.0
    %4303 = vmatpush1.xpose.msra.mxu0 0.0
    %4304 = vmatprep.subr.mxu0 0.0
    %4305 = vmatpush1.xpose.msra.mxu0 0.0
    %4306 = vmatprep.subr.mxu0 0.0
    %4307 = vmatpush1.xpose.msra.mxu0 0.0
    %4308 = vmatprep.subr.mxu0 0.0
    %4309 = vmatpush1.xpose.msra.mxu0 0.0
    %4310 = vmatprep.subr.mxu0 0.0
    %4311 = vmatpush1.xpose.msra.mxu0 0.0
    %4312 = vmatprep.subr.mxu0 0.0
    %4313 = vmatpush1.xpose.msra.mxu0 0.0
    %4314 = vmatprep.subr.mxu0 0.0
    %4315 = vmatpush1.xpose.msra.mxu0 0.0
    %4316 = vmatprep.subr.mxu0 0.0
    %4317 = vmatpush1.xpose.msra.mxu0 0.0
    %4318 = vmatprep.subr.mxu0 0.0
    %4319 = vmatpush1.xpose.msra.mxu0 0.0
    %4320 = vmatprep.subr.mxu0 0.0
    %4321 = vmatpush1.xpose.msra.mxu0 0.0
    %4322 = vmatprep.subr.mxu0 0.0
    %4323 = vmatpush1.xpose.msra.mxu0 0.0
    %4324 = vmatprep.subr.mxu0 0.0
    %4325 = vmatpush1.xpose.msra.mxu0 0.0
    %4326 = vmatprep.subr.mxu0 0.0
    %4327 = vmatpush1.xpose.msra.mxu0 0.0
    %4328 = vmatprep.subr.mxu0 0.0
    %4329 = vmatpush1.xpose.msra.mxu0 0.0
    %4330 = vmatprep.subr.mxu0 0.0
    %4331 = vmatpush1.xpose.msra.mxu0 0.0
    %4332 = vmatprep.subr.mxu0 0.0
    %4333 = vmatpush1.xpose.msra.mxu0 0.0
    %4334 = vmatprep.mubr.f32.mxu0 0.0
    %4335 = vmatmul.mubr.f32.gmra.mrb[0].mxu0 %v4266
    %v4336 = vpop.f32.mrb[0].mxu0
    %v4337 = vadd.f32 0.0, %v4336
    %v4338 = vpop.f32.mrb[0].mxu0
    %4339 = vdwg.mxu0
    %v4340 = vsel %vm239, %v4259, -inf
    %4341 = vmax.xlane.f32.xlu0 %v4340
    %v4342 = vpop.xlane.xlu0 %4341
    %v4343 = vsel %vm239, %v4337, -inf
    %4344 = vmax.xlane.f32.xlu0 %v4343
    %v4345 = vpop.xlane.xlu0 %4344
    %v4346 = vsub.f32 %v4259, %v4342
    %v4347 = vsub.f32 %v4337, %v4345
    %v4348 = vmul.f32 %v4346, 1.442695
    %v4349 = vpow.pop %v4348
    %v4350 = vmul.f32 %v4347, 1.442695
    %v4351 = vpow.pop %v4350
    %v4352 = vsel %vm239, %v4349, 0.0
    %4353 = vadd.xlane.f32.xlu0 %v4352
    %v4354 = vpop.xlane.xlu0 %4353
    %v4355 = vsel %vm239, %v4351, 0.0
    %4356 = vadd.xlane.f32.xlu0 %v4355
    %v4357 = vpop.xlane.xlu0 %4356
    %v4358 = vrcp.pop %v4354
    %v4359 = vrcp.pop %v4357
    %v4360 = vmul.f32 %v4349, %v4358
    %v4361 = vmul.f32 %v4351, %v4359
    %4362 = vrot.lane.b32.xlu0 %v4167, 64
    %v4363 = vpop.permute.xlu0 %4362
    %v4366 = vsel %vm239, %v4360, 0
    %4368 = vmatprep.subr.mxu0 0.0
    %4369 = vmatpush1.msra.mxu0 %v4363
    %4370 = vmatprep.subr.mxu0 0.0
    %4371 = vmatpush1.msra.mxu0 0.0
    %4372 = vmatprep.subr.mxu0 0.0
    %4373 = vmatpush1.msra.mxu0 0.0
    %4374 = vmatprep.subr.mxu0 0.0
    %4375 = vmatpush1.msra.mxu0 0.0
    %4376 = vmatprep.subr.mxu0 0.0
    %4377 = vmatpush1.msra.mxu0 0.0
    %4378 = vmatprep.subr.mxu0 0.0
    %4379 = vmatpush1.msra.mxu0 0.0
    %4380 = vmatprep.subr.mxu0 0.0
    %4381 = vmatpush1.msra.mxu0 0.0
    %4382 = vmatprep.subr.mxu0 0.0
    %4383 = vmatpush1.msra.mxu0 0.0
    %4384 = vmatprep.subr.mxu0 0.0
    %4385 = vmatpush1.msra.mxu0 0.0
    %4386 = vmatprep.subr.mxu0 0.0
    %4387 = vmatpush1.msra.mxu0 0.0
    %4388 = vmatprep.subr.mxu0 0.0
    %4389 = vmatpush1.msra.mxu0 0.0
    %4390 = vmatprep.subr.mxu0 0.0
    %4391 = vmatpush1.msra.mxu0 0.0
    %4392 = vmatprep.subr.mxu0 0.0
    %4393 = vmatpush1.msra.mxu0 0.0
    %4394 = vmatprep.subr.mxu0 0.0
    %4395 = vmatpush1.msra.mxu0 0.0
    %4396 = vmatprep.subr.mxu0 0.0
    %4397 = vmatpush1.msra.mxu0 0.0
    %4398 = vmatprep.subr.mxu0 0.0
    %4399 = vmatpush1.msra.mxu0 0.0
    %4400 = vmatprep.subr.mxu0 0.0
    %4401 = vmatpush1.msra.mxu0 0.0
    %4402 = vmatprep.subr.mxu0 0.0
    %4403 = vmatpush1.msra.mxu0 0.0
    %4404 = vmatprep.subr.mxu0 0.0
    %4405 = vmatpush1.msra.mxu0 0.0
    %4406 = vmatprep.subr.mxu0 0.0
    %4407 = vmatpush1.msra.mxu0 0.0
    %4408 = vmatprep.subr.mxu0 0.0
    %4409 = vmatpush1.msra.mxu0 0.0
    %4410 = vmatprep.subr.mxu0 0.0
    %4411 = vmatpush1.msra.mxu0 0.0
    %4412 = vmatprep.subr.mxu0 0.0
    %4413 = vmatpush1.msra.mxu0 0.0
    %4414 = vmatprep.subr.mxu0 0.0
    %4415 = vmatpush1.msra.mxu0 0.0
    %4416 = vmatprep.subr.mxu0 0.0
    %4417 = vmatpush1.msra.mxu0 0.0
    %4418 = vmatprep.subr.mxu0 0.0
    %4419 = vmatpush1.msra.mxu0 0.0
    %4420 = vmatprep.subr.mxu0 0.0
    %4421 = vmatpush1.msra.mxu0 0.0
    %4422 = vmatprep.subr.mxu0 0.0
    %4423 = vmatpush1.msra.mxu0 0.0
    %4424 = vmatprep.subr.mxu0 0.0
    %4425 = vmatpush1.msra.mxu0 0.0
    %4426 = vmatprep.subr.mxu0 0.0
    %4427 = vmatpush1.msra.mxu0 0.0
    %4428 = vmatprep.subr.mxu0 0.0
    %4429 = vmatpush1.msra.mxu0 0.0
    %4430 = vmatprep.subr.mxu0 0.0
    %4431 = vmatpush1.msra.mxu0 0.0
    %4432 = vmatprep.mubr.f32.mxu0 0.0
    %4433 = vmatmul.mubr.f32.gmra.mrb[0].mxu0 %v4366
    %v4434 = vpop.f32.mrb[0].mxu0
    %v4435 = vadd.f32 0.0, %v4434
    %v4436 = vpop.f32.mrb[0].mxu0
    %4437 = vdwg.mxu0
    %4438 = vrot.lane.b32.xlu0 %v4172, 64
    %v4439 = vpop.permute.xlu0 %4438
    %v4442 = vsel %vm239, %v4361, 0
    %4444 = vmatprep.subr.mxu0 0.0
    %4445 = vmatpush1.msra.mxu0 %v4439
    %4446 = vmatprep.subr.mxu0 0.0
    %4447 = vmatpush1.msra.mxu0 0.0
    %4448 = vmatprep.subr.mxu0 0.0
    %4449 = vmatpush1.msra.mxu0 0.0
    %4450 = vmatprep.subr.mxu0 0.0
    %4451 = vmatpush1.msra.mxu0 0.0
    %4452 = vmatprep.subr.mxu0 0.0
    %4453 = vmatpush1.msra.mxu0 0.0
    %4454 = vmatprep.subr.mxu0 0.0
    %4455 = vmatpush1.msra.mxu0 0.0
    %4456 = vmatprep.subr.mxu0 0.0
    %4457 = vmatpush1.msra.mxu0 0.0
    %4458 = vmatprep.subr.mxu0 0.0
    %4459 = vmatpush1.msra.mxu0 0.0
    %4460 = vmatprep.subr.mxu0 0.0
    %4461 = vmatpush1.msra.mxu0 0.0
    %4462 = vmatprep.subr.mxu0 0.0
    %4463 = vmatpush1.msra.mxu0 0.0
    %4464 = vmatprep.subr.mxu0 0.0
    %4465 = vmatpush1.msra.mxu0 0.0
    %4466 = vmatprep.subr.mxu0 0.0
    %4467 = vmatpush1.msra.mxu0 0.0
    %4468 = vmatprep.subr.mxu0 0.0
    %4469 = vmatpush1.msra.mxu0 0.0
    %4470 = vmatprep.subr.mxu0 0.0
    %4471 = vmatpush1.msra.mxu0 0.0
    %4472 = vmatprep.subr.mxu0 0.0
    %4473 = vmatpush1.msra.mxu0 0.0
    %4474 = vmatprep.subr.mxu0 0.0
    %4475 = vmatpush1.msra.mxu0 0.0
    %4476 = vmatprep.subr.mxu0 0.0
    %4477 = vmatpush1.msra.mxu0 0.0
    %4478 = vmatprep.subr.mxu0 0.0
    %4479 = vmatpush1.msra.mxu0 0.0
    %4480 = vmatprep.subr.mxu0 0.0
    %4481 = vmatpush1.msra.mxu0 0.0
    %4482 = vmatprep.subr.mxu0 0.0
    %4483 = vmatpush1.msra.mxu0 0.0
    %4484 = vmatprep.subr.mxu0 0.0
    %4485 = vmatpush1.msra.mxu0 0.0
    %4486 = vmatprep.subr.mxu0 0.0
    %4487 = vmatpush1.msra.mxu0 0.0
    %4488 = vmatprep.subr.mxu0 0.0
    %4489 = vmatpush1.msra.mxu0 0.0
    %4490 = vmatprep.subr.mxu0 0.0
    %4491 = vmatpush1.msra.mxu0 0.0
    %4492 = vmatprep.subr.mxu0 0.0
    %4493 = vmatpush1.msra.mxu0 0.0
    %4494 = vmatprep.subr.mxu0 0.0
    %4495 = vmatpush1.msra.mxu0 0.0
    %4496 = vmatprep.subr.mxu0 0.0
    %4497 = vmatpush1.msra.mxu0 0.0
    %4498 = vmatprep.subr.mxu0 0.0
    %4499 = vmatpush1.msra.mxu0 0.0
    %4500 = vmatprep.subr.mxu0 0.0
    %4501 = vmatpush1.msra.mxu0 0.0
    %4502 = vmatprep.subr.mxu0 0.0
    %4503 = vmatpush1.msra.mxu0 0.0
    %4504 = vmatprep.subr.mxu0 0.0
    %4505 = vmatpush1.msra.mxu0 0.0
    %4506 = vmatprep.subr.mxu0 0.0
    %4507 = vmatpush1.msra.mxu0 0.0
    %4508 = vmatprep.mubr.f32.mxu0 0.0
    %4509 = vmatmul.mubr.f32.gmra.mrb[0].mxu0 %v4442
    %v4510 = vpop.f32.mrb[0].mxu0
    %v4511 = vadd.f32 0.0, %v4510
    %v4512 = vpop.f32.mrb[0].mxu0
    %4513 = vdwg.mxu0
    %4514 = vrot.lane.b32.xlu0 %v4175, 120
    %v4515 = vpop.permute.xlu0 %4514
    %4516 = vrot.lane.b32.xlu0 %v4167, 88
    %v4517 = vpop.permute.xlu0 %4516
    %v4518 = vsel %vm239, %v4515, 0
    %v4520 = vsel %vm239, %v4517, 0
    %4522 = vmatprep.subr.mxu0 0.0
    %4523 = vmatpush1.xpose.msra.mxu0 %v4520
    %4524 = vmatprep.subr.mxu0 0.0
    %4525 = vmatpush1.xpose.msra.mxu0 0.0
    %4526 = vmatprep.subr.mxu0 0.0
    %4527 = vmatpush1.xpose.msra.mxu0 0.0
    %4528 = vmatprep.subr.mxu0 0.0
    %4529 = vmatpush1.xpose.msra.mxu0 0.0
    %4530 = vmatprep.subr.mxu0 0.0
    %4531 = vmatpush1.xpose.msra.mxu0 0.0
    %4532 = vmatprep.subr.mxu0 0.0
    %4533 = vmatpush1.xpose.msra.mxu0 0.0
    %4534 = vmatprep.subr.mxu0 0.0
    %4535 = vmatpush1.xpose.msra.mxu0 0.0
    %4536 = vmatprep.subr.mxu0 0.0
    %4537 = vmatpush1.xpose.msra.mxu0 0.0
    %4538 = vmatprep.subr.mxu0 0.0
    %4539 = vmatpush1.xpose.msra.mxu0 0.0
    %4540 = vmatprep.subr.mxu0 0.0
    %4541 = vmatpush1.xpose.msra.mxu0 0.0
    %4542 = vmatprep.subr.mxu0 0.0
    %4543 = vmatpush1.xpose.msra.mxu0 0.0
    %4544 = vmatprep.subr.mxu0 0.0
    %4545 = vmatpush1.xpose.msra.mxu0 0.0
    %4546 = vmatprep.subr.mxu0 0.0
    %4547 = vmatpush1.xpose.msra.mxu0 0.0
    %4548 = vmatprep.subr.mxu0 0.0
    %4549 = vmatpush1.xpose.msra.mxu0 0.0
    %4550 = vmatprep.subr.mxu0 0.0
    %4551 = vmatpush1.xpose.msra.mxu0 0.0
    %4552 = vmatprep.subr.mxu0 0.0
    %4553 = vmatpush1.xpose.msra.mxu0 0.0
    %4554 = vmatprep.subr.mxu0 0.0
    %4555 = vmatpush1.xpose.msra.mxu0 0.0
    %4556 = vmatprep.subr.mxu0 0.0
    %4557 = vmatpush1.xpose.msra.mxu0 0.0
    %4558 = vmatprep.subr.mxu0 0.0
    %4559 = vmatpush1.xpose.msra.mxu0 0.0
    %4560 = vmatprep.subr.mxu0 0.0
    %4561 = vmatpush1.xpose.msra.mxu0 0.0
    %4562 = vmatprep.subr.mxu0 0.0
    %4563 = vmatpush1.xpose.msra.mxu0 0.0
    %4564 = vmatprep.subr.mxu0 0.0
    %4565 = vmatpush1.xpose.msra.mxu0 0.0
    %4566 = vmatprep.subr.mxu0 0.0
    %4567 = vmatpush1.xpose.msra.mxu0 0.0
    %4568 = vmatprep.subr.mxu0 0.0
    %4569 = vmatpush1.xpose.msra.mxu0 0.0
    %4570 = vmatprep.subr.mxu0 0.0
    %4571 = vmatpush1.xpose.msra.mxu0 0.0
    %4572 = vmatprep.subr.mxu0 0.0
    %4573 = vmatpush1.xpose.msra.mxu0 0.0
    %4574 = vmatprep.subr.mxu0 0.0
    %4575 = vmatpush1.xpose.msra.mxu0 0.0
    %4576 = vmatprep.subr.mxu0 0.0
    %4577 = vmatpush1.xpose.msra.mxu0 0.0
    %4578 = vmatprep.subr.mxu0 0.0
    %4579 = vmatpush1.xpose.msra.mxu0 0.0
    %4580 = vmatprep.subr.mxu0 0.0
    %4581 = vmatpush1.xpose.msra.mxu0 0.0
    %4582 = vmatprep.subr.mxu0 0.0
    %4583 = vmatpush1.xpose.msra.mxu0 0.0
    %4584 = vmatprep.subr.mxu0 0.0
    %4585 = vmatpush1.xpose.msra.mxu0 0.0
    %4586 = vmatprep.mubr.f32.mxu0 0.0
    %4587 = vmatmul.mubr.f32.gmra.mrb[0].mxu0 %v4518
    %v4588 = vpop.f32.mrb[0].mxu0
    %v4589 = vadd.f32 0.0, %v4588
    %v4590 = vpop.f32.mrb[0].mxu0
    %4591 = vdwg.mxu0
    %4592 = vrot.lane.b32.xlu0 %v4176, 120
    %v4593 = vpop.permute.xlu0 %4592
    %4594 = vrot.lane.b32.xlu0 %v4172, 88
    %v4595 = vpop.permute.xlu0 %4594
    %v4596 = vsel %vm239, %v4593, 0
    %v4598 = vsel %vm239, %v4595, 0
    %4600 = vmatprep.subr.mxu0 0.0
    %4601 = vmatpush1.xpose.msra.mxu0 %v4598
    %4602 = vmatprep.subr.mxu0 0.0
    %4603 = vmatpush1.xpose.msra.mxu0 0.0
    %4604 = vmatprep.subr.mxu0 0.0
    %4605 = vmatpush1.xpose.msra.mxu0 0.0
    %4606 = vmatprep.subr.mxu0 0.0
    %4607 = vmatpush1.xpose.msra.mxu0 0.0
    %4608 = vmatprep.subr.mxu0 0.0
    %4609 = vmatpush1.xpose.msra.mxu0 0.0
    %4610 = vmatprep.subr.mxu0 0.0
    %4611 = vmatpush1.xpose.msra.mxu0 0.0
    %4612 = vmatprep.subr.mxu0 0.0
    %4613 = vmatpush1.xpose.msra.mxu0 0.0
    %4614 = vmatprep.subr.mxu0 0.0
    %4615 = vmatpush1.xpose.msra.mxu0 0.0
    %4616 = vmatprep.subr.mxu0 0.0
    %4617 = vmatpush1.xpose.msra.mxu0 0.0
    %4618 = vmatprep.subr.mxu0 0.0
    %4619 = vmatpush1.xpose.msra.mxu0 0.0
    %4620 = vmatprep.subr.mxu0 0.0
    %4621 = vmatpush1.xpose.msra.mxu0 0.0
    %4622 = vmatprep.subr.mxu0 0.0
    %4623 = vmatpush1.xpose.msra.mxu0 0.0
    %4624 = vmatprep.subr.mxu0 0.0
    %4625 = vmatpush1.xpose.msra.mxu0 0.0
    %4626 = vmatprep.subr.mxu0 0.0
    %4627 = vmatpush1.xpose.msra.mxu0 0.0
    %4628 = vmatprep.subr.mxu0 0.0
    %4629 = vmatpush1.xpose.msra.mxu0 0.0
    %4630 = vmatprep.subr.mxu0 0.0
    %4631 = vmatpush1.xpose.msra.mxu0 0.0
    %4632 = vmatprep.subr.mxu0 0.0
    %4633 = vmatpush1.xpose.msra.mxu0 0.0
    %4634 = vmatprep.subr.mxu0 0.0
    %4635 = vmatpush1.xpose.msra.mxu0 0.0
    %4636 = vmatprep.subr.mxu0 0.0
    %4637 = vmatpush1.xpose.msra.mxu0 0.0
    %4638 = vmatprep.subr.mxu0 0.0
    %4639 = vmatpush1.xpose.msra.mxu0 0.0
    %4640 = vmatprep.subr.mxu0 0.0
    %4641 = vmatpush1.xpose.msra.mxu0 0.0
    %4642 = vmatprep.subr.mxu0 0.0
    %4643 = vmatpush1.xpose.msra.mxu0 0.0
    %4644 = vmatprep.subr.mxu0 0.0
    %4645 = vmatpush1.xpose.msra.mxu0 0.0
    %4646 = vmatprep.subr.mxu0 0.0
    %4647 = vmatpush1.xpose.msra.mxu0 0.0
    %4648 = vmatprep.subr.mxu0 0.0
    %4649 = vmatpush1.xpose.msra.mxu0 0.0
    %4650 = vmatprep.subr.mxu0 0.0
    %4651 = vmatpush1.xpose.msra.mxu0 0.0
    %4652 = vmatprep.subr.mxu0 0.0
    %4653 = vmatpush1.xpose.msra.mxu0 0.0
    %4654 = vmatprep.subr.mxu0 0.0
    %4655 = vmatpush1.xpose.msra.mxu0 0.0
    %4656 = vmatprep.subr.mxu0 0.0
    %4657 = vmatpush1.xpose.msra.mxu0 0.0
    %4658 = vmatprep.subr.mxu0 0.0
    %4659 = vmatpush1.xpose.msra.mxu0 0.0
    %4660 = vmatprep.subr.mxu0 0.0
    %4661 = vmatpush1.xpose.msra.mxu0 0.0
    %4662 = vmatprep.subr.mxu0 0.0
    %4663 = vmatpush1.xpose.msra.mxu0 0.0
    %4664 = vmatprep.mubr.f32.mxu0 0.0
    %4665 = vmatmul.mubr.f32.gmra.mrb[0].mxu0 %v4596
    %v4666 = vpop.f32.mrb[0].mxu0
    %v4667 = vadd.f32 0.0, %v4666
    %v4668 = vpop.f32.mrb[0].mxu0
    %4669 = vdwg.mxu0
    %v4670 = vsel %vm239, %v4589, -inf
    %4671 = vmax.xlane.f32.xlu0 %v4670
    %v4672 = vpop.xlane.xlu0 %4671
    %v4673 = vsel %vm239, %v4667, -inf
    %4674 = vmax.xlane.f32.xlu0 %v4673
    %v4675 = vpop.xlane.xlu0 %4674
    %v4676 = vsub.f32 %v4589, %v4672
    %v4677 = vsub.f32 %v4667, %v4675
    %v4678 = vmul.f32 %v4676, 1.442695
    %v4679 = vpow.pop %v4678
    %v4680 = vmul.f32 %v4677, 1.442695
    %v4681 = vpow.pop %v4680
    %v4682 = vsel %vm239, %v4679, 0.0
    %4683 = vadd.xlane.f32.xlu0 %v4682
    %v4684 = vpop.xlane.xlu0 %4683
    %v4685 = vsel %vm239, %v4681, 0.0
    %4686 = vadd.xlane.f32.xlu0 %v4685
    %v4687 = vpop.xlane.xlu0 %4686
    %v4688 = vrcp.pop %v4684
    %v4689 = vrcp.pop %v4687
    %v4690 = vmul.f32 %v4679, %v4688
    %v4691 = vmul.f32 %v4681, %v4689
    %4692 = vrot.lane.b32.xlu0 %v4167, 56
    %v4693 = vpop.permute.xlu0 %4692
    %v4696 = vsel %vm239, %v4690, 0
    %4698 = vmatprep.subr.mxu0 0.0
    %4699 = vmatpush1.msra.mxu0 %v4693
    %4700 = vmatprep.subr.mxu0 0.0
    %4701 = vmatpush1.msra.mxu0 0.0
    %4702 = vmatprep.subr.mxu0 0.0
    %4703 = vmatpush1.msra.mxu0 0.0
    %4704 = vmatprep.subr.mxu0 0.0
    %4705 = vmatpush1.msra.mxu0 0.0
    %4706 = vmatprep.subr.mxu0 0.0
    %4707 = vmatpush1.msra.mxu0 0.0
    %4708 = vmatprep.subr.mxu0 0.0
    %4709 = vmatpush1.msra.mxu0 0.0
    %4710 = vmatprep.subr.mxu0 0.0
    %4711 = vmatpush1.msra.mxu0 0.0
    %4712 = vmatprep.subr.mxu0 0.0
    %4713 = vmatpush1.msra.mxu0 0.0
    %4714 = vmatprep.subr.mxu0 0.0
    %4715 = vmatpush1.msra.mxu0 0.0
    %4716 = vmatprep.subr.mxu0 0.0
    %4717 = vmatpush1.msra.mxu0 0.0
    %4718 = vmatprep.subr.mxu0 0.0
    %4719 = vmatpush1.msra.mxu0 0.0
    %4720 = vmatprep.subr.mxu0 0.0
    %4721 = vmatpush1.msra.mxu0 0.0
    %4722 = vmatprep.subr.mxu0 0.0
    %4723 = vmatpush1.msra.mxu0 0.0
    %4724 = vmatprep.subr.mxu0 0.0
    %4725 = vmatpush1.msra.mxu0 0.0
    %4726 = vmatprep.subr.mxu0 0.0
    %4727 = vmatpush1.msra.mxu0 0.0
    %4728 = vmatprep.subr.mxu0 0.0
    %4729 = vmatpush1.msra.mxu0 0.0
    %4730 = vmatprep.subr.mxu0 0.0
    %4731 = vmatpush1.msra.mxu0 0.0
    %4732 = vmatprep.subr.mxu0 0.0
    %4733 = vmatpush1.msra.mxu0 0.0
    %4734 = vmatprep.subr.mxu0 0.0
    %4735 = vmatpush1.msra.mxu0 0.0
    %4736 = vmatprep.subr.mxu0 0.0
    %4737 = vmatpush1.msra.mxu0 0.0
    %4738 = vmatprep.subr.mxu0 0.0
    %4739 = vmatpush1.msra.mxu0 0.0
    %4740 = vmatprep.subr.mxu0 0.0
    %4741 = vmatpush1.msra.mxu0 0.0
    %4742 = vmatprep.subr.mxu0 0.0
    %4743 = vmatpush1.msra.mxu0 0.0
    %4744 = vmatprep.subr.mxu0 0.0
    %4745 = vmatpush1.msra.mxu0 0.0
    %4746 = vmatprep.subr.mxu0 0.0
    %4747 = vmatpush1.msra.mxu0 0.0
    %4748 = vmatprep.subr.mxu0 0.0
    %4749 = vmatpush1.msra.mxu0 0.0
    %4750 = vmatprep.subr.mxu0 0.0
    %4751 = vmatpush1.msra.mxu0 0.0
    %4752 = vmatprep.subr.mxu0 0.0
    %4753 = vmatpush1.msra.mxu0 0.0
    %4754 = vmatprep.subr.mxu0 0.0
    %4755 = vmatpush1.msra.mxu0 0.0
    %4756 = vmatprep.subr.mxu0 0.0
    %4757 = vmatpush1.msra.mxu0 0.0
    %4758 = vmatprep.subr.mxu0 0.0
    %4759 = vmatpush1.msra.mxu0 0.0
    %4760 = vmatprep.subr.mxu0 0.0
    %4761 = vmatpush1.msra.mxu0 0.0
    %4762 = vmatprep.mubr.f32.mxu0 0.0
    %4763 = vmatmul.mubr.f32.gmra.mrb[0].mxu0 %v4696
    %v4764 = vpop.f32.mrb[0].mxu0
    %v4765 = vadd.f32 0.0, %v4764
    %v4766 = vpop.f32.mrb[0].mxu0
    %4767 = vdwg.mxu0
    %4768 = vrot.lane.b32.xlu0 %v4172, 56
    %v4769 = vpop.permute.xlu0 %4768
    %v4772 = vsel %vm239, %v4691, 0
    %4774 = vmatprep.subr.mxu0 0.0
    %4775 = vmatpush1.msra.mxu0 %v4769
    %4776 = vmatprep.subr.mxu0 0.0
    %4777 = vmatpush1.msra.mxu0 0.0
    %4778 = vmatprep.subr.mxu0 0.0
    %4779 = vmatpush1.msra.mxu0 0.0
    %4780 = vmatprep.subr.mxu0 0.0
    %4781 = vmatpush1.msra.mxu0 0.0
    %4782 = vmatprep.subr.mxu0 0.0
    %4783 = vmatpush1.msra.mxu0 0.0
    %4784 = vmatprep.subr.mxu0 0.0
    %4785 = vmatpush1.msra.mxu0 0.0
    %4786 = vmatprep.subr.mxu0 0.0
    %4787 = vmatpush1.msra.mxu0 0.0
    %4788 = vmatprep.subr.mxu0 0.0
    %4789 = vmatpush1.msra.mxu0 0.0
    %4790 = vmatprep.subr.mxu0 0.0
    %4791 = vmatpush1.msra.mxu0 0.0
    %4792 = vmatprep.subr.mxu0 0.0
    %4793 = vmatpush1.msra.mxu0 0.0
    %4794 = vmatprep.subr.mxu0 0.0
    %4795 = vmatpush1.msra.mxu0 0.0
    %4796 = vmatprep.subr.mxu0 0.0
    %4797 = vmatpush1.msra.mxu0 0.0
    %4798 = vmatprep.subr.mxu0 0.0
    %4799 = vmatpush1.msra.mxu0 0.0
    %4800 = vmatprep.subr.mxu0 0.0
    %4801 = vmatpush1.msra.mxu0 0.0
    %4802 = vmatprep.subr.mxu0 0.0
    %4803 = vmatpush1.msra.mxu0 0.0
    %4804 = vmatprep.subr.mxu0 0.0
    %4805 = vmatpush1.msra.mxu0 0.0
    %4806 = vmatprep.subr.mxu0 0.0
    %4807 = vmatpush1.msra.mxu0 0.0
    %4808 = vmatprep.subr.mxu0 0.0
    %4809 = vmatpush1.msra.mxu0 0.0
    %4810 = vmatprep.subr.mxu0 0.0
    %4811 = vmatpush1.msra.mxu0 0.0
    %4812 = vmatprep.subr.mxu0 0.0
    %4813 = vmatpush1.msra.mxu0 0.0
    %4814 = vmatprep.subr.mxu0 0.0
    %4815 = vmatpush1.msra.mxu0 0.0
    %4816 = vmatprep.subr.mxu0 0.0
    %4817 = vmatpush1.msra.mxu0 0.0
    %4818 = vmatprep.subr.mxu0 0.0
    %4819 = vmatpush1.msra.mxu0 0.0
    %4820 = vmatprep.subr.mxu0 0.0
    %4821 = vmatpush1.msra.mxu0 0.0
    %4822 = vmatprep.subr.mxu0 0.0
    %4823 = vmatpush1.msra.mxu0 0.0
    %4824 = vmatprep.subr.mxu0 0.0
    %4825 = vmatpush1.msra.mxu0 0.0
    %4826 = vmatprep.subr.mxu0 0.0
    %4827 = vmatpush1.msra.mxu0 0.0
    %4828 = vmatprep.subr.mxu0 0.0
    %4829 = vmatpush1.msra.mxu0 0.0
    %4830 = vmatprep.subr.mxu0 0.0
    %4831 = vmatpush1.msra.mxu0 0.0
    %4832 = vmatprep.subr.mxu0 0.0
    %4833 = vmatpush1.msra.mxu0 0.0
    %4834 = vmatprep.subr.mxu0 0.0
    %4835 = vmatpush1.msra.mxu0 0.0
    %4836 = vmatprep.subr.mxu0 0.0
    %4837 = vmatpush1.msra.mxu0 0.0
    %4838 = vmatprep.mubr.f32.mxu0 0.0
    %4839 = vmatmul.mubr.f32.gmra.mrb[0].mxu0 %v4772
    %v4840 = vpop.f32.mrb[0].mxu0
    %v4841 = vadd.f32 0.0, %v4840
    %v4842 = vpop.f32.mrb[0].mxu0
    %4843 = vdwg.mxu0
    %v4845 = vsel %vm239, %v4765, 0
    %v4848 = vsel %vm239, %v4841, 0
    %4850 = vmatprep.subr.mxu0 0.0
    %4851 = vmatpush1.msra.mxu0 %v4179
    %4852 = vmatprep.subr.mxu0 0.0
    %4853 = vmatpush1.msra.mxu0 0.0
    %4854 = vmatprep.subr.mxu0 0.0
    %4855 = vmatpush1.msra.mxu0 0.0
    %4856 = vmatprep.subr.mxu0 0.0
    %4857 = vmatpush1.msra.mxu0 0.0
    %4858 = vmatprep.subr.mxu0 0.0
    %4859 = vmatpush1.msra.mxu0 0.0
    %4860 = vmatprep.subr.mxu0 0.0
    %4861 = vmatpush1.msra.mxu0 0.0
    %4862 = vmatprep.subr.mxu0 0.0
    %4863 = vmatpush1.msra.mxu0 0.0
    %4864 = vmatprep.subr.mxu0 0.0
    %4865 = vmatpush1.msra.mxu0 0.0
    %4866 = vmatprep.subr.mxu0 0.0
    %4867 = vmatpush1.msra.mxu0 0.0
    %4868 = vmatprep.subr.mxu0 0.0
    %4869 = vmatpush1.msra.mxu0 0.0
    %4870 = vmatprep.subr.mxu0 0.0
    %4871 = vmatpush1.msra.mxu0 0.0
    %4872 = vmatprep.subr.mxu0 0.0
    %4873 = vmatpush1.msra.mxu0 0.0
    %4874 = vmatprep.subr.mxu0 0.0
    %4875 = vmatpush1.msra.mxu0 0.0
    %4876 = vmatprep.subr.mxu0 0.0
    %4877 = vmatpush1.msra.mxu0 0.0
    %4878 = vmatprep.subr.mxu0 0.0
    %4879 = vmatpush1.msra.mxu0 0.0
    %4880 = vmatprep.subr.mxu0 0.0
    %4881 = vmatpush1.msra.mxu0 0.0
    %4882 = vmatprep.subr.mxu0 0.0
    %4883 = vmatpush1.msra.mxu0 0.0
    %4884 = vmatprep.subr.mxu0 0.0
    %4885 = vmatpush1.msra.mxu0 0.0
    %4886 = vmatprep.subr.mxu0 0.0
    %4887 = vmatpush1.msra.mxu0 0.0
    %4888 = vmatprep.subr.mxu0 0.0
    %4889 = vmatpush1.msra.mxu0 0.0
    %4890 = vmatprep.subr.mxu0 0.0
    %4891 = vmatpush1.msra.mxu0 0.0
    %4892 = vmatprep.subr.mxu0 0.0
    %4893 = vmatpush1.msra.mxu0 0.0
    %4894 = vmatprep.subr.mxu0 0.0
    %4895 = vmatpush1.msra.mxu0 0.0
    %4896 = vmatprep.subr.mxu0 0.0
    %4897 = vmatpush1.msra.mxu0 0.0
    %4898 = vmatprep.subr.mxu0 0.0
    %4899 = vmatpush1.msra.mxu0 0.0
    %4900 = vmatprep.subr.mxu0 0.0
    %4901 = vmatpush1.msra.mxu0 0.0
    %4902 = vmatprep.subr.mxu0 0.0
    %4903 = vmatpush1.msra.mxu0 0.0
    %4904 = vmatprep.subr.mxu0 0.0
    %4905 = vmatpush1.msra.mxu0 0.0
    %4906 = vmatprep.subr.mxu0 0.0
    %4907 = vmatpush1.msra.mxu0 0.0
    %4908 = vmatprep.subr.mxu0 0.0
    %4909 = vmatpush1.msra.mxu0 0.0
    %4910 = vmatprep.subr.mxu0 0.0
    %4911 = vmatpush1.msra.mxu0 0.0
    %4912 = vmatprep.subr.mxu0 0.0
    %4913 = vmatpush1.msra.mxu0 0.0
    %4914 = vmatprep.mubr.f32.mxu0 0.0
    %4915 = vmatmul.mubr.f32.gmra.mrb[0].mxu0 %v4845
    %v4916 = vpop.f32.mrb[0].mxu0
    %v4917 = vadd.f32 0.0, %v4916
    %v4918 = vpop.f32.mrb[0].mxu0
    %4919 = vmatprep.mubr.f32.mxu0 0.0
    %4920 = vmatmul.mubr.f32.gmra.mrb[0].mxu0 %v4848
    %v4921 = vpop.f32.mrb[0].mxu0
    %v4922 = vadd.f32 0.0, %v4921
    %v4923 = vpop.f32.mrb[0].mxu0
    %4924 = vdwg.mxu0
    %v4926 = vsel %vm239, %v4435, 0
    %v4929 = vsel %vm239, %v4511, 0
    %4931 = vmatprep.subr.mxu0 0.0
    %4932 = vmatpush1.msra.mxu0 %v4178
    %4933 = vmatprep.subr.mxu0 0.0
    %4934 = vmatpush1.msra.mxu0 0.0
    %4935 = vmatprep.subr.mxu0 0.0
    %4936 = vmatpush1.msra.mxu0 0.0
    %4937 = vmatprep.subr.mxu0 0.0
    %4938 = vmatpush1.msra.mxu0 0.0
    %4939 = vmatprep.subr.mxu0 0.0
    %4940 = vmatpush1.msra.mxu0 0.0
    %4941 = vmatprep.subr.mxu0 0.0
    %4942 = vmatpush1.msra.mxu0 0.0
    %4943 = vmatprep.subr.mxu0 0.0
    %4944 = vmatpush1.msra.mxu0 0.0
    %4945 = vmatprep.subr.mxu0 0.0
    %4946 = vmatpush1.msra.mxu0 0.0
    %4947 = vmatprep.subr.mxu0 0.0
    %4948 = vmatpush1.msra.mxu0 0.0
    %4949 = vmatprep.subr.mxu0 0.0
    %4950 = vmatpush1.msra.mxu0 0.0
    %4951 = vmatprep.subr.mxu0 0.0
    %4952 = vmatpush1.msra.mxu0 0.0
    %4953 = vmatprep.subr.mxu0 0.0
    %4954 = vmatpush1.msra.mxu0 0.0
    %4955 = vmatprep.subr.mxu0 0.0
    %4956 = vmatpush1.msra.mxu0 0.0
    %4957 = vmatprep.subr.mxu0 0.0
    %4958 = vmatpush1.msra.mxu0 0.0
    %4959 = vmatprep.subr.mxu0 0.0
    %4960 = vmatpush1.msra.mxu0 0.0
    %4961 = vmatprep.subr.mxu0 0.0
    %4962 = vmatpush1.msra.mxu0 0.0
    %4963 = vmatprep.subr.mxu0 0.0
    %4964 = vmatpush1.msra.mxu0 0.0
    %4965 = vmatprep.subr.mxu0 0.0
    %4966 = vmatpush1.msra.mxu0 0.0
    %4967 = vmatprep.subr.mxu0 0.0
    %4968 = vmatpush1.msra.mxu0 0.0
    %4969 = vmatprep.subr.mxu0 0.0
    %4970 = vmatpush1.msra.mxu0 0.0
    %4971 = vmatprep.subr.mxu0 0.0
    %4972 = vmatpush1.msra.mxu0 0.0
    %4973 = vmatprep.subr.mxu0 0.0
    %4974 = vmatpush1.msra.mxu0 0.0
    %4975 = vmatprep.subr.mxu0 0.0
    %4976 = vmatpush1.msra.mxu0 0.0
    %4977 = vmatprep.subr.mxu0 0.0
    %4978 = vmatpush1.msra.mxu0 0.0
    %4979 = vmatprep.subr.mxu0 0.0
    %4980 = vmatpush1.msra.mxu0 0.0
    %4981 = vmatprep.subr.mxu0 0.0
    %4982 = vmatpush1.msra.mxu0 0.0
    %4983 = vmatprep.subr.mxu0 0.0
    %4984 = vmatpush1.msra.mxu0 0.0
    %4985 = vmatprep.subr.mxu0 0.0
    %4986 = vmatpush1.msra.mxu0 0.0
    %4987 = vmatprep.subr.mxu0 0.0
    %4988 = vmatpush1.msra.mxu0 0.0
    %4989 = vmatprep.subr.mxu0 0.0
    %4990 = vmatpush1.msra.mxu0 0.0
    %4991 = vmatprep.subr.mxu0 0.0
    %4992 = vmatpush1.msra.mxu0 0.0
    %4993 = vmatprep.subr.mxu0 0.0
    %4994 = vmatpush1.msra.mxu0 0.0
    %4995 = vmatprep.mubr.f32.mxu0 0.0
    %4996 = vmatmul.mubr.f32.gmra.mrb[0].mxu0 %v4926
    %v4997 = vpop.f32.mrb[0].mxu0
    %v4998 = vadd.f32 %v4917, %v4997
    %v4999 = vpop.f32.mrb[0].mxu0
    %5000 = vmatprep.mubr.f32.mxu0 0.0
    %5001 = vmatmul.mubr.f32.gmra.mrb[0].mxu0 %v4929
    %v5002 = vpop.f32.mrb[0].mxu0
    %v5003 = vadd.f32 %v4922, %v5002
    %v5004 = vpop.f32.mrb[0].mxu0
    %5005 = vdwg.mxu0
    %5006 = vrot.lane.b32.xlu0 %v4175, 112
    %v5007 = vpop.permute.xlu0 %5006
    %5008 = vrot.lane.b32.xlu0 %v4167, 80
    %v5009 = vpop.permute.xlu0 %5008
    %v5010 = vsel %vm239, %v5007, 0
    %v5012 = vsel %vm239, %v5009, 0
    %5014 = vmatprep.subr.mxu0 0.0
    %5015 = vmatpush1.xpose.msra.mxu0 %v5012
    %5016 = vmatprep.subr.mxu0 0.0
    %5017 = vmatpush1.xpose.msra.mxu0 0.0
    %5018 = vmatprep.subr.mxu0 0.0
    %5019 = vmatpush1.xpose.msra.mxu0 0.0
    %5020 = vmatprep.subr.mxu0 0.0
    %5021 = vmatpush1.xpose.msra.mxu0 0.0
    %5022 = vmatprep.subr.mxu0 0.0
    %5023 = vmatpush1.xpose.msra.mxu0 0.0
    %5024 = vmatprep.subr.mxu0 0.0
    %5025 = vmatpush1.xpose.msra.mxu0 0.0
    %5026 = vmatprep.subr.mxu0 0.0
    %5027 = vmatpush1.xpose.msra.mxu0 0.0
    %5028 = vmatprep.subr.mxu0 0.0
    %5029 = vmatpush1.xpose.msra.mxu0 0.0
    %5030 = vmatprep.subr.mxu0 0.0
    %5031 = vmatpush1.xpose.msra.mxu0 0.0
    %5032 = vmatprep.subr.mxu0 0.0
    %5033 = vmatpush1.xpose.msra.mxu0 0.0
    %5034 = vmatprep.subr.mxu0 0.0
    %5035 = vmatpush1.xpose.msra.mxu0 0.0
    %5036 = vmatprep.subr.mxu0 0.0
    %5037 = vmatpush1.xpose.msra.mxu0 0.0
    %5038 = vmatprep.subr.mxu0 0.0
    %5039 = vmatpush1.xpose.msra.mxu0 0.0
    %5040 = vmatprep.subr.mxu0 0.0
    %5041 = vmatpush1.xpose.msra.mxu0 0.0
    %5042 = vmatprep.subr.mxu0 0.0
    %5043 = vmatpush1.xpose.msra.mxu0 0.0
    %5044 = vmatprep.subr.mxu0 0.0
    %5045 = vmatpush1.xpose.msra.mxu0 0.0
    %5046 = vmatprep.subr.mxu0 0.0
    %5047 = vmatpush1.xpose.msra.mxu0 0.0
    %5048 = vmatprep.subr.mxu0 0.0
    %5049 = vmatpush1.xpose.msra.mxu0 0.0
    %5050 = vmatprep.subr.mxu0 0.0
    %5051 = vmatpush1.xpose.msra.mxu0 0.0
    %5052 = vmatprep.subr.mxu0 0.0
    %5053 = vmatpush1.xpose.msra.mxu0 0.0
    %5054 = vmatprep.subr.mxu0 0.0
    %5055 = vmatpush1.xpose.msra.mxu0 0.0
    %5056 = vmatprep.subr.mxu0 0.0
    %5057 = vmatpush1.xpose.msra.mxu0 0.0
    %5058 = vmatprep.subr.mxu0 0.0
    %5059 = vmatpush1.xpose.msra.mxu0 0.0
    %5060 = vmatprep.subr.mxu0 0.0
    %5061 = vmatpush1.xpose.msra.mxu0 0.0
    %5062 = vmatprep.subr.mxu0 0.0
    %5063 = vmatpush1.xpose.msra.mxu0 0.0
    %5064 = vmatprep.subr.mxu0 0.0
    %5065 = vmatpush1.xpose.msra.mxu0 0.0
    %5066 = vmatprep.subr.mxu0 0.0
    %5067 = vmatpush1.xpose.msra.mxu0 0.0
    %5068 = vmatprep.subr.mxu0 0.0
    %5069 = vmatpush1.xpose.msra.mxu0 0.0
    %5070 = vmatprep.subr.mxu0 0.0
    %5071 = vmatpush1.xpose.msra.mxu0 0.0
    %5072 = vmatprep.subr.mxu0 0.0
    %5073 = vmatpush1.xpose.msra.mxu0 0.0
    %5074 = vmatprep.subr.mxu0 0.0
    %5075 = vmatpush1.xpose.msra.mxu0 0.0
    %5076 = vmatprep.subr.mxu0 0.0
    %5077 = vmatpush1.xpose.msra.mxu0 0.0
    %5078 = vmatprep.mubr.f32.mxu0 0.0
    %5079 = vmatmul.mubr.f32.gmra.mrb[0].mxu0 %v5010
    %v5080 = vpop.f32.mrb[0].mxu0
    %v5081 = vadd.f32 0.0, %v5080
    %v5082 = vpop.f32.mrb[0].mxu0
    %5083 = vdwg.mxu0
    %5084 = vrot.lane.b32.xlu0 %v4176, 112
    %v5085 = vpop.permute.xlu0 %5084
    %5086 = vrot.lane.b32.xlu0 %v4172, 80
    %v5087 = vpop.permute.xlu0 %5086
    %v5088 = vsel %vm239, %v5085, 0
    %v5090 = vsel %vm239, %v5087, 0
    %5092 = vmatprep.subr.mxu0 0.0
    %5093 = vmatpush1.xpose.msra.mxu0 %v5090
    %5094 = vmatprep.subr.mxu0 0.0
    %5095 = vmatpush1.xpose.msra.mxu0 0.0
    %5096 = vmatprep.subr.mxu0 0.0
    %5097 = vmatpush1.xpose.msra.mxu0 0.0
    %5098 = vmatprep.subr.mxu0 0.0
    %5099 = vmatpush1.xpose.msra.mxu0 0.0
    %5100 = vmatprep.subr.mxu0 0.0
    %5101 = vmatpush1.xpose.msra.mxu0 0.0
    %5102 = vmatprep.subr.mxu0 0.0
    %5103 = vmatpush1.xpose.msra.mxu0 0.0
    %5104 = vmatprep.subr.mxu0 0.0
    %5105 = vmatpush1.xpose.msra.mxu0 0.0
    %5106 = vmatprep.subr.mxu0 0.0
    %5107 = vmatpush1.xpose.msra.mxu0 0.0
    %5108 = vmatprep.subr.mxu0 0.0
    %5109 = vmatpush1.xpose.msra.mxu0 0.0
    %5110 = vmatprep.subr.mxu0 0.0
    %5111 = vmatpush1.xpose.msra.mxu0 0.0
    %5112 = vmatprep.subr.mxu0 0.0
    %5113 = vmatpush1.xpose.msra.mxu0 0.0
    %5114 = vmatprep.subr.mxu0 0.0
    %5115 = vmatpush1.xpose.msra.mxu0 0.0
    %5116 = vmatprep.subr.mxu0 0.0
    %5117 = vmatpush1.xpose.msra.mxu0 0.0
    %5118 = vmatprep.subr.mxu0 0.0
    %5119 = vmatpush1.xpose.msra.mxu0 0.0
    %5120 = vmatprep.subr.mxu0 0.0
    %5121 = vmatpush1.xpose.msra.mxu0 0.0
    %5122 = vmatprep.subr.mxu0 0.0
    %5123 = vmatpush1.xpose.msra.mxu0 0.0
    %5124 = vmatprep.subr.mxu0 0.0
    %5125 = vmatpush1.xpose.msra.mxu0 0.0
    %5126 = vmatprep.subr.mxu0 0.0
    %5127 = vmatpush1.xpose.msra.mxu0 0.0
    %5128 = vmatprep.subr.mxu0 0.0
    %5129 = vmatpush1.xpose.msra.mxu0 0.0
    %5130 = vmatprep.subr.mxu0 0.0
    %5131 = vmatpush1.xpose.msra.mxu0 0.0
    %5132 = vmatprep.subr.mxu0 0.0
    %5133 = vmatpush1.xpose.msra.mxu0 0.0
    %5134 = vmatprep.subr.mxu0 0.0
    %5135 = vmatpush1.xpose.msra.mxu0 0.0
    %5136 = vmatprep.subr.mxu0 0.0
    %5137 = vmatpush1.xpose.msra.mxu0 0.0
    %5138 = vmatprep.subr.mxu0 0.0
    %5139 = vmatpush1.xpose.msra.mxu0 0.0
    %5140 = vmatprep.subr.mxu0 0.0
    %5141 = vmatpush1.xpose.msra.mxu0 0.0
    %5142 = vmatprep.subr.mxu0 0.0
    %5143 = vmatpush1.xpose.msra.mxu0 0.0
    %5144 = vmatprep.subr.mxu0 0.0
    %5145 = vmatpush1.xpose.msra.mxu0 0.0
    %5146 = vmatprep.subr.mxu0 0.0
    %5147 = vmatpush1.xpose.msra.mxu0 0.0
    %5148 = vmatprep.subr.mxu0 0.0
    %5149 = vmatpush1.xpose.msra.mxu0 0.0
    %5150 = vmatprep.subr.mxu0 0.0
    %5151 = vmatpush1.xpose.msra.mxu0 0.0
    %5152 = vmatprep.subr.mxu0 0.0
    %5153 = vmatpush1.xpose.msra.mxu0 0.0
    %5154 = vmatprep.subr.mxu0 0.0
    %5155 = vmatpush1.xpose.msra.mxu0 0.0
    %5156 = vmatprep.mubr.f32.mxu0 0.0
    %5157 = vmatmul.mubr.f32.gmra.mrb[0].mxu0 %v5088
    %v5158 = vpop.f32.mrb[0].mxu0
    %v5159 = vadd.f32 0.0, %v5158
    %v5160 = vpop.f32.mrb[0].mxu0
    %5161 = vdwg.mxu0
    %v5162 = vsel %vm239, %v5081, -inf
    %5163 = vmax.xlane.f32.xlu0 %v5162
    %v5164 = vpop.xlane.xlu0 %5163
    %v5165 = vsel %vm239, %v5159, -inf
    %5166 = vmax.xlane.f32.xlu0 %v5165
    %v5167 = vpop.xlane.xlu0 %5166
    %v5168 = vsub.f32 %v5081, %v5164
    %v5169 = vsub.f32 %v5159, %v5167
    %v5170 = vmul.f32 %v5168, 1.442695
    %v5171 = vpow.pop %v5170
    %v5172 = vmul.f32 %v5169, 1.442695
    %v5173 = vpow.pop %v5172
    %v5174 = vsel %vm239, %v5171, 0.0
    %5175 = vadd.xlane.f32.xlu0 %v5174
    %v5176 = vpop.xlane.xlu0 %5175
    %v5177 = vsel %vm239, %v5173, 0.0
    %5178 = vadd.xlane.f32.xlu0 %v5177
    %v5179 = vpop.xlane.xlu0 %5178
    %v5180 = vrcp.pop %v5176
    %v5181 = vrcp.pop %v5179
    %v5182 = vmul.f32 %v5171, %v5180
    %v5183 = vmul.f32 %v5173, %v5181
    %5184 = vrot.lane.b32.xlu0 %v4167, 48
    %v5185 = vpop.permute.xlu0 %5184
    %v5188 = vsel %vm239, %v5182, 0
    %5190 = vmatprep.subr.mxu0 0.0
    %5191 = vmatpush1.msra.mxu0 %v5185
    %5192 = vmatprep.subr.mxu0 0.0
    %5193 = vmatpush1.msra.mxu0 0.0
    %5194 = vmatprep.subr.mxu0 0.0
    %5195 = vmatpush1.msra.mxu0 0.0
    %5196 = vmatprep.subr.mxu0 0.0
    %5197 = vmatpush1.msra.mxu0 0.0
    %5198 = vmatprep.subr.mxu0 0.0
    %5199 = vmatpush1.msra.mxu0 0.0
    %5200 = vmatprep.subr.mxu0 0.0
    %5201 = vmatpush1.msra.mxu0 0.0
    %5202 = vmatprep.subr.mxu0 0.0
    %5203 = vmatpush1.msra.mxu0 0.0
    %5204 = vmatprep.subr.mxu0 0.0
    %5205 = vmatpush1.msra.mxu0 0.0
    %5206 = vmatprep.subr.mxu0 0.0
    %5207 = vmatpush1.msra.mxu0 0.0
    %5208 = vmatprep.subr.mxu0 0.0
    %5209 = vmatpush1.msra.mxu0 0.0
    %5210 = vmatprep.subr.mxu0 0.0
    %5211 = vmatpush1.msra.mxu0 0.0
    %5212 = vmatprep.subr.mxu0 0.0
    %5213 = vmatpush1.msra.mxu0 0.0
    %5214 = vmatprep.subr.mxu0 0.0
    %5215 = vmatpush1.msra.mxu0 0.0
    %5216 = vmatprep.subr.mxu0 0.0
    %5217 = vmatpush1.msra.mxu0 0.0
    %5218 = vmatprep.subr.mxu0 0.0
    %5219 = vmatpush1.msra.mxu0 0.0
    %5220 = vmatprep.subr.mxu0 0.0
    %5221 = vmatpush1.msra.mxu0 0.0
    %5222 = vmatprep.subr.mxu0 0.0
    %5223 = vmatpush1.msra.mxu0 0.0
    %5224 = vmatprep.subr.mxu0 0.0
    %5225 = vmatpush1.msra.mxu0 0.0
    %5226 = vmatprep.subr.mxu0 0.0
    %5227 = vmatpush1.msra.mxu0 0.0
    %5228 = vmatprep.subr.mxu0 0.0
    %5229 = vmatpush1.msra.mxu0 0.0
    %5230 = vmatprep.subr.mxu0 0.0
    %5231 = vmatpush1.msra.mxu0 0.0
    %5232 = vmatprep.subr.mxu0 0.0
    %5233 = vmatpush1.msra.mxu0 0.0
    %5234 = vmatprep.subr.mxu0 0.0
    %5235 = vmatpush1.msra.mxu0 0.0
    %5236 = vmatprep.subr.mxu0 0.0
    %5237 = vmatpush1.msra.mxu0 0.0
    %5238 = vmatprep.subr.mxu0 0.0
    %5239 = vmatpush1.msra.mxu0 0.0
    %5240 = vmatprep.subr.mxu0 0.0
    %5241 = vmatpush1.msra.mxu0 0.0
    %5242 = vmatprep.subr.mxu0 0.0
    %5243 = vmatpush1.msra.mxu0 0.0
    %5244 = vmatprep.subr.mxu0 0.0
    %5245 = vmatpush1.msra.mxu0 0.0
    %5246 = vmatprep.subr.mxu0 0.0
    %5247 = vmatpush1.msra.mxu0 0.0
    %5248 = vmatprep.subr.mxu0 0.0
    %5249 = vmatpush1.msra.mxu0 0.0
    %5250 = vmatprep.subr.mxu0 0.0
    %5251 = vmatpush1.msra.mxu0 0.0
    %5252 = vmatprep.subr.mxu0 0.0
    %5253 = vmatpush1.msra.mxu0 0.0
    %5254 = vmatprep.mubr.f32.mxu0 0.0
    %5255 = vmatmul.mubr.f32.gmra.mrb[0].mxu0 %v5188
    %v5256 = vpop.f32.mrb[0].mxu0
    %v5257 = vadd.f32 0.0, %v5256
    %v5258 = vpop.f32.mrb[0].mxu0
    %5259 = vdwg.mxu0
    %5260 = vrot.lane.b32.xlu0 %v4172, 48
    %v5261 = vpop.permute.xlu0 %5260
    %v5264 = vsel %vm239, %v5183, 0
    %5266 = vmatprep.subr.mxu0 0.0
    %5267 = vmatpush1.msra.mxu0 %v5261
    %5268 = vmatprep.subr.mxu0 0.0
    %5269 = vmatpush1.msra.mxu0 0.0
    %5270 = vmatprep.subr.mxu0 0.0
    %5271 = vmatpush1.msra.mxu0 0.0
    %5272 = vmatprep.subr.mxu0 0.0
    %5273 = vmatpush1.msra.mxu0 0.0
    %5274 = vmatprep.subr.mxu0 0.0
    %5275 = vmatpush1.msra.mxu0 0.0
    %5276 = vmatprep.subr.mxu0 0.0
    %5277 = vmatpush1.msra.mxu0 0.0
    %5278 = vmatprep.subr.mxu0 0.0
    %5279 = vmatpush1.msra.mxu0 0.0
    %5280 = vmatprep.subr.mxu0 0.0
    %5281 = vmatpush1.msra.mxu0 0.0
    %5282 = vmatprep.subr.mxu0 0.0
    %5283 = vmatpush1.msra.mxu0 0.0
    %5284 = vmatprep.subr.mxu0 0.0
    %5285 = vmatpush1.msra.mxu0 0.0
    %5286 = vmatprep.subr.mxu0 0.0
    %5287 = vmatpush1.msra.mxu0 0.0
    %5288 = vmatprep.subr.mxu0 0.0
    %5289 = vmatpush1.msra.mxu0 0.0
    %5290 = vmatprep.subr.mxu0 0.0
    %5291 = vmatpush1.msra.mxu0 0.0
    %5292 = vmatprep.subr.mxu0 0.0
    %5293 = vmatpush1.msra.mxu0 0.0
    %5294 = vmatprep.subr.mxu0 0.0
    %5295 = vmatpush1.msra.mxu0 0.0
    %5296 = vmatprep.subr.mxu0 0.0
    %5297 = vmatpush1.msra.mxu0 0.0
    %5298 = vmatprep.subr.mxu0 0.0
    %5299 = vmatpush1.msra.mxu0 0.0
    %5300 = vmatprep.subr.mxu0 0.0
    %5301 = vmatpush1.msra.mxu0 0.0
    %5302 = vmatprep.subr.mxu0 0.0
    %5303 = vmatpush1.msra.mxu0 0.0
    %5304 = vmatprep.subr.mxu0 0.0
    %5305 = vmatpush1.msra.mxu0 0.0
    %5306 = vmatprep.subr.mxu0 0.0
    %5307 = vmatpush1.msra.mxu0 0.0
    %5308 = vmatprep.subr.mxu0 0.0
    %5309 = vmatpush1.msra.mxu0 0.0
    %5310 = vmatprep.subr.mxu0 0.0
    %5311 = vmatpush1.msra.mxu0 0.0
    %5312 = vmatprep.subr.mxu0 0.0
    %5313 = vmatpush1.msra.mxu0 0.0
    %5314 = vmatprep.subr.mxu0 0.0
    %5315 = vmatpush1.msra.mxu0 0.0
    %5316 = vmatprep.subr.mxu0 0.0
    %5317 = vmatpush1.msra.mxu0 0.0
    %5318 = vmatprep.subr.mxu0 0.0
    %5319 = vmatpush1.msra.mxu0 0.0
    %5320 = vmatprep.subr.mxu0 0.0
    %5321 = vmatpush1.msra.mxu0 0.0
    %5322 = vmatprep.subr.mxu0 0.0
    %5323 = vmatpush1.msra.mxu0 0.0
    %5324 = vmatprep.subr.mxu0 0.0
    %5325 = vmatpush1.msra.mxu0 0.0
    %5326 = vmatprep.subr.mxu0 0.0
    %5327 = vmatpush1.msra.mxu0 0.0
    %5328 = vmatprep.subr.mxu0 0.0
    %5329 = vmatpush1.msra.mxu0 0.0
    %5330 = vmatprep.mubr.f32.mxu0 0.0
    %5331 = vmatmul.mubr.f32.gmra.mrb[0].mxu0 %v5264
    %v5332 = vpop.f32.mrb[0].mxu0
    %v5333 = vadd.f32 0.0, %v5332
    %v5334 = vpop.f32.mrb[0].mxu0
    %5335 = vdwg.mxu0
    %v5337 = vsel %vm239, %v5257, 0
    %v5340 = vsel %vm239, %v5333, 0
    %5342 = vmatprep.subr.mxu0 0.0
    %5343 = vmatpush1.msra.mxu0 %v4180
    %5344 = vmatprep.subr.mxu0 0.0
    %5345 = vmatpush1.msra.mxu0 0.0
    %5346 = vmatprep.subr.mxu0 0.0
    %5347 = vmatpush1.msra.mxu0 0.0
    %5348 = vmatprep.subr.mxu0 0.0
    %5349 = vmatpush1.msra.mxu0 0.0
    %5350 = vmatprep.subr.mxu0 0.0
    %5351 = vmatpush1.msra.mxu0 0.0
    %5352 = vmatprep.subr.mxu0 0.0
    %5353 = vmatpush1.msra.mxu0 0.0
    %5354 = vmatprep.subr.mxu0 0.0
    %5355 = vmatpush1.msra.mxu0 0.0
    %5356 = vmatprep.subr.mxu0 0.0
    %5357 = vmatpush1.msra.mxu0 0.0
    %5358 = vmatprep.subr.mxu0 0.0
    %5359 = vmatpush1.msra.mxu0 0.0
    %5360 = vmatprep.subr.mxu0 0.0
    %5361 = vmatpush1.msra.mxu0 0.0
    %5362 = vmatprep.subr.mxu0 0.0
    %5363 = vmatpush1.msra.mxu0 0.0
    %5364 = vmatprep.subr.mxu0 0.0
    %5365 = vmatpush1.msra.mxu0 0.0
    %5366 = vmatprep.subr.mxu0 0.0
    %5367 = vmatpush1.msra.mxu0 0.0
    %5368 = vmatprep.subr.mxu0 0.0
    %5369 = vmatpush1.msra.mxu0 0.0
    %5370 = vmatprep.subr.mxu0 0.0
    %5371 = vmatpush1.msra.mxu0 0.0
    %5372 = vmatprep.subr.mxu0 0.0
    %5373 = vmatpush1.msra.mxu0 0.0
    %5374 = vmatprep.subr.mxu0 0.0
    %5375 = vmatpush1.msra.mxu0 0.0
    %5376 = vmatprep.subr.mxu0 0.0
    %5377 = vmatpush1.msra.mxu0 0.0
    %5378 = vmatprep.subr.mxu0 0.0
    %5379 = vmatpush1.msra.mxu0 0.0
    %5380 = vmatprep.subr.mxu0 0.0
    %5381 = vmatpush1.msra.mxu0 0.0
    %5382 = vmatprep.subr.mxu0 0.0
    %5383 = vmatpush1.msra.mxu0 0.0
    %5384 = vmatprep.subr.mxu0 0.0
    %5385 = vmatpush1.msra.mxu0 0.0
    %5386 = vmatprep.subr.mxu0 0.0
    %5387 = vmatpush1.msra.mxu0 0.0
    %5388 = vmatprep.subr.mxu0 0.0
    %5389 = vmatpush1.msra.mxu0 0.0
    %5390 = vmatprep.subr.mxu0 0.0
    %5391 = vmatpush1.msra.mxu0 0.0
    %5392 = vmatprep.subr.mxu0 0.0
    %5393 = vmatpush1.msra.mxu0 0.0
    %5394 = vmatprep.subr.mxu0 0.0
    %5395 = vmatpush1.msra.mxu0 0.0
    %5396 = vmatprep.subr.mxu0 0.0
    %5397 = vmatpush1.msra.mxu0 0.0
    %5398 = vmatprep.subr.mxu0 0.0
    %5399 = vmatpush1.msra.mxu0 0.0
    %5400 = vmatprep.subr.mxu0 0.0
    %5401 = vmatpush1.msra.mxu0 0.0
    %5402 = vmatprep.subr.mxu0 0.0
    %5403 = vmatpush1.msra.mxu0 0.0
    %5404 = vmatprep.subr.mxu0 0.0
    %5405 = vmatpush1.msra.mxu0 0.0
    %5406 = vmatprep.mubr.f32.mxu0 0.0
    %5407 = vmatmul.mubr.f32.gmra.mrb[0].mxu0 %v5337
    %v5408 = vpop.f32.mrb[0].mxu0
    %v5409 = vadd.f32 0.0, %v5408
    %v5410 = vpop.f32.mrb[0].mxu0
    %5411 = vmatprep.mubr.f32.mxu0 0.0
    %5412 = vmatmul.mubr.f32.gmra.mrb[0].mxu0 %v5340
    %v5413 = vpop.f32.mrb[0].mxu0
    %v5414 = vadd.f32 0.0, %v5413
    %v5415 = vpop.f32.mrb[0].mxu0
    %5416 = vdwg.mxu0
    %v5417 = vadd.f32 %v4998, %v5409
    %v5418 = vadd.f32 %v5003, %v5414
    %5419 = vrot.lane.b32.xlu0 %v4175, 104
    %v5420 = vpop.permute.xlu0 %5419
    %5421 = vrot.lane.b32.xlu0 %v4167, 72
    %v5422 = vpop.permute.xlu0 %5421
    %v5423 = vsel %vm239, %v5420, 0
    %v5425 = vsel %vm239, %v5422, 0
    %5427 = vmatprep.subr.mxu0 0.0
    %5428 = vmatpush1.xpose.msra.mxu0 %v5425
    %5429 = vmatprep.subr.mxu0 0.0
    %5430 = vmatpush1.xpose.msra.mxu0 0.0
    %5431 = vmatprep.subr.mxu0 0.0
    %5432 = vmatpush1.xpose.msra.mxu0 0.0
    %5433 = vmatprep.subr.mxu0 0.0
    %5434 = vmatpush1.xpose.msra.mxu0 0.0
    %5435 = vmatprep.subr.mxu0 0.0
    %5436 = vmatpush1.xpose.msra.mxu0 0.0
    %5437 = vmatprep.subr.mxu0 0.0
    %5438 = vmatpush1.xpose.msra.mxu0 0.0
    %5439 = vmatprep.subr.mxu0 0.0
    %5440 = vmatpush1.xpose.msra.mxu0 0.0
    %5441 = vmatprep.subr.mxu0 0.0
    %5442 = vmatpush1.xpose.msra.mxu0 0.0
    %5443 = vmatprep.subr.mxu0 0.0
    %5444 = vmatpush1.xpose.msra.mxu0 0.0
    %5445 = vmatprep.subr.mxu0 0.0
    %5446 = vmatpush1.xpose.msra.mxu0 0.0
    %5447 = vmatprep.subr.mxu0 0.0
    %5448 = vmatpush1.xpose.msra.mxu0 0.0
    %5449 = vmatprep.subr.mxu0 0.0
    %5450 = vmatpush1.xpose.msra.mxu0 0.0
    %5451 = vmatprep.subr.mxu0 0.0
    %5452 = vmatpush1.xpose.msra.mxu0 0.0
    %5453 = vmatprep.subr.mxu0 0.0
    %5454 = vmatpush1.xpose.msra.mxu0 0.0
    %5455 = vmatprep.subr.mxu0 0.0
    %5456 = vmatpush1.xpose.msra.mxu0 0.0
    %5457 = vmatprep.subr.mxu0 0.0
    %5458 = vmatpush1.xpose.msra.mxu0 0.0
    %5459 = vmatprep.subr.mxu0 0.0
    %5460 = vmatpush1.xpose.msra.mxu0 0.0
    %5461 = vmatprep.subr.mxu0 0.0
    %5462 = vmatpush1.xpose.msra.mxu0 0.0
    %5463 = vmatprep.subr.mxu0 0.0
    %5464 = vmatpush1.xpose.msra.mxu0 0.0
    %5465 = vmatprep.subr.mxu0 0.0
    %5466 = vmatpush1.xpose.msra.mxu0 0.0
    %5467 = vmatprep.subr.mxu0 0.0
    %5468 = vmatpush1.xpose.msra.mxu0 0.0
    %5469 = vmatprep.subr.mxu0 0.0
    %5470 = vmatpush1.xpose.msra.mxu0 0.0
    %5471 = vmatprep.subr.mxu0 0.0
    %5472 = vmatpush1.xpose.msra.mxu0 0.0
    %5473 = vmatprep.subr.mxu0 0.0
    %5474 = vmatpush1.xpose.msra.mxu0 0.0
    %5475 = vmatprep.subr.mxu0 0.0
    %5476 = vmatpush1.xpose.msra.mxu0 0.0
    %5477 = vmatprep.subr.mxu0 0.0
    %5478 = vmatpush1.xpose.msra.mxu0 0.0
    %5479 = vmatprep.subr.mxu0 0.0
    %5480 = vmatpush1.xpose.msra.mxu0 0.0
    %5481 = vmatprep.subr.mxu0 0.0
    %5482 = vmatpush1.xpose.msra.mxu0 0.0
    %5483 = vmatprep.subr.mxu0 0.0
    %5484 = vmatpush1.xpose.msra.mxu0 0.0
    %5485 = vmatprep.subr.mxu0 0.0
    %5486 = vmatpush1.xpose.msra.mxu0 0.0
    %5487 = vmatprep.subr.mxu0 0.0
    %5488 = vmatpush1.xpose.msra.mxu0 0.0
    %5489 = vmatprep.subr.mxu0 0.0
    %5490 = vmatpush1.xpose.msra.mxu0 0.0
    %5491 = vmatprep.mubr.f32.mxu0 0.0
    %5492 = vmatmul.mubr.f32.gmra.mrb[0].mxu0 %v5423
    %v5493 = vpop.f32.mrb[0].mxu0
    %v5494 = vadd.f32 0.0, %v5493
    %v5495 = vpop.f32.mrb[0].mxu0
    %5496 = vdwg.mxu0
    %5497 = vrot.lane.b32.xlu0 %v4176, 104
    %v5498 = vpop.permute.xlu0 %5497
    %5499 = vrot.lane.b32.xlu0 %v4172, 72
    %v5500 = vpop.permute.xlu0 %5499
    %v5501 = vsel %vm239, %v5498, 0
    %v5503 = vsel %vm239, %v5500, 0
    %5505 = vmatprep.subr.mxu0 0.0
    %5506 = vmatpush1.xpose.msra.mxu0 %v5503
    %5507 = vmatprep.subr.mxu0 0.0
    %5508 = vmatpush1.xpose.msra.mxu0 0.0
    %5509 = vmatprep.subr.mxu0 0.0
    %5510 = vmatpush1.xpose.msra.mxu0 0.0
    %5511 = vmatprep.subr.mxu0 0.0
    %5512 = vmatpush1.xpose.msra.mxu0 0.0
    %5513 = vmatprep.subr.mxu0 0.0
    %5514 = vmatpush1.xpose.msra.mxu0 0.0
    %5515 = vmatprep.subr.mxu0 0.0
    %5516 = vmatpush1.xpose.msra.mxu0 0.0
    %5517 = vmatprep.subr.mxu0 0.0
    %5518 = vmatpush1.xpose.msra.mxu0 0.0
    %5519 = vmatprep.subr.mxu0 0.0
    %5520 = vmatpush1.xpose.msra.mxu0 0.0
    %5521 = vmatprep.subr.mxu0 0.0
    %5522 = vmatpush1.xpose.msra.mxu0 0.0
    %5523 = vmatprep.subr.mxu0 0.0
    %5524 = vmatpush1.xpose.msra.mxu0 0.0
    %5525 = vmatprep.subr.mxu0 0.0
    %5526 = vmatpush1.xpose.msra.mxu0 0.0
    %5527 = vmatprep.subr.mxu0 0.0
    %5528 = vmatpush1.xpose.msra.mxu0 0.0
    %5529 = vmatprep.subr.mxu0 0.0
    %5530 = vmatpush1.xpose.msra.mxu0 0.0
    %5531 = vmatprep.subr.mxu0 0.0
    %5532 = vmatpush1.xpose.msra.mxu0 0.0
    %5533 = vmatprep.subr.mxu0 0.0
    %5534 = vmatpush1.xpose.msra.mxu0 0.0
    %5535 = vmatprep.subr.mxu0 0.0
    %5536 = vmatpush1.xpose.msra.mxu0 0.0
    %5537 = vmatprep.subr.mxu0 0.0
    %5538 = vmatpush1.xpose.msra.mxu0 0.0
    %5539 = vmatprep.subr.mxu0 0.0
    %5540 = vmatpush1.xpose.msra.mxu0 0.0
    %5541 = vmatprep.subr.mxu0 0.0
    %5542 = vmatpush1.xpose.msra.mxu0 0.0
    %5543 = vmatprep.subr.mxu0 0.0
    %5544 = vmatpush1.xpose.msra.mxu0 0.0
    %5545 = vmatprep.subr.mxu0 0.0
    %5546 = vmatpush1.xpose.msra.mxu0 0.0
    %5547 = vmatprep.subr.mxu0 0.0
    %5548 = vmatpush1.xpose.msra.mxu0 0.0
    %5549 = vmatprep.subr.mxu0 0.0
    %5550 = vmatpush1.xpose.msra.mxu0 0.0
    %5551 = vmatprep.subr.mxu0 0.0
    %5552 = vmatpush1.xpose.msra.mxu0 0.0
    %5553 = vmatprep.subr.mxu0 0.0
    %5554 = vmatpush1.xpose.msra.mxu0 0.0
    %5555 = vmatprep.subr.mxu0 0.0
    %5556 = vmatpush1.xpose.msra.mxu0 0.0
    %5557 = vmatprep.subr.mxu0 0.0
    %5558 = vmatpush1.xpose.msra.mxu0 0.0
    %5559 = vmatprep.subr.mxu0 0.0
    %5560 = vmatpush1.xpose.msra.mxu0 0.0
    %5561 = vmatprep.subr.mxu0 0.0
    %5562 = vmatpush1.xpose.msra.mxu0 0.0
    %5563 = vmatprep.subr.mxu0 0.0
    %5564 = vmatpush1.xpose.msra.mxu0 0.0
    %5565 = vmatprep.subr.mxu0 0.0
    %5566 = vmatpush1.xpose.msra.mxu0 0.0
    %5567 = vmatprep.subr.mxu0 0.0
    %5568 = vmatpush1.xpose.msra.mxu0 0.0
    %5569 = vmatprep.mubr.f32.mxu0 0.0
    %5570 = vmatmul.mubr.f32.gmra.mrb[0].mxu0 %v5501
    %v5571 = vpop.f32.mrb[0].mxu0
    %v5572 = vadd.f32 0.0, %v5571
    %v5573 = vpop.f32.mrb[0].mxu0
    %5574 = vdwg.mxu0
    %v5575 = vsel %vm239, %v5494, -inf
    %5576 = vmax.xlane.f32.xlu0 %v5575
    %v5577 = vpop.xlane.xlu0 %5576
    %v5578 = vsel %vm239, %v5572, -inf
    %5579 = vmax.xlane.f32.xlu0 %v5578
    %v5580 = vpop.xlane.xlu0 %5579
    %v5581 = vsub.f32 %v5494, %v5577
    %v5582 = vsub.f32 %v5572, %v5580
    %v5583 = vmul.f32 %v5581, 1.442695
    %v5584 = vpow.pop %v5583
    %v5585 = vmul.f32 %v5582, 1.442695
    %v5586 = vpow.pop %v5585
    %v5587 = vsel %vm239, %v5584, 0.0
    %5588 = vadd.xlane.f32.xlu0 %v5587
    %v5589 = vpop.xlane.xlu0 %5588
    %v5590 = vsel %vm239, %v5586, 0.0
    %5591 = vadd.xlane.f32.xlu0 %v5590
    %v5592 = vpop.xlane.xlu0 %5591
    %v5593 = vrcp.pop %v5589
    %v5594 = vrcp.pop %v5592
    %v5595 = vmul.f32 %v5584, %v5593
    %v5596 = vmul.f32 %v5586, %v5594
    %5597 = vrot.lane.b32.xlu0 %v4167, 40
    %v5598 = vpop.permute.xlu0 %5597
    %v5601 = vsel %vm239, %v5595, 0
    %5603 = vmatprep.subr.mxu0 0.0
    %5604 = vmatpush1.msra.mxu0 %v5598
    %5605 = vmatprep.subr.mxu0 0.0
    %5606 = vmatpush1.msra.mxu0 0.0
    %5607 = vmatprep.subr.mxu0 0.0
    %5608 = vmatpush1.msra.mxu0 0.0
    %5609 = vmatprep.subr.mxu0 0.0
    %5610 = vmatpush1.msra.mxu0 0.0
    %5611 = vmatprep.subr.mxu0 0.0
    %5612 = vmatpush1.msra.mxu0 0.0
    %5613 = vmatprep.subr.mxu0 0.0
    %5614 = vmatpush1.msra.mxu0 0.0
    %5615 = vmatprep.subr.mxu0 0.0
    %5616 = vmatpush1.msra.mxu0 0.0
    %5617 = vmatprep.subr.mxu0 0.0
    %5618 = vmatpush1.msra.mxu0 0.0
    %5619 = vmatprep.subr.mxu0 0.0
    %5620 = vmatpush1.msra.mxu0 0.0
    %5621 = vmatprep.subr.mxu0 0.0
    %5622 = vmatpush1.msra.mxu0 0.0
    %5623 = vmatprep.subr.mxu0 0.0
    %5624 = vmatpush1.msra.mxu0 0.0
    %5625 = vmatprep.subr.mxu0 0.0
    %5626 = vmatpush1.msra.mxu0 0.0
    %5627 = vmatprep.subr.mxu0 0.0
    %5628 = vmatpush1.msra.mxu0 0.0
    %5629 = vmatprep.subr.mxu0 0.0
    %5630 = vmatpush1.msra.mxu0 0.0
    %5631 = vmatprep.subr.mxu0 0.0
    %5632 = vmatpush1.msra.mxu0 0.0
    %5633 = vmatprep.subr.mxu0 0.0
    %5634 = vmatpush1.msra.mxu0 0.0
    %5635 = vmatprep.subr.mxu0 0.0
    %5636 = vmatpush1.msra.mxu0 0.0
    %5637 = vmatprep.subr.mxu0 0.0
    %5638 = vmatpush1.msra.mxu0 0.0
    %5639 = vmatprep.subr.mxu0 0.0
    %5640 = vmatpush1.msra.mxu0 0.0
    %5641 = vmatprep.subr.mxu0 0.0
    %5642 = vmatpush1.msra.mxu0 0.0
    %5643 = vmatprep.subr.mxu0 0.0
    %5644 = vmatpush1.msra.mxu0 0.0
    %5645 = vmatprep.subr.mxu0 0.0
    %5646 = vmatpush1.msra.mxu0 0.0
    %5647 = vmatprep.subr.mxu0 0.0
    %5648 = vmatpush1.msra.mxu0 0.0
    %5649 = vmatprep.subr.mxu0 0.0
    %5650 = vmatpush1.msra.mxu0 0.0
    %5651 = vmatprep.subr.mxu0 0.0
    %5652 = vmatpush1.msra.mxu0 0.0
    %5653 = vmatprep.subr.mxu0 0.0
    %5654 = vmatpush1.msra.mxu0 0.0
    %5655 = vmatprep.subr.mxu0 0.0
    %5656 = vmatpush1.msra.mxu0 0.0
    %5657 = vmatprep.subr.mxu0 0.0
    %5658 = vmatpush1.msra.mxu0 0.0
    %5659 = vmatprep.subr.mxu0 0.0
    %5660 = vmatpush1.msra.mxu0 0.0
    %5661 = vmatprep.subr.mxu0 0.0
    %5662 = vmatpush1.msra.mxu0 0.0
    %5663 = vmatprep.subr.mxu0 0.0
    %5664 = vmatpush1.msra.mxu0 0.0
    %5665 = vmatprep.subr.mxu0 0.0
    %5666 = vmatpush1.msra.mxu0 0.0
    %5667 = vmatprep.mubr.f32.mxu0 0.0
    %5668 = vmatmul.mubr.f32.gmra.mrb[0].mxu0 %v5601
    %v5669 = vpop.f32.mrb[0].mxu0
    %v5670 = vadd.f32 0.0, %v5669
    %v5671 = vpop.f32.mrb[0].mxu0
    %5672 = vdwg.mxu0
    %5673 = vrot.lane.b32.xlu0 %v4172, 40
    %v5674 = vpop.permute.xlu0 %5673
    %v5677 = vsel %vm239, %v5596, 0
    %5679 = vmatprep.subr.mxu0 0.0
    %5680 = vmatpush1.msra.mxu0 %v5674
    %5681 = vmatprep.subr.mxu0 0.0
    %5682 = vmatpush1.msra.mxu0 0.0
    %5683 = vmatprep.subr.mxu0 0.0
    %5684 = vmatpush1.msra.mxu0 0.0
    %5685 = vmatprep.subr.mxu0 0.0
    %5686 = vmatpush1.msra.mxu0 0.0
    %5687 = vmatprep.subr.mxu0 0.0
    %5688 = vmatpush1.msra.mxu0 0.0
    %5689 = vmatprep.subr.mxu0 0.0
    %5690 = vmatpush1.msra.mxu0 0.0
    %5691 = vmatprep.subr.mxu0 0.0
    %5692 = vmatpush1.msra.mxu0 0.0
    %5693 = vmatprep.subr.mxu0 0.0
    %5694 = vmatpush1.msra.mxu0 0.0
    %5695 = vmatprep.subr.mxu0 0.0
    %5696 = vmatpush1.msra.mxu0 0.0
    %5697 = vmatprep.subr.mxu0 0.0
    %5698 = vmatpush1.msra.mxu0 0.0
    %5699 = vmatprep.subr.mxu0 0.0
    %5700 = vmatpush1.msra.mxu0 0.0
    %5701 = vmatprep.subr.mxu0 0.0
    %5702 = vmatpush1.msra.mxu0 0.0
    %5703 = vmatprep.subr.mxu0 0.0
    %5704 = vmatpush1.msra.mxu0 0.0
    %5705 = vmatprep.subr.mxu0 0.0
    %5706 = vmatpush1.msra.mxu0 0.0
    %5707 = vmatprep.subr.mxu0 0.0
    %5708 = vmatpush1.msra.mxu0 0.0
    %5709 = vmatprep.subr.mxu0 0.0
    %5710 = vmatpush1.msra.mxu0 0.0
    %5711 = vmatprep.subr.mxu0 0.0
    %5712 = vmatpush1.msra.mxu0 0.0
    %5713 = vmatprep.subr.mxu0 0.0
    %5714 = vmatpush1.msra.mxu0 0.0
    %5715 = vmatprep.subr.mxu0 0.0
    %5716 = vmatpush1.msra.mxu0 0.0
    %5717 = vmatprep.subr.mxu0 0.0
    %5718 = vmatpush1.msra.mxu0 0.0
    %5719 = vmatprep.subr.mxu0 0.0
    %5720 = vmatpush1.msra.mxu0 0.0
    %5721 = vmatprep.subr.mxu0 0.0
    %5722 = vmatpush1.msra.mxu0 0.0
    %5723 = vmatprep.subr.mxu0 0.0
    %5724 = vmatpush1.msra.mxu0 0.0
    %5725 = vmatprep.subr.mxu0 0.0
    %5726 = vmatpush1.msra.mxu0 0.0
    %5727 = vmatprep.subr.mxu0 0.0
    %5728 = vmatpush1.msra.mxu0 0.0
    %5729 = vmatprep.subr.mxu0 0.0
    %5730 = vmatpush1.msra.mxu0 0.0
    %5731 = vmatprep.subr.mxu0 0.0
    %5732 = vmatpush1.msra.mxu0 0.0
    %5733 = vmatprep.subr.mxu0 0.0
    %5734 = vmatpush1.msra.mxu0 0.0
    %5735 = vmatprep.subr.mxu0 0.0
    %5736 = vmatpush1.msra.mxu0 0.0
    %5737 = vmatprep.subr.mxu0 0.0
    %5738 = vmatpush1.msra.mxu0 0.0
    %5739 = vmatprep.subr.mxu0 0.0
    %5740 = vmatpush1.msra.mxu0 0.0
    %5741 = vmatprep.subr.mxu0 0.0
    %5742 = vmatpush1.msra.mxu0 0.0
    %5743 = vmatprep.mubr.f32.mxu0 0.0
    %5744 = vmatmul.mubr.f32.gmra.mrb[0].mxu0 %v5677
    %v5745 = vpop.f32.mrb[0].mxu0
    %v5746 = vadd.f32 0.0, %v5745
    %v5747 = vpop.f32.mrb[0].mxu0
    %5748 = vdwg.mxu0
    %v5750 = vsel %vm239, %v5670, 0
    %v5753 = vsel %vm239, %v5746, 0
    %5755 = vmatprep.subr.mxu0 0.0
    %5756 = vmatpush1.msra.mxu0 %v4181
    %5757 = vmatprep.subr.mxu0 0.0
    %5758 = vmatpush1.msra.mxu0 0.0
    %5759 = vmatprep.subr.mxu0 0.0
    %5760 = vmatpush1.msra.mxu0 0.0
    %5761 = vmatprep.subr.mxu0 0.0
    %5762 = vmatpush1.msra.mxu0 0.0
    %5763 = vmatprep.subr.mxu0 0.0
    %5764 = vmatpush1.msra.mxu0 0.0
    %5765 = vmatprep.subr.mxu0 0.0
    %5766 = vmatpush1.msra.mxu0 0.0
    %5767 = vmatprep.subr.mxu0 0.0
    %5768 = vmatpush1.msra.mxu0 0.0
    %5769 = vmatprep.subr.mxu0 0.0
    %5770 = vmatpush1.msra.mxu0 0.0
    %5771 = vmatprep.subr.mxu0 0.0
    %5772 = vmatpush1.msra.mxu0 0.0
    %5773 = vmatprep.subr.mxu0 0.0
    %5774 = vmatpush1.msra.mxu0 0.0
    %5775 = vmatprep.subr.mxu0 0.0
    %5776 = vmatpush1.msra.mxu0 0.0
    %5777 = vmatprep.subr.mxu0 0.0
    %5778 = vmatpush1.msra.mxu0 0.0
    %5779 = vmatprep.subr.mxu0 0.0
    %5780 = vmatpush1.msra.mxu0 0.0
    %5781 = vmatprep.subr.mxu0 0.0
    %5782 = vmatpush1.msra.mxu0 0.0
    %5783 = vmatprep.subr.mxu0 0.0
    %5784 = vmatpush1.msra.mxu0 0.0
    %5785 = vmatprep.subr.mxu0 0.0
    %5786 = vmatpush1.msra.mxu0 0.0
    %5787 = vmatprep.subr.mxu0 0.0
    %5788 = vmatpush1.msra.mxu0 0.0
    %5789 = vmatprep.subr.mxu0 0.0
    %5790 = vmatpush1.msra.mxu0 0.0
    %5791 = vmatprep.subr.mxu0 0.0
    %5792 = vmatpush1.msra.mxu0 0.0
    %5793 = vmatprep.subr.mxu0 0.0
    %5794 = vmatpush1.msra.mxu0 0.0
    %5795 = vmatprep.subr.mxu0 0.0
    %5796 = vmatpush1.msra.mxu0 0.0
    %5797 = vmatprep.subr.mxu0 0.0
    %5798 = vmatpush1.msra.mxu0 0.0
    %5799 = vmatprep.subr.mxu0 0.0
    %5800 = vmatpush1.msra.mxu0 0.0
    %5801 = vmatprep.subr.mxu0 0.0
    %5802 = vmatpush1.msra.mxu0 0.0
    %5803 = vmatprep.subr.mxu0 0.0
    %5804 = vmatpush1.msra.mxu0 0.0
    %5805 = vmatprep.subr.mxu0 0.0
    %5806 = vmatpush1.msra.mxu0 0.0
    %5807 = vmatprep.subr.mxu0 0.0
    %5808 = vmatpush1.msra.mxu0 0.0
    %5809 = vmatprep.subr.mxu0 0.0
    %5810 = vmatpush1.msra.mxu0 0.0
    %5811 = vmatprep.subr.mxu0 0.0
    %5812 = vmatpush1.msra.mxu0 0.0
    %5813 = vmatprep.subr.mxu0 0.0
    %5814 = vmatpush1.msra.mxu0 0.0
    %5815 = vmatprep.subr.mxu0 0.0
    %5816 = vmatpush1.msra.mxu0 0.0
    %5817 = vmatprep.subr.mxu0 0.0
    %5818 = vmatpush1.msra.mxu0 0.0
    %5819 = vmatprep.mubr.f32.mxu0 0.0
    %5820 = vmatmul.mubr.f32.gmra.mrb[0].mxu0 %v5750
    %v5821 = vpop.f32.mrb[0].mxu0
    %v5822 = vadd.f32 0.0, %v5821
    %v5823 = vpop.f32.mrb[0].mxu0
    %5824 = vmatprep.mubr.f32.mxu0 0.0
    %5825 = vmatmul.mubr.f32.gmra.mrb[0].mxu0 %v5753
    %v5826 = vpop.f32.mrb[0].mxu0
    %v5827 = vadd.f32 0.0, %v5826
    %v5828 = vpop.f32.mrb[0].mxu0
    %5829 = vdwg.mxu0
    %v5830 = vadd.f32 %v5417, %v5822
    %v5831 = vadd.f32 %v5418, %v5827
    %v5833 = vlaneseq
    %v5834 = vshrl.u32 %v5833, 7
    %v5835 = vsub.s32 0, %v5834
    %v5836 = vrot.slane %v4183, %v5835
    %v5838 = vadd.f32 %v5830, %v5836
    %v5839 = vadd.f32 %v5831, %v5836
    %v5840 = vadd.f32 %v4033, %v5838
    %v5841 = vadd.f32 %v4034, %v5839
    %s5842 = scalar_lea.vmem %s9, 1
    %v5843 = vld [vmem:[%s5842] sm:$0x1]
    %s5844 = scalar_lea.vmem %s10, 1
    %v5845 = vld [vmem:[%s5844] sm:$0x1]
    %v5846 = vsel %vm93, %v5840, 0.0
    %5847 = vadd.xlane.f32.xlu0 %v5846
    %v5848 = vpop.xlane.xlu0 %5847
    %v5849 = vsel %vm93, %v5841, 0.0
    %5850 = vadd.xlane.f32.xlu0 %v5849
    %v5851 = vpop.xlane.xlu0 %5850
    %v5852 = vmul.f32 %v5848, %v100
    %v5853 = vmul.f32 %v5851, %v100
    %v5854 = vsub.f32 %v5840, %v5852
    %v5855 = vsub.f32 %v5841, %v5853
    %v5856 = vmul.f32 %v5854, %v5854
    %v5857 = vmul.f32 %v5855, %v5855
    %v5858 = vsel %vm93, %v5856, 0.0
    %5859 = vadd.xlane.f32.xlu0 %v5858
    %v5860 = vpop.xlane.xlu0 %5859
    %v5861 = vsel %vm93, %v5857, 0.0
    %5862 = vadd.xlane.f32.xlu0 %v5861
    %v5863 = vpop.xlane.xlu0 %5862
    %v5864 = vmul.f32 %v5860, %v100
    %v5865 = vmul.f32 %v5863, %v100
    %v5866 = vadd.f32 %v5864, 1e-05
    %v5867 = vadd.f32 %v5865, 1e-05
    %v5868 = vrsqrt.pop %v5866
    %v5869 = vrsqrt.pop %v5867
    %v5870 = vmul.f32 %v5854, %v5868
    %v5871 = vmul.f32 %v5855, %v5869
    %v5873 = vlaneseq
    %v5874 = vshrl.u32 %v5873, 7
    %v5875 = vsub.s32 0, %v5874
    %v5876 = vrot.slane %v5843, %v5875
    %v5878 = vmul.f32 %v5870, %v5876
    %v5879 = vmul.f32 %v5871, %v5876
    %v5881 = vlaneseq
    %v5882 = vshrl.u32 %v5881, 7
    %v5883 = vsub.s32 0, %v5882
    %v5884 = vrot.slane %v5845, %v5883
    %v5886 = vadd.f32 %v5878, %v5884
    %v5887 = vadd.f32 %v5879, %v5884
    %s5888 = scalar_lea.vmem %s11, 32
    %v5889 = vld [vmem:[%s5888] sm:$0xff]
    %v5890 = vld [vmem:[%s5888 + $0x8] sm:$0xff]
    %v5891 = vld [vmem:[%s5888 + $0x10] sm:$0xff]
    %v5892 = vld [vmem:[%s5888 + $0x18] sm:$0xff]
    %s5893 = scalar_lea.vmem %s12, 1
    %v5894 = vld [vmem:[%s5893] sm:$0x1]
    %v5896 = vlaneseq
    %v5897 = vshrl.u32 %v5896, 7
    %v5898 = vsub.s32 0, %v5897
    %v5899 = vrot.slane %v5894, %v5898
    %v5902 = vsel %vm93, %v5886, 0
    %v5905 = vsel %vm93, %v5887, 0
    %5907 = vmatprep.subr.mxu0 0.0
    %5908 = vmatpush1.msra.mxu0 %v5889
    %5909 = vmatprep.subr.mxu0 0.0
    %5910 = vmatpush1.msra.mxu0 %v5890
    %5911 = vmatprep.subr.mxu0 0.0
    %5912 = vmatpush1.msra.mxu0 %v5891
    %5913 = vmatprep.subr.mxu0 0.0
    %5914 = vmatpush1.msra.mxu0 %v5892
    %5915 = vmatprep.subr.mxu0 0.0
    %5916 = vmatpush1.msra.mxu0 0.0
    %5917 = vmatprep.subr.mxu0 0.0
    %5918 = vmatpush1.msra.mxu0 0.0
    %5919 = vmatprep.subr.mxu0 0.0
    %5920 = vmatpush1.msra.mxu0 0.0
    %5921 = vmatprep.subr.mxu0 0.0
    %5922 = vmatpush1.msra.mxu0 0.0
    %5923 = vmatprep.subr.mxu0 0.0
    %5924 = vmatpush1.msra.mxu0 0.0
    %5925 = vmatprep.subr.mxu0 0.0
    %5926 = vmatpush1.msra.mxu0 0.0
    %5927 = vmatprep.subr.mxu0 0.0
    %5928 = vmatpush1.msra.mxu0 0.0
    %5929 = vmatprep.subr.mxu0 0.0
    %5930 = vmatpush1.msra.mxu0 0.0
    %5931 = vmatprep.subr.mxu0 0.0
    %5932 = vmatpush1.msra.mxu0 0.0
    %5933 = vmatprep.subr.mxu0 0.0
    %5934 = vmatpush1.msra.mxu0 0.0
    %5935 = vmatprep.subr.mxu0 0.0
    %5936 = vmatpush1.msra.mxu0 0.0
    %5937 = vmatprep.subr.mxu0 0.0
    %5938 = vmatpush1.msra.mxu0 0.0
    %5939 = vmatprep.subr.mxu0 0.0
    %5940 = vmatpush1.msra.mxu0 0.0
    %5941 = vmatprep.subr.mxu0 0.0
    %5942 = vmatpush1.msra.mxu0 0.0
    %5943 = vmatprep.subr.mxu0 0.0
    %5944 = vmatpush1.msra.mxu0 0.0
    %5945 = vmatprep.subr.mxu0 0.0
    %5946 = vmatpush1.msra.mxu0 0.0
    %5947 = vmatprep.subr.mxu0 0.0
    %5948 = vmatpush1.msra.mxu0 0.0
    %5949 = vmatprep.subr.mxu0 0.0
    %5950 = vmatpush1.msra.mxu0 0.0
    %5951 = vmatprep.subr.mxu0 0.0
    %5952 = vmatpush1.msra.mxu0 0.0
    %5953 = vmatprep.subr.mxu0 0.0
    %5954 = vmatpush1.msra.mxu0 0.0
    %5955 = vmatprep.subr.mxu0 0.0
    %5956 = vmatpush1.msra.mxu0 0.0
    %5957 = vmatprep.subr.mxu0 0.0
    %5958 = vmatpush1.msra.mxu0 0.0
    %5959 = vmatprep.subr.mxu0 0.0
    %5960 = vmatpush1.msra.mxu0 0.0
    %5961 = vmatprep.subr.mxu0 0.0
    %5962 = vmatpush1.msra.mxu0 0.0
    %5963 = vmatprep.subr.mxu0 0.0
    %5964 = vmatpush1.msra.mxu0 0.0
    %5965 = vmatprep.subr.mxu0 0.0
    %5966 = vmatpush1.msra.mxu0 0.0
    %5967 = vmatprep.subr.mxu0 0.0
    %5968 = vmatpush1.msra.mxu0 0.0
    %5969 = vmatprep.subr.mxu0 0.0
    %5970 = vmatpush1.msra.mxu0 0.0
    %5971 = vmatprep.mubr.f32.mxu0 0.0
    %5972 = vmatmul.mubr.f32.gmra.mrb[0].mxu0 %v5902
    %v5973 = vpop.f32.mrb[0].mxu0
    %v5974 = vadd.f32 %v5899, %v5973
    %v5975 = vpop.f32.mrb[0].mxu0
    %5976 = vmatprep.mubr.f32.mxu0 0.0
    %5977 = vmatmul.mubr.f32.gmra.mrb[0].mxu0 %v5905
    %v5978 = vpop.f32.mrb[0].mxu0
    %v5979 = vadd.f32 %v5899, %v5978
    %v5980 = vpop.f32.mrb[0].mxu0
    %5981 = vdwg.mxu0
    %v5982 = vmul.f32 %v5974, 0.35355338
    %v5983 = vmul.f32 %v5979, 0.35355338
    %s5984 = scalar_lea.vmem %s13, 32
    %v5985 = vld [vmem:[%s5984] sm:$0xff]
    %v5986 = vld [vmem:[%s5984 + $0x8] sm:$0xff]
    %v5987 = vld [vmem:[%s5984 + $0x10] sm:$0xff]
    %v5988 = vld [vmem:[%s5984 + $0x18] sm:$0xff]
    %s5989 = scalar_lea.vmem %s14, 1
    %v5990 = vld [vmem:[%s5989] sm:$0x1]
    %v5992 = vlaneseq
    %v5993 = vshrl.u32 %v5992, 7
    %v5994 = vsub.s32 0, %v5993
    %v5995 = vrot.slane %v5990, %v5994
    %5997 = vmatprep.subr.mxu0 0.0
    %5998 = vmatpush1.msra.mxu0 %v5985
    %5999 = vmatprep.subr.mxu0 0.0
    %6000 = vmatpush1.msra.mxu0 %v5986
    %6001 = vmatprep.subr.mxu0 0.0
    %6002 = vmatpush1.msra.mxu0 %v5987
    %6003 = vmatprep.subr.mxu0 0.0
    %6004 = vmatpush1.msra.mxu0 %v5988
    %6005 = vmatprep.subr.mxu0 0.0
    %6006 = vmatpush1.msra.mxu0 0.0
    %6007 = vmatprep.subr.mxu0 0.0
    %6008 = vmatpush1.msra.mxu0 0.0
    %6009 = vmatprep.subr.mxu0 0.0
    %6010 = vmatpush1.msra.mxu0 0.0
    %6011 = vmatprep.subr.mxu0 0.0
    %6012 = vmatpush1.msra.mxu0 0.0
    %6013 = vmatprep.subr.mxu0 0.0
    %6014 = vmatpush1.msra.mxu0 0.0
    %6015 = vmatprep.subr.mxu0 0.0
    %6016 = vmatpush1.msra.mxu0 0.0
    %6017 = vmatprep.subr.mxu0 0.0
    %6018 = vmatpush1.msra.mxu0 0.0
    %6019 = vmatprep.subr.mxu0 0.0
    %6020 = vmatpush1.msra.mxu0 0.0
    %6021 = vmatprep.subr.mxu0 0.0
    %6022 = vmatpush1.msra.mxu0 0.0
    %6023 = vmatprep.subr.mxu0 0.0
    %6024 = vmatpush1.msra.mxu0 0.0
    %6025 = vmatprep.subr.mxu0 0.0
    %6026 = vmatpush1.msra.mxu0 0.0
    %6027 = vmatprep.subr.mxu0 0.0
    %6028 = vmatpush1.msra.mxu0 0.0
    %6029 = vmatprep.subr.mxu0 0.0
    %6030 = vmatpush1.msra.mxu0 0.0
    %6031 = vmatprep.subr.mxu0 0.0
    %6032 = vmatpush1.msra.mxu0 0.0
    %6033 = vmatprep.subr.mxu0 0.0
    %6034 = vmatpush1.msra.mxu0 0.0
    %6035 = vmatprep.subr.mxu0 0.0
    %6036 = vmatpush1.msra.mxu0 0.0
    %6037 = vmatprep.subr.mxu0 0.0
    %6038 = vmatpush1.msra.mxu0 0.0
    %6039 = vmatprep.subr.mxu0 0.0
    %6040 = vmatpush1.msra.mxu0 0.0
    %6041 = vmatprep.subr.mxu0 0.0
    %6042 = vmatpush1.msra.mxu0 0.0
    %6043 = vmatprep.subr.mxu0 0.0
    %6044 = vmatpush1.msra.mxu0 0.0
    %6045 = vmatprep.subr.mxu0 0.0
    %6046 = vmatpush1.msra.mxu0 0.0
    %6047 = vmatprep.subr.mxu0 0.0
    %6048 = vmatpush1.msra.mxu0 0.0
    %6049 = vmatprep.subr.mxu0 0.0
    %6050 = vmatpush1.msra.mxu0 0.0
    %6051 = vmatprep.subr.mxu0 0.0
    %6052 = vmatpush1.msra.mxu0 0.0
    %6053 = vmatprep.subr.mxu0 0.0
    %6054 = vmatpush1.msra.mxu0 0.0
    %6055 = vmatprep.subr.mxu0 0.0
    %6056 = vmatpush1.msra.mxu0 0.0
    %6057 = vmatprep.subr.mxu0 0.0
    %6058 = vmatpush1.msra.mxu0 0.0
    %6059 = vmatprep.subr.mxu0 0.0
    %6060 = vmatpush1.msra.mxu0 0.0
    %6061 = vmatprep.mubr.f32.mxu0 0.0
    %6062 = vmatmul.mubr.f32.gmra.mrb[0].mxu0 %v2045
    %v6063 = vpop.f32.mrb[0].mxu0
    %v6064 = vadd.f32 %v5995, %v6063
    %v6065 = vpop.f32.mrb[0].mxu0
    %6066 = vmatprep.mubr.f32.mxu0 0.0
    %6067 = vmatmul.mubr.f32.gmra.mrb[0].mxu0 %v2048
    %v6068 = vpop.f32.mrb[0].mxu0
    %v6069 = vadd.f32 %v5995, %v6068
    %v6070 = vpop.f32.mrb[0].mxu0
    %6071 = vdwg.mxu0
    %s6072 = scalar_lea.vmem %s15, 32
    %v6073 = vld [vmem:[%s6072] sm:$0xff]
    %v6074 = vld [vmem:[%s6072 + $0x8] sm:$0xff]
    %v6075 = vld [vmem:[%s6072 + $0x10] sm:$0xff]
    %v6076 = vld [vmem:[%s6072 + $0x18] sm:$0xff]
    %s6077 = scalar_lea.vmem %s16, 1
    %v6078 = vld [vmem:[%s6077] sm:$0x1]
    %v6080 = vsel %vm239, %v5982, 0
    %v6083 = vsel %vm239, %v6064, 0
    %6085 = vmatprep.subr.mxu0 0.0
    %6086 = vmatpush1.xpose.msra.mxu0 %v6083
    %6087 = vmatprep.subr.mxu0 0.0
    %6088 = vmatpush1.xpose.msra.mxu0 0.0
    %6089 = vmatprep.subr.mxu0 0.0
    %6090 = vmatpush1.xpose.msra.mxu0 0.0
    %6091 = vmatprep.subr.mxu0 0.0
    %6092 = vmatpush1.xpose.msra.mxu0 0.0
    %6093 = vmatprep.subr.mxu0 0.0
    %6094 = vmatpush1.xpose.msra.mxu0 0.0
    %6095 = vmatprep.subr.mxu0 0.0
    %6096 = vmatpush1.xpose.msra.mxu0 0.0
    %6097 = vmatprep.subr.mxu0 0.0
    %6098 = vmatpush1.xpose.msra.mxu0 0.0
    %6099 = vmatprep.subr.mxu0 0.0
    %6100 = vmatpush1.xpose.msra.mxu0 0.0
    %6101 = vmatprep.subr.mxu0 0.0
    %6102 = vmatpush1.xpose.msra.mxu0 0.0
    %6103 = vmatprep.subr.mxu0 0.0
    %6104 = vmatpush1.xpose.msra.mxu0 0.0
    %6105 = vmatprep.subr.mxu0 0.0
    %6106 = vmatpush1.xpose.msra.mxu0 0.0
    %6107 = vmatprep.subr.mxu0 0.0
    %6108 = vmatpush1.xpose.msra.mxu0 0.0
    %6109 = vmatprep.subr.mxu0 0.0
    %6110 = vmatpush1.xpose.msra.mxu0 0.0
    %6111 = vmatprep.subr.mxu0 0.0
    %6112 = vmatpush1.xpose.msra.mxu0 0.0
    %6113 = vmatprep.subr.mxu0 0.0
    %6114 = vmatpush1.xpose.msra.mxu0 0.0
    %6115 = vmatprep.subr.mxu0 0.0
    %6116 = vmatpush1.xpose.msra.mxu0 0.0
    %6117 = vmatprep.subr.mxu0 0.0
    %6118 = vmatpush1.xpose.msra.mxu0 0.0
    %6119 = vmatprep.subr.mxu0 0.0
    %6120 = vmatpush1.xpose.msra.mxu0 0.0
    %6121 = vmatprep.subr.mxu0 0.0
    %6122 = vmatpush1.xpose.msra.mxu0 0.0
    %6123 = vmatprep.subr.mxu0 0.0
    %6124 = vmatpush1.xpose.msra.mxu0 0.0
    %6125 = vmatprep.subr.mxu0 0.0
    %6126 = vmatpush1.xpose.msra.mxu0 0.0
    %6127 = vmatprep.subr.mxu0 0.0
    %6128 = vmatpush1.xpose.msra.mxu0 0.0
    %6129 = vmatprep.subr.mxu0 0.0
    %6130 = vmatpush1.xpose.msra.mxu0 0.0
    %6131 = vmatprep.subr.mxu0 0.0
    %6132 = vmatpush1.xpose.msra.mxu0 0.0
    %6133 = vmatprep.subr.mxu0 0.0
    %6134 = vmatpush1.xpose.msra.mxu0 0.0
    %6135 = vmatprep.subr.mxu0 0.0
    %6136 = vmatpush1.xpose.msra.mxu0 0.0
    %6137 = vmatprep.subr.mxu0 0.0
    %6138 = vmatpush1.xpose.msra.mxu0 0.0
    %6139 = vmatprep.subr.mxu0 0.0
    %6140 = vmatpush1.xpose.msra.mxu0 0.0
    %6141 = vmatprep.subr.mxu0 0.0
    %6142 = vmatpush1.xpose.msra.mxu0 0.0
    %6143 = vmatprep.subr.mxu0 0.0
    %6144 = vmatpush1.xpose.msra.mxu0 0.0
    %6145 = vmatprep.subr.mxu0 0.0
    %6146 = vmatpush1.xpose.msra.mxu0 0.0
    %6147 = vmatprep.subr.mxu0 0.0
    %6148 = vmatpush1.xpose.msra.mxu0 0.0
    %6149 = vmatprep.mubr.f32.mxu0 0.0
    %6150 = vmatmul.mubr.f32.gmra.mrb[0].mxu0 %v6080
    %v6151 = vpop.f32.mrb[0].mxu0
    %v6152 = vadd.f32 %v2135, %v6151
    %v6153 = vpop.f32.mrb[0].mxu0
    %6154 = vdwg.mxu0
    %v6156 = vsel %vm239, %v5983, 0
    %v6159 = vsel %vm239, %v6069, 0
    %6161 = vmatprep.subr.mxu0 0.0
    %6162 = vmatpush1.xpose.msra.mxu0 %v6159
    %6163 = vmatprep.subr.mxu0 0.0
    %6164 = vmatpush1.xpose.msra.mxu0 0.0
    %6165 = vmatprep.subr.mxu0 0.0
    %6166 = vmatpush1.xpose.msra.mxu0 0.0
    %6167 = vmatprep.subr.mxu0 0.0
    %6168 = vmatpush1.xpose.msra.mxu0 0.0
    %6169 = vmatprep.subr.mxu0 0.0
    %6170 = vmatpush1.xpose.msra.mxu0 0.0
    %6171 = vmatprep.subr.mxu0 0.0
    %6172 = vmatpush1.xpose.msra.mxu0 0.0
    %6173 = vmatprep.subr.mxu0 0.0
    %6174 = vmatpush1.xpose.msra.mxu0 0.0
    %6175 = vmatprep.subr.mxu0 0.0
    %6176 = vmatpush1.xpose.msra.mxu0 0.0
    %6177 = vmatprep.subr.mxu0 0.0
    %6178 = vmatpush1.xpose.msra.mxu0 0.0
    %6179 = vmatprep.subr.mxu0 0.0
    %6180 = vmatpush1.xpose.msra.mxu0 0.0
    %6181 = vmatprep.subr.mxu0 0.0
    %6182 = vmatpush1.xpose.msra.mxu0 0.0
    %6183 = vmatprep.subr.mxu0 0.0
    %6184 = vmatpush1.xpose.msra.mxu0 0.0
    %6185 = vmatprep.subr.mxu0 0.0
    %6186 = vmatpush1.xpose.msra.mxu0 0.0
    %6187 = vmatprep.subr.mxu0 0.0
    %6188 = vmatpush1.xpose.msra.mxu0 0.0
    %6189 = vmatprep.subr.mxu0 0.0
    %6190 = vmatpush1.xpose.msra.mxu0 0.0
    %6191 = vmatprep.subr.mxu0 0.0
    %6192 = vmatpush1.xpose.msra.mxu0 0.0
    %6193 = vmatprep.subr.mxu0 0.0
    %6194 = vmatpush1.xpose.msra.mxu0 0.0
    %6195 = vmatprep.subr.mxu0 0.0
    %6196 = vmatpush1.xpose.msra.mxu0 0.0
    %6197 = vmatprep.subr.mxu0 0.0
    %6198 = vmatpush1.xpose.msra.mxu0 0.0
    %6199 = vmatprep.subr.mxu0 0.0
    %6200 = vmatpush1.xpose.msra.mxu0 0.0
    %6201 = vmatprep.subr.mxu0 0.0
    %6202 = vmatpush1.xpose.msra.mxu0 0.0
    %6203 = vmatprep.subr.mxu0 0.0
    %6204 = vmatpush1.xpose.msra.mxu0 0.0
    %6205 = vmatprep.subr.mxu0 0.0
    %6206 = vmatpush1.xpose.msra.mxu0 0.0
    %6207 = vmatprep.subr.mxu0 0.0
    %6208 = vmatpush1.xpose.msra.mxu0 0.0
    %6209 = vmatprep.subr.mxu0 0.0
    %6210 = vmatpush1.xpose.msra.mxu0 0.0
    %6211 = vmatprep.subr.mxu0 0.0
    %6212 = vmatpush1.xpose.msra.mxu0 0.0
    %6213 = vmatprep.subr.mxu0 0.0
    %6214 = vmatpush1.xpose.msra.mxu0 0.0
    %6215 = vmatprep.subr.mxu0 0.0
    %6216 = vmatpush1.xpose.msra.mxu0 0.0
    %6217 = vmatprep.subr.mxu0 0.0
    %6218 = vmatpush1.xpose.msra.mxu0 0.0
    %6219 = vmatprep.subr.mxu0 0.0
    %6220 = vmatpush1.xpose.msra.mxu0 0.0
    %6221 = vmatprep.subr.mxu0 0.0
    %6222 = vmatpush1.xpose.msra.mxu0 0.0
    %6223 = vmatprep.subr.mxu0 0.0
    %6224 = vmatpush1.xpose.msra.mxu0 0.0
    %6225 = vmatprep.mubr.f32.mxu0 0.0
    %6226 = vmatmul.mubr.f32.gmra.mrb[0].mxu0 %v6156
    %v6227 = vpop.f32.mrb[0].mxu0
    %v6228 = vadd.f32 %v2139, %v6227
    %v6229 = vpop.f32.mrb[0].mxu0
    %6230 = vdwg.mxu0
    %v6231 = vsel %vm239, %v6152, -inf
    %6232 = vmax.xlane.f32.xlu0 %v6231
    %v6233 = vpop.xlane.xlu0 %6232
    %v6234 = vsel %vm239, %v6228, -inf
    %6235 = vmax.xlane.f32.xlu0 %v6234
    %v6236 = vpop.xlane.xlu0 %6235
    %v6237 = vsub.f32 %v6152, %v6233
    %v6238 = vsub.f32 %v6228, %v6236
    %v6239 = vmul.f32 %v6237, 1.442695
    %v6240 = vpow.pop %v6239
    %v6241 = vmul.f32 %v6238, 1.442695
    %v6242 = vpow.pop %v6241
    %v6243 = vsel %vm239, %v6240, 0.0
    %6244 = vadd.xlane.f32.xlu0 %v6243
    %v6245 = vpop.xlane.xlu0 %6244
    %v6246 = vsel %vm239, %v6242, 0.0
    %6247 = vadd.xlane.f32.xlu0 %v6246
    %v6248 = vpop.xlane.xlu0 %6247
    %v6249 = vrcp.pop %v6245
    %v6250 = vrcp.pop %v6248
    %v6251 = vmul.f32 %v6240, %v6249
    %v6252 = vmul.f32 %v6242, %v6250
    %6253 = vrot.lane.b32.xlu0 %v6064, 96
    %v6254 = vpop.permute.xlu0 %6253
    %v6257 = vsel %vm239, %v6251, 0
    %6259 = vmatprep.subr.mxu0 0.0
    %6260 = vmatpush1.msra.mxu0 %v6254
    %6261 = vmatprep.subr.mxu0 0.0
    %6262 = vmatpush1.msra.mxu0 0.0
    %6263 = vmatprep.subr.mxu0 0.0
    %6264 = vmatpush1.msra.mxu0 0.0
    %6265 = vmatprep.subr.mxu0 0.0
    %6266 = vmatpush1.msra.mxu0 0.0
    %6267 = vmatprep.subr.mxu0 0.0
    %6268 = vmatpush1.msra.mxu0 0.0
    %6269 = vmatprep.subr.mxu0 0.0
    %6270 = vmatpush1.msra.mxu0 0.0
    %6271 = vmatprep.subr.mxu0 0.0
    %6272 = vmatpush1.msra.mxu0 0.0
    %6273 = vmatprep.subr.mxu0 0.0
    %6274 = vmatpush1.msra.mxu0 0.0
    %6275 = vmatprep.subr.mxu0 0.0
    %6276 = vmatpush1.msra.mxu0 0.0
    %6277 = vmatprep.subr.mxu0 0.0
    %6278 = vmatpush1.msra.mxu0 0.0
    %6279 = vmatprep.subr.mxu0 0.0
    %6280 = vmatpush1.msra.mxu0 0.0
    %6281 = vmatprep.subr.mxu0 0.0
    %6282 = vmatpush1.msra.mxu0 0.0
    %6283 = vmatprep.subr.mxu0 0.0
    %6284 = vmatpush1.msra.mxu0 0.0
    %6285 = vmatprep.subr.mxu0 0.0
    %6286 = vmatpush1.msra.mxu0 0.0
    %6287 = vmatprep.subr.mxu0 0.0
    %6288 = vmatpush1.msra.mxu0 0.0
    %6289 = vmatprep.subr.mxu0 0.0
    %6290 = vmatpush1.msra.mxu0 0.0
    %6291 = vmatprep.subr.mxu0 0.0
    %6292 = vmatpush1.msra.mxu0 0.0
    %6293 = vmatprep.subr.mxu0 0.0
    %6294 = vmatpush1.msra.mxu0 0.0
    %6295 = vmatprep.subr.mxu0 0.0
    %6296 = vmatpush1.msra.mxu0 0.0
    %6297 = vmatprep.subr.mxu0 0.0
    %6298 = vmatpush1.msra.mxu0 0.0
    %6299 = vmatprep.subr.mxu0 0.0
    %6300 = vmatpush1.msra.mxu0 0.0
    %6301 = vmatprep.subr.mxu0 0.0
    %6302 = vmatpush1.msra.mxu0 0.0
    %6303 = vmatprep.subr.mxu0 0.0
    %6304 = vmatpush1.msra.mxu0 0.0
    %6305 = vmatprep.subr.mxu0 0.0
    %6306 = vmatpush1.msra.mxu0 0.0
    %6307 = vmatprep.subr.mxu0 0.0
    %6308 = vmatpush1.msra.mxu0 0.0
    %6309 = vmatprep.subr.mxu0 0.0
    %6310 = vmatpush1.msra.mxu0 0.0
    %6311 = vmatprep.subr.mxu0 0.0
    %6312 = vmatpush1.msra.mxu0 0.0
    %6313 = vmatprep.subr.mxu0 0.0
    %6314 = vmatpush1.msra.mxu0 0.0
    %6315 = vmatprep.subr.mxu0 0.0
    %6316 = vmatpush1.msra.mxu0 0.0
    %6317 = vmatprep.subr.mxu0 0.0
    %6318 = vmatpush1.msra.mxu0 0.0
    %6319 = vmatprep.subr.mxu0 0.0
    %6320 = vmatpush1.msra.mxu0 0.0
    %6321 = vmatprep.subr.mxu0 0.0
    %6322 = vmatpush1.msra.mxu0 0.0
    %6323 = vmatprep.mubr.f32.mxu0 0.0
    %6324 = vmatmul.mubr.f32.gmra.mrb[0].mxu0 %v6257
    %v6325 = vpop.f32.mrb[0].mxu0
    %v6326 = vadd.f32 0.0, %v6325
    %v6327 = vpop.f32.mrb[0].mxu0
    %6328 = vdwg.mxu0
    %6329 = vrot.lane.b32.xlu0 %v6069, 96
    %v6330 = vpop.permute.xlu0 %6329
    %v6333 = vsel %vm239, %v6252, 0
    %6335 = vmatprep.subr.mxu0 0.0
    %6336 = vmatpush1.msra.mxu0 %v6330
    %6337 = vmatprep.subr.mxu0 0.0
    %6338 = vmatpush1.msra.mxu0 0.0
    %6339 = vmatprep.subr.mxu0 0.0
    %6340 = vmatpush1.msra.mxu0 0.0
    %6341 = vmatprep.subr.mxu0 0.0
    %6342 = vmatpush1.msra.mxu0 0.0
    %6343 = vmatprep.subr.mxu0 0.0
    %6344 = vmatpush1.msra.mxu0 0.0
    %6345 = vmatprep.subr.mxu0 0.0
    %6346 = vmatpush1.msra.mxu0 0.0
    %6347 = vmatprep.subr.mxu0 0.0
    %6348 = vmatpush1.msra.mxu0 0.0
    %6349 = vmatprep.subr.mxu0 0.0
    %6350 = vmatpush1.msra.mxu0 0.0
    %6351 = vmatprep.subr.mxu0 0.0
    %6352 = vmatpush1.msra.mxu0 0.0
    %6353 = vmatprep.subr.mxu0 0.0
    %6354 = vmatpush1.msra.mxu0 0.0
    %6355 = vmatprep.subr.mxu0 0.0
    %6356 = vmatpush1.msra.mxu0 0.0
    %6357 = vmatprep.subr.mxu0 0.0
    %6358 = vmatpush1.msra.mxu0 0.0
    %6359 = vmatprep.subr.mxu0 0.0
    %6360 = vmatpush1.msra.mxu0 0.0
    %6361 = vmatprep.subr.mxu0 0.0
    %6362 = vmatpush1.msra.mxu0 0.0
    %6363 = vmatprep.subr.mxu0 0.0
    %6364 = vmatpush1.msra.mxu0 0.0
    %6365 = vmatprep.subr.mxu0 0.0
    %6366 = vmatpush1.msra.mxu0 0.0
    %6367 = vmatprep.subr.mxu0 0.0
    %6368 = vmatpush1.msra.mxu0 0.0
    %6369 = vmatprep.subr.mxu0 0.0
    %6370 = vmatpush1.msra.mxu0 0.0
    %6371 = vmatprep.subr.mxu0 0.0
    %6372 = vmatpush1.msra.mxu0 0.0
    %6373 = vmatprep.subr.mxu0 0.0
    %6374 = vmatpush1.msra.mxu0 0.0
    %6375 = vmatprep.subr.mxu0 0.0
    %6376 = vmatpush1.msra.mxu0 0.0
    %6377 = vmatprep.subr.mxu0 0.0
    %6378 = vmatpush1.msra.mxu0 0.0
    %6379 = vmatprep.subr.mxu0 0.0
    %6380 = vmatpush1.msra.mxu0 0.0
    %6381 = vmatprep.subr.mxu0 0.0
    %6382 = vmatpush1.msra.mxu0 0.0
    %6383 = vmatprep.subr.mxu0 0.0
    %6384 = vmatpush1.msra.mxu0 0.0
    %6385 = vmatprep.subr.mxu0 0.0
    %6386 = vmatpush1.msra.mxu0 0.0
    %6387 = vmatprep.subr.mxu0 0.0
    %6388 = vmatpush1.msra.mxu0 0.0
    %6389 = vmatprep.subr.mxu0 0.0
    %6390 = vmatpush1.msra.mxu0 0.0
    %6391 = vmatprep.subr.mxu0 0.0
    %6392 = vmatpush1.msra.mxu0 0.0
    %6393 = vmatprep.subr.mxu0 0.0
    %6394 = vmatpush1.msra.mxu0 0.0
    %6395 = vmatprep.subr.mxu0 0.0
    %6396 = vmatpush1.msra.mxu0 0.0
    %6397 = vmatprep.subr.mxu0 0.0
    %6398 = vmatpush1.msra.mxu0 0.0
    %6399 = vmatprep.mubr.f32.mxu0 0.0
    %6400 = vmatmul.mubr.f32.gmra.mrb[0].mxu0 %v6333
    %v6401 = vpop.f32.mrb[0].mxu0
    %v6402 = vadd.f32 0.0, %v6401
    %v6403 = vpop.f32.mrb[0].mxu0
    %6404 = vdwg.mxu0
    %6405 = vrot.lane.b32.xlu0 %v5982, 120
    %v6406 = vpop.permute.xlu0 %6405
    %6407 = vrot.lane.b32.xlu0 %v6064, 120
    %v6408 = vpop.permute.xlu0 %6407
    %v6409 = vsel %vm239, %v6406, 0
    %v6411 = vsel %vm239, %v6408, 0
    %6413 = vmatprep.subr.mxu0 0.0
    %6414 = vmatpush1.xpose.msra.mxu0 %v6411
    %6415 = vmatprep.subr.mxu0 0.0
    %6416 = vmatpush1.xpose.msra.mxu0 0.0
    %6417 = vmatprep.subr.mxu0 0.0
    %6418 = vmatpush1.xpose.msra.mxu0 0.0
    %6419 = vmatprep.subr.mxu0 0.0
    %6420 = vmatpush1.xpose.msra.mxu0 0.0
    %6421 = vmatprep.subr.mxu0 0.0
    %6422 = vmatpush1.xpose.msra.mxu0 0.0
    %6423 = vmatprep.subr.mxu0 0.0
    %6424 = vmatpush1.xpose.msra.mxu0 0.0
    %6425 = vmatprep.subr.mxu0 0.0
    %6426 = vmatpush1.xpose.msra.mxu0 0.0
    %6427 = vmatprep.subr.mxu0 0.0
    %6428 = vmatpush1.xpose.msra.mxu0 0.0
    %6429 = vmatprep.subr.mxu0 0.0
    %6430 = vmatpush1.xpose.msra.mxu0 0.0
    %6431 = vmatprep.subr.mxu0 0.0
    %6432 = vmatpush1.xpose.msra.mxu0 0.0
    %6433 = vmatprep.subr.mxu0 0.0
    %6434 = vmatpush1.xpose.msra.mxu0 0.0
    %6435 = vmatprep.subr.mxu0 0.0
    %6436 = vmatpush1.xpose.msra.mxu0 0.0
    %6437 = vmatprep.subr.mxu0 0.0
    %6438 = vmatpush1.xpose.msra.mxu0 0.0
    %6439 = vmatprep.subr.mxu0 0.0
    %6440 = vmatpush1.xpose.msra.mxu0 0.0
    %6441 = vmatprep.subr.mxu0 0.0
    %6442 = vmatpush1.xpose.msra.mxu0 0.0
    %6443 = vmatprep.subr.mxu0 0.0
    %6444 = vmatpush1.xpose.msra.mxu0 0.0
    %6445 = vmatprep.subr.mxu0 0.0
    %6446 = vmatpush1.xpose.msra.mxu0 0.0
    %6447 = vmatprep.subr.mxu0 0.0
    %6448 = vmatpush1.xpose.msra.mxu0 0.0
    %6449 = vmatprep.subr.mxu0 0.0
    %6450 = vmatpush1.xpose.msra.mxu0 0.0
    %6451 = vmatprep.subr.mxu0 0.0
    %6452 = vmatpush1.xpose.msra.mxu0 0.0
    %6453 = vmatprep.subr.mxu0 0.0
    %6454 = vmatpush1.xpose.msra.mxu0 0.0
    %6455 = vmatprep.subr.mxu0 0.0
    %6456 = vmatpush1.xpose.msra.mxu0 0.0
    %6457 = vmatprep.subr.mxu0 0.0
    %6458 = vmatpush1.xpose.msra.mxu0 0.0
    %6459 = vmatprep.subr.mxu0 0.0
    %6460 = vmatpush1.xpose.msra.mxu0 0.0
    %6461 = vmatprep.subr.mxu0 0.0
    %6462 = vmatpush1.xpose.msra.mxu0 0.0
    %6463 = vmatprep.subr.mxu0 0.0
    %6464 = vmatpush1.xpose.msra.mxu0 0.0
    %6465 = vmatprep.subr.mxu0 0.0
    %6466 = vmatpush1.xpose.msra.mxu0 0.0
    %6467 = vmatprep.subr.mxu0 0.0
    %6468 = vmatpush1.xpose.msra.mxu0 0.0
    %6469 = vmatprep.subr.mxu0 0.0
    %6470 = vmatpush1.xpose.msra.mxu0 0.0
    %6471 = vmatprep.subr.mxu0 0.0
    %6472 = vmatpush1.xpose.msra.mxu0 0.0
    %6473 = vmatprep.subr.mxu0 0.0
    %6474 = vmatpush1.xpose.msra.mxu0 0.0
    %6475 = vmatprep.subr.mxu0 0.0
    %6476 = vmatpush1.xpose.msra.mxu0 0.0
    %6477 = vmatprep.mubr.f32.mxu0 0.0
    %6478 = vmatmul.mubr.f32.gmra.mrb[0].mxu0 %v6409
    %v6479 = vpop.f32.mrb[0].mxu0
    %v6480 = vadd.f32 %v2135, %v6479
    %v6481 = vpop.f32.mrb[0].mxu0
    %6482 = vdwg.mxu0
    %6483 = vrot.lane.b32.xlu0 %v5983, 120
    %v6484 = vpop.permute.xlu0 %6483
    %6485 = vrot.lane.b32.xlu0 %v6069, 120
    %v6486 = vpop.permute.xlu0 %6485
    %v6487 = vsel %vm239, %v6484, 0
    %v6489 = vsel %vm239, %v6486, 0
    %6491 = vmatprep.subr.mxu0 0.0
    %6492 = vmatpush1.xpose.msra.mxu0 %v6489
    %6493 = vmatprep.subr.mxu0 0.0
    %6494 = vmatpush1.xpose.msra.mxu0 0.0
    %6495 = vmatprep.subr.mxu0 0.0
    %6496 = vmatpush1.xpose.msra.mxu0 0.0
    %6497 = vmatprep.subr.mxu0 0.0
    %6498 = vmatpush1.xpose.msra.mxu0 0.0
    %6499 = vmatprep.subr.mxu0 0.0
    %6500 = vmatpush1.xpose.msra.mxu0 0.0
    %6501 = vmatprep.subr.mxu0 0.0
    %6502 = vmatpush1.xpose.msra.mxu0 0.0
    %6503 = vmatprep.subr.mxu0 0.0
    %6504 = vmatpush1.xpose.msra.mxu0 0.0
    %6505 = vmatprep.subr.mxu0 0.0
    %6506 = vmatpush1.xpose.msra.mxu0 0.0
    %6507 = vmatprep.subr.mxu0 0.0
    %6508 = vmatpush1.xpose.msra.mxu0 0.0
    %6509 = vmatprep.subr.mxu0 0.0
    %6510 = vmatpush1.xpose.msra.mxu0 0.0
    %6511 = vmatprep.subr.mxu0 0.0
    %6512 = vmatpush1.xpose.msra.mxu0 0.0
    %6513 = vmatprep.subr.mxu0 0.0
    %6514 = vmatpush1.xpose.msra.mxu0 0.0
    %6515 = vmatprep.subr.mxu0 0.0
    %6516 = vmatpush1.xpose.msra.mxu0 0.0
    %6517 = vmatprep.subr.mxu0 0.0
    %6518 = vmatpush1.xpose.msra.mxu0 0.0
    %6519 = vmatprep.subr.mxu0 0.0
    %6520 = vmatpush1.xpose.msra.mxu0 0.0
    %6521 = vmatprep.subr.mxu0 0.0
    %6522 = vmatpush1.xpose.msra.mxu0 0.0
    %6523 = vmatprep.subr.mxu0 0.0
    %6524 = vmatpush1.xpose.msra.mxu0 0.0
    %6525 = vmatprep.subr.mxu0 0.0
    %6526 = vmatpush1.xpose.msra.mxu0 0.0
    %6527 = vmatprep.subr.mxu0 0.0
    %6528 = vmatpush1.xpose.msra.mxu0 0.0
    %6529 = vmatprep.subr.mxu0 0.0
    %6530 = vmatpush1.xpose.msra.mxu0 0.0
    %6531 = vmatprep.subr.mxu0 0.0
    %6532 = vmatpush1.xpose.msra.mxu0 0.0
    %6533 = vmatprep.subr.mxu0 0.0
    %6534 = vmatpush1.xpose.msra.mxu0 0.0
    %6535 = vmatprep.subr.mxu0 0.0
    %6536 = vmatpush1.xpose.msra.mxu0 0.0
    %6537 = vmatprep.subr.mxu0 0.0
    %6538 = vmatpush1.xpose.msra.mxu0 0.0
    %6539 = vmatprep.subr.mxu0 0.0
    %6540 = vmatpush1.xpose.msra.mxu0 0.0
    %6541 = vmatprep.subr.mxu0 0.0
    %6542 = vmatpush1.xpose.msra.mxu0 0.0
    %6543 = vmatprep.subr.mxu0 0.0
    %6544 = vmatpush1.xpose.msra.mxu0 0.0
    %6545 = vmatprep.subr.mxu0 0.0
    %6546 = vmatpush1.xpose.msra.mxu0 0.0
    %6547 = vmatprep.subr.mxu0 0.0
    %6548 = vmatpush1.xpose.msra.mxu0 0.0
    %6549 = vmatprep.subr.mxu0 0.0
    %6550 = vmatpush1.xpose.msra.mxu0 0.0
    %6551 = vmatprep.subr.mxu0 0.0
    %6552 = vmatpush1.xpose.msra.mxu0 0.0
    %6553 = vmatprep.subr.mxu0 0.0
    %6554 = vmatpush1.xpose.msra.mxu0 0.0
    %6555 = vmatprep.mubr.f32.mxu0 0.0
    %6556 = vmatmul.mubr.f32.gmra.mrb[0].mxu0 %v6487
    %v6557 = vpop.f32.mrb[0].mxu0
    %v6558 = vadd.f32 %v2139, %v6557
    %v6559 = vpop.f32.mrb[0].mxu0
    %6560 = vdwg.mxu0
    %v6561 = vsel %vm239, %v6480, -inf
    %6562 = vmax.xlane.f32.xlu0 %v6561
    %v6563 = vpop.xlane.xlu0 %6562
    %v6564 = vsel %vm239, %v6558, -inf
    %6565 = vmax.xlane.f32.xlu0 %v6564
    %v6566 = vpop.xlane.xlu0 %6565
    %v6567 = vsub.f32 %v6480, %v6563
    %v6568 = vsub.f32 %v6558, %v6566
    %v6569 = vmul.f32 %v6567, 1.442695
    %v6570 = vpow.pop %v6569
    %v6571 = vmul.f32 %v6568, 1.442695
    %v6572 = vpow.pop %v6571
    %v6573 = vsel %vm239, %v6570, 0.0
    %6574 = vadd.xlane.f32.xlu0 %v6573
    %v6575 = vpop.xlane.xlu0 %6574
    %v6576 = vsel %vm239, %v6572, 0.0
    %6577 = vadd.xlane.f32.xlu0 %v6576
    %v6578 = vpop.xlane.xlu0 %6577
    %v6579 = vrcp.pop %v6575
    %v6580 = vrcp.pop %v6578
    %v6581 = vmul.f32 %v6570, %v6579
    %v6582 = vmul.f32 %v6572, %v6580
    %6583 = vrot.lane.b32.xlu0 %v6064, 88
    %v6584 = vpop.permute.xlu0 %6583
    %v6587 = vsel %vm239, %v6581, 0
    %6589 = vmatprep.subr.mxu0 0.0
    %6590 = vmatpush1.msra.mxu0 %v6584
    %6591 = vmatprep.subr.mxu0 0.0
    %6592 = vmatpush1.msra.mxu0 0.0
    %6593 = vmatprep.subr.mxu0 0.0
    %6594 = vmatpush1.msra.mxu0 0.0
    %6595 = vmatprep.subr.mxu0 0.0
    %6596 = vmatpush1.msra.mxu0 0.0
    %6597 = vmatprep.subr.mxu0 0.0
    %6598 = vmatpush1.msra.mxu0 0.0
    %6599 = vmatprep.subr.mxu0 0.0
    %6600 = vmatpush1.msra.mxu0 0.0
    %6601 = vmatprep.subr.mxu0 0.0
    %6602 = vmatpush1.msra.mxu0 0.0
    %6603 = vmatprep.subr.mxu0 0.0
    %6604 = vmatpush1.msra.mxu0 0.0
    %6605 = vmatprep.subr.mxu0 0.0
    %6606 = vmatpush1.msra.mxu0 0.0
    %6607 = vmatprep.subr.mxu0 0.0
    %6608 = vmatpush1.msra.mxu0 0.0
    %6609 = vmatprep.subr.mxu0 0.0
    %6610 = vmatpush1.msra.mxu0 0.0
    %6611 = vmatprep.subr.mxu0 0.0
    %6612 = vmatpush1.msra.mxu0 0.0
    %6613 = vmatprep.subr.mxu0 0.0
    %6614 = vmatpush1.msra.mxu0 0.0
    %6615 = vmatprep.subr.mxu0 0.0
    %6616 = vmatpush1.msra.mxu0 0.0
    %6617 = vmatprep.subr.mxu0 0.0
    %6618 = vmatpush1.msra.mxu0 0.0
    %6619 = vmatprep.subr.mxu0 0.0
    %6620 = vmatpush1.msra.mxu0 0.0
    %6621 = vmatprep.subr.mxu0 0.0
    %6622 = vmatpush1.msra.mxu0 0.0
    %6623 = vmatprep.subr.mxu0 0.0
    %6624 = vmatpush1.msra.mxu0 0.0
    %6625 = vmatprep.subr.mxu0 0.0
    %6626 = vmatpush1.msra.mxu0 0.0
    %6627 = vmatprep.subr.mxu0 0.0
    %6628 = vmatpush1.msra.mxu0 0.0
    %6629 = vmatprep.subr.mxu0 0.0
    %6630 = vmatpush1.msra.mxu0 0.0
    %6631 = vmatprep.subr.mxu0 0.0
    %6632 = vmatpush1.msra.mxu0 0.0
    %6633 = vmatprep.subr.mxu0 0.0
    %6634 = vmatpush1.msra.mxu0 0.0
    %6635 = vmatprep.subr.mxu0 0.0
    %6636 = vmatpush1.msra.mxu0 0.0
    %6637 = vmatprep.subr.mxu0 0.0
    %6638 = vmatpush1.msra.mxu0 0.0
    %6639 = vmatprep.subr.mxu0 0.0
    %6640 = vmatpush1.msra.mxu0 0.0
    %6641 = vmatprep.subr.mxu0 0.0
    %6642 = vmatpush1.msra.mxu0 0.0
    %6643 = vmatprep.subr.mxu0 0.0
    %6644 = vmatpush1.msra.mxu0 0.0
    %6645 = vmatprep.subr.mxu0 0.0
    %6646 = vmatpush1.msra.mxu0 0.0
    %6647 = vmatprep.subr.mxu0 0.0
    %6648 = vmatpush1.msra.mxu0 0.0
    %6649 = vmatprep.subr.mxu0 0.0
    %6650 = vmatpush1.msra.mxu0 0.0
    %6651 = vmatprep.subr.mxu0 0.0
    %6652 = vmatpush1.msra.mxu0 0.0
    %6653 = vmatprep.mubr.f32.mxu0 0.0
    %6654 = vmatmul.mubr.f32.gmra.mrb[0].mxu0 %v6587
    %v6655 = vpop.f32.mrb[0].mxu0
    %v6656 = vadd.f32 0.0, %v6655
    %v6657 = vpop.f32.mrb[0].mxu0
    %6658 = vdwg.mxu0
    %6659 = vrot.lane.b32.xlu0 %v6069, 88
    %v6660 = vpop.permute.xlu0 %6659
    %v6663 = vsel %vm239, %v6582, 0
    %6665 = vmatprep.subr.mxu0 0.0
    %6666 = vmatpush1.msra.mxu0 %v6660
    %6667 = vmatprep.subr.mxu0 0.0
    %6668 = vmatpush1.msra.mxu0 0.0
    %6669 = vmatprep.subr.mxu0 0.0
    %6670 = vmatpush1.msra.mxu0 0.0
    %6671 = vmatprep.subr.mxu0 0.0
    %6672 = vmatpush1.msra.mxu0 0.0
    %6673 = vmatprep.subr.mxu0 0.0
    %6674 = vmatpush1.msra.mxu0 0.0
    %6675 = vmatprep.subr.mxu0 0.0
    %6676 = vmatpush1.msra.mxu0 0.0
    %6677 = vmatprep.subr.mxu0 0.0
    %6678 = vmatpush1.msra.mxu0 0.0
    %6679 = vmatprep.subr.mxu0 0.0
    %6680 = vmatpush1.msra.mxu0 0.0
    %6681 = vmatprep.subr.mxu0 0.0
    %6682 = vmatpush1.msra.mxu0 0.0
    %6683 = vmatprep.subr.mxu0 0.0
    %6684 = vmatpush1.msra.mxu0 0.0
    %6685 = vmatprep.subr.mxu0 0.0
    %6686 = vmatpush1.msra.mxu0 0.0
    %6687 = vmatprep.subr.mxu0 0.0
    %6688 = vmatpush1.msra.mxu0 0.0
    %6689 = vmatprep.subr.mxu0 0.0
    %6690 = vmatpush1.msra.mxu0 0.0
    %6691 = vmatprep.subr.mxu0 0.0
    %6692 = vmatpush1.msra.mxu0 0.0
    %6693 = vmatprep.subr.mxu0 0.0
    %6694 = vmatpush1.msra.mxu0 0.0
    %6695 = vmatprep.subr.mxu0 0.0
    %6696 = vmatpush1.msra.mxu0 0.0
    %6697 = vmatprep.subr.mxu0 0.0
    %6698 = vmatpush1.msra.mxu0 0.0
    %6699 = vmatprep.subr.mxu0 0.0
    %6700 = vmatpush1.msra.mxu0 0.0
    %6701 = vmatprep.subr.mxu0 0.0
    %6702 = vmatpush1.msra.mxu0 0.0
    %6703 = vmatprep.subr.mxu0 0.0
    %6704 = vmatpush1.msra.mxu0 0.0
    %6705 = vmatprep.subr.mxu0 0.0
    %6706 = vmatpush1.msra.mxu0 0.0
    %6707 = vmatprep.subr.mxu0 0.0
    %6708 = vmatpush1.msra.mxu0 0.0
    %6709 = vmatprep.subr.mxu0 0.0
    %6710 = vmatpush1.msra.mxu0 0.0
    %6711 = vmatprep.subr.mxu0 0.0
    %6712 = vmatpush1.msra.mxu0 0.0
    %6713 = vmatprep.subr.mxu0 0.0
    %6714 = vmatpush1.msra.mxu0 0.0
    %6715 = vmatprep.subr.mxu0 0.0
    %6716 = vmatpush1.msra.mxu0 0.0
    %6717 = vmatprep.subr.mxu0 0.0
    %6718 = vmatpush1.msra.mxu0 0.0
    %6719 = vmatprep.subr.mxu0 0.0
    %6720 = vmatpush1.msra.mxu0 0.0
    %6721 = vmatprep.subr.mxu0 0.0
    %6722 = vmatpush1.msra.mxu0 0.0
    %6723 = vmatprep.subr.mxu0 0.0
    %6724 = vmatpush1.msra.mxu0 0.0
    %6725 = vmatprep.subr.mxu0 0.0
    %6726 = vmatpush1.msra.mxu0 0.0
    %6727 = vmatprep.subr.mxu0 0.0
    %6728 = vmatpush1.msra.mxu0 0.0
    %6729 = vmatprep.mubr.f32.mxu0 0.0
    %6730 = vmatmul.mubr.f32.gmra.mrb[0].mxu0 %v6663
    %v6731 = vpop.f32.mrb[0].mxu0
    %v6732 = vadd.f32 0.0, %v6731
    %v6733 = vpop.f32.mrb[0].mxu0
    %6734 = vdwg.mxu0
    %v6736 = vsel %vm239, %v6656, 0
    %v6739 = vsel %vm239, %v6732, 0
    %6741 = vmatprep.subr.mxu0 0.0
    %6742 = vmatpush1.msra.mxu0 %v6074
    %6743 = vmatprep.subr.mxu0 0.0
    %6744 = vmatpush1.msra.mxu0 0.0
    %6745 = vmatprep.subr.mxu0 0.0
    %6746 = vmatpush1.msra.mxu0 0.0
    %6747 = vmatprep.subr.mxu0 0.0
    %6748 = vmatpush1.msra.mxu0 0.0
    %6749 = vmatprep.subr.mxu0 0.0
    %6750 = vmatpush1.msra.mxu0 0.0
    %6751 = vmatprep.subr.mxu0 0.0
    %6752 = vmatpush1.msra.mxu0 0.0
    %6753 = vmatprep.subr.mxu0 0.0
    %6754 = vmatpush1.msra.mxu0 0.0
    %6755 = vmatprep.subr.mxu0 0.0
    %6756 = vmatpush1.msra.mxu0 0.0
    %6757 = vmatprep.subr.mxu0 0.0
    %6758 = vmatpush1.msra.mxu0 0.0
    %6759 = vmatprep.subr.mxu0 0.0
    %6760 = vmatpush1.msra.mxu0 0.0
    %6761 = vmatprep.subr.mxu0 0.0
    %6762 = vmatpush1.msra.mxu0 0.0
    %6763 = vmatprep.subr.mxu0 0.0
    %6764 = vmatpush1.msra.mxu0 0.0
    %6765 = vmatprep.subr.mxu0 0.0
    %6766 = vmatpush1.msra.mxu0 0.0
    %6767 = vmatprep.subr.mxu0 0.0
    %6768 = vmatpush1.msra.mxu0 0.0
    %6769 = vmatprep.subr.mxu0 0.0
    %6770 = vmatpush1.msra.mxu0 0.0
    %6771 = vmatprep.subr.mxu0 0.0
    %6772 = vmatpush1.msra.mxu0 0.0
    %6773 = vmatprep.subr.mxu0 0.0
    %6774 = vmatpush1.msra.mxu0 0.0
    %6775 = vmatprep.subr.mxu0 0.0
    %6776 = vmatpush1.msra.mxu0 0.0
    %6777 = vmatprep.subr.mxu0 0.0
    %6778 = vmatpush1.msra.mxu0 0.0
    %6779 = vmatprep.subr.mxu0 0.0
    %6780 = vmatpush1.msra.mxu0 0.0
    %6781 = vmatprep.subr.mxu0 0.0
    %6782 = vmatpush1.msra.mxu0 0.0
    %6783 = vmatprep.subr.mxu0 0.0
    %6784 = vmatpush1.msra.mxu0 0.0
    %6785 = vmatprep.subr.mxu0 0.0
    %6786 = vmatpush1.msra.mxu0 0.0
    %6787 = vmatprep.subr.mxu0 0.0
    %6788 = vmatpush1.msra.mxu0 0.0
    %6789 = vmatprep.subr.mxu0 0.0
    %6790 = vmatpush1.msra.mxu0 0.0
    %6791 = vmatprep.subr.mxu0 0.0
    %6792 = vmatpush1.msra.mxu0 0.0
    %6793 = vmatprep.subr.mxu0 0.0
    %6794 = vmatpush1.msra.mxu0 0.0
    %6795 = vmatprep.subr.mxu0 0.0
    %6796 = vmatpush1.msra.mxu0 0.0
    %6797 = vmatprep.subr.mxu0 0.0
    %6798 = vmatpush1.msra.mxu0 0.0
    %6799 = vmatprep.subr.mxu0 0.0
    %6800 = vmatpush1.msra.mxu0 0.0
    %6801 = vmatprep.subr.mxu0 0.0
    %6802 = vmatpush1.msra.mxu0 0.0
    %6803 = vmatprep.subr.mxu0 0.0
    %6804 = vmatpush1.msra.mxu0 0.0
    %6805 = vmatprep.mubr.f32.mxu0 0.0
    %6806 = vmatmul.mubr.f32.gmra.mrb[0].mxu0 %v6736
    %v6807 = vpop.f32.mrb[0].mxu0
    %v6808 = vadd.f32 0.0, %v6807
    %v6809 = vpop.f32.mrb[0].mxu0
    %6810 = vmatprep.mubr.f32.mxu0 0.0
    %6811 = vmatmul.mubr.f32.gmra.mrb[0].mxu0 %v6739
    %v6812 = vpop.f32.mrb[0].mxu0
    %v6813 = vadd.f32 0.0, %v6812
    %v6814 = vpop.f32.mrb[0].mxu0
    %6815 = vdwg.mxu0
    %v6817 = vsel %vm239, %v6326, 0
    %v6820 = vsel %vm239, %v6402, 0
    %6822 = vmatprep.subr.mxu0 0.0
    %6823 = vmatpush1.msra.mxu0 %v6073
    %6824 = vmatprep.subr.mxu0 0.0
    %6825 = vmatpush1.msra.mxu0 0.0
    %6826 = vmatprep.subr.mxu0 0.0
    %6827 = vmatpush1.msra.mxu0 0.0
    %6828 = vmatprep.subr.mxu0 0.0
    %6829 = vmatpush1.msra.mxu0 0.0
    %6830 = vmatprep.subr.mxu0 0.0
    %6831 = vmatpush1.msra.mxu0 0.0
    %6832 = vmatprep.subr.mxu0 0.0
    %6833 = vmatpush1.msra.mxu0 0.0
    %6834 = vmatprep.subr.mxu0 0.0
    %6835 = vmatpush1.msra.mxu0 0.0
    %6836 = vmatprep.subr.mxu0 0.0
    %6837 = vmatpush1.msra.mxu0 0.0
    %6838 = vmatprep.subr.mxu0 0.0
    %6839 = vmatpush1.msra.mxu0 0.0
    %6840 = vmatprep.subr.mxu0 0.0
    %6841 = vmatpush1.msra.mxu0 0.0
    %6842 = vmatprep.subr.mxu0 0.0
    %6843 = vmatpush1.msra.mxu0 0.0
    %6844 = vmatprep.subr.mxu0 0.0
    %6845 = vmatpush1.msra.mxu0 0.0
    %6846 = vmatprep.subr.mxu0 0.0
    %6847 = vmatpush1.msra.mxu0 0.0
    %6848 = vmatprep.subr.mxu0 0.0
    %6849 = vmatpush1.msra.mxu0 0.0
    %6850 = vmatprep.subr.mxu0 0.0
    %6851 = vmatpush1.msra.mxu0 0.0
    %6852 = vmatprep.subr.mxu0 0.0
    %6853 = vmatpush1.msra.mxu0 0.0
    %6854 = vmatprep.subr.mxu0 0.0
    %6855 = vmatpush1.msra.mxu0 0.0
    %6856 = vmatprep.subr.mxu0 0.0
    %6857 = vmatpush1.msra.mxu0 0.0
    %6858 = vmatprep.subr.mxu0 0.0
    %6859 = vmatpush1.msra.mxu0 0.0
    %6860 = vmatprep.subr.mxu0 0.0
    %6861 = vmatpush1.msra.mxu0 0.0
    %6862 = vmatprep.subr.mxu0 0.0
    %6863 = vmatpush1.msra.mxu0 0.0
    %6864 = vmatprep.subr.mxu0 0.0
    %6865 = vmatpush1.msra.mxu0 0.0
    %6866 = vmatprep.subr.mxu0 0.0
    %6867 = vmatpush1.msra.mxu0 0.0
    %6868 = vmatprep.subr.mxu0 0.0
    %6869 = vmatpush1.msra.mxu0 0.0
    %6870 = vmatprep.subr.mxu0 0.0
    %6871 = vmatpush1.msra.mxu0 0.0
    %6872 = vmatprep.subr.mxu0 0.0
    %6873 = vmatpush1.msra.mxu0 0.0
    %6874 = vmatprep.subr.mxu0 0.0
    %6875 = vmatpush1.msra.mxu0 0.0
    %6876 = vmatprep.subr.mxu0 0.0
    %6877 = vmatpush1.msra.mxu0 0.0
    %6878 = vmatprep.subr.mxu0 0.0
    %6879 = vmatpush1.msra.mxu0 0.0
    %6880 = vmatprep.subr.mxu0 0.0
    %6881 = vmatpush1.msra.mxu0 0.0
    %6882 = vmatprep.subr.mxu0 0.0
    %6883 = vmatpush1.msra.mxu0 0.0
    %6884 = vmatprep.subr.mxu0 0.0
    %6885 = vmatpush1.msra.mxu0 0.0
    %6886 = vmatprep.mubr.f32.mxu0 0.0
    %6887 = vmatmul.mubr.f32.gmra.mrb[0].mxu0 %v6817
    %v6888 = vpop.f32.mrb[0].mxu0
    %v6889 = vadd.f32 %v6808, %v6888
    %v6890 = vpop.f32.mrb[0].mxu0
    %6891 = vmatprep.mubr.f32.mxu0 0.0
    %6892 = vmatmul.mubr.f32.gmra.mrb[0].mxu0 %v6820
    %v6893 = vpop.f32.mrb[0].mxu0
    %v6894 = vadd.f32 %v6813, %v6893
    %v6895 = vpop.f32.mrb[0].mxu0
    %6896 = vdwg.mxu0
    %6897 = vrot.lane.b32.xlu0 %v5982, 112
    %v6898 = vpop.permute.xlu0 %6897
    %6899 = vrot.lane.b32.xlu0 %v6064, 112
    %v6900 = vpop.permute.xlu0 %6899
    %v6901 = vsel %vm239, %v6898, 0
    %v6903 = vsel %vm239, %v6900, 0
    %6905 = vmatprep.subr.mxu0 0.0
    %6906 = vmatpush1.xpose.msra.mxu0 %v6903
    %6907 = vmatprep.subr.mxu0 0.0
    %6908 = vmatpush1.xpose.msra.mxu0 0.0
    %6909 = vmatprep.subr.mxu0 0.0
    %6910 = vmatpush1.xpose.msra.mxu0 0.0
    %6911 = vmatprep.subr.mxu0 0.0
    %6912 = vmatpush1.xpose.msra.mxu0 0.0
    %6913 = vmatprep.subr.mxu0 0.0
    %6914 = vmatpush1.xpose.msra.mxu0 0.0
    %6915 = vmatprep.subr.mxu0 0.0
    %6916 = vmatpush1.xpose.msra.mxu0 0.0
    %6917 = vmatprep.subr.mxu0 0.0
    %6918 = vmatpush1.xpose.msra.mxu0 0.0
    %6919 = vmatprep.subr.mxu0 0.0
    %6920 = vmatpush1.xpose.msra.mxu0 0.0
    %6921 = vmatprep.subr.mxu0 0.0
    %6922 = vmatpush1.xpose.msra.mxu0 0.0
    %6923 = vmatprep.subr.mxu0 0.0
    %6924 = vmatpush1.xpose.msra.mxu0 0.0
    %6925 = vmatprep.subr.mxu0 0.0
    %6926 = vmatpush1.xpose.msra.mxu0 0.0
    %6927 = vmatprep.subr.mxu0 0.0
    %6928 = vmatpush1.xpose.msra.mxu0 0.0
    %6929 = vmatprep.subr.mxu0 0.0
    %6930 = vmatpush1.xpose.msra.mxu0 0.0
    %6931 = vmatprep.subr.mxu0 0.0
    %6932 = vmatpush1.xpose.msra.mxu0 0.0
    %6933 = vmatprep.subr.mxu0 0.0
    %6934 = vmatpush1.xpose.msra.mxu0 0.0
    %6935 = vmatprep.subr.mxu0 0.0
    %6936 = vmatpush1.xpose.msra.mxu0 0.0
    %6937 = vmatprep.subr.mxu0 0.0
    %6938 = vmatpush1.xpose.msra.mxu0 0.0
    %6939 = vmatprep.subr.mxu0 0.0
    %6940 = vmatpush1.xpose.msra.mxu0 0.0
    %6941 = vmatprep.subr.mxu0 0.0
    %6942 = vmatpush1.xpose.msra.mxu0 0.0
    %6943 = vmatprep.subr.mxu0 0.0
    %6944 = vmatpush1.xpose.msra.mxu0 0.0
    %6945 = vmatprep.subr.mxu0 0.0
    %6946 = vmatpush1.xpose.msra.mxu0 0.0
    %6947 = vmatprep.subr.mxu0 0.0
    %6948 = vmatpush1.xpose.msra.mxu0 0.0
    %6949 = vmatprep.subr.mxu0 0.0
    %6950 = vmatpush1.xpose.msra.mxu0 0.0
    %6951 = vmatprep.subr.mxu0 0.0
    %6952 = vmatpush1.xpose.msra.mxu0 0.0
    %6953 = vmatprep.subr.mxu0 0.0
    %6954 = vmatpush1.xpose.msra.mxu0 0.0
    %6955 = vmatprep.subr.mxu0 0.0
    %6956 = vmatpush1.xpose.msra.mxu0 0.0
    %6957 = vmatprep.subr.mxu0 0.0
    %6958 = vmatpush1.xpose.msra.mxu0 0.0
    %6959 = vmatprep.subr.mxu0 0.0
    %6960 = vmatpush1.xpose.msra.mxu0 0.0
    %6961 = vmatprep.subr.mxu0 0.0
    %6962 = vmatpush1.xpose.msra.mxu0 0.0
    %6963 = vmatprep.subr.mxu0 0.0
    %6964 = vmatpush1.xpose.msra.mxu0 0.0
    %6965 = vmatprep.subr.mxu0 0.0
    %6966 = vmatpush1.xpose.msra.mxu0 0.0
    %6967 = vmatprep.subr.mxu0 0.0
    %6968 = vmatpush1.xpose.msra.mxu0 0.0
    %6969 = vmatprep.mubr.f32.mxu0 0.0
    %6970 = vmatmul.mubr.f32.gmra.mrb[0].mxu0 %v6901
    %v6971 = vpop.f32.mrb[0].mxu0
    %v6972 = vadd.f32 %v2135, %v6971
    %v6973 = vpop.f32.mrb[0].mxu0
    %6974 = vdwg.mxu0
    %6975 = vrot.lane.b32.xlu0 %v5983, 112
    %v6976 = vpop.permute.xlu0 %6975
    %6977 = vrot.lane.b32.xlu0 %v6069, 112
    %v6978 = vpop.permute.xlu0 %6977
    %v6979 = vsel %vm239, %v6976, 0
    %v6981 = vsel %vm239, %v6978, 0
    %6983 = vmatprep.subr.mxu0 0.0
    %6984 = vmatpush1.xpose.msra.mxu0 %v6981
    %6985 = vmatprep.subr.mxu0 0.0
    %6986 = vmatpush1.xpose.msra.mxu0 0.0
    %6987 = vmatprep.subr.mxu0 0.0
    %6988 = vmatpush1.xpose.msra.mxu0 0.0
    %6989 = vmatprep.subr.mxu0 0.0
    %6990 = vmatpush1.xpose.msra.mxu0 0.0
    %6991 = vmatprep.subr.mxu0 0.0
    %6992 = vmatpush1.xpose.msra.mxu0 0.0
    %6993 = vmatprep.subr.mxu0 0.0
    %6994 = vmatpush1.xpose.msra.mxu0 0.0
    %6995 = vmatprep.subr.mxu0 0.0
    %6996 = vmatpush1.xpose.msra.mxu0 0.0
    %6997 = vmatprep.subr.mxu0 0.0
    %6998 = vmatpush1.xpose.msra.mxu0 0.0
    %6999 = vmatprep.subr.mxu0 0.0
    %7000 = vmatpush1.xpose.msra.mxu0 0.0
    %7001 = vmatprep.subr.mxu0 0.0
    %7002 = vmatpush1.xpose.msra.mxu0 0.0
    %7003 = vmatprep.subr.mxu0 0.0
    %7004 = vmatpush1.xpose.msra.mxu0 0.0
    %7005 = vmatprep.subr.mxu0 0.0
    %7006 = vmatpush1.xpose.msra.mxu0 0.0
    %7007 = vmatprep.subr.mxu0 0.0
    %7008 = vmatpush1.xpose.msra.mxu0 0.0
    %7009 = vmatprep.subr.mxu0 0.0
    %7010 = vmatpush1.xpose.msra.mxu0 0.0
    %7011 = vmatprep.subr.mxu0 0.0
    %7012 = vmatpush1.xpose.msra.mxu0 0.0
    %7013 = vmatprep.subr.mxu0 0.0
    %7014 = vmatpush1.xpose.msra.mxu0 0.0
    %7015 = vmatprep.subr.mxu0 0.0
    %7016 = vmatpush1.xpose.msra.mxu0 0.0
    %7017 = vmatprep.subr.mxu0 0.0
    %7018 = vmatpush1.xpose.msra.mxu0 0.0
    %7019 = vmatprep.subr.mxu0 0.0
    %7020 = vmatpush1.xpose.msra.mxu0 0.0
    %7021 = vmatprep.subr.mxu0 0.0
    %7022 = vmatpush1.xpose.msra.mxu0 0.0
    %7023 = vmatprep.subr.mxu0 0.0
    %7024 = vmatpush1.xpose.msra.mxu0 0.0
    %7025 = vmatprep.subr.mxu0 0.0
    %7026 = vmatpush1.xpose.msra.mxu0 0.0
    %7027 = vmatprep.subr.mxu0 0.0
    %7028 = vmatpush1.xpose.msra.mxu0 0.0
    %7029 = vmatprep.subr.mxu0 0.0
    %7030 = vmatpush1.xpose.msra.mxu0 0.0
    %7031 = vmatprep.subr.mxu0 0.0
    %7032 = vmatpush1.xpose.msra.mxu0 0.0
    %7033 = vmatprep.subr.mxu0 0.0
    %7034 = vmatpush1.xpose.msra.mxu0 0.0
    %7035 = vmatprep.subr.mxu0 0.0
    %7036 = vmatpush1.xpose.msra.mxu0 0.0
    %7037 = vmatprep.subr.mxu0 0.0
    %7038 = vmatpush1.xpose.msra.mxu0 0.0
    %7039 = vmatprep.subr.mxu0 0.0
    %7040 = vmatpush1.xpose.msra.mxu0 0.0
    %7041 = vmatprep.subr.mxu0 0.0
    %7042 = vmatpush1.xpose.msra.mxu0 0.0
    %7043 = vmatprep.subr.mxu0 0.0
    %7044 = vmatpush1.xpose.msra.mxu0 0.0
    %7045 = vmatprep.subr.mxu0 0.0
    %7046 = vmatpush1.xpose.msra.mxu0 0.0
    %7047 = vmatprep.mubr.f32.mxu0 0.0
    %7048 = vmatmul.mubr.f32.gmra.mrb[0].mxu0 %v6979
    %v7049 = vpop.f32.mrb[0].mxu0
    %v7050 = vadd.f32 %v2139, %v7049
    %v7051 = vpop.f32.mrb[0].mxu0
    %7052 = vdwg.mxu0
    %v7053 = vsel %vm239, %v6972, -inf
    %7054 = vmax.xlane.f32.xlu0 %v7053
    %v7055 = vpop.xlane.xlu0 %7054
    %v7056 = vsel %vm239, %v7050, -inf
    %7057 = vmax.xlane.f32.xlu0 %v7056
    %v7058 = vpop.xlane.xlu0 %7057
    %v7059 = vsub.f32 %v6972, %v7055
    %v7060 = vsub.f32 %v7050, %v7058
    %v7061 = vmul.f32 %v7059, 1.442695
    %v7062 = vpow.pop %v7061
    %v7063 = vmul.f32 %v7060, 1.442695
    %v7064 = vpow.pop %v7063
    %v7065 = vsel %vm239, %v7062, 0.0
    %7066 = vadd.xlane.f32.xlu0 %v7065
    %v7067 = vpop.xlane.xlu0 %7066
    %v7068 = vsel %vm239, %v7064, 0.0
    %7069 = vadd.xlane.f32.xlu0 %v7068
    %v7070 = vpop.xlane.xlu0 %7069
    %v7071 = vrcp.pop %v7067
    %v7072 = vrcp.pop %v7070
    %v7073 = vmul.f32 %v7062, %v7071
    %v7074 = vmul.f32 %v7064, %v7072
    %7075 = vrot.lane.b32.xlu0 %v6064, 80
    %v7076 = vpop.permute.xlu0 %7075
    %v7079 = vsel %vm239, %v7073, 0
    %7081 = vmatprep.subr.mxu0 0.0
    %7082 = vmatpush1.msra.mxu0 %v7076
    %7083 = vmatprep.subr.mxu0 0.0
    %7084 = vmatpush1.msra.mxu0 0.0
    %7085 = vmatprep.subr.mxu0 0.0
    %7086 = vmatpush1.msra.mxu0 0.0
    %7087 = vmatprep.subr.mxu0 0.0
    %7088 = vmatpush1.msra.mxu0 0.0
    %7089 = vmatprep.subr.mxu0 0.0
    %7090 = vmatpush1.msra.mxu0 0.0
    %7091 = vmatprep.subr.mxu0 0.0
    %7092 = vmatpush1.msra.mxu0 0.0
    %7093 = vmatprep.subr.mxu0 0.0
    %7094 = vmatpush1.msra.mxu0 0.0
    %7095 = vmatprep.subr.mxu0 0.0
    %7096 = vmatpush1.msra.mxu0 0.0
    %7097 = vmatprep.subr.mxu0 0.0
    %7098 = vmatpush1.msra.mxu0 0.0
    %7099 = vmatprep.subr.mxu0 0.0
    %7100 = vmatpush1.msra.mxu0 0.0
    %7101 = vmatprep.subr.mxu0 0.0
    %7102 = vmatpush1.msra.mxu0 0.0
    %7103 = vmatprep.subr.mxu0 0.0
    %7104 = vmatpush1.msra.mxu0 0.0
    %7105 = vmatprep.subr.mxu0 0.0
    %7106 = vmatpush1.msra.mxu0 0.0
    %7107 = vmatprep.subr.mxu0 0.0
    %7108 = vmatpush1.msra.mxu0 0.0
    %7109 = vmatprep.subr.mxu0 0.0
    %7110 = vmatpush1.msra.mxu0 0.0
    %7111 = vmatprep.subr.mxu0 0.0
    %7112 = vmatpush1.msra.mxu0 0.0
    %7113 = vmatprep.subr.mxu0 0.0
    %7114 = vmatpush1.msra.mxu0 0.0
    %7115 = vmatprep.subr.mxu0 0.0
    %7116 = vmatpush1.msra.mxu0 0.0
    %7117 = vmatprep.subr.mxu0 0.0
    %7118 = vmatpush1.msra.mxu0 0.0
    %7119 = vmatprep.subr.mxu0 0.0
    %7120 = vmatpush1.msra.mxu0 0.0
    %7121 = vmatprep.subr.mxu0 0.0
    %7122 = vmatpush1.msra.mxu0 0.0
    %7123 = vmatprep.subr.mxu0 0.0
    %7124 = vmatpush1.msra.mxu0 0.0
    %7125 = vmatprep.subr.mxu0 0.0
    %7126 = vmatpush1.msra.mxu0 0.0
    %7127 = vmatprep.subr.mxu0 0.0
    %7128 = vmatpush1.msra.mxu0 0.0
    %7129 = vmatprep.subr.mxu0 0.0
    %7130 = vmatpush1.msra.mxu0 0.0
    %7131 = vmatprep.subr.mxu0 0.0
    %7132 = vmatpush1.msra.mxu0 0.0
    %7133 = vmatprep.subr.mxu0 0.0
    %7134 = vmatpush1.msra.mxu0 0.0
    %7135 = vmatprep.subr.mxu0 0.0
    %7136 = vmatpush1.msra.mxu0 0.0
    %7137 = vmatprep.subr.mxu0 0.0
    %7138 = vmatpush1.msra.mxu0 0.0
    %7139 = vmatprep.subr.mxu0 0.0
    %7140 = vmatpush1.msra.mxu0 0.0
    %7141 = vmatprep.subr.mxu0 0.0
    %7142 = vmatpush1.msra.mxu0 0.0
    %7143 = vmatprep.subr.mxu0 0.0
    %7144 = vmatpush1.msra.mxu0 0.0
    %7145 = vmatprep.mubr.f32.mxu0 0.0
    %7146 = vmatmul.mubr.f32.gmra.mrb[0].mxu0 %v7079
    %v7147 = vpop.f32.mrb[0].mxu0
    %v7148 = vadd.f32 0.0, %v7147
    %v7149 = vpop.f32.mrb[0].mxu0
    %7150 = vdwg.mxu0
    %7151 = vrot.lane.b32.xlu0 %v6069, 80
    %v7152 = vpop.permute.xlu0 %7151
    %v7155 = vsel %vm239, %v7074, 0
    %7157 = vmatprep.subr.mxu0 0.0
    %7158 = vmatpush1.msra.mxu0 %v7152
    %7159 = vmatprep.subr.mxu0 0.0
    %7160 = vmatpush1.msra.mxu0 0.0
    %7161 = vmatprep.subr.mxu0 0.0
    %7162 = vmatpush1.msra.mxu0 0.0
    %7163 = vmatprep.subr.mxu0 0.0
    %7164 = vmatpush1.msra.mxu0 0.0
    %7165 = vmatprep.subr.mxu0 0.0
    %7166 = vmatpush1.msra.mxu0 0.0
    %7167 = vmatprep.subr.mxu0 0.0
    %7168 = vmatpush1.msra.mxu0 0.0
    %7169 = vmatprep.subr.mxu0 0.0
    %7170 = vmatpush1.msra.mxu0 0.0
    %7171 = vmatprep.subr.mxu0 0.0
    %7172 = vmatpush1.msra.mxu0 0.0
    %7173 = vmatprep.subr.mxu0 0.0
    %7174 = vmatpush1.msra.mxu0 0.0
    %7175 = vmatprep.subr.mxu0 0.0
    %7176 = vmatpush1.msra.mxu0 0.0
    %7177 = vmatprep.subr.mxu0 0.0
    %7178 = vmatpush1.msra.mxu0 0.0
    %7179 = vmatprep.subr.mxu0 0.0
    %7180 = vmatpush1.msra.mxu0 0.0
    %7181 = vmatprep.subr.mxu0 0.0
    %7182 = vmatpush1.msra.mxu0 0.0
    %7183 = vmatprep.subr.mxu0 0.0
    %7184 = vmatpush1.msra.mxu0 0.0
    %7185 = vmatprep.subr.mxu0 0.0
    %7186 = vmatpush1.msra.mxu0 0.0
    %7187 = vmatprep.subr.mxu0 0.0
    %7188 = vmatpush1.msra.mxu0 0.0
    %7189 = vmatprep.subr.mxu0 0.0
    %7190 = vmatpush1.msra.mxu0 0.0
    %7191 = vmatprep.subr.mxu0 0.0
    %7192 = vmatpush1.msra.mxu0 0.0
    %7193 = vmatprep.subr.mxu0 0.0
    %7194 = vmatpush1.msra.mxu0 0.0
    %7195 = vmatprep.subr.mxu0 0.0
    %7196 = vmatpush1.msra.mxu0 0.0
    %7197 = vmatprep.subr.mxu0 0.0
    %7198 = vmatpush1.msra.mxu0 0.0
    %7199 = vmatprep.subr.mxu0 0.0
    %7200 = vmatpush1.msra.mxu0 0.0
    %7201 = vmatprep.subr.mxu0 0.0
    %7202 = vmatpush1.msra.mxu0 0.0
    %7203 = vmatprep.subr.mxu0 0.0
    %7204 = vmatpush1.msra.mxu0 0.0
    %7205 = vmatprep.subr.mxu0 0.0
    %7206 = vmatpush1.msra.mxu0 0.0
    %7207 = vmatprep.subr.mxu0 0.0
    %7208 = vmatpush1.msra.mxu0 0.0
    %7209 = vmatprep.subr.mxu0 0.0
    %7210 = vmatpush1.msra.mxu0 0.0
    %7211 = vmatprep.subr.mxu0 0.0
    %7212 = vmatpush1.msra.mxu0 0.0
    %7213 = vmatprep.subr.mxu0 0.0
    %7214 = vmatpush1.msra.mxu0 0.0
    %7215 = vmatprep.subr.mxu0 0.0
    %7216 = vmatpush1.msra.mxu0 0.0
    %7217 = vmatprep.subr.mxu0 0.0
    %7218 = vmatpush1.msra.mxu0 0.0
    %7219 = vmatprep.subr.mxu0 0.0
    %7220 = vmatpush1.msra.mxu0 0.0
    %7221 = vmatprep.mubr.f32.mxu0 0.0
    %7222 = vmatmul.mubr.f32.gmra.mrb[0].mxu0 %v7155
    %v7223 = vpop.f32.mrb[0].mxu0
    %v7224 = vadd.f32 0.0, %v7223
    %v7225 = vpop.f32.mrb[0].mxu0
    %7226 = vdwg.mxu0
    %v7228 = vsel %vm239, %v7148, 0
    %v7231 = vsel %vm239, %v7224, 0
    %7233 = vmatprep.subr.mxu0 0.0
    %7234 = vmatpush1.msra.mxu0 %v6075
    %7235 = vmatprep.subr.mxu0 0.0
    %7236 = vmatpush1.msra.mxu0 0.0
    %7237 = vmatprep.subr.mxu0 0.0
    %7238 = vmatpush1.msra.mxu0 0.0
    %7239 = vmatprep.subr.mxu0 0.0
    %7240 = vmatpush1.msra.mxu0 0.0
    %7241 = vmatprep.subr.mxu0 0.0
    %7242 = vmatpush1.msra.mxu0 0.0
    %7243 = vmatprep.subr.mxu0 0.0
    %7244 = vmatpush1.msra.mxu0 0.0
    %7245 = vmatprep.subr.mxu0 0.0
    %7246 = vmatpush1.msra.mxu0 0.0
    %7247 = vmatprep.subr.mxu0 0.0
    %7248 = vmatpush1.msra.mxu0 0.0
    %7249 = vmatprep.subr.mxu0 0.0
    %7250 = vmatpush1.msra.mxu0 0.0
    %7251 = vmatprep.subr.mxu0 0.0
    %7252 = vmatpush1.msra.mxu0 0.0
    %7253 = vmatprep.subr.mxu0 0.0
    %7254 = vmatpush1.msra.mxu0 0.0
    %7255 = vmatprep.subr.mxu0 0.0
    %7256 = vmatpush1.msra.mxu0 0.0
    %7257 = vmatprep.subr.mxu0 0.0
    %7258 = vmatpush1.msra.mxu0 0.0
    %7259 = vmatprep.subr.mxu0 0.0
    %7260 = vmatpush1.msra.mxu0 0.0
    %7261 = vmatprep.subr.mxu0 0.0
    %7262 = vmatpush1.msra.mxu0 0.0
    %7263 = vmatprep.subr.mxu0 0.0
    %7264 = vmatpush1.msra.mxu0 0.0
    %7265 = vmatprep.subr.mxu0 0.0
    %7266 = vmatpush1.msra.mxu0 0.0
    %7267 = vmatprep.subr.mxu0 0.0
    %7268 = vmatpush1.msra.mxu0 0.0
    %7269 = vmatprep.subr.mxu0 0.0
    %7270 = vmatpush1.msra.mxu0 0.0
    %7271 = vmatprep.subr.mxu0 0.0
    %7272 = vmatpush1.msra.mxu0 0.0
    %7273 = vmatprep.subr.mxu0 0.0
    %7274 = vmatpush1.msra.mxu0 0.0
    %7275 = vmatprep.subr.mxu0 0.0
    %7276 = vmatpush1.msra.mxu0 0.0
    %7277 = vmatprep.subr.mxu0 0.0
    %7278 = vmatpush1.msra.mxu0 0.0
    %7279 = vmatprep.subr.mxu0 0.0
    %7280 = vmatpush1.msra.mxu0 0.0
    %7281 = vmatprep.subr.mxu0 0.0
    %7282 = vmatpush1.msra.mxu0 0.0
    %7283 = vmatprep.subr.mxu0 0.0
    %7284 = vmatpush1.msra.mxu0 0.0
    %7285 = vmatprep.subr.mxu0 0.0
    %7286 = vmatpush1.msra.mxu0 0.0
    %7287 = vmatprep.subr.mxu0 0.0
    %7288 = vmatpush1.msra.mxu0 0.0
    %7289 = vmatprep.subr.mxu0 0.0
    %7290 = vmatpush1.msra.mxu0 0.0
    %7291 = vmatprep.subr.mxu0 0.0
    %7292 = vmatpush1.msra.mxu0 0.0
    %7293 = vmatprep.subr.mxu0 0.0
    %7294 = vmatpush1.msra.mxu0 0.0
    %7295 = vmatprep.subr.mxu0 0.0
    %7296 = vmatpush1.msra.mxu0 0.0
    %7297 = vmatprep.mubr.f32.mxu0 0.0
    %7298 = vmatmul.mubr.f32.gmra.mrb[0].mxu0 %v7228
    %v7299 = vpop.f32.mrb[0].mxu0
    %v7300 = vadd.f32 0.0, %v7299
    %v7301 = vpop.f32.mrb[0].mxu0
    %7302 = vmatprep.mubr.f32.mxu0 0.0
    %7303 = vmatmul.mubr.f32.gmra.mrb[0].mxu0 %v7231
    %v7304 = vpop.f32.mrb[0].mxu0
    %v7305 = vadd.f32 0.0, %v7304
    %v7306 = vpop.f32.mrb[0].mxu0
    %7307 = vdwg.mxu0
    %v7308 = vadd.f32 %v6889, %v7300
    %v7309 = vadd.f32 %v6894, %v7305
    %7310 = vrot.lane.b32.xlu0 %v5982, 104
    %v7311 = vpop.permute.xlu0 %7310
    %7312 = vrot.lane.b32.xlu0 %v6064, 104
    %v7313 = vpop.permute.xlu0 %7312
    %v7314 = vsel %vm239, %v7311, 0
    %v7316 = vsel %vm239, %v7313, 0
    %7318 = vmatprep.subr.mxu0 0.0
    %7319 = vmatpush1.xpose.msra.mxu0 %v7316
    %7320 = vmatprep.subr.mxu0 0.0
    %7321 = vmatpush1.xpose.msra.mxu0 0.0
    %7322 = vmatprep.subr.mxu0 0.0
    %7323 = vmatpush1.xpose.msra.mxu0 0.0
    %7324 = vmatprep.subr.mxu0 0.0
    %7325 = vmatpush1.xpose.msra.mxu0 0.0
    %7326 = vmatprep.subr.mxu0 0.0
    %7327 = vmatpush1.xpose.msra.mxu0 0.0
    %7328 = vmatprep.subr.mxu0 0.0
    %7329 = vmatpush1.xpose.msra.mxu0 0.0
    %7330 = vmatprep.subr.mxu0 0.0
    %7331 = vmatpush1.xpose.msra.mxu0 0.0
    %7332 = vmatprep.subr.mxu0 0.0
    %7333 = vmatpush1.xpose.msra.mxu0 0.0
    %7334 = vmatprep.subr.mxu0 0.0
    %7335 = vmatpush1.xpose.msra.mxu0 0.0
    %7336 = vmatprep.subr.mxu0 0.0
    %7337 = vmatpush1.xpose.msra.mxu0 0.0
    %7338 = vmatprep.subr.mxu0 0.0
    %7339 = vmatpush1.xpose.msra.mxu0 0.0
    %7340 = vmatprep.subr.mxu0 0.0
    %7341 = vmatpush1.xpose.msra.mxu0 0.0
    %7342 = vmatprep.subr.mxu0 0.0
    %7343 = vmatpush1.xpose.msra.mxu0 0.0
    %7344 = vmatprep.subr.mxu0 0.0
    %7345 = vmatpush1.xpose.msra.mxu0 0.0
    %7346 = vmatprep.subr.mxu0 0.0
    %7347 = vmatpush1.xpose.msra.mxu0 0.0
    %7348 = vmatprep.subr.mxu0 0.0
    %7349 = vmatpush1.xpose.msra.mxu0 0.0
    %7350 = vmatprep.subr.mxu0 0.0
    %7351 = vmatpush1.xpose.msra.mxu0 0.0
    %7352 = vmatprep.subr.mxu0 0.0
    %7353 = vmatpush1.xpose.msra.mxu0 0.0
    %7354 = vmatprep.subr.mxu0 0.0
    %7355 = vmatpush1.xpose.msra.mxu0 0.0
    %7356 = vmatprep.subr.mxu0 0.0
    %7357 = vmatpush1.xpose.msra.mxu0 0.0
    %7358 = vmatprep.subr.mxu0 0.0
    %7359 = vmatpush1.xpose.msra.mxu0 0.0
    %7360 = vmatprep.subr.mxu0 0.0
    %7361 = vmatpush1.xpose.msra.mxu0 0.0
    %7362 = vmatprep.subr.mxu0 0.0
    %7363 = vmatpush1.xpose.msra.mxu0 0.0
    %7364 = vmatprep.subr.mxu0 0.0
    %7365 = vmatpush1.xpose.msra.mxu0 0.0
    %7366 = vmatprep.subr.mxu0 0.0
    %7367 = vmatpush1.xpose.msra.mxu0 0.0
    %7368 = vmatprep.subr.mxu0 0.0
    %7369 = vmatpush1.xpose.msra.mxu0 0.0
    %7370 = vmatprep.subr.mxu0 0.0
    %7371 = vmatpush1.xpose.msra.mxu0 0.0
    %7372 = vmatprep.subr.mxu0 0.0
    %7373 = vmatpush1.xpose.msra.mxu0 0.0
    %7374 = vmatprep.subr.mxu0 0.0
    %7375 = vmatpush1.xpose.msra.mxu0 0.0
    %7376 = vmatprep.subr.mxu0 0.0
    %7377 = vmatpush1.xpose.msra.mxu0 0.0
    %7378 = vmatprep.subr.mxu0 0.0
    %7379 = vmatpush1.xpose.msra.mxu0 0.0
    %7380 = vmatprep.subr.mxu0 0.0
    %7381 = vmatpush1.xpose.msra.mxu0 0.0
    %7382 = vmatprep.mubr.f32.mxu0 0.0
    %7383 = vmatmul.mubr.f32.gmra.mrb[0].mxu0 %v7314
    %v7384 = vpop.f32.mrb[0].mxu0
    %v7385 = vadd.f32 %v2135, %v7384
    %v7386 = vpop.f32.mrb[0].mxu0
    %7387 = vdwg.mxu0
    %7388 = vrot.lane.b32.xlu0 %v5983, 104
    %v7389 = vpop.permute.xlu0 %7388
    %7390 = vrot.lane.b32.xlu0 %v6069, 104
    %v7391 = vpop.permute.xlu0 %7390
    %v7392 = vsel %vm239, %v7389, 0
    %v7394 = vsel %vm239, %v7391, 0
    %7396 = vmatprep.subr.mxu0 0.0
    %7397 = vmatpush1.xpose.msra.mxu0 %v7394
    %7398 = vmatprep.subr.mxu0 0.0
    %7399 = vmatpush1.xpose.msra.mxu0 0.0
    %7400 = vmatprep.subr.mxu0 0.0
    %7401 = vmatpush1.xpose.msra.mxu0 0.0
    %7402 = vmatprep.subr.mxu0 0.0
    %7403 = vmatpush1.xpose.msra.mxu0 0.0
    %7404 = vmatprep.subr.mxu0 0.0
    %7405 = vmatpush1.xpose.msra.mxu0 0.0
    %7406 = vmatprep.subr.mxu0 0.0
    %7407 = vmatpush1.xpose.msra.mxu0 0.0
    %7408 = vmatprep.subr.mxu0 0.0
    %7409 = vmatpush1.xpose.msra.mxu0 0.0
    %7410 = vmatprep.subr.mxu0 0.0
    %7411 = vmatpush1.xpose.msra.mxu0 0.0
    %7412 = vmatprep.subr.mxu0 0.0
    %7413 = vmatpush1.xpose.msra.mxu0 0.0
    %7414 = vmatprep.subr.mxu0 0.0
    %7415 = vmatpush1.xpose.msra.mxu0 0.0
    %7416 = vmatprep.subr.mxu0 0.0
    %7417 = vmatpush1.xpose.msra.mxu0 0.0
    %7418 = vmatprep.subr.mxu0 0.0
    %7419 = vmatpush1.xpose.msra.mxu0 0.0
    %7420 = vmatprep.subr.mxu0 0.0
    %7421 = vmatpush1.xpose.msra.mxu0 0.0
    %7422 = vmatprep.subr.mxu0 0.0
    %7423 = vmatpush1.xpose.msra.mxu0 0.0
    %7424 = vmatprep.subr.mxu0 0.0
    %7425 = vmatpush1.xpose.msra.mxu0 0.0
    %7426 = vmatprep.subr.mxu0 0.0
    %7427 = vmatpush1.xpose.msra.mxu0 0.0
    %7428 = vmatprep.subr.mxu0 0.0
    %7429 = vmatpush1.xpose.msra.mxu0 0.0
    %7430 = vmatprep.subr.mxu0 0.0
    %7431 = vmatpush1.xpose.msra.mxu0 0.0
    %7432 = vmatprep.subr.mxu0 0.0
    %7433 = vmatpush1.xpose.msra.mxu0 0.0
    %7434 = vmatprep.subr.mxu0 0.0
    %7435 = vmatpush1.xpose.msra.mxu0 0.0
    %7436 = vmatprep.subr.mxu0 0.0
    %7437 = vmatpush1.xpose.msra.mxu0 0.0
    %7438 = vmatprep.subr.mxu0 0.0
    %7439 = vmatpush1.xpose.msra.mxu0 0.0
    %7440 = vmatprep.subr.mxu0 0.0
    %7441 = vmatpush1.xpose.msra.mxu0 0.0
    %7442 = vmatprep.subr.mxu0 0.0
    %7443 = vmatpush1.xpose.msra.mxu0 0.0
    %7444 = vmatprep.subr.mxu0 0.0
    %7445 = vmatpush1.xpose.msra.mxu0 0.0
    %7446 = vmatprep.subr.mxu0 0.0
    %7447 = vmatpush1.xpose.msra.mxu0 0.0
    %7448 = vmatprep.subr.mxu0 0.0
    %7449 = vmatpush1.xpose.msra.mxu0 0.0
    %7450 = vmatprep.subr.mxu0 0.0
    %7451 = vmatpush1.xpose.msra.mxu0 0.0
    %7452 = vmatprep.subr.mxu0 0.0
    %7453 = vmatpush1.xpose.msra.mxu0 0.0
    %7454 = vmatprep.subr.mxu0 0.0
    %7455 = vmatpush1.xpose.msra.mxu0 0.0
    %7456 = vmatprep.subr.mxu0 0.0
    %7457 = vmatpush1.xpose.msra.mxu0 0.0
    %7458 = vmatprep.subr.mxu0 0.0
    %7459 = vmatpush1.xpose.msra.mxu0 0.0
    %7460 = vmatprep.mubr.f32.mxu0 0.0
    %7461 = vmatmul.mubr.f32.gmra.mrb[0].mxu0 %v7392
    %v7462 = vpop.f32.mrb[0].mxu0
    %v7463 = vadd.f32 %v2139, %v7462
    %v7464 = vpop.f32.mrb[0].mxu0
    %7465 = vdwg.mxu0
    %v7466 = vsel %vm239, %v7385, -inf
    %7467 = vmax.xlane.f32.xlu0 %v7466
    %v7468 = vpop.xlane.xlu0 %7467
    %v7469 = vsel %vm239, %v7463, -inf
    %7470 = vmax.xlane.f32.xlu0 %v7469
    %v7471 = vpop.xlane.xlu0 %7470
    %v7472 = vsub.f32 %v7385, %v7468
    %v7473 = vsub.f32 %v7463, %v7471
    %v7474 = vmul.f32 %v7472, 1.442695
    %v7475 = vpow.pop %v7474
    %v7476 = vmul.f32 %v7473, 1.442695
    %v7477 = vpow.pop %v7476
    %v7478 = vsel %vm239, %v7475, 0.0
    %7479 = vadd.xlane.f32.xlu0 %v7478
    %v7480 = vpop.xlane.xlu0 %7479
    %v7481 = vsel %vm239, %v7477, 0.0
    %7482 = vadd.xlane.f32.xlu0 %v7481
    %v7483 = vpop.xlane.xlu0 %7482
    %v7484 = vrcp.pop %v7480
    %v7485 = vrcp.pop %v7483
    %v7486 = vmul.f32 %v7475, %v7484
    %v7487 = vmul.f32 %v7477, %v7485
    %7488 = vrot.lane.b32.xlu0 %v6064, 72
    %v7489 = vpop.permute.xlu0 %7488
    %v7492 = vsel %vm239, %v7486, 0
    %7494 = vmatprep.subr.mxu0 0.0
    %7495 = vmatpush1.msra.mxu0 %v7489
    %7496 = vmatprep.subr.mxu0 0.0
    %7497 = vmatpush1.msra.mxu0 0.0
    %7498 = vmatprep.subr.mxu0 0.0
    %7499 = vmatpush1.msra.mxu0 0.0
    %7500 = vmatprep.subr.mxu0 0.0
    %7501 = vmatpush1.msra.mxu0 0.0
    %7502 = vmatprep.subr.mxu0 0.0
    %7503 = vmatpush1.msra.mxu0 0.0
    %7504 = vmatprep.subr.mxu0 0.0
    %7505 = vmatpush1.msra.mxu0 0.0
    %7506 = vmatprep.subr.mxu0 0.0
    %7507 = vmatpush1.msra.mxu0 0.0
    %7508 = vmatprep.subr.mxu0 0.0
    %7509 = vmatpush1.msra.mxu0 0.0
    %7510 = vmatprep.subr.mxu0 0.0
    %7511 = vmatpush1.msra.mxu0 0.0
    %7512 = vmatprep.subr.mxu0 0.0
    %7513 = vmatpush1.msra.mxu0 0.0
    %7514 = vmatprep.subr.mxu0 0.0
    %7515 = vmatpush1.msra.mxu0 0.0
    %7516 = vmatprep.subr.mxu0 0.0
    %7517 = vmatpush1.msra.mxu0 0.0
    %7518 = vmatprep.subr.mxu0 0.0
    %7519 = vmatpush1.msra.mxu0 0.0
    %7520 = vmatprep.subr.mxu0 0.0
    %7521 = vmatpush1.msra.mxu0 0.0
    %7522 = vmatprep.subr.mxu0 0.0
    %7523 = vmatpush1.msra.mxu0 0.0
    %7524 = vmatprep.subr.mxu0 0.0
    %7525 = vmatpush1.msra.mxu0 0.0
    %7526 = vmatprep.subr.mxu0 0.0
    %7527 = vmatpush1.msra.mxu0 0.0
    %7528 = vmatprep.subr.mxu0 0.0
    %7529 = vmatpush1.msra.mxu0 0.0
    %7530 = vmatprep.subr.mxu0 0.0
    %7531 = vmatpush1.msra.mxu0 0.0
    %7532 = vmatprep.subr.mxu0 0.0
    %7533 = vmatpush1.msra.mxu0 0.0
    %7534 = vmatprep.subr.mxu0 0.0
    %7535 = vmatpush1.msra.mxu0 0.0
    %7536 = vmatprep.subr.mxu0 0.0
    %7537 = vmatpush1.msra.mxu0 0.0
    %7538 = vmatprep.subr.mxu0 0.0
    %7539 = vmatpush1.msra.mxu0 0.0
    %7540 = vmatprep.subr.mxu0 0.0
    %7541 = vmatpush1.msra.mxu0 0.0
    %7542 = vmatprep.subr.mxu0 0.0
    %7543 = vmatpush1.msra.mxu0 0.0
    %7544 = vmatprep.subr.mxu0 0.0
    %7545 = vmatpush1.msra.mxu0 0.0
    %7546 = vmatprep.subr.mxu0 0.0
    %7547 = vmatpush1.msra.mxu0 0.0
    %7548 = vmatprep.subr.mxu0 0.0
    %7549 = vmatpush1.msra.mxu0 0.0
    %7550 = vmatprep.subr.mxu0 0.0
    %7551 = vmatpush1.msra.mxu0 0.0
    %7552 = vmatprep.subr.mxu0 0.0
    %7553 = vmatpush1.msra.mxu0 0.0
    %7554 = vmatprep.subr.mxu0 0.0
    %7555 = vmatpush1.msra.mxu0 0.0
    %7556 = vmatprep.subr.mxu0 0.0
    %7557 = vmatpush1.msra.mxu0 0.0
    %7558 = vmatprep.mubr.f32.mxu0 0.0
    %7559 = vmatmul.mubr.f32.gmra.mrb[0].mxu0 %v7492
    %v7560 = vpop.f32.mrb[0].mxu0
    %v7561 = vadd.f32 0.0, %v7560
    %v7562 = vpop.f32.mrb[0].mxu0
    %7563 = vdwg.mxu0
    %7564 = vrot.lane.b32.xlu0 %v6069, 72
    %v7565 = vpop.permute.xlu0 %7564
    %v7568 = vsel %vm239, %v7487, 0
    %7570 = vmatprep.subr.mxu0 0.0
    %7571 = vmatpush1.msra.mxu0 %v7565
    %7572 = vmatprep.subr.mxu0 0.0
    %7573 = vmatpush1.msra.mxu0 0.0
    %7574 = vmatprep.subr.mxu0 0.0
    %7575 = vmatpush1.msra.mxu0 0.0
    %7576 = vmatprep.subr.mxu0 0.0
    %7577 = vmatpush1.msra.mxu0 0.0
    %7578 = vmatprep.subr.mxu0 0.0
    %7579 = vmatpush1.msra.mxu0 0.0
    %7580 = vmatprep.subr.mxu0 0.0
    %7581 = vmatpush1.msra.mxu0 0.0
    %7582 = vmatprep.subr.mxu0 0.0
    %7583 = vmatpush1.msra.mxu0 0.0
    %7584 = vmatprep.subr.mxu0 0.0
    %7585 = vmatpush1.msra.mxu0 0.0
    %7586 = vmatprep.subr.mxu0 0.0
    %7587 = vmatpush1.msra.mxu0 0.0
    %7588 = vmatprep.subr.mxu0 0.0
    %7589 = vmatpush1.msra.mxu0 0.0
    %7590 = vmatprep.subr.mxu0 0.0
    %7591 = vmatpush1.msra.mxu0 0.0
    %7592 = vmatprep.subr.mxu0 0.0
    %7593 = vmatpush1.msra.mxu0 0.0
    %7594 = vmatprep.subr.mxu0 0.0
    %7595 = vmatpush1.msra.mxu0 0.0
    %7596 = vmatprep.subr.mxu0 0.0
    %7597 = vmatpush1.msra.mxu0 0.0
    %7598 = vmatprep.subr.mxu0 0.0
    %7599 = vmatpush1.msra.mxu0 0.0
    %7600 = vmatprep.subr.mxu0 0.0
    %7601 = vmatpush1.msra.mxu0 0.0
    %7602 = vmatprep.subr.mxu0 0.0
    %7603 = vmatpush1.msra.mxu0 0.0
    %7604 = vmatprep.subr.mxu0 0.0
    %7605 = vmatpush1.msra.mxu0 0.0
    %7606 = vmatprep.subr.mxu0 0.0
    %7607 = vmatpush1.msra.mxu0 0.0
    %7608 = vmatprep.subr.mxu0 0.0
    %7609 = vmatpush1.msra.mxu0 0.0
    %7610 = vmatprep.subr.mxu0 0.0
    %7611 = vmatpush1.msra.mxu0 0.0
    %7612 = vmatprep.subr.mxu0 0.0
    %7613 = vmatpush1.msra.mxu0 0.0
    %7614 = vmatprep.subr.mxu0 0.0
    %7615 = vmatpush1.msra.mxu0 0.0
    %7616 = vmatprep.subr.mxu0 0.0
    %7617 = vmatpush1.msra.mxu0 0.0
    %7618 = vmatprep.subr.mxu0 0.0
    %7619 = vmatpush1.msra.mxu0 0.0
    %7620 = vmatprep.subr.mxu0 0.0
    %7621 = vmatpush1.msra.mxu0 0.0
    %7622 = vmatprep.subr.mxu0 0.0
    %7623 = vmatpush1.msra.mxu0 0.0
    %7624 = vmatprep.subr.mxu0 0.0
    %7625 = vmatpush1.msra.mxu0 0.0
    %7626 = vmatprep.subr.mxu0 0.0
    %7627 = vmatpush1.msra.mxu0 0.0
    %7628 = vmatprep.subr.mxu0 0.0
    %7629 = vmatpush1.msra.mxu0 0.0
    %7630 = vmatprep.subr.mxu0 0.0
    %7631 = vmatpush1.msra.mxu0 0.0
    %7632 = vmatprep.subr.mxu0 0.0
    %7633 = vmatpush1.msra.mxu0 0.0
    %7634 = vmatprep.mubr.f32.mxu0 0.0
    %7635 = vmatmul.mubr.f32.gmra.mrb[0].mxu0 %v7568
    %v7636 = vpop.f32.mrb[0].mxu0
    %v7637 = vadd.f32 0.0, %v7636
    %v7638 = vpop.f32.mrb[0].mxu0
    %7639 = vdwg.mxu0
    %v7641 = vsel %vm239, %v7561, 0
    %v7644 = vsel %vm239, %v7637, 0
    %7646 = vmatprep.subr.mxu0 0.0
    %7647 = vmatpush1.msra.mxu0 %v6076
    %7648 = vmatprep.subr.mxu0 0.0
    %7649 = vmatpush1.msra.mxu0 0.0
    %7650 = vmatprep.subr.mxu0 0.0
    %7651 = vmatpush1.msra.mxu0 0.0
    %7652 = vmatprep.subr.mxu0 0.0
    %7653 = vmatpush1.msra.mxu0 0.0
    %7654 = vmatprep.subr.mxu0 0.0
    %7655 = vmatpush1.msra.mxu0 0.0
    %7656 = vmatprep.subr.mxu0 0.0
    %7657 = vmatpush1.msra.mxu0 0.0
    %7658 = vmatprep.subr.mxu0 0.0
    %7659 = vmatpush1.msra.mxu0 0.0
    %7660 = vmatprep.subr.mxu0 0.0
    %7661 = vmatpush1.msra.mxu0 0.0
    %7662 = vmatprep.subr.mxu0 0.0
    %7663 = vmatpush1.msra.mxu0 0.0
    %7664 = vmatprep.subr.mxu0 0.0
    %7665 = vmatpush1.msra.mxu0 0.0
    %7666 = vmatprep.subr.mxu0 0.0
    %7667 = vmatpush1.msra.mxu0 0.0
    %7668 = vmatprep.subr.mxu0 0.0
    %7669 = vmatpush1.msra.mxu0 0.0
    %7670 = vmatprep.subr.mxu0 0.0
    %7671 = vmatpush1.msra.mxu0 0.0
    %7672 = vmatprep.subr.mxu0 0.0
    %7673 = vmatpush1.msra.mxu0 0.0
    %7674 = vmatprep.subr.mxu0 0.0
    %7675 = vmatpush1.msra.mxu0 0.0
    %7676 = vmatprep.subr.mxu0 0.0
    %7677 = vmatpush1.msra.mxu0 0.0
    %7678 = vmatprep.subr.mxu0 0.0
    %7679 = vmatpush1.msra.mxu0 0.0
    %7680 = vmatprep.subr.mxu0 0.0
    %7681 = vmatpush1.msra.mxu0 0.0
    %7682 = vmatprep.subr.mxu0 0.0
    %7683 = vmatpush1.msra.mxu0 0.0
    %7684 = vmatprep.subr.mxu0 0.0
    %7685 = vmatpush1.msra.mxu0 0.0
    %7686 = vmatprep.subr.mxu0 0.0
    %7687 = vmatpush1.msra.mxu0 0.0
    %7688 = vmatprep.subr.mxu0 0.0
    %7689 = vmatpush1.msra.mxu0 0.0
    %7690 = vmatprep.subr.mxu0 0.0
    %7691 = vmatpush1.msra.mxu0 0.0
    %7692 = vmatprep.subr.mxu0 0.0
    %7693 = vmatpush1.msra.mxu0 0.0
    %7694 = vmatprep.subr.mxu0 0.0
    %7695 = vmatpush1.msra.mxu0 0.0
    %7696 = vmatprep.subr.mxu0 0.0
    %7697 = vmatpush1.msra.mxu0 0.0
    %7698 = vmatprep.subr.mxu0 0.0
    %7699 = vmatpush1.msra.mxu0 0.0
    %7700 = vmatprep.subr.mxu0 0.0
    %7701 = vmatpush1.msra.mxu0 0.0
    %7702 = vmatprep.subr.mxu0 0.0
    %7703 = vmatpush1.msra.mxu0 0.0
    %7704 = vmatprep.subr.mxu0 0.0
    %7705 = vmatpush1.msra.mxu0 0.0
    %7706 = vmatprep.subr.mxu0 0.0
    %7707 = vmatpush1.msra.mxu0 0.0
    %7708 = vmatprep.subr.mxu0 0.0
    %7709 = vmatpush1.msra.mxu0 0.0
    %7710 = vmatprep.mubr.f32.mxu0 0.0
    %7711 = vmatmul.mubr.f32.gmra.mrb[0].mxu0 %v7641
    %v7712 = vpop.f32.mrb[0].mxu0
    %v7713 = vadd.f32 0.0, %v7712
    %v7714 = vpop.f32.mrb[0].mxu0
    %7715 = vmatprep.mubr.f32.mxu0 0.0
    %7716 = vmatmul.mubr.f32.gmra.mrb[0].mxu0 %v7644
    %v7717 = vpop.f32.mrb[0].mxu0
    %v7718 = vadd.f32 0.0, %v7717
    %v7719 = vpop.f32.mrb[0].mxu0
    %7720 = vdwg.mxu0
    %v7721 = vadd.f32 %v7308, %v7713
    %v7722 = vadd.f32 %v7309, %v7718
    %v7724 = vlaneseq
    %v7725 = vshrl.u32 %v7724, 7
    %v7726 = vsub.s32 0, %v7725
    %v7727 = vrot.slane %v6078, %v7726
    %v7729 = vadd.f32 %v7721, %v7727
    %v7730 = vadd.f32 %v7722, %v7727
    %v7731 = vadd.f32 %v5840, %v7729
    %v7732 = vadd.f32 %v5841, %v7730
    %s7733 = scalar_lea.vmem %s17, 1
    %v7734 = vld [vmem:[%s7733] sm:$0x1]
    %s7735 = scalar_lea.vmem %s18, 1
    %v7736 = vld [vmem:[%s7735] sm:$0x1]
    %v7737 = vsel %vm93, %v7731, 0.0
    %7738 = vadd.xlane.f32.xlu0 %v7737
    %v7739 = vpop.xlane.xlu0 %7738
    %v7740 = vsel %vm93, %v7732, 0.0
    %7741 = vadd.xlane.f32.xlu0 %v7740
    %v7742 = vpop.xlane.xlu0 %7741
    %v7743 = vmul.f32 %v7739, %v100
    %v7744 = vmul.f32 %v7742, %v100
    %v7745 = vsub.f32 %v7731, %v7743
    %v7746 = vsub.f32 %v7732, %v7744
    %v7747 = vmul.f32 %v7745, %v7745
    %v7748 = vmul.f32 %v7746, %v7746
    %v7749 = vsel %vm93, %v7747, 0.0
    %7750 = vadd.xlane.f32.xlu0 %v7749
    %v7751 = vpop.xlane.xlu0 %7750
    %v7752 = vsel %vm93, %v7748, 0.0
    %7753 = vadd.xlane.f32.xlu0 %v7752
    %v7754 = vpop.xlane.xlu0 %7753
    %v7755 = vmul.f32 %v7751, %v100
    %v7756 = vmul.f32 %v7754, %v100
    %v7757 = vadd.f32 %v7755, 1e-05
    %v7758 = vadd.f32 %v7756, 1e-05
    %v7759 = vrsqrt.pop %v7757
    %v7760 = vrsqrt.pop %v7758
    %v7761 = vmul.f32 %v7745, %v7759
    %v7762 = vmul.f32 %v7746, %v7760
    %v7764 = vlaneseq
    %v7765 = vshrl.u32 %v7764, 7
    %v7766 = vsub.s32 0, %v7765
    %v7767 = vrot.slane %v7734, %v7766
    %v7769 = vmul.f32 %v7761, %v7767
    %v7770 = vmul.f32 %v7762, %v7767
    %v7772 = vlaneseq
    %v7773 = vshrl.u32 %v7772, 7
    %v7774 = vsub.s32 0, %v7773
    %v7775 = vrot.slane %v7736, %v7774
    %v7777 = vadd.f32 %v7769, %v7775
    %v7778 = vadd.f32 %v7770, %v7775
    %s7779 = scalar_lea.vmem %s19, 32
    %v7780 = vld [vmem:[%s7779] sm:$0xff]
    %v7781 = vld [vmem:[%s7779 + $0x8] sm:$0xff]
    %v7782 = vld [vmem:[%s7779 + $0x10] sm:$0xff]
    %v7783 = vld [vmem:[%s7779 + $0x18] sm:$0xff]
    %s7784 = scalar_lea.vmem %s20, 1
    %v7785 = vld [vmem:[%s7784] sm:$0x1]
    %v7787 = vlaneseq
    %v7788 = vshrl.u32 %v7787, 7
    %v7789 = vsub.s32 0, %v7788
    %v7790 = vrot.slane %v7785, %v7789
    %v7793 = vsel %vm93, %v7777, 0
    %v7796 = vsel %vm93, %v7778, 0
    %7798 = vmatprep.subr.mxu0 0.0
    %7799 = vmatpush1.msra.mxu0 %v7780
    %7800 = vmatprep.subr.mxu0 0.0
    %7801 = vmatpush1.msra.mxu0 %v7781
    %7802 = vmatprep.subr.mxu0 0.0
    %7803 = vmatpush1.msra.mxu0 %v7782
    %7804 = vmatprep.subr.mxu0 0.0
    %7805 = vmatpush1.msra.mxu0 %v7783
    %7806 = vmatprep.subr.mxu0 0.0
    %7807 = vmatpush1.msra.mxu0 0.0
    %7808 = vmatprep.subr.mxu0 0.0
    %7809 = vmatpush1.msra.mxu0 0.0
    %7810 = vmatprep.subr.mxu0 0.0
    %7811 = vmatpush1.msra.mxu0 0.0
    %7812 = vmatprep.subr.mxu0 0.0
    %7813 = vmatpush1.msra.mxu0 0.0
    %7814 = vmatprep.subr.mxu0 0.0
    %7815 = vmatpush1.msra.mxu0 0.0
    %7816 = vmatprep.subr.mxu0 0.0
    %7817 = vmatpush1.msra.mxu0 0.0
    %7818 = vmatprep.subr.mxu0 0.0
    %7819 = vmatpush1.msra.mxu0 0.0
    %7820 = vmatprep.subr.mxu0 0.0
    %7821 = vmatpush1.msra.mxu0 0.0
    %7822 = vmatprep.subr.mxu0 0.0
    %7823 = vmatpush1.msra.mxu0 0.0
    %7824 = vmatprep.subr.mxu0 0.0
    %7825 = vmatpush1.msra.mxu0 0.0
    %7826 = vmatprep.subr.mxu0 0.0
    %7827 = vmatpush1.msra.mxu0 0.0
    %7828 = vmatprep.subr.mxu0 0.0
    %7829 = vmatpush1.msra.mxu0 0.0
    %7830 = vmatprep.subr.mxu0 0.0
    %7831 = vmatpush1.msra.mxu0 0.0
    %7832 = vmatprep.subr.mxu0 0.0
    %7833 = vmatpush1.msra.mxu0 0.0
    %7834 = vmatprep.subr.mxu0 0.0
    %7835 = vmatpush1.msra.mxu0 0.0
    %7836 = vmatprep.subr.mxu0 0.0
    %7837 = vmatpush1.msra.mxu0 0.0
    %7838 = vmatprep.subr.mxu0 0.0
    %7839 = vmatpush1.msra.mxu0 0.0
    %7840 = vmatprep.subr.mxu0 0.0
    %7841 = vmatpush1.msra.mxu0 0.0
    %7842 = vmatprep.subr.mxu0 0.0
    %7843 = vmatpush1.msra.mxu0 0.0
    %7844 = vmatprep.subr.mxu0 0.0
    %7845 = vmatpush1.msra.mxu0 0.0
    %7846 = vmatprep.subr.mxu0 0.0
    %7847 = vmatpush1.msra.mxu0 0.0
    %7848 = vmatprep.subr.mxu0 0.0
    %7849 = vmatpush1.msra.mxu0 0.0
    %7850 = vmatprep.subr.mxu0 0.0
    %7851 = vmatpush1.msra.mxu0 0.0
    %7852 = vmatprep.subr.mxu0 0.0
    %7853 = vmatpush1.msra.mxu0 0.0
    %7854 = vmatprep.subr.mxu0 0.0
    %7855 = vmatpush1.msra.mxu0 0.0
    %7856 = vmatprep.subr.mxu0 0.0
    %7857 = vmatpush1.msra.mxu0 0.0
    %7858 = vmatprep.subr.mxu0 0.0
    %7859 = vmatpush1.msra.mxu0 0.0
    %7860 = vmatprep.subr.mxu0 0.0
    %7861 = vmatpush1.msra.mxu0 0.0
    %7862 = vmatprep.mubr.f32.mxu0 0.0
    %7863 = vmatmul.mubr.f32.gmra.mrb[0].mxu0 %v7793
    %v7864 = vpop.f32.mrb[0].mxu0
    %v7865 = vadd.f32 %v7790, %v7864
    %v7866 = vpop.f32.mrb[0].mxu0
    %7867 = vmatprep.mubr.f32.mxu0 0.0
    %7868 = vmatmul.mubr.f32.gmra.mrb[0].mxu0 %v7796
    %v7869 = vpop.f32.mrb[0].mxu0
    %v7870 = vadd.f32 %v7790, %v7869
    %v7871 = vpop.f32.mrb[0].mxu0
    %7872 = vdwg.mxu0
    %v7873 = vmax.f32 %v7865, 0.0
    %v7874 = vmax.f32 %v7870, 0.0
    %s7875 = scalar_lea.vmem %s21, 64
    %v7876 = vld [vmem:[%s7875] sm:$0xff]
    %v7877 = vld [vmem:[%s7875 + $0x8] sm:$0xff]
    %v7878 = vld [vmem:[%s7875 + $0x10] sm:$0xff]
    %v7879 = vld [vmem:[%s7875 + $0x18] sm:$0xff]
    %v7880 = vld [vmem:[%s7875 + $0x20] sm:$0xff]
    %v7881 = vld [vmem:[%s7875 + $0x28] sm:$0xff]
    %v7882 = vld [vmem:[%s7875 + $0x30] sm:$0xff]
    %v7883 = vld [vmem:[%s7875 + $0x38] sm:$0xff]
    %v7885 = vsel %vm3942, %v7873, 0
    %v7888 = vsel %vm3942, %v7874, 0
    %7890 = vmatprep.subr.mxu0 0.0
    %7891 = vmatpush1.msra.mxu0 %v7876
    %7892 = vmatprep.subr.mxu0 0.0
    %7893 = vmatpush1.msra.mxu0 %v7877
    %7894 = vmatprep.subr.mxu0 0.0
    %7895 = vmatpush1.msra.mxu0 %v7878
    %7896 = vmatprep.subr.mxu0 0.0
    %7897 = vmatpush1.msra.mxu0 %v7879
    %7898 = vmatprep.subr.mxu0 0.0
    %7899 = vmatpush1.msra.mxu0 %v7880
    %7900 = vmatprep.subr.mxu0 0.0
    %7901 = vmatpush1.msra.mxu0 %v7881
    %7902 = vmatprep.subr.mxu0 0.0
    %7903 = vmatpush1.msra.mxu0 %v7882
    %7904 = vmatprep.subr.mxu0 0.0
    %7905 = vmatpush1.msra.mxu0 %v7883
    %7906 = vmatprep.subr.mxu0 0.0
    %7907 = vmatpush1.msra.mxu0 0.0
    %7908 = vmatprep.subr.mxu0 0.0
    %7909 = vmatpush1.msra.mxu0 0.0
    %7910 = vmatprep.subr.mxu0 0.0
    %7911 = vmatpush1.msra.mxu0 0.0
    %7912 = vmatprep.subr.mxu0 0.0
    %7913 = vmatpush1.msra.mxu0 0.0
    %7914 = vmatprep.subr.mxu0 0.0
    %7915 = vmatpush1.msra.mxu0 0.0
    %7916 = vmatprep.subr.mxu0 0.0
    %7917 = vmatpush1.msra.mxu0 0.0
    %7918 = vmatprep.subr.mxu0 0.0
    %7919 = vmatpush1.msra.mxu0 0.0
    %7920 = vmatprep.subr.mxu0 0.0
    %7921 = vmatpush1.msra.mxu0 0.0
    %7922 = vmatprep.subr.mxu0 0.0
    %7923 = vmatpush1.msra.mxu0 0.0
    %7924 = vmatprep.subr.mxu0 0.0
    %7925 = vmatpush1.msra.mxu0 0.0
    %7926 = vmatprep.subr.mxu0 0.0
    %7927 = vmatpush1.msra.mxu0 0.0
    %7928 = vmatprep.subr.mxu0 0.0
    %7929 = vmatpush1.msra.mxu0 0.0
    %7930 = vmatprep.subr.mxu0 0.0
    %7931 = vmatpush1.msra.mxu0 0.0
    %7932 = vmatprep.subr.mxu0 0.0
    %7933 = vmatpush1.msra.mxu0 0.0
    %7934 = vmatprep.subr.mxu0 0.0
    %7935 = vmatpush1.msra.mxu0 0.0
    %7936 = vmatprep.subr.mxu0 0.0
    %7937 = vmatpush1.msra.mxu0 0.0
    %7938 = vmatprep.subr.mxu0 0.0
    %7939 = vmatpush1.msra.mxu0 0.0
    %7940 = vmatprep.subr.mxu0 0.0
    %7941 = vmatpush1.msra.mxu0 0.0
    %7942 = vmatprep.subr.mxu0 0.0
    %7943 = vmatpush1.msra.mxu0 0.0
    %7944 = vmatprep.subr.mxu0 0.0
    %7945 = vmatpush1.msra.mxu0 0.0
    %7946 = vmatprep.subr.mxu0 0.0
    %7947 = vmatpush1.msra.mxu0 0.0
    %7948 = vmatprep.subr.mxu0 0.0
    %7949 = vmatpush1.msra.mxu0 0.0
    %7950 = vmatprep.subr.mxu0 0.0
    %7951 = vmatpush1.msra.mxu0 0.0
    %7952 = vmatprep.subr.mxu0 0.0
    %7953 = vmatpush1.msra.mxu0 0.0
    %7954 = vmatprep.mubr.f32.mxu0 0.0
    %7955 = vmatmul.mubr.f32.gmra.mrb[0].mxu0 %v7885
    %v7956 = vpop.f32.mrb[0].mxu0
    %v7957 = vadd.f32 0.0, %v7956
    %v7958 = vpop.f32.mrb[0].mxu0
    %7959 = vmatprep.mubr.f32.mxu0 0.0
    %7960 = vmatmul.mubr.f32.gmra.mrb[0].mxu0 %v7888
    %v7961 = vpop.f32.mrb[0].mxu0
    %v7962 = vadd.f32 0.0, %v7961
    %v7963 = vpop.f32.mrb[0].mxu0
    %7964 = vdwg.mxu0
    %v7965 = vadd.f32 %v7731, %v7957
    %v7966 = vadd.f32 %v7732, %v7962
    %s7967 = scalar_lea.vmem %s22, 1
    %v7968 = vld [vmem:[%s7967] sm:$0x1]
    %v7970 = vlaneseq
    %v7971 = vshrl.u32 %v7970, 7
    %v7972 = vsub.s32 0, %v7971
    %v7973 = vrot.slane %v7968, %v7972
    %v7975 = vadd.f32 %v7965, %v7973
    %v7976 = vadd.f32 %v7966, %v7973
    %v7977 = vld [vmem:[%s23] sm:$0x1]
    %v7978 = vld [vmem:[%s24] sm:$0x1]
    %v7979 = vsel %vm93, %v7975, 0.0
    %7980 = vadd.xlane.f32.xlu0 %v7979
    %v7981 = vpop.xlane.xlu0 %7980
    %v7982 = vsel %vm93, %v7976, 0.0
    %7983 = vadd.xlane.f32.xlu0 %v7982
    %v7984 = vpop.xlane.xlu0 %7983
    %v7985 = vmul.f32 %v7981, %v100
    %v7986 = vmul.f32 %v7984, %v100
    %v7987 = vsub.f32 %v7975, %v7985
    %v7988 = vsub.f32 %v7976, %v7986
    %v7989 = vmul.f32 %v7987, %v7987
    %v7990 = vmul.f32 %v7988, %v7988
    %v7991 = vsel %vm93, %v7989, 0.0
    %7992 = vadd.xlane.f32.xlu0 %v7991
    %v7993 = vpop.xlane.xlu0 %7992
    %v7994 = vsel %vm93, %v7990, 0.0
    %7995 = vadd.xlane.f32.xlu0 %v7994
    %v7996 = vpop.xlane.xlu0 %7995
    %v7997 = vmul.f32 %v7993, %v100
    %v7998 = vmul.f32 %v7996, %v100
    %v7999 = vadd.f32 %v7997, 1e-05
    %v8000 = vadd.f32 %v7998, 1e-05
    %v8001 = vrsqrt.pop %v7999
    %v8002 = vrsqrt.pop %v8000
    %v8003 = vmul.f32 %v7987, %v8001
    %v8004 = vmul.f32 %v7988, %v8002
    %v8006 = vlaneseq
    %v8007 = vshrl.u32 %v8006, 7
    %v8008 = vsub.s32 0, %v8007
    %v8009 = vrot.slane %v7977, %v8008
    %v8011 = vmul.f32 %v8003, %v8009
    %v8012 = vmul.f32 %v8004, %v8009
    %v8014 = vlaneseq
    %v8015 = vshrl.u32 %v8014, 7
    %v8016 = vsub.s32 0, %v8015
    %v8017 = vrot.slane %v7978, %v8016
    %v8019 = vadd.f32 %v8011, %v8017
    %v8020 = vadd.f32 %v8012, %v8017
    %8021 = vst.msk [vmem:[#allocation2] sm:$0xff] %vm93, %v8019
    %8022 = vst.msk [vmem:[#allocation2 + $0x8] sm:$0xff] %vm93, %v8020
    // Predicated region
    $region102: #{decoder_forward.1} parent=1 // pred_check
      _
    $region103: #{decoder_forward.1} parent=1 // pred_check_branch
      %8024 = sbr.rel (0) target = $region105
    $region104: #{decoder_forward.1} parent=1 // pred_region
      %s8026 = ssub.s32 256, 256
      %8027 = vsyncadd [#allocation3], %s8026
      %s8028 = sshll.u32 [#allocation2], 4
      %s8029 = int_to_ptr.vmem [resolvable:$true] %s8028
      %8034 = dma.vmem_to_hbm [thread:$0]  %s8029, 256, %s25, [#allocation3], 128, 128, 8
    $region105: #{decoder_forward.1} parent=1 // pred_fallthru
      _
    // Predicated region
    $region106: #{decoder_forward.1} parent=1 // pred_check
      _
    $region107: #{decoder_forward.1} parent=1 // pred_check_branch
      %8036 = sbr.rel (0) target = $region109
    $region108: #{decoder_forward.1} parent=1 // pred_region
      %8037 = dma.done [#allocation3], 256
    $region109: #{decoder_forward.1} parent=1 // pred_fallthru
      _
    %8038 = vsyncpa [#allocation3], 1

</llo_original>
